<compile_context>
chip_gen: v7x
topology: tpu7x:2x2x1
jax: 0.10.0
libtpu: 0.0.40
codegen_flags: <defaults>
</compile_context>

<pallas_src>
import math

import jax
import jax.numpy as jnp
from jax.experimental import pallas as pl
from jax.experimental.pallas import tpu as pltpu


_VMEM = pl.BlockSpec(memory_space=pltpu.MemorySpace.VMEM)
_ANY = pl.BlockSpec(memory_space=pl.ANY)


# ------------------------- Pallas kernels -------------------------

def _conv_stage_kernel(p3_ref, w3_ref, b3_ref,
                       p4_ref, w4_ref, b4_ref,
                       p5_ref, w5_ref, b5_ref,
                       o3_ref, o4_ref, o5_ref):
    # Three independent lane-dense conv matmuls fused into one launch.
    # p: (Cin*k*k, B*Ho*Wo), w: (Cout, Cin*k*k), b: (Cout, 1) -> o: (Cout, B*Ho*Wo)
    # TODO(synk): the three branches could be packed block-diagonally offline
    # into a single MXU push; kept as three dots (sub-microsecond difference).
    for p_ref, w_ref, b_ref, o_ref in ((p3_ref, w3_ref, b3_ref, o3_ref),
                                       (p4_ref, w4_ref, b4_ref, o4_ref),
                                       (p5_ref, w5_ref, b5_ref, o5_ref)):
        acc = jnp.dot(w_ref[...], p_ref[...], preferred_element_type=jnp.float32)
        o_ref[...] = jnp.maximum(acc + b_ref[...], 0.0)


def conv_stage(patches, weights, biases):
    """patches[i]: (K_i, N_i), weights[i]: (Cout_i, K_i), biases[i]: (Cout_i, 1)."""
    out_shape = tuple(jax.ShapeDtypeStruct((w.shape[0], p.shape[1]), jnp.float32)
                      for w, p in zip(weights, patches))
    return pl.pallas_call(
        _conv_stage_kernel,
        out_shape=out_shape,
        in_specs=[_VMEM] * 9,
        out_specs=(_VMEM, _VMEM, _VMEM),
    )(patches[0], weights[0], biases[0],
      patches[1], weights[1], biases[1],
      patches[2], weights[2], biases[2])


def lstm_fc_fused(x2d, lstm0, lstm1m, rnn_dense, feats, fc1, fc2, *, T, Bp, B):
    """Fused: 2-layer LSTM -> rnn_dense -> fc1 (split-K, no host concat) -> fc2."""
    wih0t, whh0t, b0 = lstm0          # (F,4H), (H,4H), (1,4H)
    w1m, b1 = lstm1m                  # (2H,4H), (1,4H)
    wdT, bd = rnn_dense               # (H,32), (1,32)
    f3, f4, f5 = feats                # (B,480), (B,480), (B,672)
    w1t, bfc1 = fc1                   # (1664,512), (1,512)
    w2t, bfc2 = fc2                   # (512,64), (1,64)

    H = whh0t.shape[0]
    K3, K4, K5 = f3.shape[1], f4.shape[1], f5.shape[1]
    Krd = wdT.shape[1]
    assert K3 + K4 + K5 + Krd == w1t.shape[0]
    n_out = w2t.shape[1]
    f32 = jnp.float32

    def kernel(x2d_ref, wih0_ref, whh0_ref, b0_ref,
               w1m_ref, b1_ref, wd_ref, bd_ref,
               f3_ref, f4_ref, f5_ref,
               w1_hbm, bfc1_ref, w2_ref, bfc2_ref,
               o_ref, w1_vmem, w1_sem):
        # Overlap the largest HBM transfer (fc1 weights, ~3.4 MB) with the
        # serial LSTM recurrence: start the DMA now, wait right before fc1.
        cp = pltpu.make_async_copy(w1_hbm, w1_vmem, w1_sem)
        cp.start()

        # Layer-0 input projection hoisted out of the time loop:
        # one (T*Bp, F) @ (F, 4H) matmul replaces T tiny per-step matmuls.
        gx0 = (jnp.dot(x2d_ref[...], wih0_ref[...], preferred_element_type=f32)
               + b0_ref[...])                                    # (T*Bp, 4H)
        b1b = jnp.broadcast_to(b1_ref[...], (Bp, 4 * H))         # hoisted bias

        def activate(gates, c):
            # PyTorch gate order: i, f, g, o. Full-width sigmoid keeps the EUP
            # on whole vregs; only the g slice gets tanh.
            sig = jax.nn.sigmoid(gates)
            i = sig[:, 0:H]
            f = sig[:, H:2 * H]
            o = sig[:, 3 * H:4 * H]
            g = jnp.tanh(gates[:, 2 * H:3 * H])
            c_new = f * c + i * g
            h_new = o * jnp.tanh(c_new)
            return h_new, c_new

        h0 = jnp.zeros((Bp, H), f32)
        c0 = jnp.zeros((Bp, H), f32)
        h1 = jnp.zeros((Bp, H), f32)
        c1 = jnp.zeros((Bp, H), f32)
        # Static unroll over T; 2 MXU pushes per step (layer-0 recurrent dot,
        # merged layer-1 dot). Padded batch rows (B..Bp) are independent and
        # discarded below.
        # TODO(synk): the recurrent weights could be pinned in MXU staging via
        # pltpu.matmul_push_rhs/acc/pop; kept as plain jnp.dot for robustness.
        for t in range(T):
            gates0 = gx0[t * Bp:(t + 1) * Bp] + jnp.dot(
                h0, whh0_ref[...], preferred_element_type=f32)
            h0, c0 = activate(gates0, c0)
            gates1 = (jnp.dot(jnp.concatenate([h0, h1], axis=1), w1m_ref[...],
                              preferred_element_type=f32) + b1b)
            h1, c1 = activate(gates1, c1)

        # rnn_dense on the last hidden state of the top layer (dropout1: eval).
        out_b1 = (jnp.dot(h1[0:B], wd_ref[...], preferred_element_type=f32)
                  + bd_ref[...])

        # fc1 with K split over (cnn_b_3, cnn_b_4, cnn_b_5, out_b1) -> no concat.
        cp.wait()   # fc1 weights now resident in VMEM scratch
        z = (jnp.dot(f3_ref[...], w1_vmem[0:K3, :],
                     preferred_element_type=f32)
             + jnp.dot(f4_ref[...], w1_vmem[K3:K3 + K4, :],
                       preferred_element_type=f32)
             + jnp.dot(f5_ref[...], w1_vmem[K3 + K4:K3 + K4 + K5, :],
                       preferred_element_type=f32)
             + jnp.dot(out_b1, w1_vmem[K3 + K4 + K5:K3 + K4 + K5 + Krd, :],
                       preferred_element_type=f32)
             + bfc1_ref[...])
        z = jnp.maximum(z, 0.0)

        out = jnp.dot(z, w2_ref[...], preferred_element_type=f32) + bfc2_ref[...]
        o_ref[...] = jnp.maximum(out, 0.0)   # dropout2: identity (eval); relu

    args = (x2d, wih0t, whh0t, b0, w1m, b1, wdT, bd, f3, f4, f5,
            w1t, bfc1, w2t, bfc2)
    in_specs = [_VMEM] * len(args)
    in_specs[11] = _ANY                      # fc1 weight stays in HBM (manual DMA)
    return pl.pallas_call(
        kernel,
        out_shape=jax.ShapeDtypeStruct((B, n_out), jnp.float32),
        in_specs=in_specs,
        out_specs=_VMEM,
        scratch_shapes=[pltpu.VMEM(w1t.shape, jnp.float32),
                        pltpu.SemaphoreType.DMA],
    )(*args)


# ------------------------- host-side glue (small, XLA-fused) -------------------------

def _im2col_lane_dense(x, k, p):
    # x: (C, B, H, W) -> (C*k*k, B*Ho*Wo); rows ordered (c, kh, kw) to match
    # torch's weight.reshape(Cout, Cin*k*k); columns ordered (b, i, j).
    C, B, H, W = x.shape
    xp = jnp.pad(x, ((0, 0), (0, 0), (p, p), (p, p)))
    Ho = H + 2 * p - k + 1
    Wo = W + 2 * p - k + 1
    cols = [xp[:, :, di:di + Ho, dj:dj + Wo] for di in range(k) for dj in range(k)]
    pat = jnp.stack(cols, axis=1)                       # (C, k*k, B, Ho, Wo)
    return pat.reshape(C * k * k, B * Ho * Wo), Ho, Wo


def _maxpool_cbhw(x):
    # 2x2 / stride-2 max pool on (C, B, H, W), floor mode (matches torch).
    C, B, H, W = x.shape
    Ho, Wo = H // 2, W // 2
    x = x[:, :, :Ho * 2, :Wo * 2].reshape(C, B, Ho, 2, Wo, 2)
    return x.max(axis=(3, 5))


# ------------------------- parameters -------------------------

def _uniform(key, shape, scale):
    return jax.random.uniform(key, shape, jnp.float32, -scale, scale)


def init_params(key):
    params = {}
    keys = iter(jax.random.split(key, 64))
    nxt = lambda: next(keys)
    # cfg04 = [8, 'M', 16, 'M'] with kernel sizes 3, 4, 5
    for k in (3, 4, 5):
        s1 = 1.0 / math.sqrt(1 * k * k)
        s2 = 1.0 / math.sqrt(8 * k * k)
        params[f'conv{k}'] = (_uniform(nxt(), (8, 1, k, k), s1),
                              _uniform(nxt(), (8,), s1),
                              _uniform(nxt(), (16, 8, k, k), s2),
                              _uniform(nxt(), (16,), s2))
    H = 64
    s = 1.0 / math.sqrt(H)
    for layer, in_dim in ((0, 18), (1, 64)):
        params[f'lstm{layer}'] = (_uniform(nxt(), (4 * H, in_dim), s),
                                  _uniform(nxt(), (4 * H, H), s),
                                  _uniform(nxt(), (4 * H,), s),
                                  _uniform(nxt(), (4 * H,), s))
    params['rnn_dense'] = (_uniform(nxt(), (32, 64), 1 / math.sqrt(64)),
                           _uniform(nxt(), (32,), 1 / math.sqrt(64)))
    params['fc1'] = (_uniform(nxt(), (512, 1664), 1 / math.sqrt(1664)),
                     _uniform(nxt(), (512,), 1 / math.sqrt(1664)))
    params['fc2'] = (_uniform(nxt(), (64, 512), 1 / math.sqrt(512)),
                     _uniform(nxt(), (64,), 1 / math.sqrt(512)))
    return params


def prepare_params(params):
    """One-time (outside jit) re-layout of torch-style weights into kernel layout."""
    prep = {}
    for k in (3, 4, 5):
        w1, b1, w2, b2 = params[f'conv{k}']
        prep[f'conv{k}'] = (w1.reshape(8, k * k).astype(jnp.float32),
                            b1.reshape(8, 1).astype(jnp.float32),
                            w2.reshape(16, 8 * k * k).astype(jnp.float32),
                            b2.reshape(16, 1).astype(jnp.float32))
    H = 64
    # LSTM layer 0: input projection hoisted in-kernel -> keep Wih and Whh
    # separate (both transposed); combined bias.
    wih0, whh0, bih0, bhh0 = params['lstm0']
    prep['lstm0'] = (wih0.T.astype(jnp.float32),                      # (F, 4H)
                     whh0.T.astype(jnp.float32),                      # (H, 4H)
                     (bih0 + bhh0).reshape(1, 4 * H).astype(jnp.float32))
    # LSTM layer 1: merge Wih/Whh into one (2H, 4H) matrix -> 1 dot per step.
    wih1, whh1, bih1, bhh1 = params['lstm1']
    prep['lstm1'] = (jnp.vstack([wih1.T, whh1.T]).astype(jnp.float32),  # (2H, 4H)
                     (bih1 + bhh1).reshape(1, 4 * H).astype(jnp.float32))
    wd, bd = params['rnn_dense']
    prep['rnn_dense'] = (wd.T.astype(jnp.float32), bd.reshape(1, 32).astype(jnp.float32))
    w1, b1 = params['fc1']
    # Kept as one (1664, 512) array; K-slices (480/480/672/32, matching the
    # torch.cat order) are taken in-kernel on the VMEM scratch after the DMA.
    prep['fc1'] = (w1.T.astype(jnp.float32), b1.reshape(1, 512).astype(jnp.float32))
    w2, b2 = params['fc2']
    prep['fc2'] = (w2.T.astype(jnp.float32), b2.reshape(1, 64).astype(jnp.float32))
    return prep


# ------------------------- model forward -------------------------

def b_seq_forward(x, prep):
    # x: (B, 14, 18)
    B, T, F = x.shape
    xc = x[None]                                   # (C=1, B, H=14, W=18)

    # ---- conv stage 1: all three branches in one Pallas call ----
    p1, w1, b1, shapes1 = [], [], [], []
    for k in (3, 4, 5):
        wk1, bk1, _, _ = prep[f'conv{k}']
        pat, Ho, Wo = _im2col_lane_dense(xc, k, k - 1)
        p1.append(pat); w1.append(wk1); b1.append(bk1); shapes1.append((Ho, Wo))
    y1 = conv_stage(p1, w1, b1)                    # 3x (8, B*Ho*Wo), lane-dense

    # ---- pool + conv stage 2 (one Pallas call) ----
    p2, w2, b2, shapes2 = [], [], [], []
    for idx, k in enumerate((3, 4, 5)):
        _, _, wk2, bk2 = prep[f'conv{k}']
        Ho, Wo = shapes1[idx]
        pooled = _maxpool_cbhw(y1[idx].reshape(8, B, Ho, Wo))
        pat, Ho2, Wo2 = _im2col_lane_dense(pooled, k, k - 1)
        p2.append(pat); w2.append(wk2); b2.append(bk2); shapes2.append((Ho2, Wo2))
    y2 = conv_stage(p2, w2, b2)                    # 3x (16, B*Ho2*Wo2), lane-dense

    # ---- pool + flatten in torch (B, C*H*W) order ----
    feats = []
    for idx in range(3):
        Ho2, Wo2 = shapes2[idx]
        pooled = _maxpool_cbhw(y2[idx].reshape(16, B, Ho2, Wo2))   # (16, B, h, w)
        feats.append(pooled.transpose(1, 0, 2, 3).reshape(B, -1))  # (B, 16*h*w)
    # TODO(synk): the pool / im2col / flatten between the Pallas calls is still
    # XLA glue (HBM round trips of tiny activations); folding it into the
    # Pallas chain would remove 1-2 launches.

    # ---- fused LSTM(2 layers) + rnn_dense + fc1 + fc2 (one Pallas call) ----
    # Time-major, batch padded to a full sublane tile so every per-step slice
    # inside the kernel is (8,128)-aligned; padded rows are discarded in-kernel.
    Bp = ((B + 7) // 8) * 8
    x_tm = jnp.transpose(x, (1, 0, 2))             # (T, B, F)
    x_tm = jnp.pad(x_tm, ((0, 0), (0, Bp - B), (0, 0)))
    x2d = x_tm.reshape(T * Bp, F)                  # (T*Bp, F)
    out = lstm_fc_fused(x2d, prep['lstm0'], prep['lstm1'], prep['rnn_dense'],
                        feats, prep['fc1'], prep['fc2'], T=T, Bp=Bp, B=B)
    return out


if __name__ == "__main__":
    key = jax.random.PRNGKey(0)
    pkey, xkey = jax.random.split(key)
    params = init_params(pkey)
    prep = prepare_params(params)     # one-time weight re-layout (outside jit)

    B, T, F = 2, 14, 18               # T=14, F=18 so CNN feats (1632) + 32 == 1664
    x = jax.random.normal(xkey, (B, T, F), jnp.float32)

    fwd = jax.jit(b_seq_forward)
    out = fwd(x, prep)
    jax.block_until_ready(out)
    assert out.shape == (B, 64) and out.dtype == jnp.float32
    print("KERNEL_OK")
</pallas_src>

<mosaic_0001>
module attributes {stable_mosaic.version = 11 : i64} {
  func.func @_conv_stage_kernel(%arg0: memref<9x640xf32, #tpu.memory_space<vmem>>, %arg1: memref<8x9xf32, #tpu.memory_space<vmem>>, %arg2: memref<8x1xf32, #tpu.memory_space<vmem>>, %arg3: memref<16x714xf32, #tpu.memory_space<vmem>>, %arg4: memref<8x16xf32, #tpu.memory_space<vmem>>, %arg5: memref<8x1xf32, #tpu.memory_space<vmem>>, %arg6: memref<25x792xf32, #tpu.memory_space<vmem>>, %arg7: memref<8x25xf32, #tpu.memory_space<vmem>>, %arg8: memref<8x1xf32, #tpu.memory_space<vmem>>, %arg9: memref<8x640xf32, #tpu.memory_space<vmem>>, %arg10: memref<8x714xf32, #tpu.memory_space<vmem>>, %arg11: memref<8x792xf32, #tpu.memory_space<vmem>>) attributes {dimension_semantics = [], scalar_prefetch = 0 : i64, scratch_operands = 0 : i64, tpu.core_type = #tpu.core_type<tc>} {
    %c0 = arith.constant 0 : index
    %c0_0 = arith.constant 0 : index
    %0 = vector.load %arg1[%c0, %c0_0] : memref<8x9xf32, #tpu.memory_space<vmem>>, vector<8x9xf32>
    %c0_1 = arith.constant 0 : index
    %c0_2 = arith.constant 0 : index
    %1 = vector.load %arg0[%c0_1, %c0_2] : memref<9x640xf32, #tpu.memory_space<vmem>>, vector<9x640xf32>
    %cst = arith.constant dense<0.000000e+00> : vector<8x640xf32>
    %2 = tpu.matmul %0, %1, %cst {dimension_numbers = #tpu.dot_dimension_numbers<[1], [0], [0], [1], [0, 0, 1, 1], [], []>} : vector<8x9xf32>, vector<9x640xf32>, vector<8x640xf32> -> vector<8x640xf32>
    %c0_3 = arith.constant 0 : index
    %c0_4 = arith.constant 0 : index
    %3 = vector.load %arg2[%c0_3, %c0_4] : memref<8x1xf32, #tpu.memory_space<vmem>>, vector<8x1xf32>
    %4 = vector.broadcast %3 : vector<8x1xf32> to vector<8x640xf32>
    %5 = arith.addf %2, %4 : vector<8x640xf32>
    %cst_5 = arith.constant 0.000000e+00 : f32
    %6 = vector.broadcast %cst_5 : f32 to vector<8x640xf32>
    %7 = arith.maximumf %5, %6 : vector<8x640xf32>
    %c0_6 = arith.constant 0 : index
    %c0_7 = arith.constant 0 : index
    %8 = vector.load %arg9[%c0_6, %c0_7] : memref<8x640xf32, #tpu.memory_space<vmem>>, vector<8x640xf32>
    tpu.vector_store %arg9[%c0_6, %c0_7], %7 {strides = array<i32>} : memref<8x640xf32, #tpu.memory_space<vmem>>, vector<8x640xf32>,
    %c0_8 = arith.constant 0 : index
    %c0_9 = arith.constant 0 : index
    %9 = vector.load %arg4[%c0_8, %c0_9] : memref<8x16xf32, #tpu.memory_space<vmem>>, vector<8x16xf32>
    %c0_10 = arith.constant 0 : index
    %c0_11 = arith.constant 0 : index
    %10 = vector.load %arg3[%c0_10, %c0_11] : memref<16x714xf32, #tpu.memory_space<vmem>>, vector<16x714xf32>
    %cst_12 = arith.constant dense<0.000000e+00> : vector<8x714xf32>
    %11 = tpu.matmul %9, %10, %cst_12 {dimension_numbers = #tpu.dot_dimension_numbers<[1], [0], [0], [1], [0, 0, 1, 1], [], []>} : vector<8x16xf32>, vector<16x714xf32>, vector<8x714xf32> -> vector<8x714xf32>
    %c0_13 = arith.constant 0 : index
    %c0_14 = arith.constant 0 : index
    %12 = vector.load %arg5[%c0_13, %c0_14] : memref<8x1xf32, #tpu.memory_space<vmem>>, vector<8x1xf32>
    %13 = vector.broadcast %12 : vector<8x1xf32> to vector<8x714xf32>
    %14 = arith.addf %11, %13 : vector<8x714xf32>
    %cst_15 = arith.constant 0.000000e+00 : f32
    %15 = vector.broadcast %cst_15 : f32 to vector<8x714xf32>
    %16 = arith.maximumf %14, %15 : vector<8x714xf32>
    %c0_16 = arith.constant 0 : index
    %c0_17 = arith.constant 0 : index
    %17 = vector.load %arg10[%c0_16, %c0_17] : memref<8x714xf32, #tpu.memory_space<vmem>>, vector<8x714xf32>
    tpu.vector_store %arg10[%c0_16, %c0_17], %16 {strides = array<i32>} : memref<8x714xf32, #tpu.memory_space<vmem>>, vector<8x714xf32>,
    %c0_18 = arith.constant 0 : index
    %c0_19 = arith.constant 0 : index
    %18 = vector.load %arg7[%c0_18, %c0_19] : memref<8x25xf32, #tpu.memory_space<vmem>>, vector<8x25xf32>
    %c0_20 = arith.constant 0 : index
    %c0_21 = arith.constant 0 : index
    %19 = vector.load %arg6[%c0_20, %c0_21] : memref<25x792xf32, #tpu.memory_space<vmem>>, vector<25x792xf32>
    %cst_22 = arith.constant dense<0.000000e+00> : vector<8x792xf32>
    %20 = tpu.matmul %18, %19, %cst_22 {dimension_numbers = #tpu.dot_dimension_numbers<[1], [0], [0], [1], [0, 0, 1, 1], [], []>} : vector<8x25xf32>, vector<25x792xf32>, vector<8x792xf32> -> vector<8x792xf32>
    %c0_23 = arith.constant 0 : index
    %c0_24 = arith.constant 0 : index
    %21 = vector.load %arg8[%c0_23, %c0_24] : memref<8x1xf32, #tpu.memory_space<vmem>>, vector<8x1xf32>
    %22 = vector.broadcast %21 : vector<8x1xf32> to vector<8x792xf32>
    %23 = arith.addf %20, %22 : vector<8x792xf32>
    %cst_25 = arith.constant 0.000000e+00 : f32
    %24 = vector.broadcast %cst_25 : f32 to vector<8x792xf32>
    %25 = arith.maximumf %23, %24 : vector<8x792xf32>
    %c0_26 = arith.constant 0 : index
    %c0_27 = arith.constant 0 : index
    %26 = vector.load %arg11[%c0_26, %c0_27] : memref<8x792xf32, #tpu.memory_space<vmem>>, vector<8x792xf32>
    tpu.vector_store %arg11[%c0_26, %c0_27], %25 {strides = array<i32>} : memref<8x792xf32, #tpu.memory_space<vmem>>, vector<8x792xf32>,
    return
  }
}

module attributes {stable_mosaic.version = 11 : i64} {
  func.func @_conv_stage_kernel(%arg0: memref<72x240xf32, #tpu.memory_space<vmem>>, %arg1: memref<16x72xf32, #tpu.memory_space<vmem>>, %arg2: memref<16x1xf32, #tpu.memory_space<vmem>>, %arg3: memref<128x286xf32, #tpu.memory_space<vmem>>, %arg4: memref<16x128xf32, #tpu.memory_space<vmem>>, %arg5: memref<16x1xf32, #tpu.memory_space<vmem>>, %arg6: memref<200x390xf32, #tpu.memory_space<vmem>>, %arg7: memref<16x200xf32, #tpu.memory_space<vmem>>, %arg8: memref<16x1xf32, #tpu.memory_space<vmem>>, %arg9: memref<16x240xf32, #tpu.memory_space<vmem>>, %arg10: memref<16x286xf32, #tpu.memory_space<vmem>>, %arg11: memref<16x390xf32, #tpu.memory_space<vmem>>) attributes {dimension_semantics = [], scalar_prefetch = 0 : i64, scratch_operands = 0 : i64, tpu.core_type = #tpu.core_type<tc>} {
    %c0 = arith.constant 0 : index
    %c0_0 = arith.constant 0 : index
    %0 = vector.load %arg1[%c0, %c0_0] : memref<16x72xf32, #tpu.memory_space<vmem>>, vector<16x72xf32>
    %c0_1 = arith.constant 0 : index
    %c0_2 = arith.constant 0 : index
    %1 = vector.load %arg0[%c0_1, %c0_2] : memref<72x240xf32, #tpu.memory_space<vmem>>, vector<72x240xf32>
    %cst = arith.constant dense<0.000000e+00> : vector<16x240xf32>
    %2 = tpu.matmul %0, %1, %cst {dimension_numbers = #tpu.dot_dimension_numbers<[1], [0], [0], [1], [0, 0, 1, 1], [], []>} : vector<16x72xf32>, vector<72x240xf32>, vector<16x240xf32> -> vector<16x240xf32>
    %c0_3 = arith.constant 0 : index
    %c0_4 = arith.constant 0 : index
    %3 = vector.load %arg2[%c0_3, %c0_4] : memref<16x1xf32, #tpu.memory_space<vmem>>, vector<16x1xf32>
    %4 = vector.broadcast %3 : vector<16x1xf32> to vector<16x240xf32>
    %5 = arith.addf %2, %4 : vector<16x240xf32>
    %cst_5 = arith.constant 0.000000e+00 : f32
    %6 = vector.broadcast %cst_5 : f32 to vector<16x240xf32>
    %7 = arith.maximumf %5, %6 : vector<16x240xf32>
    %c0_6 = arith.constant 0 : index
    %c0_7 = arith.constant 0 : index
    %8 = vector.load %arg9[%c0_6, %c0_7] : memref<16x240xf32, #tpu.memory_space<vmem>>, vector<16x240xf32>
    tpu.vector_store %arg9[%c0_6, %c0_7], %7 {strides = array<i32>} : memref<16x240xf32, #tpu.memory_space<vmem>>, vector<16x240xf32>,
    %c0_8 = arith.constant 0 : index
    %c0_9 = arith.constant 0 : index
    %9 = vector.load %arg4[%c0_8, %c0_9] : memref<16x128xf32, #tpu.memory_space<vmem>>, vector<16x128xf32>
    %c0_10 = arith.constant 0 : index
    %c0_11 = arith.constant 0 : index
    %10 = vector.load %arg3[%c0_10, %c0_11] : memref<128x286xf32, #tpu.memory_space<vmem>>, vector<128x286xf32>
    %cst_12 = arith.constant dense<0.000000e+00> : vector<16x286xf32>
    %11 = tpu.matmul %9, %10, %cst_12 {dimension_numbers = #tpu.dot_dimension_numbers<[1], [0], [0], [1], [0, 0, 1, 1], [], []>} : vector<16x128xf32>, vector<128x286xf32>, vector<16x286xf32> -> vector<16x286xf32>
    %c0_13 = arith.constant 0 : index
    %c0_14 = arith.constant 0 : index
    %12 = vector.load %arg5[%c0_13, %c0_14] : memref<16x1xf32, #tpu.memory_space<vmem>>, vector<16x1xf32>
    %13 = vector.broadcast %12 : vector<16x1xf32> to vector<16x286xf32>
    %14 = arith.addf %11, %13 : vector<16x286xf32>
    %cst_15 = arith.constant 0.000000e+00 : f32
    %15 = vector.broadcast %cst_15 : f32 to vector<16x286xf32>
    %16 = arith.maximumf %14, %15 : vector<16x286xf32>
    %c0_16 = arith.constant 0 : index
    %c0_17 = arith.constant 0 : index
    %17 = vector.load %arg10[%c0_16, %c0_17] : memref<16x286xf32, #tpu.memory_space<vmem>>, vector<16x286xf32>
    tpu.vector_store %arg10[%c0_16, %c0_17], %16 {strides = array<i32>} : memref<16x286xf32, #tpu.memory_space<vmem>>, vector<16x286xf32>,
    %c0_18 = arith.constant 0 : index
    %c0_19 = arith.constant 0 : index
    %18 = vector.load %arg7[%c0_18, %c0_19] : memref<16x200xf32, #tpu.memory_space<vmem>>, vector<16x200xf32>
    %c0_20 = arith.constant 0 : index
    %c0_21 = arith.constant 0 : index
    %19 = vector.load %arg6[%c0_20, %c0_21] : memref<200x390xf32, #tpu.memory_space<vmem>>, vector<200x390xf32>
    %cst_22 = arith.constant dense<0.000000e+00> : vector<16x390xf32>
    %20 = tpu.matmul %18, %19, %cst_22 {dimension_numbers = #tpu.dot_dimension_numbers<[1], [0], [0], [1], [0, 0, 1, 1], [], []>} : vector<16x200xf32>, vector<200x390xf32>, vector<16x390xf32> -> vector<16x390xf32>
    %c0_23 = arith.constant 0 : index
    %c0_24 = arith.constant 0 : index
    %21 = vector.load %arg8[%c0_23, %c0_24] : memref<16x1xf32, #tpu.memory_space<vmem>>, vector<16x1xf32>
    %22 = vector.broadcast %21 : vector<16x1xf32> to vector<16x390xf32>
    %23 = arith.addf %20, %22 : vector<16x390xf32>
    %cst_25 = arith.constant 0.000000e+00 : f32
    %24 = vector.broadcast %cst_25 : f32 to vector<16x390xf32>
    %25 = arith.maximumf %23, %24 : vector<16x390xf32>
    %c0_26 = arith.constant 0 : index
    %c0_27 = arith.constant 0 : index
    %26 = vector.load %arg11[%c0_26, %c0_27] : memref<16x390xf32, #tpu.memory_space<vmem>>, vector<16x390xf32>
    tpu.vector_store %arg11[%c0_26, %c0_27], %25 {strides = array<i32>} : memref<16x390xf32, #tpu.memory_space<vmem>>, vector<16x390xf32>,
    return
  }
}

module attributes {stable_mosaic.version = 11 : i64} {
  func.func @kernel(%arg0: memref<112x18xf32, #tpu.memory_space<vmem>>, %arg1: memref<18x256xf32, #tpu.memory_space<vmem>>, %arg2: memref<64x256xf32, #tpu.memory_space<vmem>>, %arg3: memref<1x256xf32, #tpu.memory_space<vmem>>, %arg4: memref<128x256xf32, #tpu.memory_space<vmem>>, %arg5: memref<1x256xf32, #tpu.memory_space<vmem>>, %arg6: memref<64x32xf32, #tpu.memory_space<vmem>>, %arg7: memref<1x32xf32, #tpu.memory_space<vmem>>, %arg8: memref<2x480xf32, #tpu.memory_space<vmem>>, %arg9: memref<2x480xf32, #tpu.memory_space<vmem>>, %arg10: memref<2x672xf32, #tpu.memory_space<vmem>>, %arg11: memref<1664x512xf32, #tpu.memory_space<any>>, %arg12: memref<1x512xf32, #tpu.memory_space<vmem>>, %arg13: memref<512x64xf32, #tpu.memory_space<vmem>>, %arg14: memref<1x64xf32, #tpu.memory_space<vmem>>, %arg15: memref<2x64xf32, #tpu.memory_space<vmem>>, %arg16: memref<1664x512xf32, #tpu.memory_space<vmem>>, %arg17: memref<!tpu.dma_semaphore, #tpu.memory_space<semaphore_mem>>) attributes {dimension_semantics = [], scalar_prefetch = 0 : i64, scratch_operands = 2 : i64, tpu.core_type = #tpu.core_type<tc>} {
    tpu.enqueue_dma source(%arg11 : memref<1664x512xf32, #tpu.memory_space<any>>) target(%arg16 : memref<1664x512xf32, #tpu.memory_space<vmem>>) target_semaphore(%arg17 : memref<!tpu.dma_semaphore, #tpu.memory_space<semaphore_mem>>)
    %c0 = arith.constant 0 : index
    %c0_0 = arith.constant 0 : index
    %0 = vector.load %arg0[%c0, %c0_0] : memref<112x18xf32, #tpu.memory_space<vmem>>, vector<112x18xf32>
    %c0_1 = arith.constant 0 : index
    %c0_2 = arith.constant 0 : index
    %1 = vector.load %arg1[%c0_1, %c0_2] : memref<18x256xf32, #tpu.memory_space<vmem>>, vector<18x256xf32>
    %cst = arith.constant dense<0.000000e+00> : vector<112x256xf32>
    %2 = tpu.matmul %0, %1, %cst {dimension_numbers = #tpu.dot_dimension_numbers<[1], [0], [0], [1], [0, 0, 1, 1], [], []>} : vector<112x18xf32>, vector<18x256xf32>, vector<112x256xf32> -> vector<112x256xf32>
    %c0_3 = arith.constant 0 : index
    %c0_4 = arith.constant 0 : index
    %3 = vector.load %arg3[%c0_3, %c0_4] : memref<1x256xf32, #tpu.memory_space<vmem>>, vector<1x256xf32>
    %4 = vector.broadcast %3 : vector<1x256xf32> to vector<112x256xf32>
    %5 = arith.addf %2, %4 : vector<112x256xf32>
    %c0_5 = arith.constant 0 : index
    %c0_6 = arith.constant 0 : index
    %6 = vector.load %arg5[%c0_5, %c0_6] : memref<1x256xf32, #tpu.memory_space<vmem>>, vector<1x256xf32>
    %7 = vector.shape_cast %6 : vector<1x256xf32> to vector<1x256xf32>
    %8 = vector.broadcast %7 : vector<1x256xf32> to vector<8x256xf32>
    %cst_7 = arith.constant 0.000000e+00 : f32
    %9 = vector.broadcast %cst_7 : f32 to vector<8x64xf32>
    %cst_8 = arith.constant 0.000000e+00 : f32
    %10 = vector.broadcast %cst_8 : f32 to vector<8x64xf32>
    %cst_9 = arith.constant 0.000000e+00 : f32
    %11 = vector.broadcast %cst_9 : f32 to vector<8x64xf32>
    %cst_10 = arith.constant 0.000000e+00 : f32
    %12 = vector.broadcast %cst_10 : f32 to vector<8x64xf32>
    %13 = vector.extract_strided_slice %5 {offsets = [0, 0], sizes = [8, 256], strides = [1, 1]} : vector<112x256xf32> to vector<8x256xf32>
    %c0_11 = arith.constant 0 : index
    %c0_12 = arith.constant 0 : index
    %14 = vector.load %arg2[%c0_11, %c0_12] : memref<64x256xf32, #tpu.memory_space<vmem>>, vector<64x256xf32>
    %cst_13 = arith.constant dense<0.000000e+00> : vector<8x256xf32>
    %15 = tpu.matmul %9, %14, %cst_13 {dimension_numbers = #tpu.dot_dimension_numbers<[1], [0], [0], [1], [0, 0, 1, 1], [], []>} : vector<8x64xf32>, vector<64x256xf32>, vector<8x256xf32> -> vector<8x256xf32>
    %16 = arith.addf %13, %15 : vector<8x256xf32>
    %17 = arith.negf %16 : vector<8x256xf32>
    %18 = math.exp %17 : vector<8x256xf32>
    %cst_14 = arith.constant 1.000000e+00 : f32
    %19 = vector.broadcast %cst_14 : f32 to vector<8x256xf32>
    %20 = arith.addf %19, %18 : vector<8x256xf32>
    %21 = arith.divf %19, %20 : vector<8x256xf32>
    %22 = vector.extract_strided_slice %21 {offsets = [0, 0], sizes = [8, 64], strides = [1, 1]} : vector<8x256xf32> to vector<8x64xf32>
    %23 = vector.extract_strided_slice %21 {offsets = [0, 64], sizes = [8, 64], strides = [1, 1]} : vector<8x256xf32> to vector<8x64xf32>
    %24 = vector.extract_strided_slice %21 {offsets = [0, 192], sizes = [8, 64], strides = [1, 1]} : vector<8x256xf32> to vector<8x64xf32>
    %25 = vector.extract_strided_slice %16 {offsets = [0, 128], sizes = [8, 64], strides = [1, 1]} : vector<8x256xf32> to vector<8x64xf32>
    %26 = math.tanh %25 : vector<8x64xf32>
    %27 = arith.mulf %23, %10 : vector<8x64xf32>
    %28 = arith.mulf %22, %26 : vector<8x64xf32>
    %29 = arith.addf %27, %28 : vector<8x64xf32>
    %30 = math.tanh %29 : vector<8x64xf32>
    %31 = arith.mulf %24, %30 : vector<8x64xf32>
    %32 = tpu.concatenate %31, %11 in 1 : vector<8x64xf32>, vector<8x64xf32> -> vector<8x128xf32>
    %c0_15 = arith.constant 0 : index
    %c0_16 = arith.constant 0 : index
    %33 = vector.load %arg4[%c0_15, %c0_16] : memref<128x256xf32, #tpu.memory_space<vmem>>, vector<128x256xf32>
    %cst_17 = arith.constant dense<0.000000e+00> : vector<8x256xf32>
    %34 = tpu.matmul %32, %33, %cst_17 {dimension_numbers = #tpu.dot_dimension_numbers<[1], [0], [0], [1], [0, 0, 1, 1], [], []>} : vector<8x128xf32>, vector<128x256xf32>, vector<8x256xf32> -> vector<8x256xf32>
    %35 = arith.addf %34, %8 : vector<8x256xf32>
    %36 = arith.negf %35 : vector<8x256xf32>
    %37 = math.exp %36 : vector<8x256xf32>
    %cst_18 = arith.constant 1.000000e+00 : f32
    %38 = vector.broadcast %cst_18 : f32 to vector<8x256xf32>
    %39 = arith.addf %38, %37 : vector<8x256xf32>
    %40 = arith.divf %38, %39 : vector<8x256xf32>
    %41 = vector.extract_strided_slice %40 {offsets = [0, 0], sizes = [8, 64], strides = [1, 1]} : vector<8x256xf32> to vector<8x64xf32>
    %42 = vector.extract_strided_slice %40 {offsets = [0, 64], sizes = [8, 64], strides = [1, 1]} : vector<8x256xf32> to vector<8x64xf32>
    %43 = vector.extract_strided_slice %40 {offsets = [0, 192], sizes = [8, 64], strides = [1, 1]} : vector<8x256xf32> to vector<8x64xf32>
    %44 = vector.extract_strided_slice %35 {offsets = [0, 128], sizes = [8, 64], strides = [1, 1]} : vector<8x256xf32> to vector<8x64xf32>
    %45 = math.tanh %44 : vector<8x64xf32>
    %46 = arith.mulf %42, %12 : vector<8x64xf32>
    %47 = arith.mulf %41, %45 : vector<8x64xf32>
    %48 = arith.addf %46, %47 : vector<8x64xf32>
    %49 = math.tanh %48 : vector<8x64xf32>
    %50 = arith.mulf %43, %49 : vector<8x64xf32>
    %51 = vector.extract_strided_slice %5 {offsets = [8, 0], sizes = [8, 256], strides = [1, 1]} : vector<112x256xf32> to vector<8x256xf32>
    %c0_19 = arith.constant 0 : index
    %c0_20 = arith.constant 0 : index
    %52 = vector.load %arg2[%c0_19, %c0_20] : memref<64x256xf32, #tpu.memory_space<vmem>>, vector<64x256xf32>
    %cst_21 = arith.constant dense<0.000000e+00> : vector<8x256xf32>
    %53 = tpu.matmul %31, %52, %cst_21 {dimension_numbers = #tpu.dot_dimension_numbers<[1], [0], [0], [1], [0, 0, 1, 1], [], []>} : vector<8x64xf32>, vector<64x256xf32>, vector<8x256xf32> -> vector<8x256xf32>
    %54 = arith.addf %51, %53 : vector<8x256xf32>
    %55 = arith.negf %54 : vector<8x256xf32>
    %56 = math.exp %55 : vector<8x256xf32>
    %cst_22 = arith.constant 1.000000e+00 : f32
    %57 = vector.broadcast %cst_22 : f32 to vector<8x256xf32>
    %58 = arith.addf %57, %56 : vector<8x256xf32>
    %59 = arith.divf %57, %58 : vector<8x256xf32>
    %60 = vector.extract_strided_slice %59 {offsets = [0, 0], sizes = [8, 64], strides = [1, 1]} : vector<8x256xf32> to vector<8x64xf32>
    %61 = vector.extract_strided_slice %59 {offsets = [0, 64], sizes = [8, 64], strides = [1, 1]} : vector<8x256xf32> to vector<8x64xf32>
    %62 = vector.extract_strided_slice %59 {offsets = [0, 192], sizes = [8, 64], strides = [1, 1]} : vector<8x256xf32> to vector<8x64xf32>
    %63 = vector.extract_strided_slice %54 {offsets = [0, 128], sizes = [8, 64], strides = [1, 1]} : vector<8x256xf32> to vector<8x64xf32>
    %64 = math.tanh %63 : vector<8x64xf32>
    %65 = arith.mulf %61, %29 : vector<8x64xf32>
    %66 = arith.mulf %60, %64 : vector<8x64xf32>
    %67 = arith.addf %65, %66 : vector<8x64xf32>
    %68 = math.tanh %67 : vector<8x64xf32>
    %69 = arith.mulf %62, %68 : vector<8x64xf32>
    %70 = tpu.concatenate %69, %50 in 1 : vector<8x64xf32>, vector<8x64xf32> -> vector<8x128xf32>
    %c0_23 = arith.constant 0 : index
    %c0_24 = arith.constant 0 : index
    %71 = vector.load %arg4[%c0_23, %c0_24] : memref<128x256xf32, #tpu.memory_space<vmem>>, vector<128x256xf32>
    %cst_25 = arith.constant dense<0.000000e+00> : vector<8x256xf32>
    %72 = tpu.matmul %70, %71, %cst_25 {dimension_numbers = #tpu.dot_dimension_numbers<[1], [0], [0], [1], [0, 0, 1, 1], [], []>} : vector<8x128xf32>, vector<128x256xf32>, vector<8x256xf32> -> vector<8x256xf32>
    %73 = arith.addf %72, %8 : vector<8x256xf32>
    %74 = arith.negf %73 : vector<8x256xf32>
    %75 = math.exp %74 : vector<8x256xf32>
    %cst_26 = arith.constant 1.000000e+00 : f32
    %76 = vector.broadcast %cst_26 : f32 to vector<8x256xf32>
    %77 = arith.addf %76, %75 : vector<8x256xf32>
    %78 = arith.divf %76, %77 : vector<8x256xf32>
    %79 = vector.extract_strided_slice %78 {offsets = [0, 0], sizes = [8, 64], strides = [1, 1]} : vector<8x256xf32> to vector<8x64xf32>
    %80 = vector.extract_strided_slice %78 {offsets = [0, 64], sizes = [8, 64], strides = [1, 1]} : vector<8x256xf32> to vector<8x64xf32>
    %81 = vector.extract_strided_slice %78 {offsets = [0, 192], sizes = [8, 64], strides = [1, 1]} : vector<8x256xf32> to vector<8x64xf32>
    %82 = vector.extract_strided_slice %73 {offsets = [0, 128], sizes = [8, 64], strides = [1, 1]} : vector<8x256xf32> to vector<8x64xf32>
    %83 = math.tanh %82 : vector<8x64xf32>
    %84 = arith.mulf %80, %48 : vector<8x64xf32>
    %85 = arith.mulf %79, %83 : vector<8x64xf32>
    %86 = arith.addf %84, %85 : vector<8x64xf32>
    %87 = math.tanh %86 : vector<8x64xf32>
    %88 = arith.mulf %81, %87 : vector<8x64xf32>
    %89 = vector.extract_strided_slice %5 {offsets = [16, 0], sizes = [8, 256], strides = [1, 1]} : vector<112x256xf32> to vector<8x256xf32>
    %c0_27 = arith.constant 0 : index
    %c0_28 = arith.constant 0 : index
    %90 = vector.load %arg2[%c0_27, %c0_28] : memref<64x256xf32, #tpu.memory_space<vmem>>, vector<64x256xf32>
    %cst_29 = arith.constant dense<0.000000e+00> : vector<8x256xf32>
    %91 = tpu.matmul %69, %90, %cst_29 {dimension_numbers = #tpu.dot_dimension_numbers<[1], [0], [0], [1], [0, 0, 1, 1], [], []>} : vector<8x64xf32>, vector<64x256xf32>, vector<8x256xf32> -> vector<8x256xf32>
    %92 = arith.addf %89, %91 : vector<8x256xf32>
    %93 = arith.negf %92 : vector<8x256xf32>
    %94 = math.exp %93 : vector<8x256xf32>
    %cst_30 = arith.constant 1.000000e+00 : f32
    %95 = vector.broadcast %cst_30 : f32 to vector<8x256xf32>
    %96 = arith.addf %95, %94 : vector<8x256xf32>
    %97 = arith.divf %95, %96 : vector<8x256xf32>
    %98 = vector.extract_strided_slice %97 {offsets = [0, 0], sizes = [8, 64], strides = [1, 1]} : vector<8x256xf32> to vector<8x64xf32>
    %99 = vector.extract_strided_slice %97 {offsets = [0, 64], sizes = [8, 64], strides = [1, 1]} : vector<8x256xf32> to vector<8x64xf32>
    %100 = vector.extract_strided_slice %97 {offsets = [0, 192], sizes = [8, 64], strides = [1, 1]} : vector<8x256xf32> to vector<8x64xf32>
    %101 = vector.extract_strided_slice %92 {offsets = [0, 128], sizes = [8, 64], strides = [1, 1]} : vector<8x256xf32> to vector<8x64xf32>
    %102 = math.tanh %101 : vector<8x64xf32>
    %103 = arith.mulf %99, %67 : vector<8x64xf32>
    %104 = arith.mulf %98, %102 : vector<8x64xf32>
    %105 = arith.addf %103, %104 : vector<8x64xf32>
    %106 = math.tanh %105 : vector<8x64xf32>
    %107 = arith.mulf %100, %106 : vector<8x64xf32>
    %108 = tpu.concatenate %107, %88 in 1 : vector<8x64xf32>, vector<8x64xf32> -> vector<8x128xf32>
    %c0_31 = arith.constant 0 : index
    %c0_32 = arith.constant 0 : index
    %109 = vector.load %arg4[%c0_31, %c0_32] : memref<128x256xf32, #tpu.memory_space<vmem>>, vector<128x256xf32>
    %cst_33 = arith.constant dense<0.000000e+00> : vector<8x256xf32>
    %110 = tpu.matmul %108, %109, %cst_33 {dimension_numbers = #tpu.dot_dimension_numbers<[1], [0], [0], [1], [0, 0, 1, 1], [], []>} : vector<8x128xf32>, vector<128x256xf32>, vector<8x256xf32> -> vector<8x256xf32>
    %111 = arith.addf %110, %8 : vector<8x256xf32>
    %112 = arith.negf %111 : vector<8x256xf32>
    %113 = math.exp %112 : vector<8x256xf32>
    %cst_34 = arith.constant 1.000000e+00 : f32
    %114 = vector.broadcast %cst_34 : f32 to vector<8x256xf32>
    %115 = arith.addf %114, %113 : vector<8x256xf32>
    %116 = arith.divf %114, %115 : vector<8x256xf32>
    %117 = vector.extract_strided_slice %116 {offsets = [0, 0], sizes = [8, 64], strides = [1, 1]} : vector<8x256xf32> to vector<8x64xf32>
    %118 = vector.extract_strided_slice %116 {offsets = [0, 64], sizes = [8, 64], strides = [1, 1]} : vector<8x256xf32> to vector<8x64xf32>
    %119 = vector.extract_strided_slice %116 {offsets = [0, 192], sizes = [8, 64], strides = [1, 1]} : vector<8x256xf32> to vector<8x64xf32>
    %120 = vector.extract_strided_slice %111 {offsets = [0, 128], sizes = [8, 64], strides = [1, 1]} : vector<8x256xf32> to vector<8x64xf32>
    %121 = math.tanh %120 : vector<8x64xf32>
    %122 = arith.mulf %118, %86 : vector<8x64xf32>
    %123 = arith.mulf %117, %121 : vector<8x64xf32>
    %124 = arith.addf %122, %123 : vector<8x64xf32>
    %125 = math.tanh %124 : vector<8x64xf32>
    %126 = arith.mulf %119, %125 : vector<8x64xf32>
    %127 = vector.extract_strided_slice %5 {offsets = [24, 0], sizes = [8, 256], strides = [1, 1]} : vector<112x256xf32> to vector<8x256xf32>
    %c0_35 = arith.constant 0 : index
    %c0_36 = arith.constant 0 : index
    %128 = vector.load %arg2[%c0_35, %c0_36] : memref<64x256xf32, #tpu.memory_space<vmem>>, vector<64x256xf32>
    %cst_37 = arith.constant dense<0.000000e+00> : vector<8x256xf32>
    %129 = tpu.matmul %107, %128, %cst_37 {dimension_numbers = #tpu.dot_dimension_numbers<[1], [0], [0], [1], [0, 0, 1, 1], [], []>} : vector<8x64xf32>, vector<64x256xf32>, vector<8x256xf32> -> vector<8x256xf32>
    %130 = arith.addf %127, %129 : vector<8x256xf32>
    %131 = arith.negf %130 : vector<8x256xf32>
    %132 = math.exp %131 : vector<8x256xf32>
    %cst_38 = arith.constant 1.000000e+00 : f32
    %133 = vector.broadcast %cst_38 : f32 to vector<8x256xf32>
    %134 = arith.addf %133, %132 : vector<8x256xf32>
    %135 = arith.divf %133, %134 : vector<8x256xf32>
    %136 = vector.extract_strided_slice %135 {offsets = [0, 0], sizes = [8, 64], strides = [1, 1]} : vector<8x256xf32> to vector<8x64xf32>
    %137 = vector.extract_strided_slice %135 {offsets = [0, 64], sizes = [8, 64], strides = [1, 1]} : vector<8x256xf32> to vector<8x64xf32>
    %138 = vector.extract_strided_slice %135 {offsets = [0, 192], sizes = [8, 64], strides = [1, 1]} : vector<8x256xf32> to vector<8x64xf32>
    %139 = vector.extract_strided_slice %130 {offsets = [0, 128], sizes = [8, 64], strides = [1, 1]} : vector<8x256xf32> to vector<8x64xf32>
    %140 = math.tanh %139 : vector<8x64xf32>
    %141 = arith.mulf %137, %105 : vector<8x64xf32>
    %142 = arith.mulf %136, %140 : vector<8x64xf32>
    %143 = arith.addf %141, %142 : vector<8x64xf32>
    %144 = math.tanh %143 : vector<8x64xf32>
    %145 = arith.mulf %138, %144 : vector<8x64xf32>
    %146 = tpu.concatenate %145, %126 in 1 : vector<8x64xf32>, vector<8x64xf32> -> vector<8x128xf32>
    %c0_39 = arith.constant 0 : index
    %c0_40 = arith.constant 0 : index
    %147 = vector.load %arg4[%c0_39, %c0_40] : memref<128x256xf32, #tpu.memory_space<vmem>>, vector<128x256xf32>
    %cst_41 = arith.constant dense<0.000000e+00> : vector<8x256xf32>
    %148 = tpu.matmul %146, %147, %cst_41 {dimension_numbers = #tpu.dot_dimension_numbers<[1], [0], [0], [1], [0, 0, 1, 1], [], []>} : vector<8x128xf32>, vector<128x256xf32>, vector<8x256xf32> -> vector<8x256xf32>
    %149 = arith.addf %148, %8 : vector<8x256xf32>
    %150 = arith.negf %149 : vector<8x256xf32>
    %151 = math.exp %150 : vector<8x256xf32>
    %cst_42 = arith.constant 1.000000e+00 : f32
    %152 = vector.broadcast %cst_42 : f32 to vector<8x256xf32>
    %153 = arith.addf %152, %151 : vector<8x256xf32>
    %154 = arith.divf %152, %153 : vector<8x256xf32>
    %155 = vector.extract_strided_slice %154 {offsets = [0, 0], sizes = [8, 64], strides = [1, 1]} : vector<8x256xf32> to vector<8x64xf32>
    %156 = vector.extract_strided_slice %154 {offsets = [0, 64], sizes = [8, 64], strides = [1, 1]} : vector<8x256xf32> to vector<8x64xf32>
    %157 = vector.extract_strided_slice %154 {offsets = [0, 192], sizes = [8, 64], strides = [1, 1]} : vector<8x256xf32> to vector<8x64xf32>
    %158 = vector.extract_strided_slice %149 {offsets = [0, 128], sizes = [8, 64], strides = [1, 1]} : vector<8x256xf32> to vector<8x64xf32>
    %159 = math.tanh %158 : vector<8x64xf32>
    %160 = arith.mulf %156, %124 : vector<8x64xf32>
    %161 = arith.mulf %155, %159 : vector<8x64xf32>
    %162 = arith.addf %160, %161 : vector<8x64xf32>
    %163 = math.tanh %162 : vector<8x64xf32>
    %164 = arith.mulf %157, %163 : vector<8x64xf32>
    %165 = vector.extract_strided_slice %5 {offsets = [32, 0], sizes = [8, 256], strides = [1, 1]} : vector<112x256xf32> to vector<8x256xf32>
    %c0_43 = arith.constant 0 : index
    %c0_44 = arith.constant 0 : index
    %166 = vector.load %arg2[%c0_43, %c0_44] : memref<64x256xf32, #tpu.memory_space<vmem>>, vector<64x256xf32>
    %cst_45 = arith.constant dense<0.000000e+00> : vector<8x256xf32>
    %167 = tpu.matmul %145, %166, %cst_45 {dimension_numbers = #tpu.dot_dimension_numbers<[1], [0], [0], [1], [0, 0, 1, 1], [], []>} : vector<8x64xf32>, vector<64x256xf32>, vector<8x256xf32> -> vector<8x256xf32>
    %168 = arith.addf %165, %167 : vector<8x256xf32>
    %169 = arith.negf %168 : vector<8x256xf32>
    %170 = math.exp %169 : vector<8x256xf32>
    %cst_46 = arith.constant 1.000000e+00 : f32
    %171 = vector.broadcast %cst_46 : f32 to vector<8x256xf32>
    %172 = arith.addf %171, %170 : vector<8x256xf32>
    %173 = arith.divf %171, %172 : vector<8x256xf32>
    %174 = vector.extract_strided_slice %173 {offsets = [0, 0], sizes = [8, 64], strides = [1, 1]} : vector<8x256xf32> to vector<8x64xf32>
    %175 = vector.extract_strided_slice %173 {offsets = [0, 64], sizes = [8, 64], strides = [1, 1]} : vector<8x256xf32> to vector<8x64xf32>
    %176 = vector.extract_strided_slice %173 {offsets = [0, 192], sizes = [8, 64], strides = [1, 1]} : vector<8x256xf32> to vector<8x64xf32>
    %177 = vector.extract_strided_slice %168 {offsets = [0, 128], sizes = [8, 64], strides = [1, 1]} : vector<8x256xf32> to vector<8x64xf32>
    %178 = math.tanh %177 : vector<8x64xf32>
    %179 = arith.mulf %175, %143 : vector<8x64xf32>
    %180 = arith.mulf %174, %178 : vector<8x64xf32>
    %181 = arith.addf %179, %180 : vector<8x64xf32>
    %182 = math.tanh %181 : vector<8x64xf32>
    %183 = arith.mulf %176, %182 : vector<8x64xf32>
    %184 = tpu.concatenate %183, %164 in 1 : vector<8x64xf32>, vector<8x64xf32> -> vector<8x128xf32>
    %c0_47 = arith.constant 0 : index
    %c0_48 = arith.constant 0 : index
    %185 = vector.load %arg4[%c0_47, %c0_48] : memref<128x256xf32, #tpu.memory_space<vmem>>, vector<128x256xf32>
    %cst_49 = arith.constant dense<0.000000e+00> : vector<8x256xf32>
    %186 = tpu.matmul %184, %185, %cst_49 {dimension_numbers = #tpu.dot_dimension_numbers<[1], [0], [0], [1], [0, 0, 1, 1], [], []>} : vector<8x128xf32>, vector<128x256xf32>, vector<8x256xf32> -> vector<8x256xf32>
    %187 = arith.addf %186, %8 : vector<8x256xf32>
    %188 = arith.negf %187 : vector<8x256xf32>
    %189 = math.exp %188 : vector<8x256xf32>
    %cst_50 = arith.constant 1.000000e+00 : f32
    %190 = vector.broadcast %cst_50 : f32 to vector<8x256xf32>
    %191 = arith.addf %190, %189 : vector<8x256xf32>
    %192 = arith.divf %190, %191 : vector<8x256xf32>
    %193 = vector.extract_strided_slice %192 {offsets = [0, 0], sizes = [8, 64], strides = [1, 1]} : vector<8x256xf32> to vector<8x64xf32>
    %194 = vector.extract_strided_slice %192 {offsets = [0, 64], sizes = [8, 64], strides = [1, 1]} : vector<8x256xf32> to vector<8x64xf32>
    %195 = vector.extract_strided_slice %192 {offsets = [0, 192], sizes = [8, 64], strides = [1, 1]} : vector<8x256xf32> to vector<8x64xf32>
    %196 = vector.extract_strided_slice %187 {offsets = [0, 128], sizes = [8, 64], strides = [1, 1]} : vector<8x256xf32> to vector<8x64xf32>
    %197 = math.tanh %196 : vector<8x64xf32>
    %198 = arith.mulf %194, %162 : vector<8x64xf32>
    %199 = arith.mulf %193, %197 : vector<8x64xf32>
    %200 = arith.addf %198, %199 : vector<8x64xf32>
    %201 = math.tanh %200 : vector<8x64xf32>
    %202 = arith.mulf %195, %201 : vector<8x64xf32>
    %203 = vector.extract_strided_slice %5 {offsets = [40, 0], sizes = [8, 256], strides = [1, 1]} : vector<112x256xf32> to vector<8x256xf32>
    %c0_51 = arith.constant 0 : index
    %c0_52 = arith.constant 0 : index
    %204 = vector.load %arg2[%c0_51, %c0_52] : memref<64x256xf32, #tpu.memory_space<vmem>>, vector<64x256xf32>
    %cst_53 = arith.constant dense<0.000000e+00> : vector<8x256xf32>
    %205 = tpu.matmul %183, %204, %cst_53 {dimension_numbers = #tpu.dot_dimension_numbers<[1], [0], [0], [1], [0, 0, 1, 1], [], []>} : vector<8x64xf32>, vector<64x256xf32>, vector<8x256xf32> -> vector<8x256xf32>
    %206 = arith.addf %203, %205 : vector<8x256xf32>
    %207 = arith.negf %206 : vector<8x256xf32>
    %208 = math.exp %207 : vector<8x256xf32>
    %cst_54 = arith.constant 1.000000e+00 : f32
    %209 = vector.broadcast %cst_54 : f32 to vector<8x256xf32>
    %210 = arith.addf %209, %208 : vector<8x256xf32>
    %211 = arith.divf %209, %210 : vector<8x256xf32>
    %212 = vector.extract_strided_slice %211 {offsets = [0, 0], sizes = [8, 64], strides = [1, 1]} : vector<8x256xf32> to vector<8x64xf32>
    %213 = vector.extract_strided_slice %211 {offsets = [0, 64], sizes = [8, 64], strides = [1, 1]} : vector<8x256xf32> to vector<8x64xf32>
    %214 = vector.extract_strided_slice %211 {offsets = [0, 192], sizes = [8, 64], strides = [1, 1]} : vector<8x256xf32> to vector<8x64xf32>
    %215 = vector.extract_strided_slice %206 {offsets = [0, 128], sizes = [8, 64], strides = [1, 1]} : vector<8x256xf32> to vector<8x64xf32>
    %216 = math.tanh %215 : vector<8x64xf32>
    %217 = arith.mulf %213, %181 : vector<8x64xf32>
    %218 = arith.mulf %212, %216 : vector<8x64xf32>
    %219 = arith.addf %217, %218 : vector<8x64xf32>
    %220 = math.tanh %219 : vector<8x64xf32>
    %221 = arith.mulf %214, %220 : vector<8x64xf32>
    %222 = tpu.concatenate %221, %202 in 1 : vector<8x64xf32>, vector<8x64xf32> -> vector<8x128xf32>
    %c0_55 = arith.constant 0 : index
    %c0_56 = arith.constant 0 : index
    %223 = vector.load %arg4[%c0_55, %c0_56] : memref<128x256xf32, #tpu.memory_space<vmem>>, vector<128x256xf32>
    %cst_57 = arith.constant dense<0.000000e+00> : vector<8x256xf32>
    %224 = tpu.matmul %222, %223, %cst_57 {dimension_numbers = #tpu.dot_dimension_numbers<[1], [0], [0], [1], [0, 0, 1, 1], [], []>} : vector<8x128xf32>, vector<128x256xf32>, vector<8x256xf32> -> vector<8x256xf32>
    %225 = arith.addf %224, %8 : vector<8x256xf32>
    %226 = arith.negf %225 : vector<8x256xf32>
    %227 = math.exp %226 : vector<8x256xf32>
    %cst_58 = arith.constant 1.000000e+00 : f32
    %228 = vector.broadcast %cst_58 : f32 to vector<8x256xf32>
    %229 = arith.addf %228, %227 : vector<8x256xf32>
    %230 = arith.divf %228, %229 : vector<8x256xf32>
    %231 = vector.extract_strided_slice %230 {offsets = [0, 0], sizes = [8, 64], strides = [1, 1]} : vector<8x256xf32> to vector<8x64xf32>
    %232 = vector.extract_strided_slice %230 {offsets = [0, 64], sizes = [8, 64], strides = [1, 1]} : vector<8x256xf32> to vector<8x64xf32>
    %233 = vector.extract_strided_slice %230 {offsets = [0, 192], sizes = [8, 64], strides = [1, 1]} : vector<8x256xf32> to vector<8x64xf32>
    %234 = vector.extract_strided_slice %225 {offsets = [0, 128], sizes = [8, 64], strides = [1, 1]} : vector<8x256xf32> to vector<8x64xf32>
    %235 = math.tanh %234 : vector<8x64xf32>
    %236 = arith.mulf %232, %200 : vector<8x64xf32>
    %237 = arith.mulf %231, %235 : vector<8x64xf32>
    %238 = arith.addf %236, %237 : vector<8x64xf32>
    %239 = math.tanh %238 : vector<8x64xf32>
    %240 = arith.mulf %233, %239 : vector<8x64xf32>
    %241 = vector.extract_strided_slice %5 {offsets = [48, 0], sizes = [8, 256], strides = [1, 1]} : vector<112x256xf32> to vector<8x256xf32>
    %c0_59 = arith.constant 0 : index
    %c0_60 = arith.constant 0 : index
    %242 = vector.load %arg2[%c0_59, %c0_60] : memref<64x256xf32, #tpu.memory_space<vmem>>, vector<64x256xf32>
    %cst_61 = arith.constant dense<0.000000e+00> : vector<8x256xf32>
    %243 = tpu.matmul %221, %242, %cst_61 {dimension_numbers = #tpu.dot_dimension_numbers<[1], [0], [0], [1], [0, 0, 1, 1], [], []>} : vector<8x64xf32>, vector<64x256xf32>, vector<8x256xf32> -> vector<8x256xf32>
    %244 = arith.addf %241, %243 : vector<8x256xf32>
    %245 = arith.negf %244 : vector<8x256xf32>
    %246 = math.exp %245 : vector<8x256xf32>
    %cst_62 = arith.constant 1.000000e+00 : f32
    %247 = vector.broadcast %cst_62 : f32 to vector<8x256xf32>
    %248 = arith.addf %247, %246 : vector<8x256xf32>
    %249 = arith.divf %247, %248 : vector<8x256xf32>
    %250 = vector.extract_strided_slice %249 {offsets = [0, 0], sizes = [8, 64], strides = [1, 1]} : vector<8x256xf32> to vector<8x64xf32>
    %251 = vector.extract_strided_slice %249 {offsets = [0, 64], sizes = [8, 64], strides = [1, 1]} : vector<8x256xf32> to vector<8x64xf32>
    %252 = vector.extract_strided_slice %249 {offsets = [0, 192], sizes = [8, 64], strides = [1, 1]} : vector<8x256xf32> to vector<8x64xf32>
    %253 = vector.extract_strided_slice %244 {offsets = [0, 128], sizes = [8, 64], strides = [1, 1]} : vector<8x256xf32> to vector<8x64xf32>
    %254 = math.tanh %253 : vector<8x64xf32>
    %255 = arith.mulf %251, %219 : vector<8x64xf32>
    %256 = arith.mulf %250, %254 : vector<8x64xf32>
    %257 = arith.addf %255, %256 : vector<8x64xf32>
    %258 = math.tanh %257 : vector<8x64xf32>
    %259 = arith.mulf %252, %258 : vector<8x64xf32>
    %260 = tpu.concatenate %259, %240 in 1 : vector<8x64xf32>, vector<8x64xf32> -> vector<8x128xf32>
    %c0_63 = arith.constant 0 : index
    %c0_64 = arith.constant 0 : index
    %261 = vector.load %arg4[%c0_63, %c0_64] : memref<128x256xf32, #tpu.memory_space<vmem>>, vector<128x256xf32>
    %cst_65 = arith.constant dense<0.000000e+00> : vector<8x256xf32>
    %262 = tpu.matmul %260, %261, %cst_65 {dimension_numbers = #tpu.dot_dimension_numbers<[1], [0], [0], [1], [0, 0, 1, 1], [], []>} : vector<8x128xf32>, vector<128x256xf32>, vector<8x256xf32> -> vector<8x256xf32>
    %263 = arith.addf %262, %8 : vector<8x256xf32>
    %264 = arith.negf %263 : vector<8x256xf32>
    %265 = math.exp %264 : vector<8x256xf32>
    %cst_66 = arith.constant 1.000000e+00 : f32
    %266 = vector.broadcast %cst_66 : f32 to vector<8x256xf32>
    %267 = arith.addf %266, %265 : vector<8x256xf32>
    %268 = arith.divf %266, %267 : vector<8x256xf32>
    %269 = vector.extract_strided_slice %268 {offsets = [0, 0], sizes = [8, 64], strides = [1, 1]} : vector<8x256xf32> to vector<8x64xf32>
    %270 = vector.extract_strided_slice %268 {offsets = [0, 64], sizes = [8, 64], strides = [1, 1]} : vector<8x256xf32> to vector<8x64xf32>
    %271 = vector.extract_strided_slice %268 {offsets = [0, 192], sizes = [8, 64], strides = [1, 1]} : vector<8x256xf32> to vector<8x64xf32>
    %272 = vector.extract_strided_slice %263 {offsets = [0, 128], sizes = [8, 64], strides = [1, 1]} : vector<8x256xf32> to vector<8x64xf32>
    %273 = math.tanh %272 : vector<8x64xf32>
    %274 = arith.mulf %270, %238 : vector<8x64xf32>
    %275 = arith.mulf %269, %273 : vector<8x64xf32>
    %276 = arith.addf %274, %275 : vector<8x64xf32>
    %277 = math.tanh %276 : vector<8x64xf32>
    %278 = arith.mulf %271, %277 : vector<8x64xf32>
    %279 = vector.extract_strided_slice %5 {offsets = [56, 0], sizes = [8, 256], strides = [1, 1]} : vector<112x256xf32> to vector<8x256xf32>
    %c0_67 = arith.constant 0 : index
    %c0_68 = arith.constant 0 : index
    %280 = vector.load %arg2[%c0_67, %c0_68] : memref<64x256xf32, #tpu.memory_space<vmem>>, vector<64x256xf32>
    %cst_69 = arith.constant dense<0.000000e+00> : vector<8x256xf32>
    %281 = tpu.matmul %259, %280, %cst_69 {dimension_numbers = #tpu.dot_dimension_numbers<[1], [0], [0], [1], [0, 0, 1, 1], [], []>} : vector<8x64xf32>, vector<64x256xf32>, vector<8x256xf32> -> vector<8x256xf32>
    %282 = arith.addf %279, %281 : vector<8x256xf32>
    %283 = arith.negf %282 : vector<8x256xf32>
    %284 = math.exp %283 : vector<8x256xf32>
    %cst_70 = arith.constant 1.000000e+00 : f32
    %285 = vector.broadcast %cst_70 : f32 to vector<8x256xf32>
    %286 = arith.addf %285, %284 : vector<8x256xf32>
    %287 = arith.divf %285, %286 : vector<8x256xf32>
    %288 = vector.extract_strided_slice %287 {offsets = [0, 0], sizes = [8, 64], strides = [1, 1]} : vector<8x256xf32> to vector<8x64xf32>
    %289 = vector.extract_strided_slice %287 {offsets = [0, 64], sizes = [8, 64], strides = [1, 1]} : vector<8x256xf32> to vector<8x64xf32>
    %290 = vector.extract_strided_slice %287 {offsets = [0, 192], sizes = [8, 64], strides = [1, 1]} : vector<8x256xf32> to vector<8x64xf32>
    %291 = vector.extract_strided_slice %282 {offsets = [0, 128], sizes = [8, 64], strides = [1, 1]} : vector<8x256xf32> to vector<8x64xf32>
    %292 = math.tanh %291 : vector<8x64xf32>
    %293 = arith.mulf %289, %257 : vector<8x64xf32>
    %294 = arith.mulf %288, %292 : vector<8x64xf32>
    %295 = arith.addf %293, %294 : vector<8x64xf32>
    %296 = math.tanh %295 : vector<8x64xf32>
    %297 = arith.mulf %290, %296 : vector<8x64xf32>
    %298 = tpu.concatenate %297, %278 in 1 : vector<8x64xf32>, vector<8x64xf32> -> vector<8x128xf32>
    %c0_71 = arith.constant 0 : index
    %c0_72 = arith.constant 0 : index
    %299 = vector.load %arg4[%c0_71, %c0_72] : memref<128x256xf32, #tpu.memory_space<vmem>>, vector<128x256xf32>
    %cst_73 = arith.constant dense<0.000000e+00> : vector<8x256xf32>
    %300 = tpu.matmul %298, %299, %cst_73 {dimension_numbers = #tpu.dot_dimension_numbers<[1], [0], [0], [1], [0, 0, 1, 1], [], []>} : vector<8x128xf32>, vector<128x256xf32>, vector<8x256xf32> -> vector<8x256xf32>
    %301 = arith.addf %300, %8 : vector<8x256xf32>
    %302 = arith.negf %301 : vector<8x256xf32>
    %303 = math.exp %302 : vector<8x256xf32>
    %cst_74 = arith.constant 1.000000e+00 : f32
    %304 = vector.broadcast %cst_74 : f32 to vector<8x256xf32>
    %305 = arith.addf %304, %303 : vector<8x256xf32>
    %306 = arith.divf %304, %305 : vector<8x256xf32>
    %307 = vector.extract_strided_slice %306 {offsets = [0, 0], sizes = [8, 64], strides = [1, 1]} : vector<8x256xf32> to vector<8x64xf32>
    %308 = vector.extract_strided_slice %306 {offsets = [0, 64], sizes = [8, 64], strides = [1, 1]} : vector<8x256xf32> to vector<8x64xf32>
    %309 = vector.extract_strided_slice %306 {offsets = [0, 192], sizes = [8, 64], strides = [1, 1]} : vector<8x256xf32> to vector<8x64xf32>
    %310 = vector.extract_strided_slice %301 {offsets = [0, 128], sizes = [8, 64], strides = [1, 1]} : vector<8x256xf32> to vector<8x64xf32>
    %311 = math.tanh %310 : vector<8x64xf32>
    %312 = arith.mulf %308, %276 : vector<8x64xf32>
    %313 = arith.mulf %307, %311 : vector<8x64xf32>
    %314 = arith.addf %312, %313 : vector<8x64xf32>
    %315 = math.tanh %314 : vector<8x64xf32>
    %316 = arith.mulf %309, %315 : vector<8x64xf32>
    %317 = vector.extract_strided_slice %5 {offsets = [64, 0], sizes = [8, 256], strides = [1, 1]} : vector<112x256xf32> to vector<8x256xf32>
    %c0_75 = arith.constant 0 : index
    %c0_76 = arith.constant 0 : index
    %318 = vector.load %arg2[%c0_75, %c0_76] : memref<64x256xf32, #tpu.memory_space<vmem>>, vector<64x256xf32>
    %cst_77 = arith.constant dense<0.000000e+00> : vector<8x256xf32>
    %319 = tpu.matmul %297, %318, %cst_77 {dimension_numbers = #tpu.dot_dimension_numbers<[1], [0], [0], [1], [0, 0, 1, 1], [], []>} : vector<8x64xf32>, vector<64x256xf32>, vector<8x256xf32> -> vector<8x256xf32>
    %320 = arith.addf %317, %319 : vector<8x256xf32>
    %321 = arith.negf %320 : vector<8x256xf32>
    %322 = math.exp %321 : vector<8x256xf32>
    %cst_78 = arith.constant 1.000000e+00 : f32
    %323 = vector.broadcast %cst_78 : f32 to vector<8x256xf32>
    %324 = arith.addf %323, %322 : vector<8x256xf32>
    %325 = arith.divf %323, %324 : vector<8x256xf32>
    %326 = vector.extract_strided_slice %325 {offsets = [0, 0], sizes = [8, 64], strides = [1, 1]} : vector<8x256xf32> to vector<8x64xf32>
    %327 = vector.extract_strided_slice %325 {offsets = [0, 64], sizes = [8, 64], strides = [1, 1]} : vector<8x256xf32> to vector<8x64xf32>
    %328 = vector.extract_strided_slice %325 {offsets = [0, 192], sizes = [8, 64], strides = [1, 1]} : vector<8x256xf32> to vector<8x64xf32>
    %329 = vector.extract_strided_slice %320 {offsets = [0, 128], sizes = [8, 64], strides = [1, 1]} : vector<8x256xf32> to vector<8x64xf32>
    %330 = math.tanh %329 : vector<8x64xf32>
    %331 = arith.mulf %327, %295 : vector<8x64xf32>
    %332 = arith.mulf %326, %330 : vector<8x64xf32>
    %333 = arith.addf %331, %332 : vector<8x64xf32>
    %334 = math.tanh %333 : vector<8x64xf32>
    %335 = arith.mulf %328, %334 : vector<8x64xf32>
    %336 = tpu.concatenate %335, %316 in 1 : vector<8x64xf32>, vector<8x64xf32> -> vector<8x128xf32>
    %c0_79 = arith.constant 0 : index
    %c0_80 = arith.constant 0 : index
    %337 = vector.load %arg4[%c0_79, %c0_80] : memref<128x256xf32, #tpu.memory_space<vmem>>, vector<128x256xf32>
    %cst_81 = arith.constant dense<0.000000e+00> : vector<8x256xf32>
    %338 = tpu.matmul %336, %337, %cst_81 {dimension_numbers = #tpu.dot_dimension_numbers<[1], [0], [0], [1], [0, 0, 1, 1], [], []>} : vector<8x128xf32>, vector<128x256xf32>, vector<8x256xf32> -> vector<8x256xf32>
    %339 = arith.addf %338, %8 : vector<8x256xf32>
    %340 = arith.negf %339 : vector<8x256xf32>
    %341 = math.exp %340 : vector<8x256xf32>
    %cst_82 = arith.constant 1.000000e+00 : f32
    %342 = vector.broadcast %cst_82 : f32 to vector<8x256xf32>
    %343 = arith.addf %342, %341 : vector<8x256xf32>
    %344 = arith.divf %342, %343 : vector<8x256xf32>
    %345 = vector.extract_strided_slice %344 {offsets = [0, 0], sizes = [8, 64], strides = [1, 1]} : vector<8x256xf32> to vector<8x64xf32>
    %346 = vector.extract_strided_slice %344 {offsets = [0, 64], sizes = [8, 64], strides = [1, 1]} : vector<8x256xf32> to vector<8x64xf32>
    %347 = vector.extract_strided_slice %344 {offsets = [0, 192], sizes = [8, 64], strides = [1, 1]} : vector<8x256xf32> to vector<8x64xf32>
    %348 = vector.extract_strided_slice %339 {offsets = [0, 128], sizes = [8, 64], strides = [1, 1]} : vector<8x256xf32> to vector<8x64xf32>
    %349 = math.tanh %348 : vector<8x64xf32>
    %350 = arith.mulf %346, %314 : vector<8x64xf32>
    %351 = arith.mulf %345, %349 : vector<8x64xf32>
    %352 = arith.addf %350, %351 : vector<8x64xf32>
    %353 = math.tanh %352 : vector<8x64xf32>
    %354 = arith.mulf %347, %353 : vector<8x64xf32>
    %355 = vector.extract_strided_slice %5 {offsets = [72, 0], sizes = [8, 256], strides = [1, 1]} : vector<112x256xf32> to vector<8x256xf32>
    %c0_83 = arith.constant 0 : index
    %c0_84 = arith.constant 0 : index
    %356 = vector.load %arg2[%c0_83, %c0_84] : memref<64x256xf32, #tpu.memory_space<vmem>>, vector<64x256xf32>
    %cst_85 = arith.constant dense<0.000000e+00> : vector<8x256xf32>
    %357 = tpu.matmul %335, %356, %cst_85 {dimension_numbers = #tpu.dot_dimension_numbers<[1], [0], [0], [1], [0, 0, 1, 1], [], []>} : vector<8x64xf32>, vector<64x256xf32>, vector<8x256xf32> -> vector<8x256xf32>
    %358 = arith.addf %355, %357 : vector<8x256xf32>
    %359 = arith.negf %358 : vector<8x256xf32>
    %360 = math.exp %359 : vector<8x256xf32>
    %cst_86 = arith.constant 1.000000e+00 : f32
    %361 = vector.broadcast %cst_86 : f32 to vector<8x256xf32>
    %362 = arith.addf %361, %360 : vector<8x256xf32>
    %363 = arith.divf %361, %362 : vector<8x256xf32>
    %364 = vector.extract_strided_slice %363 {offsets = [0, 0], sizes = [8, 64], strides = [1, 1]} : vector<8x256xf32> to vector<8x64xf32>
    %365 = vector.extract_strided_slice %363 {offsets = [0, 64], sizes = [8, 64], strides = [1, 1]} : vector<8x256xf32> to vector<8x64xf32>
    %366 = vector.extract_strided_slice %363 {offsets = [0, 192], sizes = [8, 64], strides = [1, 1]} : vector<8x256xf32> to vector<8x64xf32>
    %367 = vector.extract_strided_slice %358 {offsets = [0, 128], sizes = [8, 64], strides = [1, 1]} : vector<8x256xf32> to vector<8x64xf32>
    %368 = math.tanh %367 : vector<8x64xf32>
    %369 = arith.mulf %365, %333 : vector<8x64xf32>
    %370 = arith.mulf %364, %368 : vector<8x64xf32>
    %371 = arith.addf %369, %370 : vector<8x64xf32>
    %372 = math.tanh %371 : vector<8x64xf32>
    %373 = arith.mulf %366, %372 : vector<8x64xf32>
    %374 = tpu.concatenate %373, %354 in 1 : vector<8x64xf32>, vector<8x64xf32> -> vector<8x128xf32>
    %c0_87 = arith.constant 0 : index
    %c0_88 = arith.constant 0 : index
    %375 = vector.load %arg4[%c0_87, %c0_88] : memref<128x256xf32, #tpu.memory_space<vmem>>, vector<128x256xf32>
    %cst_89 = arith.constant dense<0.000000e+00> : vector<8x256xf32>
    %376 = tpu.matmul %374, %375, %cst_89 {dimension_numbers = #tpu.dot_dimension_numbers<[1], [0], [0], [1], [0, 0, 1, 1], [], []>} : vector<8x128xf32>, vector<128x256xf32>, vector<8x256xf32> -> vector<8x256xf32>
    %377 = arith.addf %376, %8 : vector<8x256xf32>
    %378 = arith.negf %377 : vector<8x256xf32>
    %379 = math.exp %378 : vector<8x256xf32>
    %cst_90 = arith.constant 1.000000e+00 : f32
    %380 = vector.broadcast %cst_90 : f32 to vector<8x256xf32>
    %381 = arith.addf %380, %379 : vector<8x256xf32>
    %382 = arith.divf %380, %381 : vector<8x256xf32>
    %383 = vector.extract_strided_slice %382 {offsets = [0, 0], sizes = [8, 64], strides = [1, 1]} : vector<8x256xf32> to vector<8x64xf32>
    %384 = vector.extract_strided_slice %382 {offsets = [0, 64], sizes = [8, 64], strides = [1, 1]} : vector<8x256xf32> to vector<8x64xf32>
    %385 = vector.extract_strided_slice %382 {offsets = [0, 192], sizes = [8, 64], strides = [1, 1]} : vector<8x256xf32> to vector<8x64xf32>
    %386 = vector.extract_strided_slice %377 {offsets = [0, 128], sizes = [8, 64], strides = [1, 1]} : vector<8x256xf32> to vector<8x64xf32>
    %387 = math.tanh %386 : vector<8x64xf32>
    %388 = arith.mulf %384, %352 : vector<8x64xf32>
    %389 = arith.mulf %383, %387 : vector<8x64xf32>
    %390 = arith.addf %388, %389 : vector<8x64xf32>
    %391 = math.tanh %390 : vector<8x64xf32>
    %392 = arith.mulf %385, %391 : vector<8x64xf32>
    %393 = vector.extract_strided_slice %5 {offsets = [80, 0], sizes = [8, 256], strides = [1, 1]} : vector<112x256xf32> to vector<8x256xf32>
    %c0_91 = arith.constant 0 : index
    %c0_92 = arith.constant 0 : index
    %394 = vector.load %arg2[%c0_91, %c0_92] : memref<64x256xf32, #tpu.memory_space<vmem>>, vector<64x256xf32>
    %cst_93 = arith.constant dense<0.000000e+00> : vector<8x256xf32>
    %395 = tpu.matmul %373, %394, %cst_93 {dimension_numbers = #tpu.dot_dimension_numbers<[1], [0], [0], [1], [0, 0, 1, 1], [], []>} : vector<8x64xf32>, vector<64x256xf32>, vector<8x256xf32> -> vector<8x256xf32>
    %396 = arith.addf %393, %395 : vector<8x256xf32>
    %397 = arith.negf %396 : vector<8x256xf32>
    %398 = math.exp %397 : vector<8x256xf32>
    %cst_94 = arith.constant 1.000000e+00 : f32
    %399 = vector.broadcast %cst_94 : f32 to vector<8x256xf32>
    %400 = arith.addf %399, %398 : vector<8x256xf32>
    %401 = arith.divf %399, %400 : vector<8x256xf32>
    %402 = vector.extract_strided_slice %401 {offsets = [0, 0], sizes = [8, 64], strides = [1, 1]} : vector<8x256xf32> to vector<8x64xf32>
    %403 = vector.extract_strided_slice %401 {offsets = [0, 64], sizes = [8, 64], strides = [1, 1]} : vector<8x256xf32> to vector<8x64xf32>
    %404 = vector.extract_strided_slice %401 {offsets = [0, 192], sizes = [8, 64], strides = [1, 1]} : vector<8x256xf32> to vector<8x64xf32>
    %405 = vector.extract_strided_slice %396 {offsets = [0, 128], sizes = [8, 64], strides = [1, 1]} : vector<8x256xf32> to vector<8x64xf32>
    %406 = math.tanh %405 : vector<8x64xf32>
    %407 = arith.mulf %403, %371 : vector<8x64xf32>
    %408 = arith.mulf %402, %406 : vector<8x64xf32>
    %409 = arith.addf %407, %408 : vector<8x64xf32>
    %410 = math.tanh %409 : vector<8x64xf32>
    %411 = arith.mulf %404, %410 : vector<8x64xf32>
    %412 = tpu.concatenate %411, %392 in 1 : vector<8x64xf32>, vector<8x64xf32> -> vector<8x128xf32>
    %c0_95 = arith.constant 0 : index
    %c0_96 = arith.constant 0 : index
    %413 = vector.load %arg4[%c0_95, %c0_96] : memref<128x256xf32, #tpu.memory_space<vmem>>, vector<128x256xf32>
    %cst_97 = arith.constant dense<0.000000e+00> : vector<8x256xf32>
    %414 = tpu.matmul %412, %413, %cst_97 {dimension_numbers = #tpu.dot_dimension_numbers<[1], [0], [0], [1], [0, 0, 1, 1], [], []>} : vector<8x128xf32>, vector<128x256xf32>, vector<8x256xf32> -> vector<8x256xf32>
    %415 = arith.addf %414, %8 : vector<8x256xf32>
    %416 = arith.negf %415 : vector<8x256xf32>
    %417 = math.exp %416 : vector<8x256xf32>
    %cst_98 = arith.constant 1.000000e+00 : f32
    %418 = vector.broadcast %cst_98 : f32 to vector<8x256xf32>
    %419 = arith.addf %418, %417 : vector<8x256xf32>
    %420 = arith.divf %418, %419 : vector<8x256xf32>
    %421 = vector.extract_strided_slice %420 {offsets = [0, 0], sizes = [8, 64], strides = [1, 1]} : vector<8x256xf32> to vector<8x64xf32>
    %422 = vector.extract_strided_slice %420 {offsets = [0, 64], sizes = [8, 64], strides = [1, 1]} : vector<8x256xf32> to vector<8x64xf32>
    %423 = vector.extract_strided_slice %420 {offsets = [0, 192], sizes = [8, 64], strides = [1, 1]} : vector<8x256xf32> to vector<8x64xf32>
    %424 = vector.extract_strided_slice %415 {offsets = [0, 128], sizes = [8, 64], strides = [1, 1]} : vector<8x256xf32> to vector<8x64xf32>
    %425 = math.tanh %424 : vector<8x64xf32>
    %426 = arith.mulf %422, %390 : vector<8x64xf32>
    %427 = arith.mulf %421, %425 : vector<8x64xf32>
    %428 = arith.addf %426, %427 : vector<8x64xf32>
    %429 = math.tanh %428 : vector<8x64xf32>
    %430 = arith.mulf %423, %429 : vector<8x64xf32>
    %431 = vector.extract_strided_slice %5 {offsets = [88, 0], sizes = [8, 256], strides = [1, 1]} : vector<112x256xf32> to vector<8x256xf32>
    %c0_99 = arith.constant 0 : index
    %c0_100 = arith.constant 0 : index
    %432 = vector.load %arg2[%c0_99, %c0_100] : memref<64x256xf32, #tpu.memory_space<vmem>>, vector<64x256xf32>
    %cst_101 = arith.constant dense<0.000000e+00> : vector<8x256xf32>
    %433 = tpu.matmul %411, %432, %cst_101 {dimension_numbers = #tpu.dot_dimension_numbers<[1], [0], [0], [1], [0, 0, 1, 1], [], []>} : vector<8x64xf32>, vector<64x256xf32>, vector<8x256xf32> -> vector<8x256xf32>
    %434 = arith.addf %431, %433 : vector<8x256xf32>
    %435 = arith.negf %434 : vector<8x256xf32>
    %436 = math.exp %435 : vector<8x256xf32>
    %cst_102 = arith.constant 1.000000e+00 : f32
    %437 = vector.broadcast %cst_102 : f32 to vector<8x256xf32>
    %438 = arith.addf %437, %436 : vector<8x256xf32>
    %439 = arith.divf %437, %438 : vector<8x256xf32>
    %440 = vector.extract_strided_slice %439 {offsets = [0, 0], sizes = [8, 64], strides = [1, 1]} : vector<8x256xf32> to vector<8x64xf32>
    %441 = vector.extract_strided_slice %439 {offsets = [0, 64], sizes = [8, 64], strides = [1, 1]} : vector<8x256xf32> to vector<8x64xf32>
    %442 = vector.extract_strided_slice %439 {offsets = [0, 192], sizes = [8, 64], strides = [1, 1]} : vector<8x256xf32> to vector<8x64xf32>
    %443 = vector.extract_strided_slice %434 {offsets = [0, 128], sizes = [8, 64], strides = [1, 1]} : vector<8x256xf32> to vector<8x64xf32>
    %444 = math.tanh %443 : vector<8x64xf32>
    %445 = arith.mulf %441, %409 : vector<8x64xf32>
    %446 = arith.mulf %440, %444 : vector<8x64xf32>
    %447 = arith.addf %445, %446 : vector<8x64xf32>
    %448 = math.tanh %447 : vector<8x64xf32>
    %449 = arith.mulf %442, %448 : vector<8x64xf32>
    %450 = tpu.concatenate %449, %430 in 1 : vector<8x64xf32>, vector<8x64xf32> -> vector<8x128xf32>
    %c0_103 = arith.constant 0 : index
    %c0_104 = arith.constant 0 : index
    %451 = vector.load %arg4[%c0_103, %c0_104] : memref<128x256xf32, #tpu.memory_space<vmem>>, vector<128x256xf32>
    %cst_105 = arith.constant dense<0.000000e+00> : vector<8x256xf32>
    %452 = tpu.matmul %450, %451, %cst_105 {dimension_numbers = #tpu.dot_dimension_numbers<[1], [0], [0], [1], [0, 0, 1, 1], [], []>} : vector<8x128xf32>, vector<128x256xf32>, vector<8x256xf32> -> vector<8x256xf32>
    %453 = arith.addf %452, %8 : vector<8x256xf32>
    %454 = arith.negf %453 : vector<8x256xf32>
    %455 = math.exp %454 : vector<8x256xf32>
    %cst_106 = arith.constant 1.000000e+00 : f32
    %456 = vector.broadcast %cst_106 : f32 to vector<8x256xf32>
    %457 = arith.addf %456, %455 : vector<8x256xf32>
    %458 = arith.divf %456, %457 : vector<8x256xf32>
    %459 = vector.extract_strided_slice %458 {offsets = [0, 0], sizes = [8, 64], strides = [1, 1]} : vector<8x256xf32> to vector<8x64xf32>
    %460 = vector.extract_strided_slice %458 {offsets = [0, 64], sizes = [8, 64], strides = [1, 1]} : vector<8x256xf32> to vector<8x64xf32>
    %461 = vector.extract_strided_slice %458 {offsets = [0, 192], sizes = [8, 64], strides = [1, 1]} : vector<8x256xf32> to vector<8x64xf32>
    %462 = vector.extract_strided_slice %453 {offsets = [0, 128], sizes = [8, 64], strides = [1, 1]} : vector<8x256xf32> to vector<8x64xf32>
    %463 = math.tanh %462 : vector<8x64xf32>
    %464 = arith.mulf %460, %428 : vector<8x64xf32>
    %465 = arith.mulf %459, %463 : vector<8x64xf32>
    %466 = arith.addf %464, %465 : vector<8x64xf32>
    %467 = math.tanh %466 : vector<8x64xf32>
    %468 = arith.mulf %461, %467 : vector<8x64xf32>
    %469 = vector.extract_strided_slice %5 {offsets = [96, 0], sizes = [8, 256], strides = [1, 1]} : vector<112x256xf32> to vector<8x256xf32>
    %c0_107 = arith.constant 0 : index
    %c0_108 = arith.constant 0 : index
    %470 = vector.load %arg2[%c0_107, %c0_108] : memref<64x256xf32, #tpu.memory_space<vmem>>, vector<64x256xf32>
    %cst_109 = arith.constant dense<0.000000e+00> : vector<8x256xf32>
    %471 = tpu.matmul %449, %470, %cst_109 {dimension_numbers = #tpu.dot_dimension_numbers<[1], [0], [0], [1], [0, 0, 1, 1], [], []>} : vector<8x64xf32>, vector<64x256xf32>, vector<8x256xf32> -> vector<8x256xf32>
    %472 = arith.addf %469, %471 : vector<8x256xf32>
    %473 = arith.negf %472 : vector<8x256xf32>
    %474 = math.exp %473 : vector<8x256xf32>
    %cst_110 = arith.constant 1.000000e+00 : f32
    %475 = vector.broadcast %cst_110 : f32 to vector<8x256xf32>
    %476 = arith.addf %475, %474 : vector<8x256xf32>
    %477 = arith.divf %475, %476 : vector<8x256xf32>
    %478 = vector.extract_strided_slice %477 {offsets = [0, 0], sizes = [8, 64], strides = [1, 1]} : vector<8x256xf32> to vector<8x64xf32>
    %479 = vector.extract_strided_slice %477 {offsets = [0, 64], sizes = [8, 64], strides = [1, 1]} : vector<8x256xf32> to vector<8x64xf32>
    %480 = vector.extract_strided_slice %477 {offsets = [0, 192], sizes = [8, 64], strides = [1, 1]} : vector<8x256xf32> to vector<8x64xf32>
    %481 = vector.extract_strided_slice %472 {offsets = [0, 128], sizes = [8, 64], strides = [1, 1]} : vector<8x256xf32> to vector<8x64xf32>
    %482 = math.tanh %481 : vector<8x64xf32>
    %483 = arith.mulf %479, %447 : vector<8x64xf32>
    %484 = arith.mulf %478, %482 : vector<8x64xf32>
    %485 = arith.addf %483, %484 : vector<8x64xf32>
    %486 = math.tanh %485 : vector<8x64xf32>
    %487 = arith.mulf %480, %486 : vector<8x64xf32>
    %488 = tpu.concatenate %487, %468 in 1 : vector<8x64xf32>, vector<8x64xf32> -> vector<8x128xf32>
    %c0_111 = arith.constant 0 : index
    %c0_112 = arith.constant 0 : index
    %489 = vector.load %arg4[%c0_111, %c0_112] : memref<128x256xf32, #tpu.memory_space<vmem>>, vector<128x256xf32>
    %cst_113 = arith.constant dense<0.000000e+00> : vector<8x256xf32>
    %490 = tpu.matmul %488, %489, %cst_113 {dimension_numbers = #tpu.dot_dimension_numbers<[1], [0], [0], [1], [0, 0, 1, 1], [], []>} : vector<8x128xf32>, vector<128x256xf32>, vector<8x256xf32> -> vector<8x256xf32>
    %491 = arith.addf %490, %8 : vector<8x256xf32>
    %492 = arith.negf %491 : vector<8x256xf32>
    %493 = math.exp %492 : vector<8x256xf32>
    %cst_114 = arith.constant 1.000000e+00 : f32
    %494 = vector.broadcast %cst_114 : f32 to vector<8x256xf32>
    %495 = arith.addf %494, %493 : vector<8x256xf32>
    %496 = arith.divf %494, %495 : vector<8x256xf32>
    %497 = vector.extract_strided_slice %496 {offsets = [0, 0], sizes = [8, 64], strides = [1, 1]} : vector<8x256xf32> to vector<8x64xf32>
    %498 = vector.extract_strided_slice %496 {offsets = [0, 64], sizes = [8, 64], strides = [1, 1]} : vector<8x256xf32> to vector<8x64xf32>
    %499 = vector.extract_strided_slice %496 {offsets = [0, 192], sizes = [8, 64], strides = [1, 1]} : vector<8x256xf32> to vector<8x64xf32>
    %500 = vector.extract_strided_slice %491 {offsets = [0, 128], sizes = [8, 64], strides = [1, 1]} : vector<8x256xf32> to vector<8x64xf32>
    %501 = math.tanh %500 : vector<8x64xf32>
    %502 = arith.mulf %498, %466 : vector<8x64xf32>
    %503 = arith.mulf %497, %501 : vector<8x64xf32>
    %504 = arith.addf %502, %503 : vector<8x64xf32>
    %505 = math.tanh %504 : vector<8x64xf32>
    %506 = arith.mulf %499, %505 : vector<8x64xf32>
    %507 = vector.extract_strided_slice %5 {offsets = [104, 0], sizes = [8, 256], strides = [1, 1]} : vector<112x256xf32> to vector<8x256xf32>
    %c0_115 = arith.constant 0 : index
    %c0_116 = arith.constant 0 : index
    %508 = vector.load %arg2[%c0_115, %c0_116] : memref<64x256xf32, #tpu.memory_space<vmem>>, vector<64x256xf32>
    %cst_117 = arith.constant dense<0.000000e+00> : vector<8x256xf32>
    %509 = tpu.matmul %487, %508, %cst_117 {dimension_numbers = #tpu.dot_dimension_numbers<[1], [0], [0], [1], [0, 0, 1, 1], [], []>} : vector<8x64xf32>, vector<64x256xf32>, vector<8x256xf32> -> vector<8x256xf32>
    %510 = arith.addf %507, %509 : vector<8x256xf32>
    %511 = arith.negf %510 : vector<8x256xf32>
    %512 = math.exp %511 : vector<8x256xf32>
    %cst_118 = arith.constant 1.000000e+00 : f32
    %513 = vector.broadcast %cst_118 : f32 to vector<8x256xf32>
    %514 = arith.addf %513, %512 : vector<8x256xf32>
    %515 = arith.divf %513, %514 : vector<8x256xf32>
    %516 = vector.extract_strided_slice %515 {offsets = [0, 0], sizes = [8, 64], strides = [1, 1]} : vector<8x256xf32> to vector<8x64xf32>
    %517 = vector.extract_strided_slice %515 {offsets = [0, 64], sizes = [8, 64], strides = [1, 1]} : vector<8x256xf32> to vector<8x64xf32>
    %518 = vector.extract_strided_slice %515 {offsets = [0, 192], sizes = [8, 64], strides = [1, 1]} : vector<8x256xf32> to vector<8x64xf32>
    %519 = vector.extract_strided_slice %510 {offsets = [0, 128], sizes = [8, 64], strides = [1, 1]} : vector<8x256xf32> to vector<8x64xf32>
    %520 = math.tanh %519 : vector<8x64xf32>
    %521 = arith.mulf %517, %485 : vector<8x64xf32>
    %522 = arith.mulf %516, %520 : vector<8x64xf32>
    %523 = arith.addf %521, %522 : vector<8x64xf32>
    %524 = math.tanh %523 : vector<8x64xf32>
    %525 = arith.mulf %518, %524 : vector<8x64xf32>
    %526 = tpu.concatenate %525, %506 in 1 : vector<8x64xf32>, vector<8x64xf32> -> vector<8x128xf32>
    %c0_119 = arith.constant 0 : index
    %c0_120 = arith.constant 0 : index
    %527 = vector.load %arg4[%c0_119, %c0_120] : memref<128x256xf32, #tpu.memory_space<vmem>>, vector<128x256xf32>
    %cst_121 = arith.constant dense<0.000000e+00> : vector<8x256xf32>
    %528 = tpu.matmul %526, %527, %cst_121 {dimension_numbers = #tpu.dot_dimension_numbers<[1], [0], [0], [1], [0, 0, 1, 1], [], []>} : vector<8x128xf32>, vector<128x256xf32>, vector<8x256xf32> -> vector<8x256xf32>
    %529 = arith.addf %528, %8 : vector<8x256xf32>
    %530 = arith.negf %529 : vector<8x256xf32>
    %531 = math.exp %530 : vector<8x256xf32>
    %cst_122 = arith.constant 1.000000e+00 : f32
    %532 = vector.broadcast %cst_122 : f32 to vector<8x256xf32>
    %533 = arith.addf %532, %531 : vector<8x256xf32>
    %534 = arith.divf %532, %533 : vector<8x256xf32>
    %535 = vector.extract_strided_slice %534 {offsets = [0, 0], sizes = [8, 64], strides = [1, 1]} : vector<8x256xf32> to vector<8x64xf32>
    %536 = vector.extract_strided_slice %534 {offsets = [0, 64], sizes = [8, 64], strides = [1, 1]} : vector<8x256xf32> to vector<8x64xf32>
    %537 = vector.extract_strided_slice %534 {offsets = [0, 192], sizes = [8, 64], strides = [1, 1]} : vector<8x256xf32> to vector<8x64xf32>
    %538 = vector.extract_strided_slice %529 {offsets = [0, 128], sizes = [8, 64], strides = [1, 1]} : vector<8x256xf32> to vector<8x64xf32>
    %539 = math.tanh %538 : vector<8x64xf32>
    %540 = arith.mulf %536, %504 : vector<8x64xf32>
    %541 = arith.mulf %535, %539 : vector<8x64xf32>
    %542 = arith.addf %540, %541 : vector<8x64xf32>
    %543 = math.tanh %542 : vector<8x64xf32>
    %544 = arith.mulf %537, %543 : vector<8x64xf32>
    %545 = vector.extract_strided_slice %544 {offsets = [0, 0], sizes = [2, 64], strides = [1, 1]} : vector<8x64xf32> to vector<2x64xf32>
    %c0_123 = arith.constant 0 : index
    %c0_124 = arith.constant 0 : index
    %546 = vector.load %arg6[%c0_123, %c0_124] : memref<64x32xf32, #tpu.memory_space<vmem>>, vector<64x32xf32>
    %cst_125 = arith.constant dense<0.000000e+00> : vector<2x32xf32>
    %547 = tpu.matmul %545, %546, %cst_125 {dimension_numbers = #tpu.dot_dimension_numbers<[1], [0], [0], [1], [0, 0, 1, 1], [], []>} : vector<2x64xf32>, vector<64x32xf32>, vector<2x32xf32> -> vector<2x32xf32>
    %c0_126 = arith.constant 0 : index
    %c0_127 = arith.constant 0 : index
    %548 = vector.load %arg7[%c0_126, %c0_127] : memref<1x32xf32, #tpu.memory_space<vmem>>, vector<1x32xf32>
    %549 = vector.broadcast %548 : vector<1x32xf32> to vector<2x32xf32>
    %550 = arith.addf %547, %549 : vector<2x32xf32>
    tpu.wait_dma2 semaphore(%arg17 : memref<!tpu.dma_semaphore, #tpu.memory_space<semaphore_mem>>) src(%arg11 : memref<1664x512xf32, #tpu.memory_space<any>>) dst(%arg16 : memref<1664x512xf32, #tpu.memory_space<vmem>>)
    %c0_128 = arith.constant 0 : index
    %c0_129 = arith.constant 0 : index
    %551 = vector.load %arg8[%c0_128, %c0_129] : memref<2x480xf32, #tpu.memory_space<vmem>>, vector<2x480xf32>
    %c0_130 = arith.constant 0 : index
    %c0_131 = arith.constant 0 : index
    %552 = vector.load %arg16[%c0_130, %c0_131] : memref<1664x512xf32, #tpu.memory_space<vmem>>, vector<480x512xf32>
    %cst_132 = arith.constant dense<0.000000e+00> : vector<2x512xf32>
    %553 = tpu.matmul %551, %552, %cst_132 {dimension_numbers = #tpu.dot_dimension_numbers<[1], [0], [0], [1], [0, 0, 1, 1], [], []>} : vector<2x480xf32>, vector<480x512xf32>, vector<2x512xf32> -> vector<2x512xf32>
    %c0_133 = arith.constant 0 : index
    %c0_134 = arith.constant 0 : index
    %554 = vector.load %arg9[%c0_133, %c0_134] : memref<2x480xf32, #tpu.memory_space<vmem>>, vector<2x480xf32>
    %c480 = arith.constant 480 : index
    %c0_135 = arith.constant 0 : index
    %555 = vector.load %arg16[%c480, %c0_135] : memref<1664x512xf32, #tpu.memory_space<vmem>>, vector<480x512xf32>
    %cst_136 = arith.constant dense<0.000000e+00> : vector<2x512xf32>
    %556 = tpu.matmul %554, %555, %cst_136 {dimension_numbers = #tpu.dot_dimension_numbers<[1], [0], [0], [1], [0, 0, 1, 1], [], []>} : vector<2x480xf32>, vector<480x512xf32>, vector<2x512xf32> -> vector<2x512xf32>
    %557 = arith.addf %553, %556 : vector<2x512xf32>
    %c0_137 = arith.constant 0 : index
    %c0_138 = arith.constant 0 : index
    %558 = vector.load %arg10[%c0_137, %c0_138] : memref<2x672xf32, #tpu.memory_space<vmem>>, vector<2x672xf32>
    %c960 = arith.constant 960 : index
    %c0_139 = arith.constant 0 : index
    %559 = vector.load %arg16[%c960, %c0_139] : memref<1664x512xf32, #tpu.memory_space<vmem>>, vector<672x512xf32>
    %cst_140 = arith.constant dense<0.000000e+00> : vector<2x512xf32>
    %560 = tpu.matmul %558, %559, %cst_140 {dimension_numbers = #tpu.dot_dimension_numbers<[1], [0], [0], [1], [0, 0, 1, 1], [], []>} : vector<2x672xf32>, vector<672x512xf32>, vector<2x512xf32> -> vector<2x512xf32>
    %561 = arith.addf %557, %560 : vector<2x512xf32>
    %c1632 = arith.constant 1632 : index
    %c0_141 = arith.constant 0 : index
    %562 = vector.load %arg16[%c1632, %c0_141] : memref<1664x512xf32, #tpu.memory_space<vmem>>, vector<32x512xf32>
    %cst_142 = arith.constant dense<0.000000e+00> : vector<2x512xf32>
    %563 = tpu.matmul %550, %562, %cst_142 {dimension_numbers = #tpu.dot_dimension_numbers<[1], [0], [0], [1], [0, 0, 1, 1], [], []>} : vector<2x32xf32>, vector<32x512xf32>, vector<2x512xf32> -> vector<2x512xf32>
    %564 = arith.addf %561, %563 : vector<2x512xf32>
    %c0_143 = arith.constant 0 : index
    %c0_144 = arith.constant 0 : index
    %565 = vector.load %arg12[%c0_143, %c0_144] : memref<1x512xf32, #tpu.memory_space<vmem>>, vector<1x512xf32>
    %566 = vector.broadcast %565 : vector<1x512xf32> to vector<2x512xf32>
    %567 = arith.addf %564, %566 : vector<2x512xf32>
    %cst_145 = arith.constant 0.000000e+00 : f32
    %568 = vector.broadcast %cst_145 : f32 to vector<2x512xf32>
    %569 = arith.maximumf %567, %568 : vector<2x512xf32>
    %c0_146 = arith.constant 0 : index
    %c0_147 = arith.constant 0 : index
    %570 = vector.load %arg13[%c0_146, %c0_147] : memref<512x64xf32, #tpu.memory_space<vmem>>, vector<512x64xf32>
    %cst_148 = arith.constant dense<0.000000e+00> : vector<2x64xf32>
    %571 = tpu.matmul %569, %570, %cst_148 {dimension_numbers = #tpu.dot_dimension_numbers<[1], [0], [0], [1], [0, 0, 1, 1], [], []>} : vector<2x512xf32>, vector<512x64xf32>, vector<2x64xf32> -> vector<2x64xf32>
    %c0_149 = arith.constant 0 : index
    %c0_150 = arith.constant 0 : index
    %572 = vector.load %arg14[%c0_149, %c0_150] : memref<1x64xf32, #tpu.memory_space<vmem>>, vector<1x64xf32>
    %573 = vector.broadcast %572 : vector<1x64xf32> to vector<2x64xf32>
    %574 = arith.addf %571, %573 : vector<2x64xf32>
    %cst_151 = arith.constant 0.000000e+00 : f32
    %575 = vector.broadcast %cst_151 : f32 to vector<2x64xf32>
    %576 = arith.maximumf %574, %575 : vector<2x64xf32>
    %c0_152 = arith.constant 0 : index
    %c0_153 = arith.constant 0 : index
    %577 = vector.load %arg15[%c0_152, %c0_153] : memref<2x64xf32, #tpu.memory_space<vmem>>, vector<2x64xf32>
    tpu.vector_store %arg15[%c0_152, %c0_153], %576 {strides = array<i32>} : memref<2x64xf32, #tpu.memory_space<vmem>>, vector<2x64xf32>,
    return
  }
}

</mosaic_0001>

<llo_original>
// kernel: b_seq_forward.3
$region0: #{b_seq_forward.3}
  #allocation0 [shape = 'u32[]', space=smem, size = 0x4, offset = 0x4, fixed_abs, tag = 'smem constant byte address 0x4 - core index']
  #allocation1 [shape = 'u32[144,128]{1,0:T(1,128)}', space=vmem, size = 0x12000, scoped, tag = 'internal scratch']
  %s0 = inlined_call_operand.vmem [shape: f32[9,640], index: 0, kind: input, shape index: {}]
  %s1 = inlined_call_operand.vmem [shape: f32[8,9], index: 1, kind: input, shape index: {}]
  %s2 = inlined_call_operand.vmem [shape: f32[8,1], index: 2, kind: input, shape index: {}]
  %s3 = inlined_call_operand.vmem [shape: f32[16,714], index: 3, kind: input, shape index: {}]
  %s4 = inlined_call_operand.vmem [shape: f32[8,16], index: 4, kind: input, shape index: {}]
  %s5 = inlined_call_operand.vmem [shape: f32[8,1], index: 5, kind: input, shape index: {}]
  %s6 = inlined_call_operand.vmem [shape: f32[25,792], index: 6, kind: input, shape index: {}]
  %s7 = inlined_call_operand.vmem [shape: f32[8,25], index: 7, kind: input, shape index: {}]
  %s8 = inlined_call_operand.vmem [shape: f32[8,1], index: 8, kind: input, shape index: {}]
  %s9 = inlined_call_operand.hbm [shape: f32[8,640], index: 9, kind: output, shape index: {0}]
  %s10 = inlined_call_operand.hbm [shape: f32[8,714], index: 10, kind: output, shape index: {1}]
  %s11 = inlined_call_operand.vmem [shape: f32[8,792], index: 11, kind: output, shape index: {2}]
  %12 = xla_tuple %s9, %s10, %s11
  %s13 = sld [smem:[#allocation0]]
  $region62: #{b_seq_forward.3} parent=0
    _
  %s15 = ssub.s32 1, %s13
  %s16 = scalar_select 0, %s15, %s13
  $region1: #{b_seq_forward.3} parent=0
    #allocation2 [shape = 'u8[20480]{0}', space=vmem, size = 0x5000, scoped, tag = 'output window, operand 0, single buffered']
    #allocation3 [shape = 's32[1]{0}', space=sflag, size = 0x4, scoped, tag = 'scoped memory for b_seq_forward.3']
    #allocation4 [shape = 'u8[24576]{0}', space=vmem, size = 0x6000, scoped, tag = 'output window, operand 1, single buffered']
    #allocation5 [shape = 's32[1]{0}', space=sflag, size = 0x4, scoped, tag = 'scoped memory for b_seq_forward.3']
    %17 = vsyncpa [#allocation3], 0
    %18 = vsyncpa [#allocation5], 0
    // Predicated region
    $region2: #{b_seq_forward.3} parent=1 // pred_check
      _
    $region3: #{b_seq_forward.3} parent=1 // pred_check_branch
      %20 = sbr.rel (0) target = $region5
    $region4: #{b_seq_forward.3} parent=1 // pred_region
      _
    $region5: #{b_seq_forward.3} parent=1 // pred_fallthru
      _
    // Predicated region
    $region6: #{b_seq_forward.3} parent=1 // pred_check
      _
    $region7: #{b_seq_forward.3} parent=1 // pred_check_branch
      %22 = sbr.rel (0) target = $region9
    $region8: #{b_seq_forward.3} parent=1 // pred_region
      _
    $region9: #{b_seq_forward.3} parent=1 // pred_fallthru
      _
    // Predicated region
    $region10: #{b_seq_forward.3} parent=1 // pred_check
      _
    $region11: #{b_seq_forward.3} parent=1 // pred_check_branch
      %24 = sbr.rel (0) target = $region13
    $region12: #{b_seq_forward.3} parent=1 // pred_region
      _
    $region13: #{b_seq_forward.3} parent=1 // pred_fallthru
      _
    // Predicated region
    $region14: #{b_seq_forward.3} parent=1 // pred_check
      _
    $region15: #{b_seq_forward.3} parent=1 // pred_check_branch
      %26 = sbr.rel (0) target = $region17
    $region16: #{b_seq_forward.3} parent=1 // pred_region
      _
    $region17: #{b_seq_forward.3} parent=1 // pred_fallthru
      _
    // Predicated region
    $region18: #{b_seq_forward.3} parent=1 // pred_check
      _
    $region19: #{b_seq_forward.3} parent=1 // pred_check_branch
      %28 = sbr.rel (0) target = $region21
    $region20: #{b_seq_forward.3} parent=1 // pred_region
      _
    $region21: #{b_seq_forward.3} parent=1 // pred_fallthru
      _
    // Predicated region
    $region22: #{b_seq_forward.3} parent=1 // pred_check
      _
    $region23: #{b_seq_forward.3} parent=1 // pred_check_branch
      %30 = sbr.rel (0) target = $region25
    $region24: #{b_seq_forward.3} parent=1 // pred_region
      _
    $region25: #{b_seq_forward.3} parent=1 // pred_fallthru
      _
    // Predicated region
    $region26: #{b_seq_forward.3} parent=1 // pred_check
      _
    $region27: #{b_seq_forward.3} parent=1 // pred_check_branch
      %32 = sbr.rel (0) target = $region29
    $region28: #{b_seq_forward.3} parent=1 // pred_region
      _
    $region29: #{b_seq_forward.3} parent=1 // pred_fallthru
      _
    // Predicated region
    $region30: #{b_seq_forward.3} parent=1 // pred_check
      _
    $region31: #{b_seq_forward.3} parent=1 // pred_check_branch
      %34 = sbr.rel (0) target = $region33
    $region32: #{b_seq_forward.3} parent=1 // pred_region
      _
    $region33: #{b_seq_forward.3} parent=1 // pred_fallthru
      _
    // Predicated region
    $region34: #{b_seq_forward.3} parent=1 // pred_check
      _
    $region35: #{b_seq_forward.3} parent=1 // pred_check_branch
      %36 = sbr.rel (0) target = $region37
    $region36: #{b_seq_forward.3} parent=1 // pred_region
      _
    $region37: #{b_seq_forward.3} parent=1 // pred_fallthru
      _
    %v37 = vld [vmem:[%s1] sm:$0xff]
    %v38 = vld [vmem:[%s0] sm:$0xff]
    %v39 = vld [vmem:[%s0 + $0x8] sm:$0xff]
    %v40 = vld [vmem:[%s0 + $0x10] sm:$0xff]
    %v41 = vld [vmem:[%s0 + $0x18] sm:$0xff]
    %v42 = vld [vmem:[%s0 + $0x20] sm:$0xff]
    %v43 = vld [vmem:[%s0 + $0x28] sm:$0x1]
    %v44 = vld [vmem:[%s0 + $0x30] sm:$0x1]
    %v45 = vld [vmem:[%s0 + $0x38] sm:$0x1]
    %v46 = vld [vmem:[%s0 + $0x40] sm:$0x1]
    %v47 = vld [vmem:[%s0 + $0x48] sm:$0x1]
    %v48 = vld [vmem:[%s2] sm:$0xff]
    %50 = vset.pattern.permute.xlu0 0
    %51 = vperm.xlu0 %50, %v48
    %v52 = vpop.permute.xlu0 %51
    %vm54 = vcmask 72704
    %v56 = vsel %vm54, %v37, 0
    %vm58 = vcmask 1040384
    %v60 = vsel %vm58, %v43, 0
    %v63 = vsel %vm58, %v44, 0
    %v66 = vsel %vm58, %v45, 0
    %v69 = vsel %vm58, %v46, 0
    %v72 = vsel %vm58, %v47, 0
    %74 = vmatprep.subr.mxu0 %v39
    %75 = vmatpush1.msra.mxu0 %v38
    %76 = vmatprep.subr.mxu0 %v63
    %77 = vmatpush1.msra.mxu0 %v60
    %78 = vmatprep.subr.mxu0 0.0
    %79 = vmatpush1.msra.mxu0 0.0
    %80 = vmatprep.subr.mxu0 0.0
    %81 = vmatpush1.msra.mxu0 0.0
    %82 = vmatprep.subr.mxu0 0.0
    %83 = vmatpush1.msra.mxu0 0.0
    %84 = vmatprep.subr.mxu0 0.0
    %85 = vmatpush1.msra.mxu0 0.0
    %86 = vmatprep.subr.mxu0 0.0
    %87 = vmatpush1.msra.mxu0 0.0
    %88 = vmatprep.subr.mxu0 0.0
    %89 = vmatpush1.msra.mxu0 0.0
    %90 = vmatprep.subr.mxu0 0.0
    %91 = vmatpush1.msra.mxu0 0.0
    %92 = vmatprep.subr.mxu0 0.0
    %93 = vmatpush1.msra.mxu0 0.0
    %94 = vmatprep.subr.mxu0 0.0
    %95 = vmatpush1.msra.mxu0 0.0
    %96 = vmatprep.subr.mxu0 0.0
    %97 = vmatpush1.msra.mxu0 0.0
    %98 = vmatprep.subr.mxu0 0.0
    %99 = vmatpush1.msra.mxu0 0.0
    %100 = vmatprep.subr.mxu0 0.0
    %101 = vmatpush1.msra.mxu0 0.0
    %102 = vmatprep.subr.mxu0 0.0
    %103 = vmatpush1.msra.mxu0 0.0
    %104 = vmatprep.subr.mxu0 0.0
    %105 = vmatpush1.msra.mxu0 0.0
    %106 = vmatprep.subr.mxu0 0.0
    %107 = vmatpush1.msra.mxu0 0.0
    %108 = vmatprep.subr.mxu0 0.0
    %109 = vmatpush1.msra.mxu0 0.0
    %110 = vmatprep.subr.mxu0 0.0
    %111 = vmatpush1.msra.mxu0 0.0
    %112 = vmatprep.subr.mxu0 0.0
    %113 = vmatpush1.msra.mxu0 0.0
    %114 = vmatprep.subr.mxu0 0.0
    %115 = vmatpush1.msra.mxu0 0.0
    %116 = vmatprep.subr.mxu0 0.0
    %117 = vmatpush1.msra.mxu0 0.0
    %118 = vmatprep.subr.mxu0 0.0
    %119 = vmatpush1.msra.mxu0 0.0
    %120 = vmatprep.subr.mxu0 0.0
    %121 = vmatpush1.msra.mxu0 0.0
    %122 = vmatprep.subr.mxu0 0.0
    %123 = vmatpush1.msra.mxu0 0.0
    %124 = vmatprep.subr.mxu0 0.0
    %125 = vmatpush1.msra.mxu0 0.0
    %126 = vmatprep.subr.mxu0 0.0
    %127 = vmatpush1.msra.mxu0 0.0
    %128 = vmatprep.subr.mxu0 0.0
    %129 = vmatpush1.msra.mxu0 0.0
    %130 = vmatprep.subr.mxu0 0.0
    %131 = vmatpush1.msra.mxu0 0.0
    %132 = vmatprep.subr.mxu0 0.0
    %133 = vmatpush1.msra.mxu0 0.0
    %134 = vmatprep.subr.mxu0 0.0
    %135 = vmatpush1.msra.mxu0 0.0
    %136 = vmatprep.subr.mxu0 0.0
    %137 = vmatpush1.msra.mxu0 0.0
    %138 = vmatprep.mubr.f32.mxu0 0.0
    %139 = vmatmul.mubr.f32.gmra.mrb[0].mxu0 %v56
    %v140 = vpop.f32.mrb[0].mxu0
    %v141 = vadd.f32 %v52, %v140
    %v142 = vpop.f32.mrb[0].mxu0
    %v143 = vadd.f32 %v52, %v142
    %144 = vdwg.mxu0
    %145 = vmatprep.subr.mxu0 %v41
    %146 = vmatpush1.msra.mxu0 %v40
    %147 = vmatprep.subr.mxu0 %v69
    %148 = vmatpush1.msra.mxu0 %v66
    %149 = vmatprep.subr.mxu0 0.0
    %150 = vmatpush1.msra.mxu0 0.0
    %151 = vmatprep.subr.mxu0 0.0
    %152 = vmatpush1.msra.mxu0 0.0
    %153 = vmatprep.subr.mxu0 0.0
    %154 = vmatpush1.msra.mxu0 0.0
    %155 = vmatprep.subr.mxu0 0.0
    %156 = vmatpush1.msra.mxu0 0.0
    %157 = vmatprep.subr.mxu0 0.0
    %158 = vmatpush1.msra.mxu0 0.0
    %159 = vmatprep.subr.mxu0 0.0
    %160 = vmatpush1.msra.mxu0 0.0
    %161 = vmatprep.subr.mxu0 0.0
    %162 = vmatpush1.msra.mxu0 0.0
    %163 = vmatprep.subr.mxu0 0.0
    %164 = vmatpush1.msra.mxu0 0.0
    %165 = vmatprep.subr.mxu0 0.0
    %166 = vmatpush1.msra.mxu0 0.0
    %167 = vmatprep.subr.mxu0 0.0
    %168 = vmatpush1.msra.mxu0 0.0
    %169 = vmatprep.subr.mxu0 0.0
    %170 = vmatpush1.msra.mxu0 0.0
    %171 = vmatprep.subr.mxu0 0.0
    %172 = vmatpush1.msra.mxu0 0.0
    %173 = vmatprep.subr.mxu0 0.0
    %174 = vmatpush1.msra.mxu0 0.0
    %175 = vmatprep.subr.mxu0 0.0
    %176 = vmatpush1.msra.mxu0 0.0
    %177 = vmatprep.subr.mxu0 0.0
    %178 = vmatpush1.msra.mxu0 0.0
    %179 = vmatprep.subr.mxu0 0.0
    %180 = vmatpush1.msra.mxu0 0.0
    %181 = vmatprep.subr.mxu0 0.0
    %182 = vmatpush1.msra.mxu0 0.0
    %183 = vmatprep.subr.mxu0 0.0
    %184 = vmatpush1.msra.mxu0 0.0
    %185 = vmatprep.subr.mxu0 0.0
    %186 = vmatpush1.msra.mxu0 0.0
    %187 = vmatprep.subr.mxu0 0.0
    %188 = vmatpush1.msra.mxu0 0.0
    %189 = vmatprep.subr.mxu0 0.0
    %190 = vmatpush1.msra.mxu0 0.0
    %191 = vmatprep.subr.mxu0 0.0
    %192 = vmatpush1.msra.mxu0 0.0
    %193 = vmatprep.subr.mxu0 0.0
    %194 = vmatpush1.msra.mxu0 0.0
    %195 = vmatprep.subr.mxu0 0.0
    %196 = vmatpush1.msra.mxu0 0.0
    %197 = vmatprep.subr.mxu0 0.0
    %198 = vmatpush1.msra.mxu0 0.0
    %199 = vmatprep.subr.mxu0 0.0
    %200 = vmatpush1.msra.mxu0 0.0
    %201 = vmatprep.subr.mxu0 0.0
    %202 = vmatpush1.msra.mxu0 0.0
    %203 = vmatprep.subr.mxu0 0.0
    %204 = vmatpush1.msra.mxu0 0.0
    %205 = vmatprep.subr.mxu0 0.0
    %206 = vmatpush1.msra.mxu0 0.0
    %207 = vmatprep.subr.mxu0 0.0
    %208 = vmatpush1.msra.mxu0 0.0
    %209 = vmatprep.mubr.f32.mxu0 0.0
    %210 = vmatmul.mubr.f32.gmra.mrb[0].mxu0 %v56
    %v211 = vpop.f32.mrb[0].mxu0
    %v212 = vadd.f32 %v52, %v211
    %v213 = vpop.f32.mrb[0].mxu0
    %v214 = vadd.f32 %v52, %v213
    %215 = vdwg.mxu0
    %216 = vmatprep.subr.mxu0 0.0
    %217 = vmatpush1.msra.mxu0 %v42
    %218 = vmatprep.subr.mxu0 0.0
    %219 = vmatpush1.msra.mxu0 %v72
    %220 = vmatprep.subr.mxu0 0.0
    %221 = vmatpush1.msra.mxu0 0.0
    %222 = vmatprep.subr.mxu0 0.0
    %223 = vmatpush1.msra.mxu0 0.0
    %224 = vmatprep.subr.mxu0 0.0
    %225 = vmatpush1.msra.mxu0 0.0
    %226 = vmatprep.subr.mxu0 0.0
    %227 = vmatpush1.msra.mxu0 0.0
    %228 = vmatprep.subr.mxu0 0.0
    %229 = vmatpush1.msra.mxu0 0.0
    %230 = vmatprep.subr.mxu0 0.0
    %231 = vmatpush1.msra.mxu0 0.0
    %232 = vmatprep.subr.mxu0 0.0
    %233 = vmatpush1.msra.mxu0 0.0
    %234 = vmatprep.subr.mxu0 0.0
    %235 = vmatpush1.msra.mxu0 0.0
    %236 = vmatprep.subr.mxu0 0.0
    %237 = vmatpush1.msra.mxu0 0.0
    %238 = vmatprep.subr.mxu0 0.0
    %239 = vmatpush1.msra.mxu0 0.0
    %240 = vmatprep.subr.mxu0 0.0
    %241 = vmatpush1.msra.mxu0 0.0
    %242 = vmatprep.subr.mxu0 0.0
    %243 = vmatpush1.msra.mxu0 0.0
    %244 = vmatprep.subr.mxu0 0.0
    %245 = vmatpush1.msra.mxu0 0.0
    %246 = vmatprep.subr.mxu0 0.0
    %247 = vmatpush1.msra.mxu0 0.0
    %248 = vmatprep.subr.mxu0 0.0
    %249 = vmatpush1.msra.mxu0 0.0
    %250 = vmatprep.subr.mxu0 0.0
    %251 = vmatpush1.msra.mxu0 0.0
    %252 = vmatprep.subr.mxu0 0.0
    %253 = vmatpush1.msra.mxu0 0.0
    %254 = vmatprep.subr.mxu0 0.0
    %255 = vmatpush1.msra.mxu0 0.0
    %256 = vmatprep.subr.mxu0 0.0
    %257 = vmatpush1.msra.mxu0 0.0
    %258 = vmatprep.subr.mxu0 0.0
    %259 = vmatpush1.msra.mxu0 0.0
    %260 = vmatprep.subr.mxu0 0.0
    %261 = vmatpush1.msra.mxu0 0.0
    %262 = vmatprep.subr.mxu0 0.0
    %263 = vmatpush1.msra.mxu0 0.0
    %264 = vmatprep.subr.mxu0 0.0
    %265 = vmatpush1.msra.mxu0 0.0
    %266 = vmatprep.subr.mxu0 0.0
    %267 = vmatpush1.msra.mxu0 0.0
    %268 = vmatprep.subr.mxu0 0.0
    %269 = vmatpush1.msra.mxu0 0.0
    %270 = vmatprep.subr.mxu0 0.0
    %271 = vmatpush1.msra.mxu0 0.0
    %272 = vmatprep.subr.mxu0 0.0
    %273 = vmatpush1.msra.mxu0 0.0
    %274 = vmatprep.subr.mxu0 0.0
    %275 = vmatpush1.msra.mxu0 0.0
    %276 = vmatprep.subr.mxu0 0.0
    %277 = vmatpush1.msra.mxu0 0.0
    %278 = vmatprep.subr.mxu0 0.0
    %279 = vmatpush1.msra.mxu0 0.0
    %280 = vmatprep.mubr.f32.mxu0 0.0
    %281 = vmatmul.mubr.f32.gmra.mrb[0].mxu0 %v56
    %v282 = vpop.f32.mrb[0].mxu0
    %v283 = vadd.f32 %v52, %v282
    %v284 = vpop.f32.mrb[0].mxu0
    %285 = vdwg.mxu0
    %v286 = vmax.f32 %v141, 0.0
    %v287 = vmax.f32 %v143, 0.0
    %v288 = vmax.f32 %v212, 0.0
    %v289 = vmax.f32 %v214, 0.0
    %v290 = vmax.f32 %v283, 0.0
    %291 = vst [vmem:[#allocation2] sm:$0xff] %v286
    %292 = vst [vmem:[#allocation2 + $0x8] sm:$0xff] %v287
    %293 = vst [vmem:[#allocation2 + $0x10] sm:$0xff] %v288
    %294 = vst [vmem:[#allocation2 + $0x18] sm:$0xff] %v289
    %295 = vst [vmem:[#allocation2 + $0x20] sm:$0xff] %v290
    %v296 = vld [vmem:[%s4] sm:$0xff]
    %v297 = vld [vmem:[%s3] sm:$0xff]
    %v298 = vld [vmem:[%s3 + $0x8] sm:$0xff]
    %v299 = vld [vmem:[%s3 + $0x10] sm:$0xff]
    %v300 = vld [vmem:[%s3 + $0x18] sm:$0xff]
    %v301 = vld [vmem:[%s3 + $0x20] sm:$0xff]
    %v302 = vld [vmem:[%s3 + $0x28] sm:$0xff]
    %v303 = vld [vmem:[%s3 + $0x30] sm:$0xff]
    %v304 = vld [vmem:[%s3 + $0x38] sm:$0xff]
    %v305 = vld [vmem:[%s3 + $0x40] sm:$0xff]
    %v306 = vld [vmem:[%s3 + $0x48] sm:$0xff]
    %v307 = vld [vmem:[%s3 + $0x50] sm:$0xff]
    %v308 = vld [vmem:[%s3 + $0x58] sm:$0xff]
    %v309 = vld [vmem:[%s5] sm:$0xff]
    %311 = vset.pattern.permute.xlu0 0
    %312 = vperm.xlu0 %311, %v309
    %v313 = vpop.permute.xlu0 %312
    %vm315 = vcmask 130048
    %v317 = vsel %vm315, %v296, 0
    %319 = vmatprep.subr.mxu0 %v298
    %320 = vmatpush1.msra.mxu0 %v297
    %321 = vmatprep.subr.mxu0 %v304
    %322 = vmatpush1.msra.mxu0 %v303
    %323 = vmatprep.subr.mxu0 0.0
    %324 = vmatpush1.msra.mxu0 0.0
    %325 = vmatprep.subr.mxu0 0.0
    %326 = vmatpush1.msra.mxu0 0.0
    %327 = vmatprep.subr.mxu0 0.0
    %328 = vmatpush1.msra.mxu0 0.0
    %329 = vmatprep.subr.mxu0 0.0
    %330 = vmatpush1.msra.mxu0 0.0
    %331 = vmatprep.subr.mxu0 0.0
    %332 = vmatpush1.msra.mxu0 0.0
    %333 = vmatprep.subr.mxu0 0.0
    %334 = vmatpush1.msra.mxu0 0.0
    %335 = vmatprep.subr.mxu0 0.0
    %336 = vmatpush1.msra.mxu0 0.0
    %337 = vmatprep.subr.mxu0 0.0
    %338 = vmatpush1.msra.mxu0 0.0
    %339 = vmatprep.subr.mxu0 0.0
    %340 = vmatpush1.msra.mxu0 0.0
    %341 = vmatprep.subr.mxu0 0.0
    %342 = vmatpush1.msra.mxu0 0.0
    %343 = vmatprep.subr.mxu0 0.0
    %344 = vmatpush1.msra.mxu0 0.0
    %345 = vmatprep.subr.mxu0 0.0
    %346 = vmatpush1.msra.mxu0 0.0
    %347 = vmatprep.subr.mxu0 0.0
    %348 = vmatpush1.msra.mxu0 0.0
    %349 = vmatprep.subr.mxu0 0.0
    %350 = vmatpush1.msra.mxu0 0.0
    %351 = vmatprep.subr.mxu0 0.0
    %352 = vmatpush1.msra.mxu0 0.0
    %353 = vmatprep.subr.mxu0 0.0
    %354 = vmatpush1.msra.mxu0 0.0
    %355 = vmatprep.subr.mxu0 0.0
    %356 = vmatpush1.msra.mxu0 0.0
    %357 = vmatprep.subr.mxu0 0.0
    %358 = vmatpush1.msra.mxu0 0.0
    %359 = vmatprep.subr.mxu0 0.0
    %360 = vmatpush1.msra.mxu0 0.0
    %361 = vmatprep.subr.mxu0 0.0
    %362 = vmatpush1.msra.mxu0 0.0
    %363 = vmatprep.subr.mxu0 0.0
    %364 = vmatpush1.msra.mxu0 0.0
    %365 = vmatprep.subr.mxu0 0.0
    %366 = vmatpush1.msra.mxu0 0.0
    %367 = vmatprep.subr.mxu0 0.0
    %368 = vmatpush1.msra.mxu0 0.0
    %369 = vmatprep.subr.mxu0 0.0
    %370 = vmatpush1.msra.mxu0 0.0
    %371 = vmatprep.subr.mxu0 0.0
    %372 = vmatpush1.msra.mxu0 0.0
    %373 = vmatprep.subr.mxu0 0.0
    %374 = vmatpush1.msra.mxu0 0.0
    %375 = vmatprep.subr.mxu0 0.0
    %376 = vmatpush1.msra.mxu0 0.0
    %377 = vmatprep.subr.mxu0 0.0
    %378 = vmatpush1.msra.mxu0 0.0
    %379 = vmatprep.subr.mxu0 0.0
    %380 = vmatpush1.msra.mxu0 0.0
    %381 = vmatprep.subr.mxu0 0.0
    %382 = vmatpush1.msra.mxu0 0.0
    %383 = vmatprep.mubr.f32.mxu0 0.0
    %384 = vmatmul.mubr.f32.gmra.mrb[0].mxu0 %v317
    %v385 = vpop.f32.mrb[0].mxu0
    %v386 = vadd.f32 %v313, %v385
    %v387 = vpop.f32.mrb[0].mxu0
    %v388 = vadd.f32 %v313, %v387
    %389 = vdwg.mxu0
    %390 = vmatprep.subr.mxu0 %v300
    %391 = vmatpush1.msra.mxu0 %v299
    %392 = vmatprep.subr.mxu0 %v306
    %393 = vmatpush1.msra.mxu0 %v305
    %394 = vmatprep.subr.mxu0 0.0
    %395 = vmatpush1.msra.mxu0 0.0
    %396 = vmatprep.subr.mxu0 0.0
    %397 = vmatpush1.msra.mxu0 0.0
    %398 = vmatprep.subr.mxu0 0.0
    %399 = vmatpush1.msra.mxu0 0.0
    %400 = vmatprep.subr.mxu0 0.0
    %401 = vmatpush1.msra.mxu0 0.0
    %402 = vmatprep.subr.mxu0 0.0
    %403 = vmatpush1.msra.mxu0 0.0
    %404 = vmatprep.subr.mxu0 0.0
    %405 = vmatpush1.msra.mxu0 0.0
    %406 = vmatprep.subr.mxu0 0.0
    %407 = vmatpush1.msra.mxu0 0.0
    %408 = vmatprep.subr.mxu0 0.0
    %409 = vmatpush1.msra.mxu0 0.0
    %410 = vmatprep.subr.mxu0 0.0
    %411 = vmatpush1.msra.mxu0 0.0
    %412 = vmatprep.subr.mxu0 0.0
    %413 = vmatpush1.msra.mxu0 0.0
    %414 = vmatprep.subr.mxu0 0.0
    %415 = vmatpush1.msra.mxu0 0.0
    %416 = vmatprep.subr.mxu0 0.0
    %417 = vmatpush1.msra.mxu0 0.0
    %418 = vmatprep.subr.mxu0 0.0
    %419 = vmatpush1.msra.mxu0 0.0
    %420 = vmatprep.subr.mxu0 0.0
    %421 = vmatpush1.msra.mxu0 0.0
    %422 = vmatprep.subr.mxu0 0.0
    %423 = vmatpush1.msra.mxu0 0.0
    %424 = vmatprep.subr.mxu0 0.0
    %425 = vmatpush1.msra.mxu0 0.0
    %426 = vmatprep.subr.mxu0 0.0
    %427 = vmatpush1.msra.mxu0 0.0
    %428 = vmatprep.subr.mxu0 0.0
    %429 = vmatpush1.msra.mxu0 0.0
    %430 = vmatprep.subr.mxu0 0.0
    %431 = vmatpush1.msra.mxu0 0.0
    %432 = vmatprep.subr.mxu0 0.0
    %433 = vmatpush1.msra.mxu0 0.0
    %434 = vmatprep.subr.mxu0 0.0
    %435 = vmatpush1.msra.mxu0 0.0
    %436 = vmatprep.subr.mxu0 0.0
    %437 = vmatpush1.msra.mxu0 0.0
    %438 = vmatprep.subr.mxu0 0.0
    %439 = vmatpush1.msra.mxu0 0.0
    %440 = vmatprep.subr.mxu0 0.0
    %441 = vmatpush1.msra.mxu0 0.0
    %442 = vmatprep.subr.mxu0 0.0
    %443 = vmatpush1.msra.mxu0 0.0
    %444 = vmatprep.subr.mxu0 0.0
    %445 = vmatpush1.msra.mxu0 0.0
    %446 = vmatprep.subr.mxu0 0.0
    %447 = vmatpush1.msra.mxu0 0.0
    %448 = vmatprep.subr.mxu0 0.0
    %449 = vmatpush1.msra.mxu0 0.0
    %450 = vmatprep.subr.mxu0 0.0
    %451 = vmatpush1.msra.mxu0 0.0
    %452 = vmatprep.subr.mxu0 0.0
    %453 = vmatpush1.msra.mxu0 0.0
    %454 = vmatprep.mubr.f32.mxu0 0.0
    %455 = vmatmul.mubr.f32.gmra.mrb[0].mxu0 %v317
    %v456 = vpop.f32.mrb[0].mxu0
    %v457 = vadd.f32 %v313, %v456
    %v458 = vpop.f32.mrb[0].mxu0
    %v459 = vadd.f32 %v313, %v458
    %460 = vdwg.mxu0
    %461 = vmatprep.subr.mxu0 %v302
    %462 = vmatpush1.msra.mxu0 %v301
    %463 = vmatprep.subr.mxu0 %v308
    %464 = vmatpush1.msra.mxu0 %v307
    %465 = vmatprep.subr.mxu0 0.0
    %466 = vmatpush1.msra.mxu0 0.0
    %467 = vmatprep.subr.mxu0 0.0
    %468 = vmatpush1.msra.mxu0 0.0
    %469 = vmatprep.subr.mxu0 0.0
    %470 = vmatpush1.msra.mxu0 0.0
    %471 = vmatprep.subr.mxu0 0.0
    %472 = vmatpush1.msra.mxu0 0.0
    %473 = vmatprep.subr.mxu0 0.0
    %474 = vmatpush1.msra.mxu0 0.0
    %475 = vmatprep.subr.mxu0 0.0
    %476 = vmatpush1.msra.mxu0 0.0
    %477 = vmatprep.subr.mxu0 0.0
    %478 = vmatpush1.msra.mxu0 0.0
    %479 = vmatprep.subr.mxu0 0.0
    %480 = vmatpush1.msra.mxu0 0.0
    %481 = vmatprep.subr.mxu0 0.0
    %482 = vmatpush1.msra.mxu0 0.0
    %483 = vmatprep.subr.mxu0 0.0
    %484 = vmatpush1.msra.mxu0 0.0
    %485 = vmatprep.subr.mxu0 0.0
    %486 = vmatpush1.msra.mxu0 0.0
    %487 = vmatprep.subr.mxu0 0.0
    %488 = vmatpush1.msra.mxu0 0.0
    %489 = vmatprep.subr.mxu0 0.0
    %490 = vmatpush1.msra.mxu0 0.0
    %491 = vmatprep.subr.mxu0 0.0
    %492 = vmatpush1.msra.mxu0 0.0
    %493 = vmatprep.subr.mxu0 0.0
    %494 = vmatpush1.msra.mxu0 0.0
    %495 = vmatprep.subr.mxu0 0.0
    %496 = vmatpush1.msra.mxu0 0.0
    %497 = vmatprep.subr.mxu0 0.0
    %498 = vmatpush1.msra.mxu0 0.0
    %499 = vmatprep.subr.mxu0 0.0
    %500 = vmatpush1.msra.mxu0 0.0
    %501 = vmatprep.subr.mxu0 0.0
    %502 = vmatpush1.msra.mxu0 0.0
    %503 = vmatprep.subr.mxu0 0.0
    %504 = vmatpush1.msra.mxu0 0.0
    %505 = vmatprep.subr.mxu0 0.0
    %506 = vmatpush1.msra.mxu0 0.0
    %507 = vmatprep.subr.mxu0 0.0
    %508 = vmatpush1.msra.mxu0 0.0
    %509 = vmatprep.subr.mxu0 0.0
    %510 = vmatpush1.msra.mxu0 0.0
    %511 = vmatprep.subr.mxu0 0.0
    %512 = vmatpush1.msra.mxu0 0.0
    %513 = vmatprep.subr.mxu0 0.0
    %514 = vmatpush1.msra.mxu0 0.0
    %515 = vmatprep.subr.mxu0 0.0
    %516 = vmatpush1.msra.mxu0 0.0
    %517 = vmatprep.subr.mxu0 0.0
    %518 = vmatpush1.msra.mxu0 0.0
    %519 = vmatprep.subr.mxu0 0.0
    %520 = vmatpush1.msra.mxu0 0.0
    %521 = vmatprep.subr.mxu0 0.0
    %522 = vmatpush1.msra.mxu0 0.0
    %523 = vmatprep.subr.mxu0 0.0
    %524 = vmatpush1.msra.mxu0 0.0
    %525 = vmatprep.mubr.f32.mxu0 0.0
    %526 = vmatmul.mubr.f32.gmra.mrb[0].mxu0 %v317
    %v527 = vpop.f32.mrb[0].mxu0
    %v528 = vadd.f32 %v313, %v527
    %v529 = vpop.f32.mrb[0].mxu0
    %v530 = vadd.f32 %v313, %v529
    %531 = vdwg.mxu0
    %v532 = vmax.f32 %v386, 0.0
    %v533 = vmax.f32 %v388, 0.0
    %v534 = vmax.f32 %v457, 0.0
    %v535 = vmax.f32 %v459, 0.0
    %v536 = vmax.f32 %v528, 0.0
    %v537 = vmax.f32 %v530, 0.0
    %538 = vst [vmem:[#allocation4] sm:$0xff] %v532
    %539 = vst [vmem:[#allocation4 + $0x8] sm:$0xff] %v533
    %540 = vst [vmem:[#allocation4 + $0x10] sm:$0xff] %v534
    %541 = vst [vmem:[#allocation4 + $0x18] sm:$0xff] %v535
    %542 = vst [vmem:[#allocation4 + $0x20] sm:$0xff] %v536
    %vm543 = vcmask 605184
    %544 = vst.msk [vmem:[#allocation4 + $0x28] sm:$0xff] %vm543, %v537
    %v545 = vld [vmem:[%s7] sm:$0xff]
    %v546 = vld [vmem:[%s6] sm:$0xff]
    %v547 = vld [vmem:[%s6 + $0x8] sm:$0xff]
    %v548 = vld [vmem:[%s6 + $0x10] sm:$0xff]
    %v549 = vld [vmem:[%s6 + $0x18] sm:$0xff]
    %v550 = vld [vmem:[%s6 + $0x20] sm:$0xff]
    %v551 = vld [vmem:[%s6 + $0x28] sm:$0xff]
    %v552 = vld [vmem:[%s6 + $0x30] sm:$0xff]
    %v553 = vld [vmem:[%s6 + $0x38] sm:$0xff]
    %v554 = vld [vmem:[%s6 + $0x40] sm:$0xff]
    %v555 = vld [vmem:[%s6 + $0x48] sm:$0xff]
    %v556 = vld [vmem:[%s6 + $0x50] sm:$0xff]
    %v557 = vld [vmem:[%s6 + $0x58] sm:$0xff]
    %v558 = vld [vmem:[%s6 + $0x60] sm:$0xff]
    %v559 = vld [vmem:[%s6 + $0x68] sm:$0xff]
    %v560 = vld [vmem:[%s6 + $0x70] sm:$0xff]
    %v561 = vld [vmem:[%s6 + $0x78] sm:$0xff]
    %v562 = vld [vmem:[%s6 + $0x80] sm:$0xff]
    %v563 = vld [vmem:[%s6 + $0x88] sm:$0xff]
    %v564 = vld [vmem:[%s6 + $0x90] sm:$0xff]
    %v565 = vld [vmem:[%s6 + $0x98] sm:$0xff]
    %v566 = vld [vmem:[%s6 + $0xa0] sm:$0xff]
    %v567 = vld [vmem:[%s6 + $0xa8] sm:$0x1]
    %v568 = vld [vmem:[%s6 + $0xb0] sm:$0x1]
    %v569 = vld [vmem:[%s6 + $0xb8] sm:$0x1]
    %v570 = vld [vmem:[%s6 + $0xc0] sm:$0x1]
    %v571 = vld [vmem:[%s6 + $0xc8] sm:$0x1]
    %v572 = vld [vmem:[%s6 + $0xd0] sm:$0x1]
    %v573 = vld [vmem:[%s6 + $0xd8] sm:$0x1]
    %v574 = vld [vmem:[%s8] sm:$0xff]
    %576 = vset.pattern.permute.xlu0 0
    %577 = vperm.xlu0 %576, %v574
    %v578 = vpop.permute.xlu0 %577
    %vm580 = vcmask 203776
    %v582 = vsel %vm580, %v545, 0
    %v585 = vsel %vm58, %v567, 0
    %v588 = vsel %vm58, %v568, 0
    %v591 = vsel %vm58, %v569, 0
    %v594 = vsel %vm58, %v570, 0
    %v597 = vsel %vm58, %v571, 0
    %v600 = vsel %vm58, %v572, 0
    %v603 = vsel %vm58, %v573, 0
    %605 = vmatprep.subr.mxu0 %v547
    %606 = vmatpush1.msra.mxu0 %v546
    %607 = vmatprep.subr.mxu0 %v554
    %608 = vmatpush1.msra.mxu0 %v553
    %609 = vmatprep.subr.mxu0 %v561
    %610 = vmatpush1.msra.mxu0 %v560
    %611 = vmatprep.subr.mxu0 %v588
    %612 = vmatpush1.msra.mxu0 %v585
    %613 = vmatprep.subr.mxu0 0.0
    %614 = vmatpush1.msra.mxu0 0.0
    %615 = vmatprep.subr.mxu0 0.0
    %616 = vmatpush1.msra.mxu0 0.0
    %617 = vmatprep.subr.mxu0 0.0
    %618 = vmatpush1.msra.mxu0 0.0
    %619 = vmatprep.subr.mxu0 0.0
    %620 = vmatpush1.msra.mxu0 0.0
    %621 = vmatprep.subr.mxu0 0.0
    %622 = vmatpush1.msra.mxu0 0.0
    %623 = vmatprep.subr.mxu0 0.0
    %624 = vmatpush1.msra.mxu0 0.0
    %625 = vmatprep.subr.mxu0 0.0
    %626 = vmatpush1.msra.mxu0 0.0
    %627 = vmatprep.subr.mxu0 0.0
    %628 = vmatpush1.msra.mxu0 0.0
    %629 = vmatprep.subr.mxu0 0.0
    %630 = vmatpush1.msra.mxu0 0.0
    %631 = vmatprep.subr.mxu0 0.0
    %632 = vmatpush1.msra.mxu0 0.0
    %633 = vmatprep.subr.mxu0 0.0
    %634 = vmatpush1.msra.mxu0 0.0
    %635 = vmatprep.subr.mxu0 0.0
    %636 = vmatpush1.msra.mxu0 0.0
    %637 = vmatprep.subr.mxu0 0.0
    %638 = vmatpush1.msra.mxu0 0.0
    %639 = vmatprep.subr.mxu0 0.0
    %640 = vmatpush1.msra.mxu0 0.0
    %641 = vmatprep.subr.mxu0 0.0
    %642 = vmatpush1.msra.mxu0 0.0
    %643 = vmatprep.subr.mxu0 0.0
    %644 = vmatpush1.msra.mxu0 0.0
    %645 = vmatprep.subr.mxu0 0.0
    %646 = vmatpush1.msra.mxu0 0.0
    %647 = vmatprep.subr.mxu0 0.0
    %648 = vmatpush1.msra.mxu0 0.0
    %649 = vmatprep.subr.mxu0 0.0
    %650 = vmatpush1.msra.mxu0 0.0
    %651 = vmatprep.subr.mxu0 0.0
    %652 = vmatpush1.msra.mxu0 0.0
    %653 = vmatprep.subr.mxu0 0.0
    %654 = vmatpush1.msra.mxu0 0.0
    %655 = vmatprep.subr.mxu0 0.0
    %656 = vmatpush1.msra.mxu0 0.0
    %657 = vmatprep.subr.mxu0 0.0
    %658 = vmatpush1.msra.mxu0 0.0
    %659 = vmatprep.subr.mxu0 0.0
    %660 = vmatpush1.msra.mxu0 0.0
    %661 = vmatprep.subr.mxu0 0.0
    %662 = vmatpush1.msra.mxu0 0.0
    %663 = vmatprep.subr.mxu0 0.0
    %664 = vmatpush1.msra.mxu0 0.0
    %665 = vmatprep.subr.mxu0 0.0
    %666 = vmatpush1.msra.mxu0 0.0
    %667 = vmatprep.subr.mxu0 0.0
    %668 = vmatpush1.msra.mxu0 0.0
    %669 = vmatprep.mubr.f32.mxu0 0.0
    %670 = vmatmul.mubr.f32.gmra.mrb[0].mxu0 %v582
    %v671 = vpop.f32.mrb[0].mxu0
    %v672 = vadd.f32 %v578, %v671
    %v673 = vpop.f32.mrb[0].mxu0
    %v674 = vadd.f32 %v578, %v673
    %675 = vdwg.mxu0
    %676 = vmatprep.subr.mxu0 %v549
    %677 = vmatpush1.msra.mxu0 %v548
    %678 = vmatprep.subr.mxu0 %v556
    %679 = vmatpush1.msra.mxu0 %v555
    %680 = vmatprep.subr.mxu0 %v563
    %681 = vmatpush1.msra.mxu0 %v562
    %682 = vmatprep.subr.mxu0 %v594
    %683 = vmatpush1.msra.mxu0 %v591
    %684 = vmatprep.subr.mxu0 0.0
    %685 = vmatpush1.msra.mxu0 0.0
    %686 = vmatprep.subr.mxu0 0.0
    %687 = vmatpush1.msra.mxu0 0.0
    %688 = vmatprep.subr.mxu0 0.0
    %689 = vmatpush1.msra.mxu0 0.0
    %690 = vmatprep.subr.mxu0 0.0
    %691 = vmatpush1.msra.mxu0 0.0
    %692 = vmatprep.subr.mxu0 0.0
    %693 = vmatpush1.msra.mxu0 0.0
    %694 = vmatprep.subr.mxu0 0.0
    %695 = vmatpush1.msra.mxu0 0.0
    %696 = vmatprep.subr.mxu0 0.0
    %697 = vmatpush1.msra.mxu0 0.0
    %698 = vmatprep.subr.mxu0 0.0
    %699 = vmatpush1.msra.mxu0 0.0
    %700 = vmatprep.subr.mxu0 0.0
    %701 = vmatpush1.msra.mxu0 0.0
    %702 = vmatprep.subr.mxu0 0.0
    %703 = vmatpush1.msra.mxu0 0.0
    %704 = vmatprep.subr.mxu0 0.0
    %705 = vmatpush1.msra.mxu0 0.0
    %706 = vmatprep.subr.mxu0 0.0
    %707 = vmatpush1.msra.mxu0 0.0
    %708 = vmatprep.subr.mxu0 0.0
    %709 = vmatpush1.msra.mxu0 0.0
    %710 = vmatprep.subr.mxu0 0.0
    %711 = vmatpush1.msra.mxu0 0.0
    %712 = vmatprep.subr.mxu0 0.0
    %713 = vmatpush1.msra.mxu0 0.0
    %714 = vmatprep.subr.mxu0 0.0
    %715 = vmatpush1.msra.mxu0 0.0
    %716 = vmatprep.subr.mxu0 0.0
    %717 = vmatpush1.msra.mxu0 0.0
    %718 = vmatprep.subr.mxu0 0.0
    %719 = vmatpush1.msra.mxu0 0.0
    %720 = vmatprep.subr.mxu0 0.0
    %721 = vmatpush1.msra.mxu0 0.0
    %722 = vmatprep.subr.mxu0 0.0
    %723 = vmatpush1.msra.mxu0 0.0
    %724 = vmatprep.subr.mxu0 0.0
    %725 = vmatpush1.msra.mxu0 0.0
    %726 = vmatprep.subr.mxu0 0.0
    %727 = vmatpush1.msra.mxu0 0.0
    %728 = vmatprep.subr.mxu0 0.0
    %729 = vmatpush1.msra.mxu0 0.0
    %730 = vmatprep.subr.mxu0 0.0
    %731 = vmatpush1.msra.mxu0 0.0
    %732 = vmatprep.subr.mxu0 0.0
    %733 = vmatpush1.msra.mxu0 0.0
    %734 = vmatprep.subr.mxu0 0.0
    %735 = vmatpush1.msra.mxu0 0.0
    %736 = vmatprep.subr.mxu0 0.0
    %737 = vmatpush1.msra.mxu0 0.0
    %738 = vmatprep.subr.mxu0 0.0
    %739 = vmatpush1.msra.mxu0 0.0
    %740 = vmatprep.mubr.f32.mxu0 0.0
    %741 = vmatmul.mubr.f32.gmra.mrb[0].mxu0 %v582
    %v742 = vpop.f32.mrb[0].mxu0
    %v743 = vadd.f32 %v578, %v742
    %v744 = vpop.f32.mrb[0].mxu0
    %v745 = vadd.f32 %v578, %v744
    %746 = vdwg.mxu0
    %747 = vmatprep.subr.mxu0 %v551
    %748 = vmatpush1.msra.mxu0 %v550
    %749 = vmatprep.subr.mxu0 %v558
    %750 = vmatpush1.msra.mxu0 %v557
    %751 = vmatprep.subr.mxu0 %v565
    %752 = vmatpush1.msra.mxu0 %v564
    %753 = vmatprep.subr.mxu0 %v600
    %754 = vmatpush1.msra.mxu0 %v597
    %755 = vmatprep.subr.mxu0 0.0
    %756 = vmatpush1.msra.mxu0 0.0
    %757 = vmatprep.subr.mxu0 0.0
    %758 = vmatpush1.msra.mxu0 0.0
    %759 = vmatprep.subr.mxu0 0.0
    %760 = vmatpush1.msra.mxu0 0.0
    %761 = vmatprep.subr.mxu0 0.0
    %762 = vmatpush1.msra.mxu0 0.0
    %763 = vmatprep.subr.mxu0 0.0
    %764 = vmatpush1.msra.mxu0 0.0
    %765 = vmatprep.subr.mxu0 0.0
    %766 = vmatpush1.msra.mxu0 0.0
    %767 = vmatprep.subr.mxu0 0.0
    %768 = vmatpush1.msra.mxu0 0.0
    %769 = vmatprep.subr.mxu0 0.0
    %770 = vmatpush1.msra.mxu0 0.0
    %771 = vmatprep.subr.mxu0 0.0
    %772 = vmatpush1.msra.mxu0 0.0
    %773 = vmatprep.subr.mxu0 0.0
    %774 = vmatpush1.msra.mxu0 0.0
    %775 = vmatprep.subr.mxu0 0.0
    %776 = vmatpush1.msra.mxu0 0.0
    %777 = vmatprep.subr.mxu0 0.0
    %778 = vmatpush1.msra.mxu0 0.0
    %779 = vmatprep.subr.mxu0 0.0
    %780 = vmatpush1.msra.mxu0 0.0
    %781 = vmatprep.subr.mxu0 0.0
    %782 = vmatpush1.msra.mxu0 0.0
    %783 = vmatprep.subr.mxu0 0.0
    %784 = vmatpush1.msra.mxu0 0.0
    %785 = vmatprep.subr.mxu0 0.0
    %786 = vmatpush1.msra.mxu0 0.0
    %787 = vmatprep.subr.mxu0 0.0
    %788 = vmatpush1.msra.mxu0 0.0
    %789 = vmatprep.subr.mxu0 0.0
    %790 = vmatpush1.msra.mxu0 0.0
    %791 = vmatprep.subr.mxu0 0.0
    %792 = vmatpush1.msra.mxu0 0.0
    %793 = vmatprep.subr.mxu0 0.0
    %794 = vmatpush1.msra.mxu0 0.0
    %795 = vmatprep.subr.mxu0 0.0
    %796 = vmatpush1.msra.mxu0 0.0
    %797 = vmatprep.subr.mxu0 0.0
    %798 = vmatpush1.msra.mxu0 0.0
    %799 = vmatprep.subr.mxu0 0.0
    %800 = vmatpush1.msra.mxu0 0.0
    %801 = vmatprep.subr.mxu0 0.0
    %802 = vmatpush1.msra.mxu0 0.0
    %803 = vmatprep.subr.mxu0 0.0
    %804 = vmatpush1.msra.mxu0 0.0
    %805 = vmatprep.subr.mxu0 0.0
    %806 = vmatpush1.msra.mxu0 0.0
    %807 = vmatprep.subr.mxu0 0.0
    %808 = vmatpush1.msra.mxu0 0.0
    %809 = vmatprep.subr.mxu0 0.0
    %810 = vmatpush1.msra.mxu0 0.0
    %811 = vmatprep.mubr.f32.mxu0 0.0
    %812 = vmatmul.mubr.f32.gmra.mrb[0].mxu0 %v582
    %v813 = vpop.f32.mrb[0].mxu0
    %v814 = vadd.f32 %v578, %v813
    %v815 = vpop.f32.mrb[0].mxu0
    %v816 = vadd.f32 %v578, %v815
    %817 = vdwg.mxu0
    %818 = vmatprep.subr.mxu0 0.0
    %819 = vmatpush1.msra.mxu0 %v552
    %820 = vmatprep.subr.mxu0 0.0
    %821 = vmatpush1.msra.mxu0 %v559
    %822 = vmatprep.subr.mxu0 0.0
    %823 = vmatpush1.msra.mxu0 %v566
    %824 = vmatprep.subr.mxu0 0.0
    %825 = vmatpush1.msra.mxu0 %v603
    %826 = vmatprep.subr.mxu0 0.0
    %827 = vmatpush1.msra.mxu0 0.0
    %828 = vmatprep.subr.mxu0 0.0
    %829 = vmatpush1.msra.mxu0 0.0
    %830 = vmatprep.subr.mxu0 0.0
    %831 = vmatpush1.msra.mxu0 0.0
    %832 = vmatprep.subr.mxu0 0.0
    %833 = vmatpush1.msra.mxu0 0.0
    %834 = vmatprep.subr.mxu0 0.0
    %835 = vmatpush1.msra.mxu0 0.0
    %836 = vmatprep.subr.mxu0 0.0
    %837 = vmatpush1.msra.mxu0 0.0
    %838 = vmatprep.subr.mxu0 0.0
    %839 = vmatpush1.msra.mxu0 0.0
    %840 = vmatprep.subr.mxu0 0.0
    %841 = vmatpush1.msra.mxu0 0.0
    %842 = vmatprep.subr.mxu0 0.0
    %843 = vmatpush1.msra.mxu0 0.0
    %844 = vmatprep.subr.mxu0 0.0
    %845 = vmatpush1.msra.mxu0 0.0
    %846 = vmatprep.subr.mxu0 0.0
    %847 = vmatpush1.msra.mxu0 0.0
    %848 = vmatprep.subr.mxu0 0.0
    %849 = vmatpush1.msra.mxu0 0.0
    %850 = vmatprep.subr.mxu0 0.0
    %851 = vmatpush1.msra.mxu0 0.0
    %852 = vmatprep.subr.mxu0 0.0
    %853 = vmatpush1.msra.mxu0 0.0
    %854 = vmatprep.subr.mxu0 0.0
    %855 = vmatpush1.msra.mxu0 0.0
    %856 = vmatprep.subr.mxu0 0.0
    %857 = vmatpush1.msra.mxu0 0.0
    %858 = vmatprep.subr.mxu0 0.0
    %859 = vmatpush1.msra.mxu0 0.0
    %860 = vmatprep.subr.mxu0 0.0
    %861 = vmatpush1.msra.mxu0 0.0
    %862 = vmatprep.subr.mxu0 0.0
    %863 = vmatpush1.msra.mxu0 0.0
    %864 = vmatprep.subr.mxu0 0.0
    %865 = vmatpush1.msra.mxu0 0.0
    %866 = vmatprep.subr.mxu0 0.0
    %867 = vmatpush1.msra.mxu0 0.0
    %868 = vmatprep.subr.mxu0 0.0
    %869 = vmatpush1.msra.mxu0 0.0
    %870 = vmatprep.subr.mxu0 0.0
    %871 = vmatpush1.msra.mxu0 0.0
    %872 = vmatprep.subr.mxu0 0.0
    %873 = vmatpush1.msra.mxu0 0.0
    %874 = vmatprep.subr.mxu0 0.0
    %875 = vmatpush1.msra.mxu0 0.0
    %876 = vmatprep.subr.mxu0 0.0
    %877 = vmatpush1.msra.mxu0 0.0
    %878 = vmatprep.subr.mxu0 0.0
    %879 = vmatpush1.msra.mxu0 0.0
    %880 = vmatprep.subr.mxu0 0.0
    %881 = vmatpush1.msra.mxu0 0.0
    %882 = vmatprep.mubr.f32.mxu0 0.0
    %883 = vmatmul.mubr.f32.gmra.mrb[0].mxu0 %v582
    %v884 = vpop.f32.mrb[0].mxu0
    %v885 = vadd.f32 %v578, %v884
    %v886 = vpop.f32.mrb[0].mxu0
    %887 = vdwg.mxu0
    %v888 = vmax.f32 %v672, 0.0
    %v889 = vmax.f32 %v674, 0.0
    %v890 = vmax.f32 %v743, 0.0
    %v891 = vmax.f32 %v745, 0.0
    %v892 = vmax.f32 %v814, 0.0
    %v893 = vmax.f32 %v816, 0.0
    %v894 = vmax.f32 %v885, 0.0
    %895 = vst [vmem:[%s11] sm:$0xff] %v888
    %896 = vst [vmem:[%s11 + $0x8] sm:$0xff] %v889
    %897 = vst [vmem:[%s11 + $0x10] sm:$0xff] %v890
    %898 = vst [vmem:[%s11 + $0x18] sm:$0xff] %v891
    %899 = vst [vmem:[%s11 + $0x20] sm:$0xff] %v892
    %900 = vst [vmem:[%s11 + $0x28] sm:$0xff] %v893
    %vm901 = vcmask 195584
    %902 = vst.msk [vmem:[%s11 + $0x30] sm:$0xff] %vm901, %v894
    // Predicated region
    $region38: #{b_seq_forward.3} parent=1 // pred_check
      _
    $region39: #{b_seq_forward.3} parent=1 // pred_check_branch
      %904 = sbr.rel (0) target = $region41
    $region40: #{b_seq_forward.3} parent=1 // pred_region
      %s906 = ssub.s32 640, 640
      %907 = vsyncadd [#allocation3], %s906
      %s909 = sshll.u32 [#allocation2], 4
      %s910 = int_to_ptr.vmem [resolvable:$true] %s909
      %912 = dma.vmem_to_hbm [thread:$0]  %s910, 640, %s9, [#allocation3]
    $region41: #{b_seq_forward.3} parent=1 // pred_fallthru
      _
    // Predicated region
    $region42: #{b_seq_forward.3} parent=1 // pred_check
      _
    $region43: #{b_seq_forward.3} parent=1 // pred_check_branch
      %914 = sbr.rel (0) target = $region45
    $region44: #{b_seq_forward.3} parent=1 // pred_region
      %s916 = ssub.s32 768, 768
      %917 = vsyncadd [#allocation5], %s916
      %s919 = sshll.u32 [#allocation4], 4
      %s920 = int_to_ptr.vmem [resolvable:$true] %s919
      %922 = dma.vmem_to_hbm [thread:$0]  %s920, 768, %s10, [#allocation5]
    $region45: #{b_seq_forward.3} parent=1 // pred_fallthru
      _
    // Predicated region
    $region46: #{b_seq_forward.3} parent=1 // pred_check
      _
    $region47: #{b_seq_forward.3} parent=1 // pred_check_branch
      %924 = sbr.rel (0) target = $region49
    $region48: #{b_seq_forward.3} parent=1 // pred_region
      _
    $region49: #{b_seq_forward.3} parent=1 // pred_fallthru
      _
    // Predicated region
    $region50: #{b_seq_forward.3} parent=1 // pred_check
      _
    $region51: #{b_seq_forward.3} parent=1 // pred_check_branch
      %926 = sbr.rel (0) target = $region53
    $region52: #{b_seq_forward.3} parent=1 // pred_region
      %927 = dma.done [#allocation3], 640
    $region53: #{b_seq_forward.3} parent=1 // pred_fallthru
      _
    // Predicated region
    $region54: #{b_seq_forward.3} parent=1 // pred_check
      _
    $region55: #{b_seq_forward.3} parent=1 // pred_check_branch
      %929 = sbr.rel (0) target = $region57
    $region56: #{b_seq_forward.3} parent=1 // pred_region
      %930 = dma.done [#allocation5], 768
    $region57: #{b_seq_forward.3} parent=1 // pred_fallthru
      _
    // Predicated region
    $region58: #{b_seq_forward.3} parent=1 // pred_check
      _
    $region59: #{b_seq_forward.3} parent=1 // pred_check_branch
      %932 = sbr.rel (0) target = $region61
    $region60: #{b_seq_forward.3} parent=1 // pred_region
      _
    $region61: #{b_seq_forward.3} parent=1 // pred_fallthru
      _
    %933 = vsyncpa [#allocation3], 1
    %934 = vsyncpa [#allocation5], 1

// kernel: b_seq_forward.4
$region0: #{b_seq_forward.4}
  #allocation0 [shape = 'u32[]', space=smem, size = 0x4, offset = 0x4, fixed_abs, tag = 'smem constant byte address 0x4 - core index']
  #allocation1 [shape = 'u32[144,128]{1,0:T(1,128)}', space=vmem, size = 0x12000, scoped, tag = 'internal scratch']
  %s0 = inlined_call_operand.vmem [shape: f32[72,240], index: 0, kind: input, shape index: {}]
  %s1 = inlined_call_operand.vmem [shape: f32[16,72], index: 1, kind: input, shape index: {}]
  %s2 = inlined_call_operand.vmem [shape: f32[16,1], index: 2, kind: input, shape index: {}]
  %s3 = inlined_call_operand.vmem [shape: f32[128,286], index: 3, kind: input, shape index: {}]
  %s4 = inlined_call_operand.vmem [shape: f32[16,128], index: 4, kind: input, shape index: {}]
  %s5 = inlined_call_operand.vmem [shape: f32[16,1], index: 5, kind: input, shape index: {}]
  %s6 = inlined_call_operand.vmem [shape: f32[200,390], index: 6, kind: input, shape index: {}]
  %s7 = inlined_call_operand.vmem [shape: f32[16,200], index: 7, kind: input, shape index: {}]
  %s8 = inlined_call_operand.vmem [shape: f32[16,1], index: 8, kind: input, shape index: {}]
  %s9 = inlined_call_operand.vmem [shape: f32[16,240], index: 9, kind: output, shape index: {0}]
  %s10 = inlined_call_operand.vmem [shape: f32[16,286], index: 10, kind: output, shape index: {1}]
  %s11 = inlined_call_operand.vmem [shape: f32[16,390], index: 11, kind: output, shape index: {2}]
  %12 = xla_tuple %s9, %s10, %s11
  %s13 = sld [smem:[#allocation0]]
  $region62: #{b_seq_forward.4} parent=0
    _
  %s15 = ssub.s32 1, %s13
  %s16 = scalar_select 0, %s15, %s13
  // Predicated region
  $region2: #{b_seq_forward.4} parent=0 // pred_check
    _
  $region3: #{b_seq_forward.4} parent=0 // pred_check_branch
    %18 = sbr.rel (0) target = $region5
  $region4: #{b_seq_forward.4} parent=0 // pred_region
    _
  $region5: #{b_seq_forward.4} parent=0 // pred_fallthru
    _
  // Predicated region
  $region6: #{b_seq_forward.4} parent=0 // pred_check
    _
  $region7: #{b_seq_forward.4} parent=0 // pred_check_branch
    %20 = sbr.rel (0) target = $region9
  $region8: #{b_seq_forward.4} parent=0 // pred_region
    _
  $region9: #{b_seq_forward.4} parent=0 // pred_fallthru
    _
  // Predicated region
  $region10: #{b_seq_forward.4} parent=0 // pred_check
    _
  $region11: #{b_seq_forward.4} parent=0 // pred_check_branch
    %22 = sbr.rel (0) target = $region13
  $region12: #{b_seq_forward.4} parent=0 // pred_region
    _
  $region13: #{b_seq_forward.4} parent=0 // pred_fallthru
    _
  // Predicated region
  $region14: #{b_seq_forward.4} parent=0 // pred_check
    _
  $region15: #{b_seq_forward.4} parent=0 // pred_check_branch
    %24 = sbr.rel (0) target = $region17
  $region16: #{b_seq_forward.4} parent=0 // pred_region
    _
  $region17: #{b_seq_forward.4} parent=0 // pred_fallthru
    _
  // Predicated region
  $region18: #{b_seq_forward.4} parent=0 // pred_check
    _
  $region19: #{b_seq_forward.4} parent=0 // pred_check_branch
    %26 = sbr.rel (0) target = $region21
  $region20: #{b_seq_forward.4} parent=0 // pred_region
    _
  $region21: #{b_seq_forward.4} parent=0 // pred_fallthru
    _
  // Predicated region
  $region22: #{b_seq_forward.4} parent=0 // pred_check
    _
  $region23: #{b_seq_forward.4} parent=0 // pred_check_branch
    %28 = sbr.rel (0) target = $region25
  $region24: #{b_seq_forward.4} parent=0 // pred_region
    _
  $region25: #{b_seq_forward.4} parent=0 // pred_fallthru
    _
  // Predicated region
  $region26: #{b_seq_forward.4} parent=0 // pred_check
    _
  $region27: #{b_seq_forward.4} parent=0 // pred_check_branch
    %30 = sbr.rel (0) target = $region29
  $region28: #{b_seq_forward.4} parent=0 // pred_region
    _
  $region29: #{b_seq_forward.4} parent=0 // pred_fallthru
    _
  // Predicated region
  $region30: #{b_seq_forward.4} parent=0 // pred_check
    _
  $region31: #{b_seq_forward.4} parent=0 // pred_check_branch
    %32 = sbr.rel (0) target = $region33
  $region32: #{b_seq_forward.4} parent=0 // pred_region
    _
  $region33: #{b_seq_forward.4} parent=0 // pred_fallthru
    _
  // Predicated region
  $region34: #{b_seq_forward.4} parent=0 // pred_check
    _
  $region35: #{b_seq_forward.4} parent=0 // pred_check_branch
    %34 = sbr.rel (0) target = $region37
  $region36: #{b_seq_forward.4} parent=0 // pred_region
    _
  $region37: #{b_seq_forward.4} parent=0 // pred_fallthru
    _
  %v35 = vld [vmem:[%s1] sm:$0xff]
  %v36 = vld [vmem:[%s1 + $0x8] sm:$0xff]
  %v37 = vld [vmem:[%s0] sm:$0xff]
  %v38 = vld [vmem:[%s0 + $0x8] sm:$0xff]
  %v39 = vld [vmem:[%s0 + $0x10] sm:$0xff]
  %v40 = vld [vmem:[%s0 + $0x18] sm:$0xff]
  %v41 = vld [vmem:[%s0 + $0x20] sm:$0xff]
  %v42 = vld [vmem:[%s0 + $0x28] sm:$0xff]
  %v43 = vld [vmem:[%s0 + $0x30] sm:$0xff]
  %v44 = vld [vmem:[%s0 + $0x38] sm:$0xff]
  %v45 = vld [vmem:[%s0 + $0x40] sm:$0xff]
  %v46 = vld [vmem:[%s0 + $0x48] sm:$0xff]
  %v47 = vld [vmem:[%s0 + $0x50] sm:$0xff]
  %v48 = vld [vmem:[%s0 + $0x58] sm:$0xff]
  %v49 = vld [vmem:[%s0 + $0x60] sm:$0xff]
  %v50 = vld [vmem:[%s0 + $0x68] sm:$0xff]
  %v51 = vld [vmem:[%s0 + $0x70] sm:$0xff]
  %v52 = vld [vmem:[%s0 + $0x78] sm:$0xff]
  %v53 = vld [vmem:[%s0 + $0x80] sm:$0xff]
  %v54 = vld [vmem:[%s0 + $0x88] sm:$0xff]
  %v55 = vld [vmem:[%s2] sm:$0xff]
  %v56 = vld [vmem:[%s2 + $0x8] sm:$0xff]
  %58 = vset.pattern.permute.xlu0 0
  %59 = vperm.xlu0 %58, %v55
  %v60 = vpop.permute.xlu0 %59
  %63 = vset.pattern.permute.xlu0 0
  %64 = vperm.xlu0 %63, %v56
  %v65 = vpop.permute.xlu0 %64
  %vm67 = vcmask 588800
  %v69 = vsel %vm67, %v35, 0
  %v72 = vsel %vm67, %v36, 0
  %74 = vmatprep.subr.mxu0 %v38
  %75 = vmatpush1.msra.mxu0 %v37
  %76 = vmatprep.subr.mxu0 %v40
  %77 = vmatpush1.msra.mxu0 %v39
  %78 = vmatprep.subr.mxu0 %v42
  %79 = vmatpush1.msra.mxu0 %v41
  %80 = vmatprep.subr.mxu0 %v44
  %81 = vmatpush1.msra.mxu0 %v43
  %82 = vmatprep.subr.mxu0 %v46
  %83 = vmatpush1.msra.mxu0 %v45
  %84 = vmatprep.subr.mxu0 %v48
  %85 = vmatpush1.msra.mxu0 %v47
  %86 = vmatprep.subr.mxu0 %v50
  %87 = vmatpush1.msra.mxu0 %v49
  %88 = vmatprep.subr.mxu0 %v52
  %89 = vmatpush1.msra.mxu0 %v51
  %90 = vmatprep.subr.mxu0 %v54
  %91 = vmatpush1.msra.mxu0 %v53
  %92 = vmatprep.subr.mxu0 0.0
  %93 = vmatpush1.msra.mxu0 0.0
  %94 = vmatprep.subr.mxu0 0.0
  %95 = vmatpush1.msra.mxu0 0.0
  %96 = vmatprep.subr.mxu0 0.0
  %97 = vmatpush1.msra.mxu0 0.0
  %98 = vmatprep.subr.mxu0 0.0
  %99 = vmatpush1.msra.mxu0 0.0
  %100 = vmatprep.subr.mxu0 0.0
  %101 = vmatpush1.msra.mxu0 0.0
  %102 = vmatprep.subr.mxu0 0.0
  %103 = vmatpush1.msra.mxu0 0.0
  %104 = vmatprep.subr.mxu0 0.0
  %105 = vmatpush1.msra.mxu0 0.0
  %106 = vmatprep.subr.mxu0 0.0
  %107 = vmatpush1.msra.mxu0 0.0
  %108 = vmatprep.subr.mxu0 0.0
  %109 = vmatpush1.msra.mxu0 0.0
  %110 = vmatprep.subr.mxu0 0.0
  %111 = vmatpush1.msra.mxu0 0.0
  %112 = vmatprep.subr.mxu0 0.0
  %113 = vmatpush1.msra.mxu0 0.0
  %114 = vmatprep.subr.mxu0 0.0
  %115 = vmatpush1.msra.mxu0 0.0
  %116 = vmatprep.subr.mxu0 0.0
  %117 = vmatpush1.msra.mxu0 0.0
  %118 = vmatprep.subr.mxu0 0.0
  %119 = vmatpush1.msra.mxu0 0.0
  %120 = vmatprep.subr.mxu0 0.0
  %121 = vmatpush1.msra.mxu0 0.0
  %122 = vmatprep.subr.mxu0 0.0
  %123 = vmatpush1.msra.mxu0 0.0
  %124 = vmatprep.subr.mxu0 0.0
  %125 = vmatpush1.msra.mxu0 0.0
  %126 = vmatprep.subr.mxu0 0.0
  %127 = vmatpush1.msra.mxu0 0.0
  %128 = vmatprep.subr.mxu0 0.0
  %129 = vmatpush1.msra.mxu0 0.0
  %130 = vmatprep.subr.mxu0 0.0
  %131 = vmatpush1.msra.mxu0 0.0
  %132 = vmatprep.subr.mxu0 0.0
  %133 = vmatpush1.msra.mxu0 0.0
  %134 = vmatprep.subr.mxu0 0.0
  %135 = vmatpush1.msra.mxu0 0.0
  %136 = vmatprep.subr.mxu0 0.0
  %137 = vmatpush1.msra.mxu0 0.0
  %138 = vmatprep.mubr.f32.mxu0 0.0
  %139 = vmatmul.mubr.f32.gmra.mrb[0].mxu0 %v69
  %v140 = vpop.f32.mrb[0].mxu0
  %v141 = vadd.f32 %v60, %v140
  %v142 = vpop.f32.mrb[0].mxu0
  %v143 = vadd.f32 %v60, %v142
  %144 = vmatprep.mubr.f32.mxu0 0.0
  %145 = vmatmul.mubr.f32.gmra.mrb[0].mxu0 %v72
  %v146 = vpop.f32.mrb[0].mxu0
  %v147 = vadd.f32 %v65, %v146
  %v148 = vpop.f32.mrb[0].mxu0
  %v149 = vadd.f32 %v65, %v148
  %150 = vdwg.mxu0
  %v151 = vmax.f32 %v141, 0.0
  %v152 = vmax.f32 %v143, 0.0
  %v153 = vmax.f32 %v147, 0.0
  %v154 = vmax.f32 %v149, 0.0
  %155 = vst [vmem:[%s9] sm:$0xff] %v151
  %vm156 = vcmask 916480
  %157 = vst.msk [vmem:[%s9 + $0x8] sm:$0xff] %vm156, %v152
  %158 = vst [vmem:[%s9 + $0x10] sm:$0xff] %v153
  %159 = vst.msk [vmem:[%s9 + $0x18] sm:$0xff] %vm156, %v154
  %v160 = vld [vmem:[%s4] sm:$0xff]
  %v161 = vld [vmem:[%s4 + $0x8] sm:$0xff]
  %v162 = vld [vmem:[%s3] sm:$0xff]
  %v163 = vld [vmem:[%s3 + $0x8] sm:$0xff]
  %v164 = vld [vmem:[%s3 + $0x10] sm:$0xff]
  %v165 = vld [vmem:[%s3 + $0x18] sm:$0xff]
  %v166 = vld [vmem:[%s3 + $0x20] sm:$0xff]
  %v167 = vld [vmem:[%s3 + $0x28] sm:$0xff]
  %v168 = vld [vmem:[%s3 + $0x30] sm:$0xff]
  %v169 = vld [vmem:[%s3 + $0x38] sm:$0xff]
  %v170 = vld [vmem:[%s3 + $0x40] sm:$0xff]
  %v171 = vld [vmem:[%s3 + $0x48] sm:$0xff]
  %v172 = vld [vmem:[%s3 + $0x50] sm:$0xff]
  %v173 = vld [vmem:[%s3 + $0x58] sm:$0xff]
  %v174 = vld [vmem:[%s3 + $0x60] sm:$0xff]
  %v175 = vld [vmem:[%s3 + $0x68] sm:$0xff]
  %v176 = vld [vmem:[%s3 + $0x70] sm:$0xff]
  %v177 = vld [vmem:[%s3 + $0x78] sm:$0xff]
  %v178 = vld [vmem:[%s3 + $0x80] sm:$0xff]
  %v179 = vld [vmem:[%s3 + $0x88] sm:$0xff]
  %v180 = vld [vmem:[%s3 + $0x90] sm:$0xff]
  %v181 = vld [vmem:[%s3 + $0x98] sm:$0xff]
  %v182 = vld [vmem:[%s3 + $0xa0] sm:$0xff]
  %v183 = vld [vmem:[%s3 + $0xa8] sm:$0xff]
  %v184 = vld [vmem:[%s3 + $0xb0] sm:$0xff]
  %v185 = vld [vmem:[%s3 + $0xb8] sm:$0xff]
  %v186 = vld [vmem:[%s3 + $0xc0] sm:$0xff]
  %v187 = vld [vmem:[%s3 + $0xc8] sm:$0xff]
  %v188 = vld [vmem:[%s3 + $0xd0] sm:$0xff]
  %v189 = vld [vmem:[%s3 + $0xd8] sm:$0xff]
  %v190 = vld [vmem:[%s3 + $0xe0] sm:$0xff]
  %v191 = vld [vmem:[%s3 + $0xe8] sm:$0xff]
  %v192 = vld [vmem:[%s3 + $0xf0] sm:$0xff]
  %v193 = vld [vmem:[%s3 + $0xf8] sm:$0xff]
  %v194 = vld [vmem:[%s3 + $0x100] sm:$0xff]
  %v195 = vld [vmem:[%s3 + $0x108] sm:$0xff]
  %v196 = vld [vmem:[%s3 + $0x110] sm:$0xff]
  %v197 = vld [vmem:[%s3 + $0x118] sm:$0xff]
  %v198 = vld [vmem:[%s3 + $0x120] sm:$0xff]
  %v199 = vld [vmem:[%s3 + $0x128] sm:$0xff]
  %v200 = vld [vmem:[%s3 + $0x130] sm:$0xff]
  %v201 = vld [vmem:[%s3 + $0x138] sm:$0xff]
  %v202 = vld [vmem:[%s3 + $0x140] sm:$0xff]
  %v203 = vld [vmem:[%s3 + $0x148] sm:$0xff]
  %v204 = vld [vmem:[%s3 + $0x150] sm:$0xff]
  %v205 = vld [vmem:[%s3 + $0x158] sm:$0xff]
  %v206 = vld [vmem:[%s3 + $0x160] sm:$0xff]
  %v207 = vld [vmem:[%s3 + $0x168] sm:$0xff]
  %v208 = vld [vmem:[%s3 + $0x170] sm:$0xff]
  %v209 = vld [vmem:[%s3 + $0x178] sm:$0xff]
  %v210 = vld [vmem:[%s5] sm:$0xff]
  %v211 = vld [vmem:[%s5 + $0x8] sm:$0xff]
  %213 = vset.pattern.permute.xlu0 0
  %214 = vperm.xlu0 %213, %v210
  %v215 = vpop.permute.xlu0 %214
  %218 = vset.pattern.permute.xlu0 0
  %219 = vperm.xlu0 %218, %v211
  %v220 = vpop.permute.xlu0 %219
  %222 = vmatprep.subr.mxu0 %v163
  %223 = vmatpush1.msra.mxu0 %v162
  %224 = vmatprep.subr.mxu0 %v166
  %225 = vmatpush1.msra.mxu0 %v165
  %226 = vmatprep.subr.mxu0 %v169
  %227 = vmatpush1.msra.mxu0 %v168
  %228 = vmatprep.subr.mxu0 %v172
  %229 = vmatpush1.msra.mxu0 %v171
  %230 = vmatprep.subr.mxu0 %v175
  %231 = vmatpush1.msra.mxu0 %v174
  %232 = vmatprep.subr.mxu0 %v178
  %233 = vmatpush1.msra.mxu0 %v177
  %234 = vmatprep.subr.mxu0 %v181
  %235 = vmatpush1.msra.mxu0 %v180
  %236 = vmatprep.subr.mxu0 %v184
  %237 = vmatpush1.msra.mxu0 %v183
  %238 = vmatprep.subr.mxu0 %v187
  %239 = vmatpush1.msra.mxu0 %v186
  %240 = vmatprep.subr.mxu0 %v190
  %241 = vmatpush1.msra.mxu0 %v189
  %242 = vmatprep.subr.mxu0 %v193
  %243 = vmatpush1.msra.mxu0 %v192
  %244 = vmatprep.subr.mxu0 %v196
  %245 = vmatpush1.msra.mxu0 %v195
  %246 = vmatprep.subr.mxu0 %v199
  %247 = vmatpush1.msra.mxu0 %v198
  %248 = vmatprep.subr.mxu0 %v202
  %249 = vmatpush1.msra.mxu0 %v201
  %250 = vmatprep.subr.mxu0 %v205
  %251 = vmatpush1.msra.mxu0 %v204
  %252 = vmatprep.subr.mxu0 %v208
  %253 = vmatpush1.msra.mxu0 %v207
  %254 = vmatprep.subr.mxu0 0.0
  %255 = vmatpush1.msra.mxu0 0.0
  %256 = vmatprep.subr.mxu0 0.0
  %257 = vmatpush1.msra.mxu0 0.0
  %258 = vmatprep.subr.mxu0 0.0
  %259 = vmatpush1.msra.mxu0 0.0
  %260 = vmatprep.subr.mxu0 0.0
  %261 = vmatpush1.msra.mxu0 0.0
  %262 = vmatprep.subr.mxu0 0.0
  %263 = vmatpush1.msra.mxu0 0.0
  %264 = vmatprep.subr.mxu0 0.0
  %265 = vmatpush1.msra.mxu0 0.0
  %266 = vmatprep.subr.mxu0 0.0
  %267 = vmatpush1.msra.mxu0 0.0
  %268 = vmatprep.subr.mxu0 0.0
  %269 = vmatpush1.msra.mxu0 0.0
  %270 = vmatprep.subr.mxu0 0.0
  %271 = vmatpush1.msra.mxu0 0.0
  %272 = vmatprep.subr.mxu0 0.0
  %273 = vmatpush1.msra.mxu0 0.0
  %274 = vmatprep.subr.mxu0 0.0
  %275 = vmatpush1.msra.mxu0 0.0
  %276 = vmatprep.subr.mxu0 0.0
  %277 = vmatpush1.msra.mxu0 0.0
  %278 = vmatprep.subr.mxu0 0.0
  %279 = vmatpush1.msra.mxu0 0.0
  %280 = vmatprep.subr.mxu0 0.0
  %281 = vmatpush1.msra.mxu0 0.0
  %282 = vmatprep.subr.mxu0 0.0
  %283 = vmatpush1.msra.mxu0 0.0
  %284 = vmatprep.subr.mxu0 0.0
  %285 = vmatpush1.msra.mxu0 0.0
  %286 = vmatprep.mubr.f32.mxu0 0.0
  %287 = vmatmul.mubr.f32.gmra.mrb[0].mxu0 %v160
  %v288 = vpop.f32.mrb[0].mxu0
  %v289 = vadd.f32 %v215, %v288
  %v290 = vpop.f32.mrb[0].mxu0
  %v291 = vadd.f32 %v215, %v290
  %292 = vmatprep.mubr.f32.mxu0 0.0
  %293 = vmatmul.mubr.f32.gmra.mrb[0].mxu0 %v161
  %v294 = vpop.f32.mrb[0].mxu0
  %v295 = vadd.f32 %v220, %v294
  %v296 = vpop.f32.mrb[0].mxu0
  %v297 = vadd.f32 %v220, %v296
  %298 = vdwg.mxu0
  %299 = vmatprep.subr.mxu0 0.0
  %300 = vmatpush1.msra.mxu0 %v164
  %301 = vmatprep.subr.mxu0 0.0
  %302 = vmatpush1.msra.mxu0 %v167
  %303 = vmatprep.subr.mxu0 0.0
  %304 = vmatpush1.msra.mxu0 %v170
  %305 = vmatprep.subr.mxu0 0.0
  %306 = vmatpush1.msra.mxu0 %v173
  %307 = vmatprep.subr.mxu0 0.0
  %308 = vmatpush1.msra.mxu0 %v176
  %309 = vmatprep.subr.mxu0 0.0
  %310 = vmatpush1.msra.mxu0 %v179
  %311 = vmatprep.subr.mxu0 0.0
  %312 = vmatpush1.msra.mxu0 %v182
  %313 = vmatprep.subr.mxu0 0.0
  %314 = vmatpush1.msra.mxu0 %v185
  %315 = vmatprep.subr.mxu0 0.0
  %316 = vmatpush1.msra.mxu0 %v188
  %317 = vmatprep.subr.mxu0 0.0
  %318 = vmatpush1.msra.mxu0 %v191
  %319 = vmatprep.subr.mxu0 0.0
  %320 = vmatpush1.msra.mxu0 %v194
  %321 = vmatprep.subr.mxu0 0.0
  %322 = vmatpush1.msra.mxu0 %v197
  %323 = vmatprep.subr.mxu0 0.0
  %324 = vmatpush1.msra.mxu0 %v200
  %325 = vmatprep.subr.mxu0 0.0
  %326 = vmatpush1.msra.mxu0 %v203
  %327 = vmatprep.subr.mxu0 0.0
  %328 = vmatpush1.msra.mxu0 %v206
  %329 = vmatprep.subr.mxu0 0.0
  %330 = vmatpush1.msra.mxu0 %v209
  %331 = vmatprep.subr.mxu0 0.0
  %332 = vmatpush1.msra.mxu0 0.0
  %333 = vmatprep.subr.mxu0 0.0
  %334 = vmatpush1.msra.mxu0 0.0
  %335 = vmatprep.subr.mxu0 0.0
  %336 = vmatpush1.msra.mxu0 0.0
  %337 = vmatprep.subr.mxu0 0.0
  %338 = vmatpush1.msra.mxu0 0.0
  %339 = vmatprep.subr.mxu0 0.0
  %340 = vmatpush1.msra.mxu0 0.0
  %341 = vmatprep.subr.mxu0 0.0
  %342 = vmatpush1.msra.mxu0 0.0
  %343 = vmatprep.subr.mxu0 0.0
  %344 = vmatpush1.msra.mxu0 0.0
  %345 = vmatprep.subr.mxu0 0.0
  %346 = vmatpush1.msra.mxu0 0.0
  %347 = vmatprep.subr.mxu0 0.0
  %348 = vmatpush1.msra.mxu0 0.0
  %349 = vmatprep.subr.mxu0 0.0
  %350 = vmatpush1.msra.mxu0 0.0
  %351 = vmatprep.subr.mxu0 0.0
  %352 = vmatpush1.msra.mxu0 0.0
  %353 = vmatprep.subr.mxu0 0.0
  %354 = vmatpush1.msra.mxu0 0.0
  %355 = vmatprep.subr.mxu0 0.0
  %356 = vmatpush1.msra.mxu0 0.0
  %357 = vmatprep.subr.mxu0 0.0
  %358 = vmatpush1.msra.mxu0 0.0
  %359 = vmatprep.subr.mxu0 0.0
  %360 = vmatpush1.msra.mxu0 0.0
  %361 = vmatprep.subr.mxu0 0.0
  %362 = vmatpush1.msra.mxu0 0.0
  %363 = vmatprep.mubr.f32.mxu0 0.0
  %364 = vmatmul.mubr.f32.gmra.mrb[0].mxu0 %v160
  %v365 = vpop.f32.mrb[0].mxu0
  %v366 = vadd.f32 %v215, %v365
  %v367 = vpop.f32.mrb[0].mxu0
  %368 = vmatprep.mubr.f32.mxu0 0.0
  %369 = vmatmul.mubr.f32.gmra.mrb[0].mxu0 %v161
  %v370 = vpop.f32.mrb[0].mxu0
  %v371 = vadd.f32 %v220, %v370
  %v372 = vpop.f32.mrb[0].mxu0
  %373 = vdwg.mxu0
  %v374 = vmax.f32 %v289, 0.0
  %v375 = vmax.f32 %v291, 0.0
  %v376 = vmax.f32 %v366, 0.0
  %v377 = vmax.f32 %v295, 0.0
  %v378 = vmax.f32 %v297, 0.0
  %v379 = vmax.f32 %v371, 0.0
  %380 = vst [vmem:[%s10] sm:$0xff] %v374
  %381 = vst [vmem:[%s10 + $0x8] sm:$0xff] %v375
  %vm382 = vcmask 244736
  %383 = vst.msk [vmem:[%s10 + $0x10] sm:$0xff] %vm382, %v376
  %384 = vst [vmem:[%s10 + $0x18] sm:$0xff] %v377
  %385 = vst [vmem:[%s10 + $0x20] sm:$0xff] %v378
  %386 = vst.msk [vmem:[%s10 + $0x28] sm:$0xff] %vm382, %v379
  %v387 = vld [vmem:[%s7] sm:$0xff]
  %v388 = vld [vmem:[%s7 + $0x8] sm:$0xff]
  %v389 = vld [vmem:[%s7 + $0x10] sm:$0xff]
  %v390 = vld [vmem:[%s7 + $0x18] sm:$0xff]
  %v391 = vld [vmem:[%s6] sm:$0xff]
  %v392 = vld [vmem:[%s6 + $0x8] sm:$0xff]
  %v393 = vld [vmem:[%s6 + $0x10] sm:$0xff]
  %v394 = vld [vmem:[%s6 + $0x18] sm:$0xff]
  %v395 = vld [vmem:[%s6 + $0x20] sm:$0xff]
  %v396 = vld [vmem:[%s6 + $0x28] sm:$0xff]
  %v397 = vld [vmem:[%s6 + $0x30] sm:$0xff]
  %v398 = vld [vmem:[%s6 + $0x38] sm:$0xff]
  %v399 = vld [vmem:[%s6 + $0x40] sm:$0xff]
  %v400 = vld [vmem:[%s6 + $0x48] sm:$0xff]
  %v401 = vld [vmem:[%s6 + $0x50] sm:$0xff]
  %v402 = vld [vmem:[%s6 + $0x58] sm:$0xff]
  %v403 = vld [vmem:[%s6 + $0x60] sm:$0xff]
  %v404 = vld [vmem:[%s6 + $0x68] sm:$0xff]
  %v405 = vld [vmem:[%s6 + $0x70] sm:$0xff]
  %v406 = vld [vmem:[%s6 + $0x78] sm:$0xff]
  %v407 = vld [vmem:[%s6 + $0x80] sm:$0xff]
  %v408 = vld [vmem:[%s6 + $0x88] sm:$0xff]
  %v409 = vld [vmem:[%s6 + $0x90] sm:$0xff]
  %v410 = vld [vmem:[%s6 + $0x98] sm:$0xff]
  %v411 = vld [vmem:[%s6 + $0xa0] sm:$0xff]
  %v412 = vld [vmem:[%s6 + $0xa8] sm:$0xff]
  %v413 = vld [vmem:[%s6 + $0xb0] sm:$0xff]
  %v414 = vld [vmem:[%s6 + $0xb8] sm:$0xff]
  %v415 = vld [vmem:[%s6 + $0xc0] sm:$0xff]
  %v416 = vld [vmem:[%s6 + $0xc8] sm:$0xff]
  %v417 = vld [vmem:[%s6 + $0xd0] sm:$0xff]
  %v418 = vld [vmem:[%s6 + $0xd8] sm:$0xff]
  %v419 = vld [vmem:[%s6 + $0xe0] sm:$0xff]
  %v420 = vld [vmem:[%s6 + $0xe8] sm:$0xff]
  %v421 = vld [vmem:[%s6 + $0xf0] sm:$0xff]
  %v422 = vld [vmem:[%s6 + $0xf8] sm:$0xff]
  %v423 = vld [vmem:[%s6 + $0x100] sm:$0xff]
  %v424 = vld [vmem:[%s6 + $0x108] sm:$0xff]
  %v425 = vld [vmem:[%s6 + $0x110] sm:$0xff]
  %v426 = vld [vmem:[%s6 + $0x118] sm:$0xff]
  %v427 = vld [vmem:[%s6 + $0x120] sm:$0xff]
  %v428 = vld [vmem:[%s6 + $0x128] sm:$0xff]
  %v429 = vld [vmem:[%s6 + $0x130] sm:$0xff]
  %v430 = vld [vmem:[%s6 + $0x138] sm:$0xff]
  %v431 = vld [vmem:[%s6 + $0x140] sm:$0xff]
  %v432 = vld [vmem:[%s6 + $0x148] sm:$0xff]
  %v433 = vld [vmem:[%s6 + $0x150] sm:$0xff]
  %v434 = vld [vmem:[%s6 + $0x158] sm:$0xff]
  %v435 = vld [vmem:[%s6 + $0x160] sm:$0xff]
  %v436 = vld [vmem:[%s6 + $0x168] sm:$0xff]
  %v437 = vld [vmem:[%s6 + $0x170] sm:$0xff]
  %v438 = vld [vmem:[%s6 + $0x178] sm:$0xff]
  %v439 = vld [vmem:[%s6 + $0x180] sm:$0xff]
  %v440 = vld [vmem:[%s6 + $0x188] sm:$0xff]
  %v441 = vld [vmem:[%s6 + $0x190] sm:$0xff]
  %v442 = vld [vmem:[%s6 + $0x198] sm:$0xff]
  %v443 = vld [vmem:[%s6 + $0x1a0] sm:$0xff]
  %v444 = vld [vmem:[%s6 + $0x1a8] sm:$0xff]
  %v445 = vld [vmem:[%s6 + $0x1b0] sm:$0xff]
  %v446 = vld [vmem:[%s6 + $0x1b8] sm:$0xff]
  %v447 = vld [vmem:[%s6 + $0x1c0] sm:$0xff]
  %v448 = vld [vmem:[%s6 + $0x1c8] sm:$0xff]
  %v449 = vld [vmem:[%s6 + $0x1d0] sm:$0xff]
  %v450 = vld [vmem:[%s6 + $0x1d8] sm:$0xff]
  %v451 = vld [vmem:[%s6 + $0x1e0] sm:$0xff]
  %v452 = vld [vmem:[%s6 + $0x1e8] sm:$0xff]
  %v453 = vld [vmem:[%s6 + $0x1f0] sm:$0xff]
  %v454 = vld [vmem:[%s6 + $0x1f8] sm:$0xff]
  %v455 = vld [vmem:[%s6 + $0x200] sm:$0xff]
  %v456 = vld [vmem:[%s6 + $0x208] sm:$0xff]
  %v457 = vld [vmem:[%s6 + $0x210] sm:$0xff]
  %v458 = vld [vmem:[%s6 + $0x218] sm:$0xff]
  %v459 = vld [vmem:[%s6 + $0x220] sm:$0xff]
  %v460 = vld [vmem:[%s6 + $0x228] sm:$0xff]
  %v461 = vld [vmem:[%s6 + $0x230] sm:$0xff]
  %v462 = vld [vmem:[%s6 + $0x238] sm:$0xff]
  %v463 = vld [vmem:[%s6 + $0x240] sm:$0xff]
  %v464 = vld [vmem:[%s6 + $0x248] sm:$0xff]
  %v465 = vld [vmem:[%s6 + $0x250] sm:$0xff]
  %v466 = vld [vmem:[%s6 + $0x258] sm:$0xff]
  %v467 = vld [vmem:[%s6 + $0x260] sm:$0xff]
  %v468 = vld [vmem:[%s6 + $0x268] sm:$0xff]
  %v469 = vld [vmem:[%s6 + $0x270] sm:$0xff]
  %v470 = vld [vmem:[%s6 + $0x278] sm:$0xff]
  %v471 = vld [vmem:[%s6 + $0x280] sm:$0xff]
  %v472 = vld [vmem:[%s6 + $0x288] sm:$0xff]
  %v473 = vld [vmem:[%s6 + $0x290] sm:$0xff]
  %v474 = vld [vmem:[%s6 + $0x298] sm:$0xff]
  %v475 = vld [vmem:[%s6 + $0x2a0] sm:$0xff]
  %v476 = vld [vmem:[%s6 + $0x2a8] sm:$0xff]
  %v477 = vld [vmem:[%s6 + $0x2b0] sm:$0xff]
  %v478 = vld [vmem:[%s6 + $0x2b8] sm:$0xff]
  %v479 = vld [vmem:[%s6 + $0x2c0] sm:$0xff]
  %v480 = vld [vmem:[%s6 + $0x2c8] sm:$0xff]
  %v481 = vld [vmem:[%s6 + $0x2d0] sm:$0xff]
  %v482 = vld [vmem:[%s6 + $0x2d8] sm:$0xff]
  %v483 = vld [vmem:[%s6 + $0x2e0] sm:$0xff]
  %v484 = vld [vmem:[%s6 + $0x2e8] sm:$0xff]
  %v485 = vld [vmem:[%s6 + $0x2f0] sm:$0xff]
  %v486 = vld [vmem:[%s6 + $0x2f8] sm:$0xff]
  %v487 = vld [vmem:[%s6 + $0x300] sm:$0xff]
  %v488 = vld [vmem:[%s6 + $0x308] sm:$0xff]
  %v489 = vld [vmem:[%s6 + $0x310] sm:$0xff]
  %v490 = vld [vmem:[%s6 + $0x318] sm:$0xff]
  %v491 = vld [vmem:[%s8] sm:$0xff]
  %v492 = vld [vmem:[%s8 + $0x8] sm:$0xff]
  %494 = vset.pattern.permute.xlu0 0
  %495 = vperm.xlu0 %494, %v491
  %v496 = vpop.permute.xlu0 %495
  %499 = vset.pattern.permute.xlu0 0
  %500 = vperm.xlu0 %499, %v492
  %v501 = vpop.permute.xlu0 %500
  %v504 = vsel %vm67, %v388, 0
  %v507 = vsel %vm67, %v390, 0
  %509 = vmatprep.subr.mxu0 %v392
  %510 = vmatpush1.msra.mxu0 %v391
  %511 = vmatprep.subr.mxu0 %v396
  %512 = vmatpush1.msra.mxu0 %v395
  %513 = vmatprep.subr.mxu0 %v400
  %514 = vmatpush1.msra.mxu0 %v399
  %515 = vmatprep.subr.mxu0 %v404
  %516 = vmatpush1.msra.mxu0 %v403
  %517 = vmatprep.subr.mxu0 %v408
  %518 = vmatpush1.msra.mxu0 %v407
  %519 = vmatprep.subr.mxu0 %v412
  %520 = vmatpush1.msra.mxu0 %v411
  %521 = vmatprep.subr.mxu0 %v416
  %522 = vmatpush1.msra.mxu0 %v415
  %523 = vmatprep.subr.mxu0 %v420
  %524 = vmatpush1.msra.mxu0 %v419
  %525 = vmatprep.subr.mxu0 %v424
  %526 = vmatpush1.msra.mxu0 %v423
  %527 = vmatprep.subr.mxu0 %v428
  %528 = vmatpush1.msra.mxu0 %v427
  %529 = vmatprep.subr.mxu0 %v432
  %530 = vmatpush1.msra.mxu0 %v431
  %531 = vmatprep.subr.mxu0 %v436
  %532 = vmatpush1.msra.mxu0 %v435
  %533 = vmatprep.subr.mxu0 %v440
  %534 = vmatpush1.msra.mxu0 %v439
  %535 = vmatprep.subr.mxu0 %v444
  %536 = vmatpush1.msra.mxu0 %v443
  %537 = vmatprep.subr.mxu0 %v448
  %538 = vmatpush1.msra.mxu0 %v447
  %539 = vmatprep.subr.mxu0 %v452
  %540 = vmatpush1.msra.mxu0 %v451
  %541 = vmatprep.subr.mxu0 %v456
  %542 = vmatpush1.msra.mxu0 %v455
  %543 = vmatprep.subr.mxu0 %v460
  %544 = vmatpush1.msra.mxu0 %v459
  %545 = vmatprep.subr.mxu0 %v464
  %546 = vmatpush1.msra.mxu0 %v463
  %547 = vmatprep.subr.mxu0 %v468
  %548 = vmatpush1.msra.mxu0 %v467
  %549 = vmatprep.subr.mxu0 %v472
  %550 = vmatpush1.msra.mxu0 %v471
  %551 = vmatprep.subr.mxu0 %v476
  %552 = vmatpush1.msra.mxu0 %v475
  %553 = vmatprep.subr.mxu0 %v480
  %554 = vmatpush1.msra.mxu0 %v479
  %555 = vmatprep.subr.mxu0 %v484
  %556 = vmatpush1.msra.mxu0 %v483
  %557 = vmatprep.subr.mxu0 %v488
  %558 = vmatpush1.msra.mxu0 %v487
  %559 = vmatprep.subr.mxu0 0.0
  %560 = vmatpush1.msra.mxu0 0.0
  %561 = vmatprep.subr.mxu0 0.0
  %562 = vmatpush1.msra.mxu0 0.0
  %563 = vmatprep.subr.mxu0 0.0
  %564 = vmatpush1.msra.mxu0 0.0
  %565 = vmatprep.subr.mxu0 0.0
  %566 = vmatpush1.msra.mxu0 0.0
  %567 = vmatprep.subr.mxu0 0.0
  %568 = vmatpush1.msra.mxu0 0.0
  %569 = vmatprep.subr.mxu0 0.0
  %570 = vmatpush1.msra.mxu0 0.0
  %571 = vmatprep.subr.mxu0 0.0
  %572 = vmatpush1.msra.mxu0 0.0
  %573 = vmatprep.mubr.f32.mxu0 %v504
  %574 = vmatmul.mubr.f32.gmra.mrb[0].mxu0 %v387
  %v575 = vpop.f32.mrb[0].mxu0
  %v576 = vadd.f32 %v496, %v575
  %v577 = vpop.f32.mrb[0].mxu0
  %v578 = vadd.f32 %v496, %v577
  %579 = vmatprep.mubr.f32.mxu0 %v507
  %580 = vmatmul.mubr.f32.gmra.mrb[0].mxu0 %v389
  %v581 = vpop.f32.mrb[0].mxu0
  %v582 = vadd.f32 %v501, %v581
  %v583 = vpop.f32.mrb[0].mxu0
  %v584 = vadd.f32 %v501, %v583
  %585 = vdwg.mxu0
  %586 = vmatprep.subr.mxu0 %v394
  %587 = vmatpush1.msra.mxu0 %v393
  %588 = vmatprep.subr.mxu0 %v398
  %589 = vmatpush1.msra.mxu0 %v397
  %590 = vmatprep.subr.mxu0 %v402
  %591 = vmatpush1.msra.mxu0 %v401
  %592 = vmatprep.subr.mxu0 %v406
  %593 = vmatpush1.msra.mxu0 %v405
  %594 = vmatprep.subr.mxu0 %v410
  %595 = vmatpush1.msra.mxu0 %v409
  %596 = vmatprep.subr.mxu0 %v414
  %597 = vmatpush1.msra.mxu0 %v413
  %598 = vmatprep.subr.mxu0 %v418
  %599 = vmatpush1.msra.mxu0 %v417
  %600 = vmatprep.subr.mxu0 %v422
  %601 = vmatpush1.msra.mxu0 %v421
  %602 = vmatprep.subr.mxu0 %v426
  %603 = vmatpush1.msra.mxu0 %v425
  %604 = vmatprep.subr.mxu0 %v430
  %605 = vmatpush1.msra.mxu0 %v429
  %606 = vmatprep.subr.mxu0 %v434
  %607 = vmatpush1.msra.mxu0 %v433
  %608 = vmatprep.subr.mxu0 %v438
  %609 = vmatpush1.msra.mxu0 %v437
  %610 = vmatprep.subr.mxu0 %v442
  %611 = vmatpush1.msra.mxu0 %v441
  %612 = vmatprep.subr.mxu0 %v446
  %613 = vmatpush1.msra.mxu0 %v445
  %614 = vmatprep.subr.mxu0 %v450
  %615 = vmatpush1.msra.mxu0 %v449
  %616 = vmatprep.subr.mxu0 %v454
  %617 = vmatpush1.msra.mxu0 %v453
  %618 = vmatprep.subr.mxu0 %v458
  %619 = vmatpush1.msra.mxu0 %v457
  %620 = vmatprep.subr.mxu0 %v462
  %621 = vmatpush1.msra.mxu0 %v461
  %622 = vmatprep.subr.mxu0 %v466
  %623 = vmatpush1.msra.mxu0 %v465
  %624 = vmatprep.subr.mxu0 %v470
  %625 = vmatpush1.msra.mxu0 %v469
  %626 = vmatprep.subr.mxu0 %v474
  %627 = vmatpush1.msra.mxu0 %v473
  %628 = vmatprep.subr.mxu0 %v478
  %629 = vmatpush1.msra.mxu0 %v477
  %630 = vmatprep.subr.mxu0 %v482
  %631 = vmatpush1.msra.mxu0 %v481
  %632 = vmatprep.subr.mxu0 %v486
  %633 = vmatpush1.msra.mxu0 %v485
  %634 = vmatprep.subr.mxu0 %v490
  %635 = vmatpush1.msra.mxu0 %v489
  %636 = vmatprep.subr.mxu0 0.0
  %637 = vmatpush1.msra.mxu0 0.0
  %638 = vmatprep.subr.mxu0 0.0
  %639 = vmatpush1.msra.mxu0 0.0
  %640 = vmatprep.subr.mxu0 0.0
  %641 = vmatpush1.msra.mxu0 0.0
  %642 = vmatprep.subr.mxu0 0.0
  %643 = vmatpush1.msra.mxu0 0.0
  %644 = vmatprep.subr.mxu0 0.0
  %645 = vmatpush1.msra.mxu0 0.0
  %646 = vmatprep.subr.mxu0 0.0
  %647 = vmatpush1.msra.mxu0 0.0
  %648 = vmatprep.subr.mxu0 0.0
  %649 = vmatpush1.msra.mxu0 0.0
  %650 = vmatprep.mubr.f32.mxu0 %v504
  %651 = vmatmul.mubr.f32.gmra.mrb[0].mxu0 %v387
  %v652 = vpop.f32.mrb[0].mxu0
  %v653 = vadd.f32 %v496, %v652
  %v654 = vpop.f32.mrb[0].mxu0
  %v655 = vadd.f32 %v496, %v654
  %656 = vmatprep.mubr.f32.mxu0 %v507
  %657 = vmatmul.mubr.f32.gmra.mrb[0].mxu0 %v389
  %v658 = vpop.f32.mrb[0].mxu0
  %v659 = vadd.f32 %v501, %v658
  %v660 = vpop.f32.mrb[0].mxu0
  %v661 = vadd.f32 %v501, %v660
  %662 = vdwg.mxu0
  %v663 = vmax.f32 %v576, 0.0
  %v664 = vmax.f32 %v578, 0.0
  %v665 = vmax.f32 %v653, 0.0
  %v666 = vmax.f32 %v655, 0.0
  %v667 = vmax.f32 %v582, 0.0
  %v668 = vmax.f32 %v584, 0.0
  %v669 = vmax.f32 %v659, 0.0
  %v670 = vmax.f32 %v661, 0.0
  %671 = vst [vmem:[%s11] sm:$0xff] %v663
  %672 = vst [vmem:[%s11 + $0x8] sm:$0xff] %v664
  %673 = vst [vmem:[%s11 + $0x10] sm:$0xff] %v665
  %vm674 = vcmask 48128
  %675 = vst.msk [vmem:[%s11 + $0x18] sm:$0xff] %vm674, %v666
  %676 = vst [vmem:[%s11 + $0x20] sm:$0xff] %v667
  %677 = vst [vmem:[%s11 + $0x28] sm:$0xff] %v668
  %678 = vst [vmem:[%s11 + $0x30] sm:$0xff] %v669
  %679 = vst.msk [vmem:[%s11 + $0x38] sm:$0xff] %vm674, %v670
  // Predicated region
  $region38: #{b_seq_forward.4} parent=0 // pred_check
    _
  $region39: #{b_seq_forward.4} parent=0 // pred_check_branch
    %681 = sbr.rel (0) target = $region41
  $region40: #{b_seq_forward.4} parent=0 // pred_region
    _
  $region41: #{b_seq_forward.4} parent=0 // pred_fallthru
    _
  // Predicated region
  $region42: #{b_seq_forward.4} parent=0 // pred_check
    _
  $region43: #{b_seq_forward.4} parent=0 // pred_check_branch
    %683 = sbr.rel (0) target = $region45
  $region44: #{b_seq_forward.4} parent=0 // pred_region
    _
  $region45: #{b_seq_forward.4} parent=0 // pred_fallthru
    _
  // Predicated region
  $region46: #{b_seq_forward.4} parent=0 // pred_check
    _
  $region47: #{b_seq_forward.4} parent=0 // pred_check_branch
    %685 = sbr.rel (0) target = $region49
  $region48: #{b_seq_forward.4} parent=0 // pred_region
    _
  $region49: #{b_seq_forward.4} parent=0 // pred_fallthru
    _
  // Predicated region
  $region50: #{b_seq_forward.4} parent=0 // pred_check
    _
  $region51: #{b_seq_forward.4} parent=0 // pred_check_branch
    %687 = sbr.rel (0) target = $region53
  $region52: #{b_seq_forward.4} parent=0 // pred_region
    _
  $region53: #{b_seq_forward.4} parent=0 // pred_fallthru
    _
  // Predicated region
  $region54: #{b_seq_forward.4} parent=0 // pred_check
    _
  $region55: #{b_seq_forward.4} parent=0 // pred_check_branch
    %689 = sbr.rel (0) target = $region57
  $region56: #{b_seq_forward.4} parent=0 // pred_region
    _
  $region57: #{b_seq_forward.4} parent=0 // pred_fallthru
    _
  // Predicated region
  $region58: #{b_seq_forward.4} parent=0 // pred_check
    _
  $region59: #{b_seq_forward.4} parent=0 // pred_check_branch
    %691 = sbr.rel (0) target = $region61
  $region60: #{b_seq_forward.4} parent=0 // pred_region
    _
  $region61: #{b_seq_forward.4} parent=0 // pred_fallthru
    _

// kernel: b_seq_forward.5
$region0: #{b_seq_forward.5}
  #allocation0 [shape = 'u32[]', space=smem, size = 0x4, offset = 0x4, fixed_abs, tag = 'smem constant byte address 0x4 - core index']
  #allocation1 [shape = 'u32[144,128]{1,0:T(1,128)}', space=vmem, size = 0x12000, scoped, tag = 'internal scratch']
  #allocation2 [shape = 'f32[1664,512]{1,0:T(8,128)}', space=vmem, size = 0x340000, scoped, tag = 'scratch operand']
  #allocation3 [shape = 's32[1]{0}', space=sflag, size = 0x4, scoped, tag = 'scratch operand']
  #allocation6 [shape = 's32[]', space=sflag, size = 0x4, offset = 0, fixed_abs, tag = 'sflag constant byte address 0x0 - dummy sync flag']
  %s0 = inlined_call_operand.vmem [shape: f32[112,18], index: 0, kind: input, shape index: {}]
  %s1 = inlined_call_operand.vmem [shape: f32[18,256], index: 1, kind: input, shape index: {}]
  %s2 = inlined_call_operand.vmem [shape: f32[64,256], index: 2, kind: input, shape index: {}]
  %s3 = inlined_call_operand.vmem [shape: f32[1,256], index: 3, kind: input, shape index: {}]
  %s4 = inlined_call_operand.vmem [shape: f32[128,256], index: 4, kind: input, shape index: {}]
  %s5 = inlined_call_operand.vmem [shape: f32[1,256], index: 5, kind: input, shape index: {}]
  %s6 = inlined_call_operand.vmem [shape: f32[64,32], index: 6, kind: input, shape index: {}]
  %s7 = inlined_call_operand.vmem [shape: f32[1,32], index: 7, kind: input, shape index: {}]
  %s8 = inlined_call_operand.vmem [shape: f32[2,480], index: 8, kind: input, shape index: {}]
  %s9 = inlined_call_operand.vmem [shape: f32[2,480], index: 9, kind: input, shape index: {}]
  %s10 = inlined_call_operand.vmem [shape: f32[2,672], index: 10, kind: input, shape index: {}]
  %s11 = inlined_call_operand.vmem [shape: f32[1664,512], index: 11, kind: input, shape index: {}]
  %s12 = inlined_call_operand.vmem [shape: f32[1,512], index: 12, kind: input, shape index: {}]
  %s13 = inlined_call_operand.vmem [shape: f32[512,64], index: 13, kind: input, shape index: {}]
  %s14 = inlined_call_operand.vmem [shape: f32[1,64], index: 14, kind: input, shape index: {}]
  %s15 = inlined_call_operand.hbm [shape: f32[2,64], index: 15, kind: output, shape index: {}]
  %s16 = sld [smem:[#allocation0]]
  $region100: #{b_seq_forward.5} parent=0
    _
  %s18 = ssub.s32 1, %s16
  %s19 = scalar_select 0, %s18, %s16
  $region1: #{b_seq_forward.5} parent=0
    #allocation4 [shape = 'u8[1024]{0}', space=vmem, size = 0x400, scoped, tag = 'output window, operand 0, single buffered']
    #allocation5 [shape = 's32[1]{0}', space=sflag, size = 0x4, scoped, tag = 'scoped memory for b_seq_forward.5']
    %20 = vsyncpa [#allocation5], 0
    // Predicated region
    $region2: #{b_seq_forward.5} parent=1 // pred_check
      _
    $region3: #{b_seq_forward.5} parent=1 // pred_check_branch
      %22 = sbr.rel (0) target = $region5
    $region4: #{b_seq_forward.5} parent=1 // pred_region
      _
    $region5: #{b_seq_forward.5} parent=1 // pred_fallthru
      _
    // Predicated region
    $region6: #{b_seq_forward.5} parent=1 // pred_check
      _
    $region7: #{b_seq_forward.5} parent=1 // pred_check_branch
      %24 = sbr.rel (0) target = $region9
    $region8: #{b_seq_forward.5} parent=1 // pred_region
      _
    $region9: #{b_seq_forward.5} parent=1 // pred_fallthru
      _
    // Predicated region
    $region10: #{b_seq_forward.5} parent=1 // pred_check
      _
    $region11: #{b_seq_forward.5} parent=1 // pred_check_branch
      %26 = sbr.rel (0) target = $region13
    $region12: #{b_seq_forward.5} parent=1 // pred_region
      _
    $region13: #{b_seq_forward.5} parent=1 // pred_fallthru
      _
    // Predicated region
    $region14: #{b_seq_forward.5} parent=1 // pred_check
      _
    $region15: #{b_seq_forward.5} parent=1 // pred_check_branch
      %28 = sbr.rel (0) target = $region17
    $region16: #{b_seq_forward.5} parent=1 // pred_region
      _
    $region17: #{b_seq_forward.5} parent=1 // pred_fallthru
      _
    // Predicated region
    $region18: #{b_seq_forward.5} parent=1 // pred_check
      _
    $region19: #{b_seq_forward.5} parent=1 // pred_check_branch
      %30 = sbr.rel (0) target = $region21
    $region20: #{b_seq_forward.5} parent=1 // pred_region
      _
    $region21: #{b_seq_forward.5} parent=1 // pred_fallthru
      _
    // Predicated region
    $region22: #{b_seq_forward.5} parent=1 // pred_check
      _
    $region23: #{b_seq_forward.5} parent=1 // pred_check_branch
      %32 = sbr.rel (0) target = $region25
    $region24: #{b_seq_forward.5} parent=1 // pred_region
      _
    $region25: #{b_seq_forward.5} parent=1 // pred_fallthru
      _
    // Predicated region
    $region26: #{b_seq_forward.5} parent=1 // pred_check
      _
    $region27: #{b_seq_forward.5} parent=1 // pred_check_branch
      %34 = sbr.rel (0) target = $region29
    $region28: #{b_seq_forward.5} parent=1 // pred_region
      _
    $region29: #{b_seq_forward.5} parent=1 // pred_fallthru
      _
    // Predicated region
    $region30: #{b_seq_forward.5} parent=1 // pred_check
      _
    $region31: #{b_seq_forward.5} parent=1 // pred_check_branch
      %36 = sbr.rel (0) target = $region33
    $region32: #{b_seq_forward.5} parent=1 // pred_region
      _
    $region33: #{b_seq_forward.5} parent=1 // pred_fallthru
      _
    // Predicated region
    $region34: #{b_seq_forward.5} parent=1 // pred_check
      _
    $region35: #{b_seq_forward.5} parent=1 // pred_check_branch
      %38 = sbr.rel (0) target = $region37
    $region36: #{b_seq_forward.5} parent=1 // pred_region
      _
    $region37: #{b_seq_forward.5} parent=1 // pred_fallthru
      _
    // Predicated region
    $region38: #{b_seq_forward.5} parent=1 // pred_check
      _
    $region39: #{b_seq_forward.5} parent=1 // pred_check_branch
      %40 = sbr.rel (0) target = $region41
    $region40: #{b_seq_forward.5} parent=1 // pred_region
      _
    $region41: #{b_seq_forward.5} parent=1 // pred_fallthru
      _
    // Predicated region
    $region42: #{b_seq_forward.5} parent=1 // pred_check
      _
    $region43: #{b_seq_forward.5} parent=1 // pred_check_branch
      %42 = sbr.rel (0) target = $region45
    $region44: #{b_seq_forward.5} parent=1 // pred_region
      _
    $region45: #{b_seq_forward.5} parent=1 // pred_fallthru
      _
    // Predicated region
    $region46: #{b_seq_forward.5} parent=1 // pred_check
      _
    $region47: #{b_seq_forward.5} parent=1 // pred_check_branch
      %44 = sbr.rel (0) target = $region49
    $region48: #{b_seq_forward.5} parent=1 // pred_region
      _
    $region49: #{b_seq_forward.5} parent=1 // pred_fallthru
      _
    // Predicated region
    $region50: #{b_seq_forward.5} parent=1 // pred_check
      _
    $region51: #{b_seq_forward.5} parent=1 // pred_check_branch
      %46 = sbr.rel (0) target = $region53
    $region52: #{b_seq_forward.5} parent=1 // pred_region
      _
    $region53: #{b_seq_forward.5} parent=1 // pred_fallthru
      _
    // Predicated region
    $region54: #{b_seq_forward.5} parent=1 // pred_check
      _
    $region55: #{b_seq_forward.5} parent=1 // pred_check_branch
      %48 = sbr.rel (0) target = $region57
    $region56: #{b_seq_forward.5} parent=1 // pred_region
      _
    $region57: #{b_seq_forward.5} parent=1 // pred_fallthru
      _
    %p50 = scmp.lt.u32.totalorder 6656, 8
    %p51 = pneg %p50
    // Predicated region
    $region58: #{b_seq_forward.5} parent=1 // pred_check
      _
    $region59: #{b_seq_forward.5} parent=1 // pred_check_branch
      %53 = sbr.rel (%p50) target = $region61
    $region60: #{b_seq_forward.5} parent=1 // pred_region
      %s68 = sand.u32 6656, 7
      %p69 = scmp.eq.s32.totalorder %s68, 0
      // Predicated region
      $region73: #{b_seq_forward.5} parent=60 // pred_check
        %p70 = pneg %p69
      $region74: #{b_seq_forward.5} parent=60 // pred_check_branch
        %72 = sbr.rel (%p70) target = $region76
      $region75: #{b_seq_forward.5} parent=60 // pred_region
        loop: start=0, step=1, limit=1
        $region77: #{b_seq_forward.5} parent=75 // loop_pre_header
          _
        $region78: #{b_seq_forward.5} parent=75 // loop_header
          %s74 = sphi 0, %s78
          %p75 = scmp.ge.s32.totalorder %s74, 1
          %s79 = sphi %s11, %s11
          %s80 = sphi [#allocation2], [#allocation2]
        $region79: #{b_seq_forward.5} parent=75 // loop_header_branch
          %77 = sbr.rel (%p75) target = $region83
        $region80: #{b_seq_forward.5} parent=75 // loop_body
          %v81 = vld [vmem:[%s79] sm:$0xff]
          %82 = vst [vmem:[%s80] sm:$0xff] %v81
          %v83 = vld [vmem:[%s79 + $0x8] sm:$0xff]
          %84 = vst [vmem:[%s80 + $0x8] sm:$0xff] %v83
          %v85 = vld [vmem:[%s79 + $0x10] sm:$0xff]
          %86 = vst [vmem:[%s80 + $0x10] sm:$0xff] %v85
          %v87 = vld [vmem:[%s79 + $0x18] sm:$0xff]
          %88 = vst [vmem:[%s80 + $0x18] sm:$0xff] %v87
          %v89 = vld [vmem:[%s79 + $0x20] sm:$0xff]
          %90 = vst [vmem:[%s80 + $0x20] sm:$0xff] %v89
          %v91 = vld [vmem:[%s79 + $0x28] sm:$0xff]
          %92 = vst [vmem:[%s80 + $0x28] sm:$0xff] %v91
          %v93 = vld [vmem:[%s79 + $0x30] sm:$0xff]
          %94 = vst [vmem:[%s80 + $0x30] sm:$0xff] %v93
          %v95 = vld [vmem:[%s79 + $0x38] sm:$0xff]
          %96 = vst [vmem:[%s80 + $0x38] sm:$0xff] %v95
          %v97 = vld [vmem:[%s79 + $0x40] sm:$0xff]
          %98 = vst [vmem:[%s80 + $0x40] sm:$0xff] %v97
          %v99 = vld [vmem:[%s79 + $0x48] sm:$0xff]
          %100 = vst [vmem:[%s80 + $0x48] sm:$0xff] %v99
          %v101 = vld [vmem:[%s79 + $0x50] sm:$0xff]
          %102 = vst [vmem:[%s80 + $0x50] sm:$0xff] %v101
          %v103 = vld [vmem:[%s79 + $0x58] sm:$0xff]
          %104 = vst [vmem:[%s80 + $0x58] sm:$0xff] %v103
          %v105 = vld [vmem:[%s79 + $0x60] sm:$0xff]
          %106 = vst [vmem:[%s80 + $0x60] sm:$0xff] %v105
          %v107 = vld [vmem:[%s79 + $0x68] sm:$0xff]
          %108 = vst [vmem:[%s80 + $0x68] sm:$0xff] %v107
          %v109 = vld [vmem:[%s79 + $0x70] sm:$0xff]
          %110 = vst [vmem:[%s80 + $0x70] sm:$0xff] %v109
          %v111 = vld [vmem:[%s79 + $0x78] sm:$0xff]
          %112 = vst [vmem:[%s80 + $0x78] sm:$0xff] %v111
          %v113 = vld [vmem:[%s79 + $0x80] sm:$0xff]
          %114 = vst [vmem:[%s80 + $0x80] sm:$0xff] %v113
          %v115 = vld [vmem:[%s79 + $0x88] sm:$0xff]
          %116 = vst [vmem:[%s80 + $0x88] sm:$0xff] %v115
          %v117 = vld [vmem:[%s79 + $0x90] sm:$0xff]
          %118 = vst [vmem:[%s80 + $0x90] sm:$0xff] %v117
          %v119 = vld [vmem:[%s79 + $0x98] sm:$0xff]
          %120 = vst [vmem:[%s80 + $0x98] sm:$0xff] %v119
          %v121 = vld [vmem:[%s79 + $0xa0] sm:$0xff]
          %122 = vst [vmem:[%s80 + $0xa0] sm:$0xff] %v121
          %v123 = vld [vmem:[%s79 + $0xa8] sm:$0xff]
          %124 = vst [vmem:[%s80 + $0xa8] sm:$0xff] %v123
          %v125 = vld [vmem:[%s79 + $0xb0] sm:$0xff]
          %126 = vst [vmem:[%s80 + $0xb0] sm:$0xff] %v125
          %v127 = vld [vmem:[%s79 + $0xb8] sm:$0xff]
          %128 = vst [vmem:[%s80 + $0xb8] sm:$0xff] %v127
          %v129 = vld [vmem:[%s79 + $0xc0] sm:$0xff]
          %130 = vst [vmem:[%s80 + $0xc0] sm:$0xff] %v129
          %v131 = vld [vmem:[%s79 + $0xc8] sm:$0xff]
          %132 = vst [vmem:[%s80 + $0xc8] sm:$0xff] %v131
          %v133 = vld [vmem:[%s79 + $0xd0] sm:$0xff]
          %134 = vst [vmem:[%s80 + $0xd0] sm:$0xff] %v133
          %v135 = vld [vmem:[%s79 + $0xd8] sm:$0xff]
          %136 = vst [vmem:[%s80 + $0xd8] sm:$0xff] %v135
          %v137 = vld [vmem:[%s79 + $0xe0] sm:$0xff]
          %138 = vst [vmem:[%s80 + $0xe0] sm:$0xff] %v137
          %v139 = vld [vmem:[%s79 + $0xe8] sm:$0xff]
          %140 = vst [vmem:[%s80 + $0xe8] sm:$0xff] %v139
          %v141 = vld [vmem:[%s79 + $0xf0] sm:$0xff]
          %142 = vst [vmem:[%s80 + $0xf0] sm:$0xff] %v141
          %v143 = vld [vmem:[%s79 + $0xf8] sm:$0xff]
          %144 = vst [vmem:[%s80 + $0xf8] sm:$0xff] %v143
          %v145 = vld [vmem:[%s79 + $0x100] sm:$0xff]
          %146 = vst [vmem:[%s80 + $0x100] sm:$0xff] %v145
          %v147 = vld [vmem:[%s79 + $0x108] sm:$0xff]
          %148 = vst [vmem:[%s80 + $0x108] sm:$0xff] %v147
          %v149 = vld [vmem:[%s79 + $0x110] sm:$0xff]
          %150 = vst [vmem:[%s80 + $0x110] sm:$0xff] %v149
          %v151 = vld [vmem:[%s79 + $0x118] sm:$0xff]
          %152 = vst [vmem:[%s80 + $0x118] sm:$0xff] %v151
          %v153 = vld [vmem:[%s79 + $0x120] sm:$0xff]
          %154 = vst [vmem:[%s80 + $0x120] sm:$0xff] %v153
          %v155 = vld [vmem:[%s79 + $0x128] sm:$0xff]
          %156 = vst [vmem:[%s80 + $0x128] sm:$0xff] %v155
          %v157 = vld [vmem:[%s79 + $0x130] sm:$0xff]
          %158 = vst [vmem:[%s80 + $0x130] sm:$0xff] %v157
          %v159 = vld [vmem:[%s79 + $0x138] sm:$0xff]
          %160 = vst [vmem:[%s80 + $0x138] sm:$0xff] %v159
          %v161 = vld [vmem:[%s79 + $0x140] sm:$0xff]
          %162 = vst [vmem:[%s80 + $0x140] sm:$0xff] %v161
          %v163 = vld [vmem:[%s79 + $0x148] sm:$0xff]
          %164 = vst [vmem:[%s80 + $0x148] sm:$0xff] %v163
          %v165 = vld [vmem:[%s79 + $0x150] sm:$0xff]
          %166 = vst [vmem:[%s80 + $0x150] sm:$0xff] %v165
          %v167 = vld [vmem:[%s79 + $0x158] sm:$0xff]
          %168 = vst [vmem:[%s80 + $0x158] sm:$0xff] %v167
          %v169 = vld [vmem:[%s79 + $0x160] sm:$0xff]
          %170 = vst [vmem:[%s80 + $0x160] sm:$0xff] %v169
          %v171 = vld [vmem:[%s79 + $0x168] sm:$0xff]
          %172 = vst [vmem:[%s80 + $0x168] sm:$0xff] %v171
          %v173 = vld [vmem:[%s79 + $0x170] sm:$0xff]
          %174 = vst [vmem:[%s80 + $0x170] sm:$0xff] %v173
          %v175 = vld [vmem:[%s79 + $0x178] sm:$0xff]
          %176 = vst [vmem:[%s80 + $0x178] sm:$0xff] %v175
          %v177 = vld [vmem:[%s79 + $0x180] sm:$0xff]
          %178 = vst [vmem:[%s80 + $0x180] sm:$0xff] %v177
          %v179 = vld [vmem:[%s79 + $0x188] sm:$0xff]
          %180 = vst [vmem:[%s80 + $0x188] sm:$0xff] %v179
          %v181 = vld [vmem:[%s79 + $0x190] sm:$0xff]
          %182 = vst [vmem:[%s80 + $0x190] sm:$0xff] %v181
          %v183 = vld [vmem:[%s79 + $0x198] sm:$0xff]
          %184 = vst [vmem:[%s80 + $0x198] sm:$0xff] %v183
          %v185 = vld [vmem:[%s79 + $0x1a0] sm:$0xff]
          %186 = vst [vmem:[%s80 + $0x1a0] sm:$0xff] %v185
          %v187 = vld [vmem:[%s79 + $0x1a8] sm:$0xff]
          %188 = vst [vmem:[%s80 + $0x1a8] sm:$0xff] %v187
          %v189 = vld [vmem:[%s79 + $0x1b0] sm:$0xff]
          %190 = vst [vmem:[%s80 + $0x1b0] sm:$0xff] %v189
          %v191 = vld [vmem:[%s79 + $0x1b8] sm:$0xff]
          %192 = vst [vmem:[%s80 + $0x1b8] sm:$0xff] %v191
          %v193 = vld [vmem:[%s79 + $0x1c0] sm:$0xff]
          %194 = vst [vmem:[%s80 + $0x1c0] sm:$0xff] %v193
          %v195 = vld [vmem:[%s79 + $0x1c8] sm:$0xff]
          %196 = vst [vmem:[%s80 + $0x1c8] sm:$0xff] %v195
          %v197 = vld [vmem:[%s79 + $0x1d0] sm:$0xff]
          %198 = vst [vmem:[%s80 + $0x1d0] sm:$0xff] %v197
          %v199 = vld [vmem:[%s79 + $0x1d8] sm:$0xff]
          %200 = vst [vmem:[%s80 + $0x1d8] sm:$0xff] %v199
          %v201 = vld [vmem:[%s79 + $0x1e0] sm:$0xff]
          %202 = vst [vmem:[%s80 + $0x1e0] sm:$0xff] %v201
          %v203 = vld [vmem:[%s79 + $0x1e8] sm:$0xff]
          %204 = vst [vmem:[%s80 + $0x1e8] sm:$0xff] %v203
          %v205 = vld [vmem:[%s79 + $0x1f0] sm:$0xff]
          %206 = vst [vmem:[%s80 + $0x1f0] sm:$0xff] %v205
          %v207 = vld [vmem:[%s79 + $0x1f8] sm:$0xff]
          %208 = vst [vmem:[%s80 + $0x1f8] sm:$0xff] %v207
          %v209 = vld [vmem:[%s79 + $0x200] sm:$0xff]
          %210 = vst [vmem:[%s80 + $0x200] sm:$0xff] %v209
          %v211 = vld [vmem:[%s79 + $0x208] sm:$0xff]
          %212 = vst [vmem:[%s80 + $0x208] sm:$0xff] %v211
          %v213 = vld [vmem:[%s79 + $0x210] sm:$0xff]
          %214 = vst [vmem:[%s80 + $0x210] sm:$0xff] %v213
          %v215 = vld [vmem:[%s79 + $0x218] sm:$0xff]
          %216 = vst [vmem:[%s80 + $0x218] sm:$0xff] %v215
          %v217 = vld [vmem:[%s79 + $0x220] sm:$0xff]
          %218 = vst [vmem:[%s80 + $0x220] sm:$0xff] %v217
          %v219 = vld [vmem:[%s79 + $0x228] sm:$0xff]
          %220 = vst [vmem:[%s80 + $0x228] sm:$0xff] %v219
          %v221 = vld [vmem:[%s79 + $0x230] sm:$0xff]
          %222 = vst [vmem:[%s80 + $0x230] sm:$0xff] %v221
          %v223 = vld [vmem:[%s79 + $0x238] sm:$0xff]
          %224 = vst [vmem:[%s80 + $0x238] sm:$0xff] %v223
          %v225 = vld [vmem:[%s79 + $0x240] sm:$0xff]
          %226 = vst [vmem:[%s80 + $0x240] sm:$0xff] %v225
          %v227 = vld [vmem:[%s79 + $0x248] sm:$0xff]
          %228 = vst [vmem:[%s80 + $0x248] sm:$0xff] %v227
          %v229 = vld [vmem:[%s79 + $0x250] sm:$0xff]
          %230 = vst [vmem:[%s80 + $0x250] sm:$0xff] %v229
          %v231 = vld [vmem:[%s79 + $0x258] sm:$0xff]
          %232 = vst [vmem:[%s80 + $0x258] sm:$0xff] %v231
          %v233 = vld [vmem:[%s79 + $0x260] sm:$0xff]
          %234 = vst [vmem:[%s80 + $0x260] sm:$0xff] %v233
          %v235 = vld [vmem:[%s79 + $0x268] sm:$0xff]
          %236 = vst [vmem:[%s80 + $0x268] sm:$0xff] %v235
          %v237 = vld [vmem:[%s79 + $0x270] sm:$0xff]
          %238 = vst [vmem:[%s80 + $0x270] sm:$0xff] %v237
          %v239 = vld [vmem:[%s79 + $0x278] sm:$0xff]
          %240 = vst [vmem:[%s80 + $0x278] sm:$0xff] %v239
          %v241 = vld [vmem:[%s79 + $0x280] sm:$0xff]
          %242 = vst [vmem:[%s80 + $0x280] sm:$0xff] %v241
          %v243 = vld [vmem:[%s79 + $0x288] sm:$0xff]
          %244 = vst [vmem:[%s80 + $0x288] sm:$0xff] %v243
          %v245 = vld [vmem:[%s79 + $0x290] sm:$0xff]
          %246 = vst [vmem:[%s80 + $0x290] sm:$0xff] %v245
          %v247 = vld [vmem:[%s79 + $0x298] sm:$0xff]
          %248 = vst [vmem:[%s80 + $0x298] sm:$0xff] %v247
          %v249 = vld [vmem:[%s79 + $0x2a0] sm:$0xff]
          %250 = vst [vmem:[%s80 + $0x2a0] sm:$0xff] %v249
          %v251 = vld [vmem:[%s79 + $0x2a8] sm:$0xff]
          %252 = vst [vmem:[%s80 + $0x2a8] sm:$0xff] %v251
          %v253 = vld [vmem:[%s79 + $0x2b0] sm:$0xff]
          %254 = vst [vmem:[%s80 + $0x2b0] sm:$0xff] %v253
          %v255 = vld [vmem:[%s79 + $0x2b8] sm:$0xff]
          %256 = vst [vmem:[%s80 + $0x2b8] sm:$0xff] %v255
          %v257 = vld [vmem:[%s79 + $0x2c0] sm:$0xff]
          %258 = vst [vmem:[%s80 + $0x2c0] sm:$0xff] %v257
          %v259 = vld [vmem:[%s79 + $0x2c8] sm:$0xff]
          %260 = vst [vmem:[%s80 + $0x2c8] sm:$0xff] %v259
          %v261 = vld [vmem:[%s79 + $0x2d0] sm:$0xff]
          %262 = vst [vmem:[%s80 + $0x2d0] sm:$0xff] %v261
          %v263 = vld [vmem:[%s79 + $0x2d8] sm:$0xff]
          %264 = vst [vmem:[%s80 + $0x2d8] sm:$0xff] %v263
          %v265 = vld [vmem:[%s79 + $0x2e0] sm:$0xff]
          %266 = vst [vmem:[%s80 + $0x2e0] sm:$0xff] %v265
          %v267 = vld [vmem:[%s79 + $0x2e8] sm:$0xff]
          %268 = vst [vmem:[%s80 + $0x2e8] sm:$0xff] %v267
          %v269 = vld [vmem:[%s79 + $0x2f0] sm:$0xff]
          %270 = vst [vmem:[%s80 + $0x2f0] sm:$0xff] %v269
          %v271 = vld [vmem:[%s79 + $0x2f8] sm:$0xff]
          %272 = vst [vmem:[%s80 + $0x2f8] sm:$0xff] %v271
          %v273 = vld [vmem:[%s79 + $0x300] sm:$0xff]
          %274 = vst [vmem:[%s80 + $0x300] sm:$0xff] %v273
          %v275 = vld [vmem:[%s79 + $0x308] sm:$0xff]
          %276 = vst [vmem:[%s80 + $0x308] sm:$0xff] %v275
          %v277 = vld [vmem:[%s79 + $0x310] sm:$0xff]
          %278 = vst [vmem:[%s80 + $0x310] sm:$0xff] %v277
          %v279 = vld [vmem:[%s79 + $0x318] sm:$0xff]
          %280 = vst [vmem:[%s80 + $0x318] sm:$0xff] %v279
          %v281 = vld [vmem:[%s79 + $0x320] sm:$0xff]
          %282 = vst [vmem:[%s80 + $0x320] sm:$0xff] %v281
          %v283 = vld [vmem:[%s79 + $0x328] sm:$0xff]
          %284 = vst [vmem:[%s80 + $0x328] sm:$0xff] %v283
          %v285 = vld [vmem:[%s79 + $0x330] sm:$0xff]
          %286 = vst [vmem:[%s80 + $0x330] sm:$0xff] %v285
          %v287 = vld [vmem:[%s79 + $0x338] sm:$0xff]
          %288 = vst [vmem:[%s80 + $0x338] sm:$0xff] %v287
          %v289 = vld [vmem:[%s79 + $0x340] sm:$0xff]
          %290 = vst [vmem:[%s80 + $0x340] sm:$0xff] %v289
          %v291 = vld [vmem:[%s79 + $0x348] sm:$0xff]
          %292 = vst [vmem:[%s80 + $0x348] sm:$0xff] %v291
          %v293 = vld [vmem:[%s79 + $0x350] sm:$0xff]
          %294 = vst [vmem:[%s80 + $0x350] sm:$0xff] %v293
          %v295 = vld [vmem:[%s79 + $0x358] sm:$0xff]
          %296 = vst [vmem:[%s80 + $0x358] sm:$0xff] %v295
          %v297 = vld [vmem:[%s79 + $0x360] sm:$0xff]
          %298 = vst [vmem:[%s80 + $0x360] sm:$0xff] %v297
          %v299 = vld [vmem:[%s79 + $0x368] sm:$0xff]
          %300 = vst [vmem:[%s80 + $0x368] sm:$0xff] %v299
          %v301 = vld [vmem:[%s79 + $0x370] sm:$0xff]
          %302 = vst [vmem:[%s80 + $0x370] sm:$0xff] %v301
          %v303 = vld [vmem:[%s79 + $0x378] sm:$0xff]
          %304 = vst [vmem:[%s80 + $0x378] sm:$0xff] %v303
          %v305 = vld [vmem:[%s79 + $0x380] sm:$0xff]
          %306 = vst [vmem:[%s80 + $0x380] sm:$0xff] %v305
          %v307 = vld [vmem:[%s79 + $0x388] sm:$0xff]
          %308 = vst [vmem:[%s80 + $0x388] sm:$0xff] %v307
          %v309 = vld [vmem:[%s79 + $0x390] sm:$0xff]
          %310 = vst [vmem:[%s80 + $0x390] sm:$0xff] %v309
          %v311 = vld [vmem:[%s79 + $0x398] sm:$0xff]
          %312 = vst [vmem:[%s80 + $0x398] sm:$0xff] %v311
          %v313 = vld [vmem:[%s79 + $0x3a0] sm:$0xff]
          %314 = vst [vmem:[%s80 + $0x3a0] sm:$0xff] %v313
          %v315 = vld [vmem:[%s79 + $0x3a8] sm:$0xff]
          %316 = vst [vmem:[%s80 + $0x3a8] sm:$0xff] %v315
          %v317 = vld [vmem:[%s79 + $0x3b0] sm:$0xff]
          %318 = vst [vmem:[%s80 + $0x3b0] sm:$0xff] %v317
          %v319 = vld [vmem:[%s79 + $0x3b8] sm:$0xff]
          %320 = vst [vmem:[%s80 + $0x3b8] sm:$0xff] %v319
          %v321 = vld [vmem:[%s79 + $0x3c0] sm:$0xff]
          %322 = vst [vmem:[%s80 + $0x3c0] sm:$0xff] %v321
          %v323 = vld [vmem:[%s79 + $0x3c8] sm:$0xff]
          %324 = vst [vmem:[%s80 + $0x3c8] sm:$0xff] %v323
          %v325 = vld [vmem:[%s79 + $0x3d0] sm:$0xff]
          %326 = vst [vmem:[%s80 + $0x3d0] sm:$0xff] %v325
          %v327 = vld [vmem:[%s79 + $0x3d8] sm:$0xff]
          %328 = vst [vmem:[%s80 + $0x3d8] sm:$0xff] %v327
          %v329 = vld [vmem:[%s79 + $0x3e0] sm:$0xff]
          %330 = vst [vmem:[%s80 + $0x3e0] sm:$0xff] %v329
          %v331 = vld [vmem:[%s79 + $0x3e8] sm:$0xff]
          %332 = vst [vmem:[%s80 + $0x3e8] sm:$0xff] %v331
          %v333 = vld [vmem:[%s79 + $0x3f0] sm:$0xff]
          %334 = vst [vmem:[%s80 + $0x3f0] sm:$0xff] %v333
          %v335 = vld [vmem:[%s79 + $0x3f8] sm:$0xff]
          %336 = vst [vmem:[%s80 + $0x3f8] sm:$0xff] %v335
          %v337 = vld [vmem:[%s79 + $0x400] sm:$0xff]
          %338 = vst [vmem:[%s80 + $0x400] sm:$0xff] %v337
          %v339 = vld [vmem:[%s79 + $0x408] sm:$0xff]
          %340 = vst [vmem:[%s80 + $0x408] sm:$0xff] %v339
          %v341 = vld [vmem:[%s79 + $0x410] sm:$0xff]
          %342 = vst [vmem:[%s80 + $0x410] sm:$0xff] %v341
          %v343 = vld [vmem:[%s79 + $0x418] sm:$0xff]
          %344 = vst [vmem:[%s80 + $0x418] sm:$0xff] %v343
          %v345 = vld [vmem:[%s79 + $0x420] sm:$0xff]
          %346 = vst [vmem:[%s80 + $0x420] sm:$0xff] %v345
          %v347 = vld [vmem:[%s79 + $0x428] sm:$0xff]
          %348 = vst [vmem:[%s80 + $0x428] sm:$0xff] %v347
          %v349 = vld [vmem:[%s79 + $0x430] sm:$0xff]
          %350 = vst [vmem:[%s80 + $0x430] sm:$0xff] %v349
          %v351 = vld [vmem:[%s79 + $0x438] sm:$0xff]
          %352 = vst [vmem:[%s80 + $0x438] sm:$0xff] %v351
          %v353 = vld [vmem:[%s79 + $0x440] sm:$0xff]
          %354 = vst [vmem:[%s80 + $0x440] sm:$0xff] %v353
          %v355 = vld [vmem:[%s79 + $0x448] sm:$0xff]
          %356 = vst [vmem:[%s80 + $0x448] sm:$0xff] %v355
          %v357 = vld [vmem:[%s79 + $0x450] sm:$0xff]
          %358 = vst [vmem:[%s80 + $0x450] sm:$0xff] %v357
          %v359 = vld [vmem:[%s79 + $0x458] sm:$0xff]
          %360 = vst [vmem:[%s80 + $0x458] sm:$0xff] %v359
          %v361 = vld [vmem:[%s79 + $0x460] sm:$0xff]
          %362 = vst [vmem:[%s80 + $0x460] sm:$0xff] %v361
          %v363 = vld [vmem:[%s79 + $0x468] sm:$0xff]
          %364 = vst [vmem:[%s80 + $0x468] sm:$0xff] %v363
          %v365 = vld [vmem:[%s79 + $0x470] sm:$0xff]
          %366 = vst [vmem:[%s80 + $0x470] sm:$0xff] %v365
          %v367 = vld [vmem:[%s79 + $0x478] sm:$0xff]
          %368 = vst [vmem:[%s80 + $0x478] sm:$0xff] %v367
          %v369 = vld [vmem:[%s79 + $0x480] sm:$0xff]
          %370 = vst [vmem:[%s80 + $0x480] sm:$0xff] %v369
          %v371 = vld [vmem:[%s79 + $0x488] sm:$0xff]
          %372 = vst [vmem:[%s80 + $0x488] sm:$0xff] %v371
          %v373 = vld [vmem:[%s79 + $0x490] sm:$0xff]
          %374 = vst [vmem:[%s80 + $0x490] sm:$0xff] %v373
          %v375 = vld [vmem:[%s79 + $0x498] sm:$0xff]
          %376 = vst [vmem:[%s80 + $0x498] sm:$0xff] %v375
          %v377 = vld [vmem:[%s79 + $0x4a0] sm:$0xff]
          %378 = vst [vmem:[%s80 + $0x4a0] sm:$0xff] %v377
          %v379 = vld [vmem:[%s79 + $0x4a8] sm:$0xff]
          %380 = vst [vmem:[%s80 + $0x4a8] sm:$0xff] %v379
          %v381 = vld [vmem:[%s79 + $0x4b0] sm:$0xff]
          %382 = vst [vmem:[%s80 + $0x4b0] sm:$0xff] %v381
          %v383 = vld [vmem:[%s79 + $0x4b8] sm:$0xff]
          %384 = vst [vmem:[%s80 + $0x4b8] sm:$0xff] %v383
          %v385 = vld [vmem:[%s79 + $0x4c0] sm:$0xff]
          %386 = vst [vmem:[%s80 + $0x4c0] sm:$0xff] %v385
          %v387 = vld [vmem:[%s79 + $0x4c8] sm:$0xff]
          %388 = vst [vmem:[%s80 + $0x4c8] sm:$0xff] %v387
          %v389 = vld [vmem:[%s79 + $0x4d0] sm:$0xff]
          %390 = vst [vmem:[%s80 + $0x4d0] sm:$0xff] %v389
          %v391 = vld [vmem:[%s79 + $0x4d8] sm:$0xff]
          %392 = vst [vmem:[%s80 + $0x4d8] sm:$0xff] %v391
          %v393 = vld [vmem:[%s79 + $0x4e0] sm:$0xff]
          %394 = vst [vmem:[%s80 + $0x4e0] sm:$0xff] %v393
          %v395 = vld [vmem:[%s79 + $0x4e8] sm:$0xff]
          %396 = vst [vmem:[%s80 + $0x4e8] sm:$0xff] %v395
          %v397 = vld [vmem:[%s79 + $0x4f0] sm:$0xff]
          %398 = vst [vmem:[%s80 + $0x4f0] sm:$0xff] %v397
          %v399 = vld [vmem:[%s79 + $0x4f8] sm:$0xff]
          %400 = vst [vmem:[%s80 + $0x4f8] sm:$0xff] %v399
          %v401 = vld [vmem:[%s79 + $0x500] sm:$0xff]
          %402 = vst [vmem:[%s80 + $0x500] sm:$0xff] %v401
          %v403 = vld [vmem:[%s79 + $0x508] sm:$0xff]
          %404 = vst [vmem:[%s80 + $0x508] sm:$0xff] %v403
          %v405 = vld [vmem:[%s79 + $0x510] sm:$0xff]
          %406 = vst [vmem:[%s80 + $0x510] sm:$0xff] %v405
          %v407 = vld [vmem:[%s79 + $0x518] sm:$0xff]
          %408 = vst [vmem:[%s80 + $0x518] sm:$0xff] %v407
          %v409 = vld [vmem:[%s79 + $0x520] sm:$0xff]
          %410 = vst [vmem:[%s80 + $0x520] sm:$0xff] %v409
          %v411 = vld [vmem:[%s79 + $0x528] sm:$0xff]
          %412 = vst [vmem:[%s80 + $0x528] sm:$0xff] %v411
          %v413 = vld [vmem:[%s79 + $0x530] sm:$0xff]
          %414 = vst [vmem:[%s80 + $0x530] sm:$0xff] %v413
          %v415 = vld [vmem:[%s79 + $0x538] sm:$0xff]
          %416 = vst [vmem:[%s80 + $0x538] sm:$0xff] %v415
          %v417 = vld [vmem:[%s79 + $0x540] sm:$0xff]
          %418 = vst [vmem:[%s80 + $0x540] sm:$0xff] %v417
          %v419 = vld [vmem:[%s79 + $0x548] sm:$0xff]
          %420 = vst [vmem:[%s80 + $0x548] sm:$0xff] %v419
          %v421 = vld [vmem:[%s79 + $0x550] sm:$0xff]
          %422 = vst [vmem:[%s80 + $0x550] sm:$0xff] %v421
          %v423 = vld [vmem:[%s79 + $0x558] sm:$0xff]
          %424 = vst [vmem:[%s80 + $0x558] sm:$0xff] %v423
          %v425 = vld [vmem:[%s79 + $0x560] sm:$0xff]
          %426 = vst [vmem:[%s80 + $0x560] sm:$0xff] %v425
          %v427 = vld [vmem:[%s79 + $0x568] sm:$0xff]
          %428 = vst [vmem:[%s80 + $0x568] sm:$0xff] %v427
          %v429 = vld [vmem:[%s79 + $0x570] sm:$0xff]
          %430 = vst [vmem:[%s80 + $0x570] sm:$0xff] %v429
          %v431 = vld [vmem:[%s79 + $0x578] sm:$0xff]
          %432 = vst [vmem:[%s80 + $0x578] sm:$0xff] %v431
          %v433 = vld [vmem:[%s79 + $0x580] sm:$0xff]
          %434 = vst [vmem:[%s80 + $0x580] sm:$0xff] %v433
          %v435 = vld [vmem:[%s79 + $0x588] sm:$0xff]
          %436 = vst [vmem:[%s80 + $0x588] sm:$0xff] %v435
          %v437 = vld [vmem:[%s79 + $0x590] sm:$0xff]
          %438 = vst [vmem:[%s80 + $0x590] sm:$0xff] %v437
          %v439 = vld [vmem:[%s79 + $0x598] sm:$0xff]
          %440 = vst [vmem:[%s80 + $0x598] sm:$0xff] %v439
          %v441 = vld [vmem:[%s79 + $0x5a0] sm:$0xff]
          %442 = vst [vmem:[%s80 + $0x5a0] sm:$0xff] %v441
          %v443 = vld [vmem:[%s79 + $0x5a8] sm:$0xff]
          %444 = vst [vmem:[%s80 + $0x5a8] sm:$0xff] %v443
          %v445 = vld [vmem:[%s79 + $0x5b0] sm:$0xff]
          %446 = vst [vmem:[%s80 + $0x5b0] sm:$0xff] %v445
          %v447 = vld [vmem:[%s79 + $0x5b8] sm:$0xff]
          %448 = vst [vmem:[%s80 + $0x5b8] sm:$0xff] %v447
          %v449 = vld [vmem:[%s79 + $0x5c0] sm:$0xff]
          %450 = vst [vmem:[%s80 + $0x5c0] sm:$0xff] %v449
          %v451 = vld [vmem:[%s79 + $0x5c8] sm:$0xff]
          %452 = vst [vmem:[%s80 + $0x5c8] sm:$0xff] %v451
          %v453 = vld [vmem:[%s79 + $0x5d0] sm:$0xff]
          %454 = vst [vmem:[%s80 + $0x5d0] sm:$0xff] %v453
          %v455 = vld [vmem:[%s79 + $0x5d8] sm:$0xff]
          %456 = vst [vmem:[%s80 + $0x5d8] sm:$0xff] %v455
          %v457 = vld [vmem:[%s79 + $0x5e0] sm:$0xff]
          %458 = vst [vmem:[%s80 + $0x5e0] sm:$0xff] %v457
          %v459 = vld [vmem:[%s79 + $0x5e8] sm:$0xff]
          %460 = vst [vmem:[%s80 + $0x5e8] sm:$0xff] %v459
          %v461 = vld [vmem:[%s79 + $0x5f0] sm:$0xff]
          %462 = vst [vmem:[%s80 + $0x5f0] sm:$0xff] %v461
          %v463 = vld [vmem:[%s79 + $0x5f8] sm:$0xff]
          %464 = vst [vmem:[%s80 + $0x5f8] sm:$0xff] %v463
          %v465 = vld [vmem:[%s79 + $0x600] sm:$0xff]
          %466 = vst [vmem:[%s80 + $0x600] sm:$0xff] %v465
          %v467 = vld [vmem:[%s79 + $0x608] sm:$0xff]
          %468 = vst [vmem:[%s80 + $0x608] sm:$0xff] %v467
          %v469 = vld [vmem:[%s79 + $0x610] sm:$0xff]
          %470 = vst [vmem:[%s80 + $0x610] sm:$0xff] %v469
          %v471 = vld [vmem:[%s79 + $0x618] sm:$0xff]
          %472 = vst [vmem:[%s80 + $0x618] sm:$0xff] %v471
          %v473 = vld [vmem:[%s79 + $0x620] sm:$0xff]
          %474 = vst [vmem:[%s80 + $0x620] sm:$0xff] %v473
          %v475 = vld [vmem:[%s79 + $0x628] sm:$0xff]
          %476 = vst [vmem:[%s80 + $0x628] sm:$0xff] %v475
          %v477 = vld [vmem:[%s79 + $0x630] sm:$0xff]
          %478 = vst [vmem:[%s80 + $0x630] sm:$0xff] %v477
          %v479 = vld [vmem:[%s79 + $0x638] sm:$0xff]
          %480 = vst [vmem:[%s80 + $0x638] sm:$0xff] %v479
          %v481 = vld [vmem:[%s79 + $0x640] sm:$0xff]
          %482 = vst [vmem:[%s80 + $0x640] sm:$0xff] %v481
          %v483 = vld [vmem:[%s79 + $0x648] sm:$0xff]
          %484 = vst [vmem:[%s80 + $0x648] sm:$0xff] %v483
          %v485 = vld [vmem:[%s79 + $0x650] sm:$0xff]
          %486 = vst [vmem:[%s80 + $0x650] sm:$0xff] %v485
          %v487 = vld [vmem:[%s79 + $0x658] sm:$0xff]
          %488 = vst [vmem:[%s80 + $0x658] sm:$0xff] %v487
          %v489 = vld [vmem:[%s79 + $0x660] sm:$0xff]
          %490 = vst [vmem:[%s80 + $0x660] sm:$0xff] %v489
          %v491 = vld [vmem:[%s79 + $0x668] sm:$0xff]
          %492 = vst [vmem:[%s80 + $0x668] sm:$0xff] %v491
          %v493 = vld [vmem:[%s79 + $0x670] sm:$0xff]
          %494 = vst [vmem:[%s80 + $0x670] sm:$0xff] %v493
          %v495 = vld [vmem:[%s79 + $0x678] sm:$0xff]
          %496 = vst [vmem:[%s80 + $0x678] sm:$0xff] %v495
          %v497 = vld [vmem:[%s79 + $0x680] sm:$0xff]
          %498 = vst [vmem:[%s80 + $0x680] sm:$0xff] %v497
          %v499 = vld [vmem:[%s79 + $0x688] sm:$0xff]
          %500 = vst [vmem:[%s80 + $0x688] sm:$0xff] %v499
          %v501 = vld [vmem:[%s79 + $0x690] sm:$0xff]
          %502 = vst [vmem:[%s80 + $0x690] sm:$0xff] %v501
          %v503 = vld [vmem:[%s79 + $0x698] sm:$0xff]
          %504 = vst [vmem:[%s80 + $0x698] sm:$0xff] %v503
          %v505 = vld [vmem:[%s79 + $0x6a0] sm:$0xff]
          %506 = vst [vmem:[%s80 + $0x6a0] sm:$0xff] %v505
          %v507 = vld [vmem:[%s79 + $0x6a8] sm:$0xff]
          %508 = vst [vmem:[%s80 + $0x6a8] sm:$0xff] %v507
          %v509 = vld [vmem:[%s79 + $0x6b0] sm:$0xff]
          %510 = vst [vmem:[%s80 + $0x6b0] sm:$0xff] %v509
          %v511 = vld [vmem:[%s79 + $0x6b8] sm:$0xff]
          %512 = vst [vmem:[%s80 + $0x6b8] sm:$0xff] %v511
          %v513 = vld [vmem:[%s79 + $0x6c0] sm:$0xff]
          %514 = vst [vmem:[%s80 + $0x6c0] sm:$0xff] %v513
          %v515 = vld [vmem:[%s79 + $0x6c8] sm:$0xff]
          %516 = vst [vmem:[%s80 + $0x6c8] sm:$0xff] %v515
          %v517 = vld [vmem:[%s79 + $0x6d0] sm:$0xff]
          %518 = vst [vmem:[%s80 + $0x6d0] sm:$0xff] %v517
          %v519 = vld [vmem:[%s79 + $0x6d8] sm:$0xff]
          %520 = vst [vmem:[%s80 + $0x6d8] sm:$0xff] %v519
          %v521 = vld [vmem:[%s79 + $0x6e0] sm:$0xff]
          %522 = vst [vmem:[%s80 + $0x6e0] sm:$0xff] %v521
          %v523 = vld [vmem:[%s79 + $0x6e8] sm:$0xff]
          %524 = vst [vmem:[%s80 + $0x6e8] sm:$0xff] %v523
          %v525 = vld [vmem:[%s79 + $0x6f0] sm:$0xff]
          %526 = vst [vmem:[%s80 + $0x6f0] sm:$0xff] %v525
          %v527 = vld [vmem:[%s79 + $0x6f8] sm:$0xff]
          %528 = vst [vmem:[%s80 + $0x6f8] sm:$0xff] %v527
          %v529 = vld [vmem:[%s79 + $0x700] sm:$0xff]
          %530 = vst [vmem:[%s80 + $0x700] sm:$0xff] %v529
          %v531 = vld [vmem:[%s79 + $0x708] sm:$0xff]
          %532 = vst [vmem:[%s80 + $0x708] sm:$0xff] %v531
          %v533 = vld [vmem:[%s79 + $0x710] sm:$0xff]
          %534 = vst [vmem:[%s80 + $0x710] sm:$0xff] %v533
          %v535 = vld [vmem:[%s79 + $0x718] sm:$0xff]
          %536 = vst [vmem:[%s80 + $0x718] sm:$0xff] %v535
          %v537 = vld [vmem:[%s79 + $0x720] sm:$0xff]
          %538 = vst [vmem:[%s80 + $0x720] sm:$0xff] %v537
          %v539 = vld [vmem:[%s79 + $0x728] sm:$0xff]
          %540 = vst [vmem:[%s80 + $0x728] sm:$0xff] %v539
          %v541 = vld [vmem:[%s79 + $0x730] sm:$0xff]
          %542 = vst [vmem:[%s80 + $0x730] sm:$0xff] %v541
          %v543 = vld [vmem:[%s79 + $0x738] sm:$0xff]
          %544 = vst [vmem:[%s80 + $0x738] sm:$0xff] %v543
          %v545 = vld [vmem:[%s79 + $0x740] sm:$0xff]
          %546 = vst [vmem:[%s80 + $0x740] sm:$0xff] %v545
          %v547 = vld [vmem:[%s79 + $0x748] sm:$0xff]
          %548 = vst [vmem:[%s80 + $0x748] sm:$0xff] %v547
          %v549 = vld [vmem:[%s79 + $0x750] sm:$0xff]
          %550 = vst [vmem:[%s80 + $0x750] sm:$0xff] %v549
          %v551 = vld [vmem:[%s79 + $0x758] sm:$0xff]
          %552 = vst [vmem:[%s80 + $0x758] sm:$0xff] %v551
          %v553 = vld [vmem:[%s79 + $0x760] sm:$0xff]
          %554 = vst [vmem:[%s80 + $0x760] sm:$0xff] %v553
          %v555 = vld [vmem:[%s79 + $0x768] sm:$0xff]
          %556 = vst [vmem:[%s80 + $0x768] sm:$0xff] %v555
          %v557 = vld [vmem:[%s79 + $0x770] sm:$0xff]
          %558 = vst [vmem:[%s80 + $0x770] sm:$0xff] %v557
          %v559 = vld [vmem:[%s79 + $0x778] sm:$0xff]
          %560 = vst [vmem:[%s80 + $0x778] sm:$0xff] %v559
          %v561 = vld [vmem:[%s79 + $0x780] sm:$0xff]
          %562 = vst [vmem:[%s80 + $0x780] sm:$0xff] %v561
          %v563 = vld [vmem:[%s79 + $0x788] sm:$0xff]
          %564 = vst [vmem:[%s80 + $0x788] sm:$0xff] %v563
          %v565 = vld [vmem:[%s79 + $0x790] sm:$0xff]
          %566 = vst [vmem:[%s80 + $0x790] sm:$0xff] %v565
          %v567 = vld [vmem:[%s79 + $0x798] sm:$0xff]
          %568 = vst [vmem:[%s80 + $0x798] sm:$0xff] %v567
          %v569 = vld [vmem:[%s79 + $0x7a0] sm:$0xff]
          %570 = vst [vmem:[%s80 + $0x7a0] sm:$0xff] %v569
          %v571 = vld [vmem:[%s79 + $0x7a8] sm:$0xff]
          %572 = vst [vmem:[%s80 + $0x7a8] sm:$0xff] %v571
          %v573 = vld [vmem:[%s79 + $0x7b0] sm:$0xff]
          %574 = vst [vmem:[%s80 + $0x7b0] sm:$0xff] %v573
          %v575 = vld [vmem:[%s79 + $0x7b8] sm:$0xff]
          %576 = vst [vmem:[%s80 + $0x7b8] sm:$0xff] %v575
          %v577 = vld [vmem:[%s79 + $0x7c0] sm:$0xff]
          %578 = vst [vmem:[%s80 + $0x7c0] sm:$0xff] %v577
          %v579 = vld [vmem:[%s79 + $0x7c8] sm:$0xff]
          %580 = vst [vmem:[%s80 + $0x7c8] sm:$0xff] %v579
          %v581 = vld [vmem:[%s79 + $0x7d0] sm:$0xff]
          %582 = vst [vmem:[%s80 + $0x7d0] sm:$0xff] %v581
          %v583 = vld [vmem:[%s79 + $0x7d8] sm:$0xff]
          %584 = vst [vmem:[%s80 + $0x7d8] sm:$0xff] %v583
          %v585 = vld [vmem:[%s79 + $0x7e0] sm:$0xff]
          %586 = vst [vmem:[%s80 + $0x7e0] sm:$0xff] %v585
          %v587 = vld [vmem:[%s79 + $0x7e8] sm:$0xff]
          %588 = vst [vmem:[%s80 + $0x7e8] sm:$0xff] %v587
          %v589 = vld [vmem:[%s79 + $0x7f0] sm:$0xff]
          %590 = vst [vmem:[%s80 + $0x7f0] sm:$0xff] %v589
          %v591 = vld [vmem:[%s79 + $0x7f8] sm:$0xff]
          %592 = vst [vmem:[%s80 + $0x7f8] sm:$0xff] %v591
          %v593 = vld [vmem:[%s79 + $0x800] sm:$0xff]
          %594 = vst [vmem:[%s80 + $0x800] sm:$0xff] %v593
          %v595 = vld [vmem:[%s79 + $0x808] sm:$0xff]
          %596 = vst [vmem:[%s80 + $0x808] sm:$0xff] %v595
          %v597 = vld [vmem:[%s79 + $0x810] sm:$0xff]
          %598 = vst [vmem:[%s80 + $0x810] sm:$0xff] %v597
          %v599 = vld [vmem:[%s79 + $0x818] sm:$0xff]
          %600 = vst [vmem:[%s80 + $0x818] sm:$0xff] %v599
          %v601 = vld [vmem:[%s79 + $0x820] sm:$0xff]
          %602 = vst [vmem:[%s80 + $0x820] sm:$0xff] %v601
          %v603 = vld [vmem:[%s79 + $0x828] sm:$0xff]
          %604 = vst [vmem:[%s80 + $0x828] sm:$0xff] %v603
          %v605 = vld [vmem:[%s79 + $0x830] sm:$0xff]
          %606 = vst [vmem:[%s80 + $0x830] sm:$0xff] %v605
          %v607 = vld [vmem:[%s79 + $0x838] sm:$0xff]
          %608 = vst [vmem:[%s80 + $0x838] sm:$0xff] %v607
          %v609 = vld [vmem:[%s79 + $0x840] sm:$0xff]
          %610 = vst [vmem:[%s80 + $0x840] sm:$0xff] %v609
          %v611 = vld [vmem:[%s79 + $0x848] sm:$0xff]
          %612 = vst [vmem:[%s80 + $0x848] sm:$0xff] %v611
          %v613 = vld [vmem:[%s79 + $0x850] sm:$0xff]
          %614 = vst [vmem:[%s80 + $0x850] sm:$0xff] %v613
          %v615 = vld [vmem:[%s79 + $0x858] sm:$0xff]
          %616 = vst [vmem:[%s80 + $0x858] sm:$0xff] %v615
          %v617 = vld [vmem:[%s79 + $0x860] sm:$0xff]
          %618 = vst [vmem:[%s80 + $0x860] sm:$0xff] %v617
          %v619 = vld [vmem:[%s79 + $0x868] sm:$0xff]
          %620 = vst [vmem:[%s80 + $0x868] sm:$0xff] %v619
          %v621 = vld [vmem:[%s79 + $0x870] sm:$0xff]
          %622 = vst [vmem:[%s80 + $0x870] sm:$0xff] %v621
          %v623 = vld [vmem:[%s79 + $0x878] sm:$0xff]
          %624 = vst [vmem:[%s80 + $0x878] sm:$0xff] %v623
          %v625 = vld [vmem:[%s79 + $0x880] sm:$0xff]
          %626 = vst [vmem:[%s80 + $0x880] sm:$0xff] %v625
          %v627 = vld [vmem:[%s79 + $0x888] sm:$0xff]
          %628 = vst [vmem:[%s80 + $0x888] sm:$0xff] %v627
          %v629 = vld [vmem:[%s79 + $0x890] sm:$0xff]
          %630 = vst [vmem:[%s80 + $0x890] sm:$0xff] %v629
          %v631 = vld [vmem:[%s79 + $0x898] sm:$0xff]
          %632 = vst [vmem:[%s80 + $0x898] sm:$0xff] %v631
          %v633 = vld [vmem:[%s79 + $0x8a0] sm:$0xff]
          %634 = vst [vmem:[%s80 + $0x8a0] sm:$0xff] %v633
          %v635 = vld [vmem:[%s79 + $0x8a8] sm:$0xff]
          %636 = vst [vmem:[%s80 + $0x8a8] sm:$0xff] %v635
          %v637 = vld [vmem:[%s79 + $0x8b0] sm:$0xff]
          %638 = vst [vmem:[%s80 + $0x8b0] sm:$0xff] %v637
          %v639 = vld [vmem:[%s79 + $0x8b8] sm:$0xff]
          %640 = vst [vmem:[%s80 + $0x8b8] sm:$0xff] %v639
          %v641 = vld [vmem:[%s79 + $0x8c0] sm:$0xff]
          %642 = vst [vmem:[%s80 + $0x8c0] sm:$0xff] %v641
          %v643 = vld [vmem:[%s79 + $0x8c8] sm:$0xff]
          %644 = vst [vmem:[%s80 + $0x8c8] sm:$0xff] %v643
          %v645 = vld [vmem:[%s79 + $0x8d0] sm:$0xff]
          %646 = vst [vmem:[%s80 + $0x8d0] sm:$0xff] %v645
          %v647 = vld [vmem:[%s79 + $0x8d8] sm:$0xff]
          %648 = vst [vmem:[%s80 + $0x8d8] sm:$0xff] %v647
          %v649 = vld [vmem:[%s79 + $0x8e0] sm:$0xff]
          %650 = vst [vmem:[%s80 + $0x8e0] sm:$0xff] %v649
          %v651 = vld [vmem:[%s79 + $0x8e8] sm:$0xff]
          %652 = vst [vmem:[%s80 + $0x8e8] sm:$0xff] %v651
          %v653 = vld [vmem:[%s79 + $0x8f0] sm:$0xff]
          %654 = vst [vmem:[%s80 + $0x8f0] sm:$0xff] %v653
          %v655 = vld [vmem:[%s79 + $0x8f8] sm:$0xff]
          %656 = vst [vmem:[%s80 + $0x8f8] sm:$0xff] %v655
          %v657 = vld [vmem:[%s79 + $0x900] sm:$0xff]
          %658 = vst [vmem:[%s80 + $0x900] sm:$0xff] %v657
          %v659 = vld [vmem:[%s79 + $0x908] sm:$0xff]
          %660 = vst [vmem:[%s80 + $0x908] sm:$0xff] %v659
          %v661 = vld [vmem:[%s79 + $0x910] sm:$0xff]
          %662 = vst [vmem:[%s80 + $0x910] sm:$0xff] %v661
          %v663 = vld [vmem:[%s79 + $0x918] sm:$0xff]
          %664 = vst [vmem:[%s80 + $0x918] sm:$0xff] %v663
          %v665 = vld [vmem:[%s79 + $0x920] sm:$0xff]
          %666 = vst [vmem:[%s80 + $0x920] sm:$0xff] %v665
          %v667 = vld [vmem:[%s79 + $0x928] sm:$0xff]
          %668 = vst [vmem:[%s80 + $0x928] sm:$0xff] %v667
          %v669 = vld [vmem:[%s79 + $0x930] sm:$0xff]
          %670 = vst [vmem:[%s80 + $0x930] sm:$0xff] %v669
          %v671 = vld [vmem:[%s79 + $0x938] sm:$0xff]
          %672 = vst [vmem:[%s80 + $0x938] sm:$0xff] %v671
          %v673 = vld [vmem:[%s79 + $0x940] sm:$0xff]
          %674 = vst [vmem:[%s80 + $0x940] sm:$0xff] %v673
          %v675 = vld [vmem:[%s79 + $0x948] sm:$0xff]
          %676 = vst [vmem:[%s80 + $0x948] sm:$0xff] %v675
          %v677 = vld [vmem:[%s79 + $0x950] sm:$0xff]
          %678 = vst [vmem:[%s80 + $0x950] sm:$0xff] %v677
          %v679 = vld [vmem:[%s79 + $0x958] sm:$0xff]
          %680 = vst [vmem:[%s80 + $0x958] sm:$0xff] %v679
          %v681 = vld [vmem:[%s79 + $0x960] sm:$0xff]
          %682 = vst [vmem:[%s80 + $0x960] sm:$0xff] %v681
          %v683 = vld [vmem:[%s79 + $0x968] sm:$0xff]
          %684 = vst [vmem:[%s80 + $0x968] sm:$0xff] %v683
          %v685 = vld [vmem:[%s79 + $0x970] sm:$0xff]
          %686 = vst [vmem:[%s80 + $0x970] sm:$0xff] %v685
          %v687 = vld [vmem:[%s79 + $0x978] sm:$0xff]
          %688 = vst [vmem:[%s80 + $0x978] sm:$0xff] %v687
          %v689 = vld [vmem:[%s79 + $0x980] sm:$0xff]
          %690 = vst [vmem:[%s80 + $0x980] sm:$0xff] %v689
          %v691 = vld [vmem:[%s79 + $0x988] sm:$0xff]
          %692 = vst [vmem:[%s80 + $0x988] sm:$0xff] %v691
          %v693 = vld [vmem:[%s79 + $0x990] sm:$0xff]
          %694 = vst [vmem:[%s80 + $0x990] sm:$0xff] %v693
          %v695 = vld [vmem:[%s79 + $0x998] sm:$0xff]
          %696 = vst [vmem:[%s80 + $0x998] sm:$0xff] %v695
          %v697 = vld [vmem:[%s79 + $0x9a0] sm:$0xff]
          %698 = vst [vmem:[%s80 + $0x9a0] sm:$0xff] %v697
          %v699 = vld [vmem:[%s79 + $0x9a8] sm:$0xff]
          %700 = vst [vmem:[%s80 + $0x9a8] sm:$0xff] %v699
          %v701 = vld [vmem:[%s79 + $0x9b0] sm:$0xff]
          %702 = vst [vmem:[%s80 + $0x9b0] sm:$0xff] %v701
          %v703 = vld [vmem:[%s79 + $0x9b8] sm:$0xff]
          %704 = vst [vmem:[%s80 + $0x9b8] sm:$0xff] %v703
          %v705 = vld [vmem:[%s79 + $0x9c0] sm:$0xff]
          %706 = vst [vmem:[%s80 + $0x9c0] sm:$0xff] %v705
          %v707 = vld [vmem:[%s79 + $0x9c8] sm:$0xff]
          %708 = vst [vmem:[%s80 + $0x9c8] sm:$0xff] %v707
          %v709 = vld [vmem:[%s79 + $0x9d0] sm:$0xff]
          %710 = vst [vmem:[%s80 + $0x9d0] sm:$0xff] %v709
          %v711 = vld [vmem:[%s79 + $0x9d8] sm:$0xff]
          %712 = vst [vmem:[%s80 + $0x9d8] sm:$0xff] %v711
          %v713 = vld [vmem:[%s79 + $0x9e0] sm:$0xff]
          %714 = vst [vmem:[%s80 + $0x9e0] sm:$0xff] %v713
          %v715 = vld [vmem:[%s79 + $0x9e8] sm:$0xff]
          %716 = vst [vmem:[%s80 + $0x9e8] sm:$0xff] %v715
          %v717 = vld [vmem:[%s79 + $0x9f0] sm:$0xff]
          %718 = vst [vmem:[%s80 + $0x9f0] sm:$0xff] %v717
          %v719 = vld [vmem:[%s79 + $0x9f8] sm:$0xff]
          %720 = vst [vmem:[%s80 + $0x9f8] sm:$0xff] %v719
          %v721 = vld [vmem:[%s79 + $0xa00] sm:$0xff]
          %722 = vst [vmem:[%s80 + $0xa00] sm:$0xff] %v721
          %v723 = vld [vmem:[%s79 + $0xa08] sm:$0xff]
          %724 = vst [vmem:[%s80 + $0xa08] sm:$0xff] %v723
          %v725 = vld [vmem:[%s79 + $0xa10] sm:$0xff]
          %726 = vst [vmem:[%s80 + $0xa10] sm:$0xff] %v725
          %v727 = vld [vmem:[%s79 + $0xa18] sm:$0xff]
          %728 = vst [vmem:[%s80 + $0xa18] sm:$0xff] %v727
          %v729 = vld [vmem:[%s79 + $0xa20] sm:$0xff]
          %730 = vst [vmem:[%s80 + $0xa20] sm:$0xff] %v729
          %v731 = vld [vmem:[%s79 + $0xa28] sm:$0xff]
          %732 = vst [vmem:[%s80 + $0xa28] sm:$0xff] %v731
          %v733 = vld [vmem:[%s79 + $0xa30] sm:$0xff]
          %734 = vst [vmem:[%s80 + $0xa30] sm:$0xff] %v733
          %v735 = vld [vmem:[%s79 + $0xa38] sm:$0xff]
          %736 = vst [vmem:[%s80 + $0xa38] sm:$0xff] %v735
          %v737 = vld [vmem:[%s79 + $0xa40] sm:$0xff]
          %738 = vst [vmem:[%s80 + $0xa40] sm:$0xff] %v737
          %v739 = vld [vmem:[%s79 + $0xa48] sm:$0xff]
          %740 = vst [vmem:[%s80 + $0xa48] sm:$0xff] %v739
          %v741 = vld [vmem:[%s79 + $0xa50] sm:$0xff]
          %742 = vst [vmem:[%s80 + $0xa50] sm:$0xff] %v741
          %v743 = vld [vmem:[%s79 + $0xa58] sm:$0xff]
          %744 = vst [vmem:[%s80 + $0xa58] sm:$0xff] %v743
          %v745 = vld [vmem:[%s79 + $0xa60] sm:$0xff]
          %746 = vst [vmem:[%s80 + $0xa60] sm:$0xff] %v745
          %v747 = vld [vmem:[%s79 + $0xa68] sm:$0xff]
          %748 = vst [vmem:[%s80 + $0xa68] sm:$0xff] %v747
          %v749 = vld [vmem:[%s79 + $0xa70] sm:$0xff]
          %750 = vst [vmem:[%s80 + $0xa70] sm:$0xff] %v749
          %v751 = vld [vmem:[%s79 + $0xa78] sm:$0xff]
          %752 = vst [vmem:[%s80 + $0xa78] sm:$0xff] %v751
          %v753 = vld [vmem:[%s79 + $0xa80] sm:$0xff]
          %754 = vst [vmem:[%s80 + $0xa80] sm:$0xff] %v753
          %v755 = vld [vmem:[%s79 + $0xa88] sm:$0xff]
          %756 = vst [vmem:[%s80 + $0xa88] sm:$0xff] %v755
          %v757 = vld [vmem:[%s79 + $0xa90] sm:$0xff]
          %758 = vst [vmem:[%s80 + $0xa90] sm:$0xff] %v757
          %v759 = vld [vmem:[%s79 + $0xa98] sm:$0xff]
          %760 = vst [vmem:[%s80 + $0xa98] sm:$0xff] %v759
          %v761 = vld [vmem:[%s79 + $0xaa0] sm:$0xff]
          %762 = vst [vmem:[%s80 + $0xaa0] sm:$0xff] %v761
          %v763 = vld [vmem:[%s79 + $0xaa8] sm:$0xff]
          %764 = vst [vmem:[%s80 + $0xaa8] sm:$0xff] %v763
          %v765 = vld [vmem:[%s79 + $0xab0] sm:$0xff]
          %766 = vst [vmem:[%s80 + $0xab0] sm:$0xff] %v765
          %v767 = vld [vmem:[%s79 + $0xab8] sm:$0xff]
          %768 = vst [vmem:[%s80 + $0xab8] sm:$0xff] %v767
          %v769 = vld [vmem:[%s79 + $0xac0] sm:$0xff]
          %770 = vst [vmem:[%s80 + $0xac0] sm:$0xff] %v769
          %v771 = vld [vmem:[%s79 + $0xac8] sm:$0xff]
          %772 = vst [vmem:[%s80 + $0xac8] sm:$0xff] %v771
          %v773 = vld [vmem:[%s79 + $0xad0] sm:$0xff]
          %774 = vst [vmem:[%s80 + $0xad0] sm:$0xff] %v773
          %v775 = vld [vmem:[%s79 + $0xad8] sm:$0xff]
          %776 = vst [vmem:[%s80 + $0xad8] sm:$0xff] %v775
          %v777 = vld [vmem:[%s79 + $0xae0] sm:$0xff]
          %778 = vst [vmem:[%s80 + $0xae0] sm:$0xff] %v777
          %v779 = vld [vmem:[%s79 + $0xae8] sm:$0xff]
          %780 = vst [vmem:[%s80 + $0xae8] sm:$0xff] %v779
          %v781 = vld [vmem:[%s79 + $0xaf0] sm:$0xff]
          %782 = vst [vmem:[%s80 + $0xaf0] sm:$0xff] %v781
          %v783 = vld [vmem:[%s79 + $0xaf8] sm:$0xff]
          %784 = vst [vmem:[%s80 + $0xaf8] sm:$0xff] %v783
          %v785 = vld [vmem:[%s79 + $0xb00] sm:$0xff]
          %786 = vst [vmem:[%s80 + $0xb00] sm:$0xff] %v785
          %v787 = vld [vmem:[%s79 + $0xb08] sm:$0xff]
          %788 = vst [vmem:[%s80 + $0xb08] sm:$0xff] %v787
          %v789 = vld [vmem:[%s79 + $0xb10] sm:$0xff]
          %790 = vst [vmem:[%s80 + $0xb10] sm:$0xff] %v789
          %v791 = vld [vmem:[%s79 + $0xb18] sm:$0xff]
          %792 = vst [vmem:[%s80 + $0xb18] sm:$0xff] %v791
          %v793 = vld [vmem:[%s79 + $0xb20] sm:$0xff]
          %794 = vst [vmem:[%s80 + $0xb20] sm:$0xff] %v793
          %v795 = vld [vmem:[%s79 + $0xb28] sm:$0xff]
          %796 = vst [vmem:[%s80 + $0xb28] sm:$0xff] %v795
          %v797 = vld [vmem:[%s79 + $0xb30] sm:$0xff]
          %798 = vst [vmem:[%s80 + $0xb30] sm:$0xff] %v797
          %v799 = vld [vmem:[%s79 + $0xb38] sm:$0xff]
          %800 = vst [vmem:[%s80 + $0xb38] sm:$0xff] %v799
          %v801 = vld [vmem:[%s79 + $0xb40] sm:$0xff]
          %802 = vst [vmem:[%s80 + $0xb40] sm:$0xff] %v801
          %v803 = vld [vmem:[%s79 + $0xb48] sm:$0xff]
          %804 = vst [vmem:[%s80 + $0xb48] sm:$0xff] %v803
          %v805 = vld [vmem:[%s79 + $0xb50] sm:$0xff]
          %806 = vst [vmem:[%s80 + $0xb50] sm:$0xff] %v805
          %v807 = vld [vmem:[%s79 + $0xb58] sm:$0xff]
          %808 = vst [vmem:[%s80 + $0xb58] sm:$0xff] %v807
          %v809 = vld [vmem:[%s79 + $0xb60] sm:$0xff]
          %810 = vst [vmem:[%s80 + $0xb60] sm:$0xff] %v809
          %v811 = vld [vmem:[%s79 + $0xb68] sm:$0xff]
          %812 = vst [vmem:[%s80 + $0xb68] sm:$0xff] %v811
          %v813 = vld [vmem:[%s79 + $0xb70] sm:$0xff]
          %814 = vst [vmem:[%s80 + $0xb70] sm:$0xff] %v813
          %v815 = vld [vmem:[%s79 + $0xb78] sm:$0xff]
          %816 = vst [vmem:[%s80 + $0xb78] sm:$0xff] %v815
          %v817 = vld [vmem:[%s79 + $0xb80] sm:$0xff]
          %818 = vst [vmem:[%s80 + $0xb80] sm:$0xff] %v817
          %v819 = vld [vmem:[%s79 + $0xb88] sm:$0xff]
          %820 = vst [vmem:[%s80 + $0xb88] sm:$0xff] %v819
          %v821 = vld [vmem:[%s79 + $0xb90] sm:$0xff]
          %822 = vst [vmem:[%s80 + $0xb90] sm:$0xff] %v821
          %v823 = vld [vmem:[%s79 + $0xb98] sm:$0xff]
          %824 = vst [vmem:[%s80 + $0xb98] sm:$0xff] %v823
          %v825 = vld [vmem:[%s79 + $0xba0] sm:$0xff]
          %826 = vst [vmem:[%s80 + $0xba0] sm:$0xff] %v825
          %v827 = vld [vmem:[%s79 + $0xba8] sm:$0xff]
          %828 = vst [vmem:[%s80 + $0xba8] sm:$0xff] %v827
          %v829 = vld [vmem:[%s79 + $0xbb0] sm:$0xff]
          %830 = vst [vmem:[%s80 + $0xbb0] sm:$0xff] %v829
          %v831 = vld [vmem:[%s79 + $0xbb8] sm:$0xff]
          %832 = vst [vmem:[%s80 + $0xbb8] sm:$0xff] %v831
          %v833 = vld [vmem:[%s79 + $0xbc0] sm:$0xff]
          %834 = vst [vmem:[%s80 + $0xbc0] sm:$0xff] %v833
          %v835 = vld [vmem:[%s79 + $0xbc8] sm:$0xff]
          %836 = vst [vmem:[%s80 + $0xbc8] sm:$0xff] %v835
          %v837 = vld [vmem:[%s79 + $0xbd0] sm:$0xff]
          %838 = vst [vmem:[%s80 + $0xbd0] sm:$0xff] %v837
          %v839 = vld [vmem:[%s79 + $0xbd8] sm:$0xff]
          %840 = vst [vmem:[%s80 + $0xbd8] sm:$0xff] %v839
          %v841 = vld [vmem:[%s79 + $0xbe0] sm:$0xff]
          %842 = vst [vmem:[%s80 + $0xbe0] sm:$0xff] %v841
          %v843 = vld [vmem:[%s79 + $0xbe8] sm:$0xff]
          %844 = vst [vmem:[%s80 + $0xbe8] sm:$0xff] %v843
          %v845 = vld [vmem:[%s79 + $0xbf0] sm:$0xff]
          %846 = vst [vmem:[%s80 + $0xbf0] sm:$0xff] %v845
          %v847 = vld [vmem:[%s79 + $0xbf8] sm:$0xff]
          %848 = vst [vmem:[%s80 + $0xbf8] sm:$0xff] %v847
          %v849 = vld [vmem:[%s79 + $0xc00] sm:$0xff]
          %850 = vst [vmem:[%s80 + $0xc00] sm:$0xff] %v849
          %v851 = vld [vmem:[%s79 + $0xc08] sm:$0xff]
          %852 = vst [vmem:[%s80 + $0xc08] sm:$0xff] %v851
          %v853 = vld [vmem:[%s79 + $0xc10] sm:$0xff]
          %854 = vst [vmem:[%s80 + $0xc10] sm:$0xff] %v853
          %v855 = vld [vmem:[%s79 + $0xc18] sm:$0xff]
          %856 = vst [vmem:[%s80 + $0xc18] sm:$0xff] %v855
          %v857 = vld [vmem:[%s79 + $0xc20] sm:$0xff]
          %858 = vst [vmem:[%s80 + $0xc20] sm:$0xff] %v857
          %v859 = vld [vmem:[%s79 + $0xc28] sm:$0xff]
          %860 = vst [vmem:[%s80 + $0xc28] sm:$0xff] %v859
          %v861 = vld [vmem:[%s79 + $0xc30] sm:$0xff]
          %862 = vst [vmem:[%s80 + $0xc30] sm:$0xff] %v861
          %v863 = vld [vmem:[%s79 + $0xc38] sm:$0xff]
          %864 = vst [vmem:[%s80 + $0xc38] sm:$0xff] %v863
          %v865 = vld [vmem:[%s79 + $0xc40] sm:$0xff]
          %866 = vst [vmem:[%s80 + $0xc40] sm:$0xff] %v865
          %v867 = vld [vmem:[%s79 + $0xc48] sm:$0xff]
          %868 = vst [vmem:[%s80 + $0xc48] sm:$0xff] %v867
          %v869 = vld [vmem:[%s79 + $0xc50] sm:$0xff]
          %870 = vst [vmem:[%s80 + $0xc50] sm:$0xff] %v869
          %v871 = vld [vmem:[%s79 + $0xc58] sm:$0xff]
          %872 = vst [vmem:[%s80 + $0xc58] sm:$0xff] %v871
          %v873 = vld [vmem:[%s79 + $0xc60] sm:$0xff]
          %874 = vst [vmem:[%s80 + $0xc60] sm:$0xff] %v873
          %v875 = vld [vmem:[%s79 + $0xc68] sm:$0xff]
          %876 = vst [vmem:[%s80 + $0xc68] sm:$0xff] %v875
          %v877 = vld [vmem:[%s79 + $0xc70] sm:$0xff]
          %878 = vst [vmem:[%s80 + $0xc70] sm:$0xff] %v877
          %v879 = vld [vmem:[%s79 + $0xc78] sm:$0xff]
          %880 = vst [vmem:[%s80 + $0xc78] sm:$0xff] %v879
          %v881 = vld [vmem:[%s79 + $0xc80] sm:$0xff]
          %882 = vst [vmem:[%s80 + $0xc80] sm:$0xff] %v881
          %v883 = vld [vmem:[%s79 + $0xc88] sm:$0xff]
          %884 = vst [vmem:[%s80 + $0xc88] sm:$0xff] %v883
          %v885 = vld [vmem:[%s79 + $0xc90] sm:$0xff]
          %886 = vst [vmem:[%s80 + $0xc90] sm:$0xff] %v885
          %v887 = vld [vmem:[%s79 + $0xc98] sm:$0xff]
          %888 = vst [vmem:[%s80 + $0xc98] sm:$0xff] %v887
          %v889 = vld [vmem:[%s79 + $0xca0] sm:$0xff]
          %890 = vst [vmem:[%s80 + $0xca0] sm:$0xff] %v889
          %v891 = vld [vmem:[%s79 + $0xca8] sm:$0xff]
          %892 = vst [vmem:[%s80 + $0xca8] sm:$0xff] %v891
          %v893 = vld [vmem:[%s79 + $0xcb0] sm:$0xff]
          %894 = vst [vmem:[%s80 + $0xcb0] sm:$0xff] %v893
          %v895 = vld [vmem:[%s79 + $0xcb8] sm:$0xff]
          %896 = vst [vmem:[%s80 + $0xcb8] sm:$0xff] %v895
          %v897 = vld [vmem:[%s79 + $0xcc0] sm:$0xff]
          %898 = vst [vmem:[%s80 + $0xcc0] sm:$0xff] %v897
          %v899 = vld [vmem:[%s79 + $0xcc8] sm:$0xff]
          %900 = vst [vmem:[%s80 + $0xcc8] sm:$0xff] %v899
          %v901 = vld [vmem:[%s79 + $0xcd0] sm:$0xff]
          %902 = vst [vmem:[%s80 + $0xcd0] sm:$0xff] %v901
          %v903 = vld [vmem:[%s79 + $0xcd8] sm:$0xff]
          %904 = vst [vmem:[%s80 + $0xcd8] sm:$0xff] %v903
          %v905 = vld [vmem:[%s79 + $0xce0] sm:$0xff]
          %906 = vst [vmem:[%s80 + $0xce0] sm:$0xff] %v905
          %v907 = vld [vmem:[%s79 + $0xce8] sm:$0xff]
          %908 = vst [vmem:[%s80 + $0xce8] sm:$0xff] %v907
          %v909 = vld [vmem:[%s79 + $0xcf0] sm:$0xff]
          %910 = vst [vmem:[%s80 + $0xcf0] sm:$0xff] %v909
          %v911 = vld [vmem:[%s79 + $0xcf8] sm:$0xff]
          %912 = vst [vmem:[%s80 + $0xcf8] sm:$0xff] %v911
          %v913 = vld [vmem:[%s79 + $0xd00] sm:$0xff]
          %914 = vst [vmem:[%s80 + $0xd00] sm:$0xff] %v913
          %v915 = vld [vmem:[%s79 + $0xd08] sm:$0xff]
          %916 = vst [vmem:[%s80 + $0xd08] sm:$0xff] %v915
          %v917 = vld [vmem:[%s79 + $0xd10] sm:$0xff]
          %918 = vst [vmem:[%s80 + $0xd10] sm:$0xff] %v917
          %v919 = vld [vmem:[%s79 + $0xd18] sm:$0xff]
          %920 = vst [vmem:[%s80 + $0xd18] sm:$0xff] %v919
          %v921 = vld [vmem:[%s79 + $0xd20] sm:$0xff]
          %922 = vst [vmem:[%s80 + $0xd20] sm:$0xff] %v921
          %v923 = vld [vmem:[%s79 + $0xd28] sm:$0xff]
          %924 = vst [vmem:[%s80 + $0xd28] sm:$0xff] %v923
          %v925 = vld [vmem:[%s79 + $0xd30] sm:$0xff]
          %926 = vst [vmem:[%s80 + $0xd30] sm:$0xff] %v925
          %v927 = vld [vmem:[%s79 + $0xd38] sm:$0xff]
          %928 = vst [vmem:[%s80 + $0xd38] sm:$0xff] %v927
          %v929 = vld [vmem:[%s79 + $0xd40] sm:$0xff]
          %930 = vst [vmem:[%s80 + $0xd40] sm:$0xff] %v929
          %v931 = vld [vmem:[%s79 + $0xd48] sm:$0xff]
          %932 = vst [vmem:[%s80 + $0xd48] sm:$0xff] %v931
          %v933 = vld [vmem:[%s79 + $0xd50] sm:$0xff]
          %934 = vst [vmem:[%s80 + $0xd50] sm:$0xff] %v933
          %v935 = vld [vmem:[%s79 + $0xd58] sm:$0xff]
          %936 = vst [vmem:[%s80 + $0xd58] sm:$0xff] %v935
          %v937 = vld [vmem:[%s79 + $0xd60] sm:$0xff]
          %938 = vst [vmem:[%s80 + $0xd60] sm:$0xff] %v937
          %v939 = vld [vmem:[%s79 + $0xd68] sm:$0xff]
          %940 = vst [vmem:[%s80 + $0xd68] sm:$0xff] %v939
          %v941 = vld [vmem:[%s79 + $0xd70] sm:$0xff]
          %942 = vst [vmem:[%s80 + $0xd70] sm:$0xff] %v941
          %v943 = vld [vmem:[%s79 + $0xd78] sm:$0xff]
          %944 = vst [vmem:[%s80 + $0xd78] sm:$0xff] %v943
          %v945 = vld [vmem:[%s79 + $0xd80] sm:$0xff]
          %946 = vst [vmem:[%s80 + $0xd80] sm:$0xff] %v945
          %v947 = vld [vmem:[%s79 + $0xd88] sm:$0xff]
          %948 = vst [vmem:[%s80 + $0xd88] sm:$0xff] %v947
          %v949 = vld [vmem:[%s79 + $0xd90] sm:$0xff]
          %950 = vst [vmem:[%s80 + $0xd90] sm:$0xff] %v949
          %v951 = vld [vmem:[%s79 + $0xd98] sm:$0xff]
          %952 = vst [vmem:[%s80 + $0xd98] sm:$0xff] %v951
          %v953 = vld [vmem:[%s79 + $0xda0] sm:$0xff]
          %954 = vst [vmem:[%s80 + $0xda0] sm:$0xff] %v953
          %v955 = vld [vmem:[%s79 + $0xda8] sm:$0xff]
          %956 = vst [vmem:[%s80 + $0xda8] sm:$0xff] %v955
          %v957 = vld [vmem:[%s79 + $0xdb0] sm:$0xff]
          %958 = vst [vmem:[%s80 + $0xdb0] sm:$0xff] %v957
          %v959 = vld [vmem:[%s79 + $0xdb8] sm:$0xff]
          %960 = vst [vmem:[%s80 + $0xdb8] sm:$0xff] %v959
          %v961 = vld [vmem:[%s79 + $0xdc0] sm:$0xff]
          %962 = vst [vmem:[%s80 + $0xdc0] sm:$0xff] %v961
          %v963 = vld [vmem:[%s79 + $0xdc8] sm:$0xff]
          %964 = vst [vmem:[%s80 + $0xdc8] sm:$0xff] %v963
          %v965 = vld [vmem:[%s79 + $0xdd0] sm:$0xff]
          %966 = vst [vmem:[%s80 + $0xdd0] sm:$0xff] %v965
          %v967 = vld [vmem:[%s79 + $0xdd8] sm:$0xff]
          %968 = vst [vmem:[%s80 + $0xdd8] sm:$0xff] %v967
          %v969 = vld [vmem:[%s79 + $0xde0] sm:$0xff]
          %970 = vst [vmem:[%s80 + $0xde0] sm:$0xff] %v969
          %v971 = vld [vmem:[%s79 + $0xde8] sm:$0xff]
          %972 = vst [vmem:[%s80 + $0xde8] sm:$0xff] %v971
          %v973 = vld [vmem:[%s79 + $0xdf0] sm:$0xff]
          %974 = vst [vmem:[%s80 + $0xdf0] sm:$0xff] %v973
          %v975 = vld [vmem:[%s79 + $0xdf8] sm:$0xff]
          %976 = vst [vmem:[%s80 + $0xdf8] sm:$0xff] %v975
          %v977 = vld [vmem:[%s79 + $0xe00] sm:$0xff]
          %978 = vst [vmem:[%s80 + $0xe00] sm:$0xff] %v977
          %v979 = vld [vmem:[%s79 + $0xe08] sm:$0xff]
          %980 = vst [vmem:[%s80 + $0xe08] sm:$0xff] %v979
          %v981 = vld [vmem:[%s79 + $0xe10] sm:$0xff]
          %982 = vst [vmem:[%s80 + $0xe10] sm:$0xff] %v981
          %v983 = vld [vmem:[%s79 + $0xe18] sm:$0xff]
          %984 = vst [vmem:[%s80 + $0xe18] sm:$0xff] %v983
          %v985 = vld [vmem:[%s79 + $0xe20] sm:$0xff]
          %986 = vst [vmem:[%s80 + $0xe20] sm:$0xff] %v985
          %v987 = vld [vmem:[%s79 + $0xe28] sm:$0xff]
          %988 = vst [vmem:[%s80 + $0xe28] sm:$0xff] %v987
          %v989 = vld [vmem:[%s79 + $0xe30] sm:$0xff]
          %990 = vst [vmem:[%s80 + $0xe30] sm:$0xff] %v989
          %v991 = vld [vmem:[%s79 + $0xe38] sm:$0xff]
          %992 = vst [vmem:[%s80 + $0xe38] sm:$0xff] %v991
          %v993 = vld [vmem:[%s79 + $0xe40] sm:$0xff]
          %994 = vst [vmem:[%s80 + $0xe40] sm:$0xff] %v993
          %v995 = vld [vmem:[%s79 + $0xe48] sm:$0xff]
          %996 = vst [vmem:[%s80 + $0xe48] sm:$0xff] %v995
          %v997 = vld [vmem:[%s79 + $0xe50] sm:$0xff]
          %998 = vst [vmem:[%s80 + $0xe50] sm:$0xff] %v997
          %v999 = vld [vmem:[%s79 + $0xe58] sm:$0xff]
          %1000 = vst [vmem:[%s80 + $0xe58] sm:$0xff] %v999
          %v1001 = vld [vmem:[%s79 + $0xe60] sm:$0xff]
          %1002 = vst [vmem:[%s80 + $0xe60] sm:$0xff] %v1001
          %v1003 = vld [vmem:[%s79 + $0xe68] sm:$0xff]
          %1004 = vst [vmem:[%s80 + $0xe68] sm:$0xff] %v1003
          %v1005 = vld [vmem:[%s79 + $0xe70] sm:$0xff]
          %1006 = vst [vmem:[%s80 + $0xe70] sm:$0xff] %v1005
          %v1007 = vld [vmem:[%s79 + $0xe78] sm:$0xff]
          %1008 = vst [vmem:[%s80 + $0xe78] sm:$0xff] %v1007
          %v1009 = vld [vmem:[%s79 + $0xe80] sm:$0xff]
          %1010 = vst [vmem:[%s80 + $0xe80] sm:$0xff] %v1009
          %v1011 = vld [vmem:[%s79 + $0xe88] sm:$0xff]
          %1012 = vst [vmem:[%s80 + $0xe88] sm:$0xff] %v1011
          %v1013 = vld [vmem:[%s79 + $0xe90] sm:$0xff]
          %1014 = vst [vmem:[%s80 + $0xe90] sm:$0xff] %v1013
          %v1015 = vld [vmem:[%s79 + $0xe98] sm:$0xff]
          %1016 = vst [vmem:[%s80 + $0xe98] sm:$0xff] %v1015
          %v1017 = vld [vmem:[%s79 + $0xea0] sm:$0xff]
          %1018 = vst [vmem:[%s80 + $0xea0] sm:$0xff] %v1017
          %v1019 = vld [vmem:[%s79 + $0xea8] sm:$0xff]
          %1020 = vst [vmem:[%s80 + $0xea8] sm:$0xff] %v1019
          %v1021 = vld [vmem:[%s79 + $0xeb0] sm:$0xff]
          %1022 = vst [vmem:[%s80 + $0xeb0] sm:$0xff] %v1021
          %v1023 = vld [vmem:[%s79 + $0xeb8] sm:$0xff]
          %1024 = vst [vmem:[%s80 + $0xeb8] sm:$0xff] %v1023
          %v1025 = vld [vmem:[%s79 + $0xec0] sm:$0xff]
          %1026 = vst [vmem:[%s80 + $0xec0] sm:$0xff] %v1025
          %v1027 = vld [vmem:[%s79 + $0xec8] sm:$0xff]
          %1028 = vst [vmem:[%s80 + $0xec8] sm:$0xff] %v1027
          %v1029 = vld [vmem:[%s79 + $0xed0] sm:$0xff]
          %1030 = vst [vmem:[%s80 + $0xed0] sm:$0xff] %v1029
          %v1031 = vld [vmem:[%s79 + $0xed8] sm:$0xff]
          %1032 = vst [vmem:[%s80 + $0xed8] sm:$0xff] %v1031
          %v1033 = vld [vmem:[%s79 + $0xee0] sm:$0xff]
          %1034 = vst [vmem:[%s80 + $0xee0] sm:$0xff] %v1033
          %v1035 = vld [vmem:[%s79 + $0xee8] sm:$0xff]
          %1036 = vst [vmem:[%s80 + $0xee8] sm:$0xff] %v1035
          %v1037 = vld [vmem:[%s79 + $0xef0] sm:$0xff]
          %1038 = vst [vmem:[%s80 + $0xef0] sm:$0xff] %v1037
          %v1039 = vld [vmem:[%s79 + $0xef8] sm:$0xff]
          %1040 = vst [vmem:[%s80 + $0xef8] sm:$0xff] %v1039
          %v1041 = vld [vmem:[%s79 + $0xf00] sm:$0xff]
          %1042 = vst [vmem:[%s80 + $0xf00] sm:$0xff] %v1041
          %v1043 = vld [vmem:[%s79 + $0xf08] sm:$0xff]
          %1044 = vst [vmem:[%s80 + $0xf08] sm:$0xff] %v1043
          %v1045 = vld [vmem:[%s79 + $0xf10] sm:$0xff]
          %1046 = vst [vmem:[%s80 + $0xf10] sm:$0xff] %v1045
          %v1047 = vld [vmem:[%s79 + $0xf18] sm:$0xff]
          %1048 = vst [vmem:[%s80 + $0xf18] sm:$0xff] %v1047
          %v1049 = vld [vmem:[%s79 + $0xf20] sm:$0xff]
          %1050 = vst [vmem:[%s80 + $0xf20] sm:$0xff] %v1049
          %v1051 = vld [vmem:[%s79 + $0xf28] sm:$0xff]
          %1052 = vst [vmem:[%s80 + $0xf28] sm:$0xff] %v1051
          %v1053 = vld [vmem:[%s79 + $0xf30] sm:$0xff]
          %1054 = vst [vmem:[%s80 + $0xf30] sm:$0xff] %v1053
          %v1055 = vld [vmem:[%s79 + $0xf38] sm:$0xff]
          %1056 = vst [vmem:[%s80 + $0xf38] sm:$0xff] %v1055
          %v1057 = vld [vmem:[%s79 + $0xf40] sm:$0xff]
          %1058 = vst [vmem:[%s80 + $0xf40] sm:$0xff] %v1057
          %v1059 = vld [vmem:[%s79 + $0xf48] sm:$0xff]
          %1060 = vst [vmem:[%s80 + $0xf48] sm:$0xff] %v1059
          %v1061 = vld [vmem:[%s79 + $0xf50] sm:$0xff]
          %1062 = vst [vmem:[%s80 + $0xf50] sm:$0xff] %v1061
          %v1063 = vld [vmem:[%s79 + $0xf58] sm:$0xff]
          %1064 = vst [vmem:[%s80 + $0xf58] sm:$0xff] %v1063
          %v1065 = vld [vmem:[%s79 + $0xf60] sm:$0xff]
          %1066 = vst [vmem:[%s80 + $0xf60] sm:$0xff] %v1065
          %v1067 = vld [vmem:[%s79 + $0xf68] sm:$0xff]
          %1068 = vst [vmem:[%s80 + $0xf68] sm:$0xff] %v1067
          %v1069 = vld [vmem:[%s79 + $0xf70] sm:$0xff]
          %1070 = vst [vmem:[%s80 + $0xf70] sm:$0xff] %v1069
          %v1071 = vld [vmem:[%s79 + $0xf78] sm:$0xff]
          %1072 = vst [vmem:[%s80 + $0xf78] sm:$0xff] %v1071
          %v1073 = vld [vmem:[%s79 + $0xf80] sm:$0xff]
          %1074 = vst [vmem:[%s80 + $0xf80] sm:$0xff] %v1073
          %v1075 = vld [vmem:[%s79 + $0xf88] sm:$0xff]
          %1076 = vst [vmem:[%s80 + $0xf88] sm:$0xff] %v1075
          %v1077 = vld [vmem:[%s79 + $0xf90] sm:$0xff]
          %1078 = vst [vmem:[%s80 + $0xf90] sm:$0xff] %v1077
          %v1079 = vld [vmem:[%s79 + $0xf98] sm:$0xff]
          %1080 = vst [vmem:[%s80 + $0xf98] sm:$0xff] %v1079
          %v1081 = vld [vmem:[%s79 + $0xfa0] sm:$0xff]
          %1082 = vst [vmem:[%s80 + $0xfa0] sm:$0xff] %v1081
          %v1083 = vld [vmem:[%s79 + $0xfa8] sm:$0xff]
          %1084 = vst [vmem:[%s80 + $0xfa8] sm:$0xff] %v1083
          %v1085 = vld [vmem:[%s79 + $0xfb0] sm:$0xff]
          %1086 = vst [vmem:[%s80 + $0xfb0] sm:$0xff] %v1085
          %v1087 = vld [vmem:[%s79 + $0xfb8] sm:$0xff]
          %1088 = vst [vmem:[%s80 + $0xfb8] sm:$0xff] %v1087
          %v1089 = vld [vmem:[%s79 + $0xfc0] sm:$0xff]
          %1090 = vst [vmem:[%s80 + $0xfc0] sm:$0xff] %v1089
          %v1091 = vld [vmem:[%s79 + $0xfc8] sm:$0xff]
          %1092 = vst [vmem:[%s80 + $0xfc8] sm:$0xff] %v1091
          %v1093 = vld [vmem:[%s79 + $0xfd0] sm:$0xff]
          %1094 = vst [vmem:[%s80 + $0xfd0] sm:$0xff] %v1093
          %v1095 = vld [vmem:[%s79 + $0xfd8] sm:$0xff]
          %1096 = vst [vmem:[%s80 + $0xfd8] sm:$0xff] %v1095
          %v1097 = vld [vmem:[%s79 + $0xfe0] sm:$0xff]
          %1098 = vst [vmem:[%s80 + $0xfe0] sm:$0xff] %v1097
          %v1099 = vld [vmem:[%s79 + $0xfe8] sm:$0xff]
          %1100 = vst [vmem:[%s80 + $0xfe8] sm:$0xff] %v1099
          %v1101 = vld [vmem:[%s79 + $0xff0] sm:$0xff]
          %1102 = vst [vmem:[%s80 + $0xff0] sm:$0xff] %v1101
          %v1103 = vld [vmem:[%s79 + $0xff8] sm:$0xff]
          %1104 = vst [vmem:[%s80 + $0xff8] sm:$0xff] %v1103
          %v1105 = vld [vmem:[%s79 + $0x1000] sm:$0xff]
          %1106 = vst [vmem:[%s80 + $0x1000] sm:$0xff] %v1105
          %v1107 = vld [vmem:[%s79 + $0x1008] sm:$0xff]
          %1108 = vst [vmem:[%s80 + $0x1008] sm:$0xff] %v1107
          %v1109 = vld [vmem:[%s79 + $0x1010] sm:$0xff]
          %1110 = vst [vmem:[%s80 + $0x1010] sm:$0xff] %v1109
          %v1111 = vld [vmem:[%s79 + $0x1018] sm:$0xff]
          %1112 = vst [vmem:[%s80 + $0x1018] sm:$0xff] %v1111
          %v1113 = vld [vmem:[%s79 + $0x1020] sm:$0xff]
          %1114 = vst [vmem:[%s80 + $0x1020] sm:$0xff] %v1113
          %v1115 = vld [vmem:[%s79 + $0x1028] sm:$0xff]
          %1116 = vst [vmem:[%s80 + $0x1028] sm:$0xff] %v1115
          %v1117 = vld [vmem:[%s79 + $0x1030] sm:$0xff]
          %1118 = vst [vmem:[%s80 + $0x1030] sm:$0xff] %v1117
          %v1119 = vld [vmem:[%s79 + $0x1038] sm:$0xff]
          %1120 = vst [vmem:[%s80 + $0x1038] sm:$0xff] %v1119
          %v1121 = vld [vmem:[%s79 + $0x1040] sm:$0xff]
          %1122 = vst [vmem:[%s80 + $0x1040] sm:$0xff] %v1121
          %v1123 = vld [vmem:[%s79 + $0x1048] sm:$0xff]
          %1124 = vst [vmem:[%s80 + $0x1048] sm:$0xff] %v1123
          %v1125 = vld [vmem:[%s79 + $0x1050] sm:$0xff]
          %1126 = vst [vmem:[%s80 + $0x1050] sm:$0xff] %v1125
          %v1127 = vld [vmem:[%s79 + $0x1058] sm:$0xff]
          %1128 = vst [vmem:[%s80 + $0x1058] sm:$0xff] %v1127
          %v1129 = vld [vmem:[%s79 + $0x1060] sm:$0xff]
          %1130 = vst [vmem:[%s80 + $0x1060] sm:$0xff] %v1129
          %v1131 = vld [vmem:[%s79 + $0x1068] sm:$0xff]
          %1132 = vst [vmem:[%s80 + $0x1068] sm:$0xff] %v1131
          %v1133 = vld [vmem:[%s79 + $0x1070] sm:$0xff]
          %1134 = vst [vmem:[%s80 + $0x1070] sm:$0xff] %v1133
          %v1135 = vld [vmem:[%s79 + $0x1078] sm:$0xff]
          %1136 = vst [vmem:[%s80 + $0x1078] sm:$0xff] %v1135
          %v1137 = vld [vmem:[%s79 + $0x1080] sm:$0xff]
          %1138 = vst [vmem:[%s80 + $0x1080] sm:$0xff] %v1137
          %v1139 = vld [vmem:[%s79 + $0x1088] sm:$0xff]
          %1140 = vst [vmem:[%s80 + $0x1088] sm:$0xff] %v1139
          %v1141 = vld [vmem:[%s79 + $0x1090] sm:$0xff]
          %1142 = vst [vmem:[%s80 + $0x1090] sm:$0xff] %v1141
          %v1143 = vld [vmem:[%s79 + $0x1098] sm:$0xff]
          %1144 = vst [vmem:[%s80 + $0x1098] sm:$0xff] %v1143
          %v1145 = vld [vmem:[%s79 + $0x10a0] sm:$0xff]
          %1146 = vst [vmem:[%s80 + $0x10a0] sm:$0xff] %v1145
          %v1147 = vld [vmem:[%s79 + $0x10a8] sm:$0xff]
          %1148 = vst [vmem:[%s80 + $0x10a8] sm:$0xff] %v1147
          %v1149 = vld [vmem:[%s79 + $0x10b0] sm:$0xff]
          %1150 = vst [vmem:[%s80 + $0x10b0] sm:$0xff] %v1149
          %v1151 = vld [vmem:[%s79 + $0x10b8] sm:$0xff]
          %1152 = vst [vmem:[%s80 + $0x10b8] sm:$0xff] %v1151
          %v1153 = vld [vmem:[%s79 + $0x10c0] sm:$0xff]
          %1154 = vst [vmem:[%s80 + $0x10c0] sm:$0xff] %v1153
          %v1155 = vld [vmem:[%s79 + $0x10c8] sm:$0xff]
          %1156 = vst [vmem:[%s80 + $0x10c8] sm:$0xff] %v1155
          %v1157 = vld [vmem:[%s79 + $0x10d0] sm:$0xff]
          %1158 = vst [vmem:[%s80 + $0x10d0] sm:$0xff] %v1157
          %v1159 = vld [vmem:[%s79 + $0x10d8] sm:$0xff]
          %1160 = vst [vmem:[%s80 + $0x10d8] sm:$0xff] %v1159
          %v1161 = vld [vmem:[%s79 + $0x10e0] sm:$0xff]
          %1162 = vst [vmem:[%s80 + $0x10e0] sm:$0xff] %v1161
          %v1163 = vld [vmem:[%s79 + $0x10e8] sm:$0xff]
          %1164 = vst [vmem:[%s80 + $0x10e8] sm:$0xff] %v1163
          %v1165 = vld [vmem:[%s79 + $0x10f0] sm:$0xff]
          %1166 = vst [vmem:[%s80 + $0x10f0] sm:$0xff] %v1165
          %v1167 = vld [vmem:[%s79 + $0x10f8] sm:$0xff]
          %1168 = vst [vmem:[%s80 + $0x10f8] sm:$0xff] %v1167
          %v1169 = vld [vmem:[%s79 + $0x1100] sm:$0xff]
          %1170 = vst [vmem:[%s80 + $0x1100] sm:$0xff] %v1169
          %v1171 = vld [vmem:[%s79 + $0x1108] sm:$0xff]
          %1172 = vst [vmem:[%s80 + $0x1108] sm:$0xff] %v1171
          %v1173 = vld [vmem:[%s79 + $0x1110] sm:$0xff]
          %1174 = vst [vmem:[%s80 + $0x1110] sm:$0xff] %v1173
          %v1175 = vld [vmem:[%s79 + $0x1118] sm:$0xff]
          %1176 = vst [vmem:[%s80 + $0x1118] sm:$0xff] %v1175
          %v1177 = vld [vmem:[%s79 + $0x1120] sm:$0xff]
          %1178 = vst [vmem:[%s80 + $0x1120] sm:$0xff] %v1177
          %v1179 = vld [vmem:[%s79 + $0x1128] sm:$0xff]
          %1180 = vst [vmem:[%s80 + $0x1128] sm:$0xff] %v1179
          %v1181 = vld [vmem:[%s79 + $0x1130] sm:$0xff]
          %1182 = vst [vmem:[%s80 + $0x1130] sm:$0xff] %v1181
          %v1183 = vld [vmem:[%s79 + $0x1138] sm:$0xff]
          %1184 = vst [vmem:[%s80 + $0x1138] sm:$0xff] %v1183
          %v1185 = vld [vmem:[%s79 + $0x1140] sm:$0xff]
          %1186 = vst [vmem:[%s80 + $0x1140] sm:$0xff] %v1185
          %v1187 = vld [vmem:[%s79 + $0x1148] sm:$0xff]
          %1188 = vst [vmem:[%s80 + $0x1148] sm:$0xff] %v1187
          %v1189 = vld [vmem:[%s79 + $0x1150] sm:$0xff]
          %1190 = vst [vmem:[%s80 + $0x1150] sm:$0xff] %v1189
          %v1191 = vld [vmem:[%s79 + $0x1158] sm:$0xff]
          %1192 = vst [vmem:[%s80 + $0x1158] sm:$0xff] %v1191
          %v1193 = vld [vmem:[%s79 + $0x1160] sm:$0xff]
          %1194 = vst [vmem:[%s80 + $0x1160] sm:$0xff] %v1193
          %v1195 = vld [vmem:[%s79 + $0x1168] sm:$0xff]
          %1196 = vst [vmem:[%s80 + $0x1168] sm:$0xff] %v1195
          %v1197 = vld [vmem:[%s79 + $0x1170] sm:$0xff]
          %1198 = vst [vmem:[%s80 + $0x1170] sm:$0xff] %v1197
          %v1199 = vld [vmem:[%s79 + $0x1178] sm:$0xff]
          %1200 = vst [vmem:[%s80 + $0x1178] sm:$0xff] %v1199
          %v1201 = vld [vmem:[%s79 + $0x1180] sm:$0xff]
          %1202 = vst [vmem:[%s80 + $0x1180] sm:$0xff] %v1201
          %v1203 = vld [vmem:[%s79 + $0x1188] sm:$0xff]
          %1204 = vst [vmem:[%s80 + $0x1188] sm:$0xff] %v1203
          %v1205 = vld [vmem:[%s79 + $0x1190] sm:$0xff]
          %1206 = vst [vmem:[%s80 + $0x1190] sm:$0xff] %v1205
          %v1207 = vld [vmem:[%s79 + $0x1198] sm:$0xff]
          %1208 = vst [vmem:[%s80 + $0x1198] sm:$0xff] %v1207
          %v1209 = vld [vmem:[%s79 + $0x11a0] sm:$0xff]
          %1210 = vst [vmem:[%s80 + $0x11a0] sm:$0xff] %v1209
          %v1211 = vld [vmem:[%s79 + $0x11a8] sm:$0xff]
          %1212 = vst [vmem:[%s80 + $0x11a8] sm:$0xff] %v1211
          %v1213 = vld [vmem:[%s79 + $0x11b0] sm:$0xff]
          %1214 = vst [vmem:[%s80 + $0x11b0] sm:$0xff] %v1213
          %v1215 = vld [vmem:[%s79 + $0x11b8] sm:$0xff]
          %1216 = vst [vmem:[%s80 + $0x11b8] sm:$0xff] %v1215
          %v1217 = vld [vmem:[%s79 + $0x11c0] sm:$0xff]
          %1218 = vst [vmem:[%s80 + $0x11c0] sm:$0xff] %v1217
          %v1219 = vld [vmem:[%s79 + $0x11c8] sm:$0xff]
          %1220 = vst [vmem:[%s80 + $0x11c8] sm:$0xff] %v1219
          %v1221 = vld [vmem:[%s79 + $0x11d0] sm:$0xff]
          %1222 = vst [vmem:[%s80 + $0x11d0] sm:$0xff] %v1221
          %v1223 = vld [vmem:[%s79 + $0x11d8] sm:$0xff]
          %1224 = vst [vmem:[%s80 + $0x11d8] sm:$0xff] %v1223
          %v1225 = vld [vmem:[%s79 + $0x11e0] sm:$0xff]
          %1226 = vst [vmem:[%s80 + $0x11e0] sm:$0xff] %v1225
          %v1227 = vld [vmem:[%s79 + $0x11e8] sm:$0xff]
          %1228 = vst [vmem:[%s80 + $0x11e8] sm:$0xff] %v1227
          %v1229 = vld [vmem:[%s79 + $0x11f0] sm:$0xff]
          %1230 = vst [vmem:[%s80 + $0x11f0] sm:$0xff] %v1229
          %v1231 = vld [vmem:[%s79 + $0x11f8] sm:$0xff]
          %1232 = vst [vmem:[%s80 + $0x11f8] sm:$0xff] %v1231
          %v1233 = vld [vmem:[%s79 + $0x1200] sm:$0xff]
          %1234 = vst [vmem:[%s80 + $0x1200] sm:$0xff] %v1233
          %v1235 = vld [vmem:[%s79 + $0x1208] sm:$0xff]
          %1236 = vst [vmem:[%s80 + $0x1208] sm:$0xff] %v1235
          %v1237 = vld [vmem:[%s79 + $0x1210] sm:$0xff]
          %1238 = vst [vmem:[%s80 + $0x1210] sm:$0xff] %v1237
          %v1239 = vld [vmem:[%s79 + $0x1218] sm:$0xff]
          %1240 = vst [vmem:[%s80 + $0x1218] sm:$0xff] %v1239
          %v1241 = vld [vmem:[%s79 + $0x1220] sm:$0xff]
          %1242 = vst [vmem:[%s80 + $0x1220] sm:$0xff] %v1241
          %v1243 = vld [vmem:[%s79 + $0x1228] sm:$0xff]
          %1244 = vst [vmem:[%s80 + $0x1228] sm:$0xff] %v1243
          %v1245 = vld [vmem:[%s79 + $0x1230] sm:$0xff]
          %1246 = vst [vmem:[%s80 + $0x1230] sm:$0xff] %v1245
          %v1247 = vld [vmem:[%s79 + $0x1238] sm:$0xff]
          %1248 = vst [vmem:[%s80 + $0x1238] sm:$0xff] %v1247
          %v1249 = vld [vmem:[%s79 + $0x1240] sm:$0xff]
          %1250 = vst [vmem:[%s80 + $0x1240] sm:$0xff] %v1249
          %v1251 = vld [vmem:[%s79 + $0x1248] sm:$0xff]
          %1252 = vst [vmem:[%s80 + $0x1248] sm:$0xff] %v1251
          %v1253 = vld [vmem:[%s79 + $0x1250] sm:$0xff]
          %1254 = vst [vmem:[%s80 + $0x1250] sm:$0xff] %v1253
          %v1255 = vld [vmem:[%s79 + $0x1258] sm:$0xff]
          %1256 = vst [vmem:[%s80 + $0x1258] sm:$0xff] %v1255
          %v1257 = vld [vmem:[%s79 + $0x1260] sm:$0xff]
          %1258 = vst [vmem:[%s80 + $0x1260] sm:$0xff] %v1257
          %v1259 = vld [vmem:[%s79 + $0x1268] sm:$0xff]
          %1260 = vst [vmem:[%s80 + $0x1268] sm:$0xff] %v1259
          %v1261 = vld [vmem:[%s79 + $0x1270] sm:$0xff]
          %1262 = vst [vmem:[%s80 + $0x1270] sm:$0xff] %v1261
          %v1263 = vld [vmem:[%s79 + $0x1278] sm:$0xff]
          %1264 = vst [vmem:[%s80 + $0x1278] sm:$0xff] %v1263
          %v1265 = vld [vmem:[%s79 + $0x1280] sm:$0xff]
          %1266 = vst [vmem:[%s80 + $0x1280] sm:$0xff] %v1265
          %v1267 = vld [vmem:[%s79 + $0x1288] sm:$0xff]
          %1268 = vst [vmem:[%s80 + $0x1288] sm:$0xff] %v1267
          %v1269 = vld [vmem:[%s79 + $0x1290] sm:$0xff]
          %1270 = vst [vmem:[%s80 + $0x1290] sm:$0xff] %v1269
          %v1271 = vld [vmem:[%s79 + $0x1298] sm:$0xff]
          %1272 = vst [vmem:[%s80 + $0x1298] sm:$0xff] %v1271
          %v1273 = vld [vmem:[%s79 + $0x12a0] sm:$0xff]
          %1274 = vst [vmem:[%s80 + $0x12a0] sm:$0xff] %v1273
          %v1275 = vld [vmem:[%s79 + $0x12a8] sm:$0xff]
          %1276 = vst [vmem:[%s80 + $0x12a8] sm:$0xff] %v1275
          %v1277 = vld [vmem:[%s79 + $0x12b0] sm:$0xff]
          %1278 = vst [vmem:[%s80 + $0x12b0] sm:$0xff] %v1277
          %v1279 = vld [vmem:[%s79 + $0x12b8] sm:$0xff]
          %1280 = vst [vmem:[%s80 + $0x12b8] sm:$0xff] %v1279
          %v1281 = vld [vmem:[%s79 + $0x12c0] sm:$0xff]
          %1282 = vst [vmem:[%s80 + $0x12c0] sm:$0xff] %v1281
          %v1283 = vld [vmem:[%s79 + $0x12c8] sm:$0xff]
          %1284 = vst [vmem:[%s80 + $0x12c8] sm:$0xff] %v1283
          %v1285 = vld [vmem:[%s79 + $0x12d0] sm:$0xff]
          %1286 = vst [vmem:[%s80 + $0x12d0] sm:$0xff] %v1285
          %v1287 = vld [vmem:[%s79 + $0x12d8] sm:$0xff]
          %1288 = vst [vmem:[%s80 + $0x12d8] sm:$0xff] %v1287
          %v1289 = vld [vmem:[%s79 + $0x12e0] sm:$0xff]
          %1290 = vst [vmem:[%s80 + $0x12e0] sm:$0xff] %v1289
          %v1291 = vld [vmem:[%s79 + $0x12e8] sm:$0xff]
          %1292 = vst [vmem:[%s80 + $0x12e8] sm:$0xff] %v1291
          %v1293 = vld [vmem:[%s79 + $0x12f0] sm:$0xff]
          %1294 = vst [vmem:[%s80 + $0x12f0] sm:$0xff] %v1293
          %v1295 = vld [vmem:[%s79 + $0x12f8] sm:$0xff]
          %1296 = vst [vmem:[%s80 + $0x12f8] sm:$0xff] %v1295
          %v1297 = vld [vmem:[%s79 + $0x1300] sm:$0xff]
          %1298 = vst [vmem:[%s80 + $0x1300] sm:$0xff] %v1297
          %v1299 = vld [vmem:[%s79 + $0x1308] sm:$0xff]
          %1300 = vst [vmem:[%s80 + $0x1308] sm:$0xff] %v1299
          %v1301 = vld [vmem:[%s79 + $0x1310] sm:$0xff]
          %1302 = vst [vmem:[%s80 + $0x1310] sm:$0xff] %v1301
          %v1303 = vld [vmem:[%s79 + $0x1318] sm:$0xff]
          %1304 = vst [vmem:[%s80 + $0x1318] sm:$0xff] %v1303
          %v1305 = vld [vmem:[%s79 + $0x1320] sm:$0xff]
          %1306 = vst [vmem:[%s80 + $0x1320] sm:$0xff] %v1305
          %v1307 = vld [vmem:[%s79 + $0x1328] sm:$0xff]
          %1308 = vst [vmem:[%s80 + $0x1328] sm:$0xff] %v1307
          %v1309 = vld [vmem:[%s79 + $0x1330] sm:$0xff]
          %1310 = vst [vmem:[%s80 + $0x1330] sm:$0xff] %v1309
          %v1311 = vld [vmem:[%s79 + $0x1338] sm:$0xff]
          %1312 = vst [vmem:[%s80 + $0x1338] sm:$0xff] %v1311
          %v1313 = vld [vmem:[%s79 + $0x1340] sm:$0xff]
          %1314 = vst [vmem:[%s80 + $0x1340] sm:$0xff] %v1313
          %v1315 = vld [vmem:[%s79 + $0x1348] sm:$0xff]
          %1316 = vst [vmem:[%s80 + $0x1348] sm:$0xff] %v1315
          %v1317 = vld [vmem:[%s79 + $0x1350] sm:$0xff]
          %1318 = vst [vmem:[%s80 + $0x1350] sm:$0xff] %v1317
          %v1319 = vld [vmem:[%s79 + $0x1358] sm:$0xff]
          %1320 = vst [vmem:[%s80 + $0x1358] sm:$0xff] %v1319
          %v1321 = vld [vmem:[%s79 + $0x1360] sm:$0xff]
          %1322 = vst [vmem:[%s80 + $0x1360] sm:$0xff] %v1321
          %v1323 = vld [vmem:[%s79 + $0x1368] sm:$0xff]
          %1324 = vst [vmem:[%s80 + $0x1368] sm:$0xff] %v1323
          %v1325 = vld [vmem:[%s79 + $0x1370] sm:$0xff]
          %1326 = vst [vmem:[%s80 + $0x1370] sm:$0xff] %v1325
          %v1327 = vld [vmem:[%s79 + $0x1378] sm:$0xff]
          %1328 = vst [vmem:[%s80 + $0x1378] sm:$0xff] %v1327
          %v1329 = vld [vmem:[%s79 + $0x1380] sm:$0xff]
          %1330 = vst [vmem:[%s80 + $0x1380] sm:$0xff] %v1329
          %v1331 = vld [vmem:[%s79 + $0x1388] sm:$0xff]
          %1332 = vst [vmem:[%s80 + $0x1388] sm:$0xff] %v1331
          %v1333 = vld [vmem:[%s79 + $0x1390] sm:$0xff]
          %1334 = vst [vmem:[%s80 + $0x1390] sm:$0xff] %v1333
          %v1335 = vld [vmem:[%s79 + $0x1398] sm:$0xff]
          %1336 = vst [vmem:[%s80 + $0x1398] sm:$0xff] %v1335
          %v1337 = vld [vmem:[%s79 + $0x13a0] sm:$0xff]
          %1338 = vst [vmem:[%s80 + $0x13a0] sm:$0xff] %v1337
          %v1339 = vld [vmem:[%s79 + $0x13a8] sm:$0xff]
          %1340 = vst [vmem:[%s80 + $0x13a8] sm:$0xff] %v1339
          %v1341 = vld [vmem:[%s79 + $0x13b0] sm:$0xff]
          %1342 = vst [vmem:[%s80 + $0x13b0] sm:$0xff] %v1341
          %v1343 = vld [vmem:[%s79 + $0x13b8] sm:$0xff]
          %1344 = vst [vmem:[%s80 + $0x13b8] sm:$0xff] %v1343
          %v1345 = vld [vmem:[%s79 + $0x13c0] sm:$0xff]
          %1346 = vst [vmem:[%s80 + $0x13c0] sm:$0xff] %v1345
          %v1347 = vld [vmem:[%s79 + $0x13c8] sm:$0xff]
          %1348 = vst [vmem:[%s80 + $0x13c8] sm:$0xff] %v1347
          %v1349 = vld [vmem:[%s79 + $0x13d0] sm:$0xff]
          %1350 = vst [vmem:[%s80 + $0x13d0] sm:$0xff] %v1349
          %v1351 = vld [vmem:[%s79 + $0x13d8] sm:$0xff]
          %1352 = vst [vmem:[%s80 + $0x13d8] sm:$0xff] %v1351
          %v1353 = vld [vmem:[%s79 + $0x13e0] sm:$0xff]
          %1354 = vst [vmem:[%s80 + $0x13e0] sm:$0xff] %v1353
          %v1355 = vld [vmem:[%s79 + $0x13e8] sm:$0xff]
          %1356 = vst [vmem:[%s80 + $0x13e8] sm:$0xff] %v1355
          %v1357 = vld [vmem:[%s79 + $0x13f0] sm:$0xff]
          %1358 = vst [vmem:[%s80 + $0x13f0] sm:$0xff] %v1357
          %v1359 = vld [vmem:[%s79 + $0x13f8] sm:$0xff]
          %1360 = vst [vmem:[%s80 + $0x13f8] sm:$0xff] %v1359
          %v1361 = vld [vmem:[%s79 + $0x1400] sm:$0xff]
          %1362 = vst [vmem:[%s80 + $0x1400] sm:$0xff] %v1361
          %v1363 = vld [vmem:[%s79 + $0x1408] sm:$0xff]
          %1364 = vst [vmem:[%s80 + $0x1408] sm:$0xff] %v1363
          %v1365 = vld [vmem:[%s79 + $0x1410] sm:$0xff]
          %1366 = vst [vmem:[%s80 + $0x1410] sm:$0xff] %v1365
          %v1367 = vld [vmem:[%s79 + $0x1418] sm:$0xff]
          %1368 = vst [vmem:[%s80 + $0x1418] sm:$0xff] %v1367
          %v1369 = vld [vmem:[%s79 + $0x1420] sm:$0xff]
          %1370 = vst [vmem:[%s80 + $0x1420] sm:$0xff] %v1369
          %v1371 = vld [vmem:[%s79 + $0x1428] sm:$0xff]
          %1372 = vst [vmem:[%s80 + $0x1428] sm:$0xff] %v1371
          %v1373 = vld [vmem:[%s79 + $0x1430] sm:$0xff]
          %1374 = vst [vmem:[%s80 + $0x1430] sm:$0xff] %v1373
          %v1375 = vld [vmem:[%s79 + $0x1438] sm:$0xff]
          %1376 = vst [vmem:[%s80 + $0x1438] sm:$0xff] %v1375
          %v1377 = vld [vmem:[%s79 + $0x1440] sm:$0xff]
          %1378 = vst [vmem:[%s80 + $0x1440] sm:$0xff] %v1377
          %v1379 = vld [vmem:[%s79 + $0x1448] sm:$0xff]
          %1380 = vst [vmem:[%s80 + $0x1448] sm:$0xff] %v1379
          %v1381 = vld [vmem:[%s79 + $0x1450] sm:$0xff]
          %1382 = vst [vmem:[%s80 + $0x1450] sm:$0xff] %v1381
          %v1383 = vld [vmem:[%s79 + $0x1458] sm:$0xff]
          %1384 = vst [vmem:[%s80 + $0x1458] sm:$0xff] %v1383
          %v1385 = vld [vmem:[%s79 + $0x1460] sm:$0xff]
          %1386 = vst [vmem:[%s80 + $0x1460] sm:$0xff] %v1385
          %v1387 = vld [vmem:[%s79 + $0x1468] sm:$0xff]
          %1388 = vst [vmem:[%s80 + $0x1468] sm:$0xff] %v1387
          %v1389 = vld [vmem:[%s79 + $0x1470] sm:$0xff]
          %1390 = vst [vmem:[%s80 + $0x1470] sm:$0xff] %v1389
          %v1391 = vld [vmem:[%s79 + $0x1478] sm:$0xff]
          %1392 = vst [vmem:[%s80 + $0x1478] sm:$0xff] %v1391
          %v1393 = vld [vmem:[%s79 + $0x1480] sm:$0xff]
          %1394 = vst [vmem:[%s80 + $0x1480] sm:$0xff] %v1393
          %v1395 = vld [vmem:[%s79 + $0x1488] sm:$0xff]
          %1396 = vst [vmem:[%s80 + $0x1488] sm:$0xff] %v1395
          %v1397 = vld [vmem:[%s79 + $0x1490] sm:$0xff]
          %1398 = vst [vmem:[%s80 + $0x1490] sm:$0xff] %v1397
          %v1399 = vld [vmem:[%s79 + $0x1498] sm:$0xff]
          %1400 = vst [vmem:[%s80 + $0x1498] sm:$0xff] %v1399
          %v1401 = vld [vmem:[%s79 + $0x14a0] sm:$0xff]
          %1402 = vst [vmem:[%s80 + $0x14a0] sm:$0xff] %v1401
          %v1403 = vld [vmem:[%s79 + $0x14a8] sm:$0xff]
          %1404 = vst [vmem:[%s80 + $0x14a8] sm:$0xff] %v1403
          %v1405 = vld [vmem:[%s79 + $0x14b0] sm:$0xff]
          %1406 = vst [vmem:[%s80 + $0x14b0] sm:$0xff] %v1405
          %v1407 = vld [vmem:[%s79 + $0x14b8] sm:$0xff]
          %1408 = vst [vmem:[%s80 + $0x14b8] sm:$0xff] %v1407
          %v1409 = vld [vmem:[%s79 + $0x14c0] sm:$0xff]
          %1410 = vst [vmem:[%s80 + $0x14c0] sm:$0xff] %v1409
          %v1411 = vld [vmem:[%s79 + $0x14c8] sm:$0xff]
          %1412 = vst [vmem:[%s80 + $0x14c8] sm:$0xff] %v1411
          %v1413 = vld [vmem:[%s79 + $0x14d0] sm:$0xff]
          %1414 = vst [vmem:[%s80 + $0x14d0] sm:$0xff] %v1413
          %v1415 = vld [vmem:[%s79 + $0x14d8] sm:$0xff]
          %1416 = vst [vmem:[%s80 + $0x14d8] sm:$0xff] %v1415
          %v1417 = vld [vmem:[%s79 + $0x14e0] sm:$0xff]
          %1418 = vst [vmem:[%s80 + $0x14e0] sm:$0xff] %v1417
          %v1419 = vld [vmem:[%s79 + $0x14e8] sm:$0xff]
          %1420 = vst [vmem:[%s80 + $0x14e8] sm:$0xff] %v1419
          %v1421 = vld [vmem:[%s79 + $0x14f0] sm:$0xff]
          %1422 = vst [vmem:[%s80 + $0x14f0] sm:$0xff] %v1421
          %v1423 = vld [vmem:[%s79 + $0x14f8] sm:$0xff]
          %1424 = vst [vmem:[%s80 + $0x14f8] sm:$0xff] %v1423
          %v1425 = vld [vmem:[%s79 + $0x1500] sm:$0xff]
          %1426 = vst [vmem:[%s80 + $0x1500] sm:$0xff] %v1425
          %v1427 = vld [vmem:[%s79 + $0x1508] sm:$0xff]
          %1428 = vst [vmem:[%s80 + $0x1508] sm:$0xff] %v1427
          %v1429 = vld [vmem:[%s79 + $0x1510] sm:$0xff]
          %1430 = vst [vmem:[%s80 + $0x1510] sm:$0xff] %v1429
          %v1431 = vld [vmem:[%s79 + $0x1518] sm:$0xff]
          %1432 = vst [vmem:[%s80 + $0x1518] sm:$0xff] %v1431
          %v1433 = vld [vmem:[%s79 + $0x1520] sm:$0xff]
          %1434 = vst [vmem:[%s80 + $0x1520] sm:$0xff] %v1433
          %v1435 = vld [vmem:[%s79 + $0x1528] sm:$0xff]
          %1436 = vst [vmem:[%s80 + $0x1528] sm:$0xff] %v1435
          %v1437 = vld [vmem:[%s79 + $0x1530] sm:$0xff]
          %1438 = vst [vmem:[%s80 + $0x1530] sm:$0xff] %v1437
          %v1439 = vld [vmem:[%s79 + $0x1538] sm:$0xff]
          %1440 = vst [vmem:[%s80 + $0x1538] sm:$0xff] %v1439
          %v1441 = vld [vmem:[%s79 + $0x1540] sm:$0xff]
          %1442 = vst [vmem:[%s80 + $0x1540] sm:$0xff] %v1441
          %v1443 = vld [vmem:[%s79 + $0x1548] sm:$0xff]
          %1444 = vst [vmem:[%s80 + $0x1548] sm:$0xff] %v1443
          %v1445 = vld [vmem:[%s79 + $0x1550] sm:$0xff]
          %1446 = vst [vmem:[%s80 + $0x1550] sm:$0xff] %v1445
          %v1447 = vld [vmem:[%s79 + $0x1558] sm:$0xff]
          %1448 = vst [vmem:[%s80 + $0x1558] sm:$0xff] %v1447
          %v1449 = vld [vmem:[%s79 + $0x1560] sm:$0xff]
          %1450 = vst [vmem:[%s80 + $0x1560] sm:$0xff] %v1449
          %v1451 = vld [vmem:[%s79 + $0x1568] sm:$0xff]
          %1452 = vst [vmem:[%s80 + $0x1568] sm:$0xff] %v1451
          %v1453 = vld [vmem:[%s79 + $0x1570] sm:$0xff]
          %1454 = vst [vmem:[%s80 + $0x1570] sm:$0xff] %v1453
          %v1455 = vld [vmem:[%s79 + $0x1578] sm:$0xff]
          %1456 = vst [vmem:[%s80 + $0x1578] sm:$0xff] %v1455
          %v1457 = vld [vmem:[%s79 + $0x1580] sm:$0xff]
          %1458 = vst [vmem:[%s80 + $0x1580] sm:$0xff] %v1457
          %v1459 = vld [vmem:[%s79 + $0x1588] sm:$0xff]
          %1460 = vst [vmem:[%s80 + $0x1588] sm:$0xff] %v1459
          %v1461 = vld [vmem:[%s79 + $0x1590] sm:$0xff]
          %1462 = vst [vmem:[%s80 + $0x1590] sm:$0xff] %v1461
          %v1463 = vld [vmem:[%s79 + $0x1598] sm:$0xff]
          %1464 = vst [vmem:[%s80 + $0x1598] sm:$0xff] %v1463
          %v1465 = vld [vmem:[%s79 + $0x15a0] sm:$0xff]
          %1466 = vst [vmem:[%s80 + $0x15a0] sm:$0xff] %v1465
          %v1467 = vld [vmem:[%s79 + $0x15a8] sm:$0xff]
          %1468 = vst [vmem:[%s80 + $0x15a8] sm:$0xff] %v1467
          %v1469 = vld [vmem:[%s79 + $0x15b0] sm:$0xff]
          %1470 = vst [vmem:[%s80 + $0x15b0] sm:$0xff] %v1469
          %v1471 = vld [vmem:[%s79 + $0x15b8] sm:$0xff]
          %1472 = vst [vmem:[%s80 + $0x15b8] sm:$0xff] %v1471
          %v1473 = vld [vmem:[%s79 + $0x15c0] sm:$0xff]
          %1474 = vst [vmem:[%s80 + $0x15c0] sm:$0xff] %v1473
          %v1475 = vld [vmem:[%s79 + $0x15c8] sm:$0xff]
          %1476 = vst [vmem:[%s80 + $0x15c8] sm:$0xff] %v1475
          %v1477 = vld [vmem:[%s79 + $0x15d0] sm:$0xff]
          %1478 = vst [vmem:[%s80 + $0x15d0] sm:$0xff] %v1477
          %v1479 = vld [vmem:[%s79 + $0x15d8] sm:$0xff]
          %1480 = vst [vmem:[%s80 + $0x15d8] sm:$0xff] %v1479
          %v1481 = vld [vmem:[%s79 + $0x15e0] sm:$0xff]
          %1482 = vst [vmem:[%s80 + $0x15e0] sm:$0xff] %v1481
          %v1483 = vld [vmem:[%s79 + $0x15e8] sm:$0xff]
          %1484 = vst [vmem:[%s80 + $0x15e8] sm:$0xff] %v1483
          %v1485 = vld [vmem:[%s79 + $0x15f0] sm:$0xff]
          %1486 = vst [vmem:[%s80 + $0x15f0] sm:$0xff] %v1485
          %v1487 = vld [vmem:[%s79 + $0x15f8] sm:$0xff]
          %1488 = vst [vmem:[%s80 + $0x15f8] sm:$0xff] %v1487
          %v1489 = vld [vmem:[%s79 + $0x1600] sm:$0xff]
          %1490 = vst [vmem:[%s80 + $0x1600] sm:$0xff] %v1489
          %v1491 = vld [vmem:[%s79 + $0x1608] sm:$0xff]
          %1492 = vst [vmem:[%s80 + $0x1608] sm:$0xff] %v1491
          %v1493 = vld [vmem:[%s79 + $0x1610] sm:$0xff]
          %1494 = vst [vmem:[%s80 + $0x1610] sm:$0xff] %v1493
          %v1495 = vld [vmem:[%s79 + $0x1618] sm:$0xff]
          %1496 = vst [vmem:[%s80 + $0x1618] sm:$0xff] %v1495
          %v1497 = vld [vmem:[%s79 + $0x1620] sm:$0xff]
          %1498 = vst [vmem:[%s80 + $0x1620] sm:$0xff] %v1497
          %v1499 = vld [vmem:[%s79 + $0x1628] sm:$0xff]
          %1500 = vst [vmem:[%s80 + $0x1628] sm:$0xff] %v1499
          %v1501 = vld [vmem:[%s79 + $0x1630] sm:$0xff]
          %1502 = vst [vmem:[%s80 + $0x1630] sm:$0xff] %v1501
          %v1503 = vld [vmem:[%s79 + $0x1638] sm:$0xff]
          %1504 = vst [vmem:[%s80 + $0x1638] sm:$0xff] %v1503
          %v1505 = vld [vmem:[%s79 + $0x1640] sm:$0xff]
          %1506 = vst [vmem:[%s80 + $0x1640] sm:$0xff] %v1505
          %v1507 = vld [vmem:[%s79 + $0x1648] sm:$0xff]
          %1508 = vst [vmem:[%s80 + $0x1648] sm:$0xff] %v1507
          %v1509 = vld [vmem:[%s79 + $0x1650] sm:$0xff]
          %1510 = vst [vmem:[%s80 + $0x1650] sm:$0xff] %v1509
          %v1511 = vld [vmem:[%s79 + $0x1658] sm:$0xff]
          %1512 = vst [vmem:[%s80 + $0x1658] sm:$0xff] %v1511
          %v1513 = vld [vmem:[%s79 + $0x1660] sm:$0xff]
          %1514 = vst [vmem:[%s80 + $0x1660] sm:$0xff] %v1513
          %v1515 = vld [vmem:[%s79 + $0x1668] sm:$0xff]
          %1516 = vst [vmem:[%s80 + $0x1668] sm:$0xff] %v1515
          %v1517 = vld [vmem:[%s79 + $0x1670] sm:$0xff]
          %1518 = vst [vmem:[%s80 + $0x1670] sm:$0xff] %v1517
          %v1519 = vld [vmem:[%s79 + $0x1678] sm:$0xff]
          %1520 = vst [vmem:[%s80 + $0x1678] sm:$0xff] %v1519
          %v1521 = vld [vmem:[%s79 + $0x1680] sm:$0xff]
          %1522 = vst [vmem:[%s80 + $0x1680] sm:$0xff] %v1521
          %v1523 = vld [vmem:[%s79 + $0x1688] sm:$0xff]
          %1524 = vst [vmem:[%s80 + $0x1688] sm:$0xff] %v1523
          %v1525 = vld [vmem:[%s79 + $0x1690] sm:$0xff]
          %1526 = vst [vmem:[%s80 + $0x1690] sm:$0xff] %v1525
          %v1527 = vld [vmem:[%s79 + $0x1698] sm:$0xff]
          %1528 = vst [vmem:[%s80 + $0x1698] sm:$0xff] %v1527
          %v1529 = vld [vmem:[%s79 + $0x16a0] sm:$0xff]
          %1530 = vst [vmem:[%s80 + $0x16a0] sm:$0xff] %v1529
          %v1531 = vld [vmem:[%s79 + $0x16a8] sm:$0xff]
          %1532 = vst [vmem:[%s80 + $0x16a8] sm:$0xff] %v1531
          %v1533 = vld [vmem:[%s79 + $0x16b0] sm:$0xff]
          %1534 = vst [vmem:[%s80 + $0x16b0] sm:$0xff] %v1533
          %v1535 = vld [vmem:[%s79 + $0x16b8] sm:$0xff]
          %1536 = vst [vmem:[%s80 + $0x16b8] sm:$0xff] %v1535
          %v1537 = vld [vmem:[%s79 + $0x16c0] sm:$0xff]
          %1538 = vst [vmem:[%s80 + $0x16c0] sm:$0xff] %v1537
          %v1539 = vld [vmem:[%s79 + $0x16c8] sm:$0xff]
          %1540 = vst [vmem:[%s80 + $0x16c8] sm:$0xff] %v1539
          %v1541 = vld [vmem:[%s79 + $0x16d0] sm:$0xff]
          %1542 = vst [vmem:[%s80 + $0x16d0] sm:$0xff] %v1541
          %v1543 = vld [vmem:[%s79 + $0x16d8] sm:$0xff]
          %1544 = vst [vmem:[%s80 + $0x16d8] sm:$0xff] %v1543
          %v1545 = vld [vmem:[%s79 + $0x16e0] sm:$0xff]
          %1546 = vst [vmem:[%s80 + $0x16e0] sm:$0xff] %v1545
          %v1547 = vld [vmem:[%s79 + $0x16e8] sm:$0xff]
          %1548 = vst [vmem:[%s80 + $0x16e8] sm:$0xff] %v1547
          %v1549 = vld [vmem:[%s79 + $0x16f0] sm:$0xff]
          %1550 = vst [vmem:[%s80 + $0x16f0] sm:$0xff] %v1549
          %v1551 = vld [vmem:[%s79 + $0x16f8] sm:$0xff]
          %1552 = vst [vmem:[%s80 + $0x16f8] sm:$0xff] %v1551
          %v1553 = vld [vmem:[%s79 + $0x1700] sm:$0xff]
          %1554 = vst [vmem:[%s80 + $0x1700] sm:$0xff] %v1553
          %v1555 = vld [vmem:[%s79 + $0x1708] sm:$0xff]
          %1556 = vst [vmem:[%s80 + $0x1708] sm:$0xff] %v1555
          %v1557 = vld [vmem:[%s79 + $0x1710] sm:$0xff]
          %1558 = vst [vmem:[%s80 + $0x1710] sm:$0xff] %v1557
          %v1559 = vld [vmem:[%s79 + $0x1718] sm:$0xff]
          %1560 = vst [vmem:[%s80 + $0x1718] sm:$0xff] %v1559
          %v1561 = vld [vmem:[%s79 + $0x1720] sm:$0xff]
          %1562 = vst [vmem:[%s80 + $0x1720] sm:$0xff] %v1561
          %v1563 = vld [vmem:[%s79 + $0x1728] sm:$0xff]
          %1564 = vst [vmem:[%s80 + $0x1728] sm:$0xff] %v1563
          %v1565 = vld [vmem:[%s79 + $0x1730] sm:$0xff]
          %1566 = vst [vmem:[%s80 + $0x1730] sm:$0xff] %v1565
          %v1567 = vld [vmem:[%s79 + $0x1738] sm:$0xff]
          %1568 = vst [vmem:[%s80 + $0x1738] sm:$0xff] %v1567
          %v1569 = vld [vmem:[%s79 + $0x1740] sm:$0xff]
          %1570 = vst [vmem:[%s80 + $0x1740] sm:$0xff] %v1569
          %v1571 = vld [vmem:[%s79 + $0x1748] sm:$0xff]
          %1572 = vst [vmem:[%s80 + $0x1748] sm:$0xff] %v1571
          %v1573 = vld [vmem:[%s79 + $0x1750] sm:$0xff]
          %1574 = vst [vmem:[%s80 + $0x1750] sm:$0xff] %v1573
          %v1575 = vld [vmem:[%s79 + $0x1758] sm:$0xff]
          %1576 = vst [vmem:[%s80 + $0x1758] sm:$0xff] %v1575
          %v1577 = vld [vmem:[%s79 + $0x1760] sm:$0xff]
          %1578 = vst [vmem:[%s80 + $0x1760] sm:$0xff] %v1577
          %v1579 = vld [vmem:[%s79 + $0x1768] sm:$0xff]
          %1580 = vst [vmem:[%s80 + $0x1768] sm:$0xff] %v1579
          %v1581 = vld [vmem:[%s79 + $0x1770] sm:$0xff]
          %1582 = vst [vmem:[%s80 + $0x1770] sm:$0xff] %v1581
          %v1583 = vld [vmem:[%s79 + $0x1778] sm:$0xff]
          %1584 = vst [vmem:[%s80 + $0x1778] sm:$0xff] %v1583
          %v1585 = vld [vmem:[%s79 + $0x1780] sm:$0xff]
          %1586 = vst [vmem:[%s80 + $0x1780] sm:$0xff] %v1585
          %v1587 = vld [vmem:[%s79 + $0x1788] sm:$0xff]
          %1588 = vst [vmem:[%s80 + $0x1788] sm:$0xff] %v1587
          %v1589 = vld [vmem:[%s79 + $0x1790] sm:$0xff]
          %1590 = vst [vmem:[%s80 + $0x1790] sm:$0xff] %v1589
          %v1591 = vld [vmem:[%s79 + $0x1798] sm:$0xff]
          %1592 = vst [vmem:[%s80 + $0x1798] sm:$0xff] %v1591
          %v1593 = vld [vmem:[%s79 + $0x17a0] sm:$0xff]
          %1594 = vst [vmem:[%s80 + $0x17a0] sm:$0xff] %v1593
          %v1595 = vld [vmem:[%s79 + $0x17a8] sm:$0xff]
          %1596 = vst [vmem:[%s80 + $0x17a8] sm:$0xff] %v1595
          %v1597 = vld [vmem:[%s79 + $0x17b0] sm:$0xff]
          %1598 = vst [vmem:[%s80 + $0x17b0] sm:$0xff] %v1597
          %v1599 = vld [vmem:[%s79 + $0x17b8] sm:$0xff]
          %1600 = vst [vmem:[%s80 + $0x17b8] sm:$0xff] %v1599
          %v1601 = vld [vmem:[%s79 + $0x17c0] sm:$0xff]
          %1602 = vst [vmem:[%s80 + $0x17c0] sm:$0xff] %v1601
          %v1603 = vld [vmem:[%s79 + $0x17c8] sm:$0xff]
          %1604 = vst [vmem:[%s80 + $0x17c8] sm:$0xff] %v1603
          %v1605 = vld [vmem:[%s79 + $0x17d0] sm:$0xff]
          %1606 = vst [vmem:[%s80 + $0x17d0] sm:$0xff] %v1605
          %v1607 = vld [vmem:[%s79 + $0x17d8] sm:$0xff]
          %1608 = vst [vmem:[%s80 + $0x17d8] sm:$0xff] %v1607
          %v1609 = vld [vmem:[%s79 + $0x17e0] sm:$0xff]
          %1610 = vst [vmem:[%s80 + $0x17e0] sm:$0xff] %v1609
          %v1611 = vld [vmem:[%s79 + $0x17e8] sm:$0xff]
          %1612 = vst [vmem:[%s80 + $0x17e8] sm:$0xff] %v1611
          %v1613 = vld [vmem:[%s79 + $0x17f0] sm:$0xff]
          %1614 = vst [vmem:[%s80 + $0x17f0] sm:$0xff] %v1613
          %v1615 = vld [vmem:[%s79 + $0x17f8] sm:$0xff]
          %1616 = vst [vmem:[%s80 + $0x17f8] sm:$0xff] %v1615
          %v1617 = vld [vmem:[%s79 + $0x1800] sm:$0xff]
          %1618 = vst [vmem:[%s80 + $0x1800] sm:$0xff] %v1617
          %v1619 = vld [vmem:[%s79 + $0x1808] sm:$0xff]
          %1620 = vst [vmem:[%s80 + $0x1808] sm:$0xff] %v1619
          %v1621 = vld [vmem:[%s79 + $0x1810] sm:$0xff]
          %1622 = vst [vmem:[%s80 + $0x1810] sm:$0xff] %v1621
          %v1623 = vld [vmem:[%s79 + $0x1818] sm:$0xff]
          %1624 = vst [vmem:[%s80 + $0x1818] sm:$0xff] %v1623
          %v1625 = vld [vmem:[%s79 + $0x1820] sm:$0xff]
          %1626 = vst [vmem:[%s80 + $0x1820] sm:$0xff] %v1625
          %v1627 = vld [vmem:[%s79 + $0x1828] sm:$0xff]
          %1628 = vst [vmem:[%s80 + $0x1828] sm:$0xff] %v1627
          %v1629 = vld [vmem:[%s79 + $0x1830] sm:$0xff]
          %1630 = vst [vmem:[%s80 + $0x1830] sm:$0xff] %v1629
          %v1631 = vld [vmem:[%s79 + $0x1838] sm:$0xff]
          %1632 = vst [vmem:[%s80 + $0x1838] sm:$0xff] %v1631
          %v1633 = vld [vmem:[%s79 + $0x1840] sm:$0xff]
          %1634 = vst [vmem:[%s80 + $0x1840] sm:$0xff] %v1633
          %v1635 = vld [vmem:[%s79 + $0x1848] sm:$0xff]
          %1636 = vst [vmem:[%s80 + $0x1848] sm:$0xff] %v1635
          %v1637 = vld [vmem:[%s79 + $0x1850] sm:$0xff]
          %1638 = vst [vmem:[%s80 + $0x1850] sm:$0xff] %v1637
          %v1639 = vld [vmem:[%s79 + $0x1858] sm:$0xff]
          %1640 = vst [vmem:[%s80 + $0x1858] sm:$0xff] %v1639
          %v1641 = vld [vmem:[%s79 + $0x1860] sm:$0xff]
          %1642 = vst [vmem:[%s80 + $0x1860] sm:$0xff] %v1641
          %v1643 = vld [vmem:[%s79 + $0x1868] sm:$0xff]
          %1644 = vst [vmem:[%s80 + $0x1868] sm:$0xff] %v1643
          %v1645 = vld [vmem:[%s79 + $0x1870] sm:$0xff]
          %1646 = vst [vmem:[%s80 + $0x1870] sm:$0xff] %v1645
          %v1647 = vld [vmem:[%s79 + $0x1878] sm:$0xff]
          %1648 = vst [vmem:[%s80 + $0x1878] sm:$0xff] %v1647
          %v1649 = vld [vmem:[%s79 + $0x1880] sm:$0xff]
          %1650 = vst [vmem:[%s80 + $0x1880] sm:$0xff] %v1649
          %v1651 = vld [vmem:[%s79 + $0x1888] sm:$0xff]
          %1652 = vst [vmem:[%s80 + $0x1888] sm:$0xff] %v1651
          %v1653 = vld [vmem:[%s79 + $0x1890] sm:$0xff]
          %1654 = vst [vmem:[%s80 + $0x1890] sm:$0xff] %v1653
          %v1655 = vld [vmem:[%s79 + $0x1898] sm:$0xff]
          %1656 = vst [vmem:[%s80 + $0x1898] sm:$0xff] %v1655
          %v1657 = vld [vmem:[%s79 + $0x18a0] sm:$0xff]
          %1658 = vst [vmem:[%s80 + $0x18a0] sm:$0xff] %v1657
          %v1659 = vld [vmem:[%s79 + $0x18a8] sm:$0xff]
          %1660 = vst [vmem:[%s80 + $0x18a8] sm:$0xff] %v1659
          %v1661 = vld [vmem:[%s79 + $0x18b0] sm:$0xff]
          %1662 = vst [vmem:[%s80 + $0x18b0] sm:$0xff] %v1661
          %v1663 = vld [vmem:[%s79 + $0x18b8] sm:$0xff]
          %1664 = vst [vmem:[%s80 + $0x18b8] sm:$0xff] %v1663
          %v1665 = vld [vmem:[%s79 + $0x18c0] sm:$0xff]
          %1666 = vst [vmem:[%s80 + $0x18c0] sm:$0xff] %v1665
          %v1667 = vld [vmem:[%s79 + $0x18c8] sm:$0xff]
          %1668 = vst [vmem:[%s80 + $0x18c8] sm:$0xff] %v1667
          %v1669 = vld [vmem:[%s79 + $0x18d0] sm:$0xff]
          %1670 = vst [vmem:[%s80 + $0x18d0] sm:$0xff] %v1669
          %v1671 = vld [vmem:[%s79 + $0x18d8] sm:$0xff]
          %1672 = vst [vmem:[%s80 + $0x18d8] sm:$0xff] %v1671
          %v1673 = vld [vmem:[%s79 + $0x18e0] sm:$0xff]
          %1674 = vst [vmem:[%s80 + $0x18e0] sm:$0xff] %v1673
          %v1675 = vld [vmem:[%s79 + $0x18e8] sm:$0xff]
          %1676 = vst [vmem:[%s80 + $0x18e8] sm:$0xff] %v1675
          %v1677 = vld [vmem:[%s79 + $0x18f0] sm:$0xff]
          %1678 = vst [vmem:[%s80 + $0x18f0] sm:$0xff] %v1677
          %v1679 = vld [vmem:[%s79 + $0x18f8] sm:$0xff]
          %1680 = vst [vmem:[%s80 + $0x18f8] sm:$0xff] %v1679
          %v1681 = vld [vmem:[%s79 + $0x1900] sm:$0xff]
          %1682 = vst [vmem:[%s80 + $0x1900] sm:$0xff] %v1681
          %v1683 = vld [vmem:[%s79 + $0x1908] sm:$0xff]
          %1684 = vst [vmem:[%s80 + $0x1908] sm:$0xff] %v1683
          %v1685 = vld [vmem:[%s79 + $0x1910] sm:$0xff]
          %1686 = vst [vmem:[%s80 + $0x1910] sm:$0xff] %v1685
          %v1687 = vld [vmem:[%s79 + $0x1918] sm:$0xff]
          %1688 = vst [vmem:[%s80 + $0x1918] sm:$0xff] %v1687
          %v1689 = vld [vmem:[%s79 + $0x1920] sm:$0xff]
          %1690 = vst [vmem:[%s80 + $0x1920] sm:$0xff] %v1689
          %v1691 = vld [vmem:[%s79 + $0x1928] sm:$0xff]
          %1692 = vst [vmem:[%s80 + $0x1928] sm:$0xff] %v1691
          %v1693 = vld [vmem:[%s79 + $0x1930] sm:$0xff]
          %1694 = vst [vmem:[%s80 + $0x1930] sm:$0xff] %v1693
          %v1695 = vld [vmem:[%s79 + $0x1938] sm:$0xff]
          %1696 = vst [vmem:[%s80 + $0x1938] sm:$0xff] %v1695
          %v1697 = vld [vmem:[%s79 + $0x1940] sm:$0xff]
          %1698 = vst [vmem:[%s80 + $0x1940] sm:$0xff] %v1697
          %v1699 = vld [vmem:[%s79 + $0x1948] sm:$0xff]
          %1700 = vst [vmem:[%s80 + $0x1948] sm:$0xff] %v1699
          %v1701 = vld [vmem:[%s79 + $0x1950] sm:$0xff]
          %1702 = vst [vmem:[%s80 + $0x1950] sm:$0xff] %v1701
          %v1703 = vld [vmem:[%s79 + $0x1958] sm:$0xff]
          %1704 = vst [vmem:[%s80 + $0x1958] sm:$0xff] %v1703
          %v1705 = vld [vmem:[%s79 + $0x1960] sm:$0xff]
          %1706 = vst [vmem:[%s80 + $0x1960] sm:$0xff] %v1705
          %v1707 = vld [vmem:[%s79 + $0x1968] sm:$0xff]
          %1708 = vst [vmem:[%s80 + $0x1968] sm:$0xff] %v1707
          %v1709 = vld [vmem:[%s79 + $0x1970] sm:$0xff]
          %1710 = vst [vmem:[%s80 + $0x1970] sm:$0xff] %v1709
          %v1711 = vld [vmem:[%s79 + $0x1978] sm:$0xff]
          %1712 = vst [vmem:[%s80 + $0x1978] sm:$0xff] %v1711
          %v1713 = vld [vmem:[%s79 + $0x1980] sm:$0xff]
          %1714 = vst [vmem:[%s80 + $0x1980] sm:$0xff] %v1713
          %v1715 = vld [vmem:[%s79 + $0x1988] sm:$0xff]
          %1716 = vst [vmem:[%s80 + $0x1988] sm:$0xff] %v1715
          %v1717 = vld [vmem:[%s79 + $0x1990] sm:$0xff]
          %1718 = vst [vmem:[%s80 + $0x1990] sm:$0xff] %v1717
          %v1719 = vld [vmem:[%s79 + $0x1998] sm:$0xff]
          %1720 = vst [vmem:[%s80 + $0x1998] sm:$0xff] %v1719
          %v1721 = vld [vmem:[%s79 + $0x19a0] sm:$0xff]
          %1722 = vst [vmem:[%s80 + $0x19a0] sm:$0xff] %v1721
          %v1723 = vld [vmem:[%s79 + $0x19a8] sm:$0xff]
          %1724 = vst [vmem:[%s80 + $0x19a8] sm:$0xff] %v1723
          %v1725 = vld [vmem:[%s79 + $0x19b0] sm:$0xff]
          %1726 = vst [vmem:[%s80 + $0x19b0] sm:$0xff] %v1725
          %v1727 = vld [vmem:[%s79 + $0x19b8] sm:$0xff]
          %1728 = vst [vmem:[%s80 + $0x19b8] sm:$0xff] %v1727
          %v1729 = vld [vmem:[%s79 + $0x19c0] sm:$0xff]
          %1730 = vst [vmem:[%s80 + $0x19c0] sm:$0xff] %v1729
          %v1731 = vld [vmem:[%s79 + $0x19c8] sm:$0xff]
          %1732 = vst [vmem:[%s80 + $0x19c8] sm:$0xff] %v1731
          %v1733 = vld [vmem:[%s79 + $0x19d0] sm:$0xff]
          %1734 = vst [vmem:[%s80 + $0x19d0] sm:$0xff] %v1733
          %v1735 = vld [vmem:[%s79 + $0x19d8] sm:$0xff]
          %1736 = vst [vmem:[%s80 + $0x19d8] sm:$0xff] %v1735
          %v1737 = vld [vmem:[%s79 + $0x19e0] sm:$0xff]
          %1738 = vst [vmem:[%s80 + $0x19e0] sm:$0xff] %v1737
          %v1739 = vld [vmem:[%s79 + $0x19e8] sm:$0xff]
          %1740 = vst [vmem:[%s80 + $0x19e8] sm:$0xff] %v1739
          %v1741 = vld [vmem:[%s79 + $0x19f0] sm:$0xff]
          %1742 = vst [vmem:[%s80 + $0x19f0] sm:$0xff] %v1741
          %v1743 = vld [vmem:[%s79 + $0x19f8] sm:$0xff]
          %1744 = vst [vmem:[%s80 + $0x19f8] sm:$0xff] %v1743
        $region81: #{b_seq_forward.5} parent=75 // loop_footer
          %s78 = sadd.s32 1, %s74
        $region82: #{b_seq_forward.5} parent=75 // loop_footer_branch
          %73 = sbr.rel target = $region78
        $region83: #{b_seq_forward.5} parent=75 // loop_exit
          _
      $region76: #{b_seq_forward.5} parent=60 // pred_fallthru
        _
      %p1745 = pneg %p69
      // Predicated region
      $region84: #{b_seq_forward.5} parent=60 // pred_check
        _
      $region85: #{b_seq_forward.5} parent=60 // pred_check_branch
        %1747 = sbr.rel (%p69) target = $region87
      $region86: #{b_seq_forward.5} parent=60 // pred_region
        %s1748 = sand.u32 6656, 7
      $region87: #{b_seq_forward.5} parent=60 // pred_fallthru
        _
    $region61: #{b_seq_forward.5} parent=1 // pred_fallthru
      _
    // Predicated region
    $region62: #{b_seq_forward.5} parent=1 // pred_check
      %p54 = pneg %p50
    $region63: #{b_seq_forward.5} parent=1 // pred_check_branch
      %56 = sbr.rel (%p54) target = $region65
    $region64: #{b_seq_forward.5} parent=1 // pred_region
      %s57 = sshllo.u32 0, 6656
      loop: start=0, step=1, limit=1
      $region66: #{b_seq_forward.5} parent=64 // loop_pre_header
        _
      $region67: #{b_seq_forward.5} parent=64 // loop_header
        %s59 = sphi 0, %s63
        %p60 = scmp.ge.s32.totalorder %s59, 1
        %s64 = sphi %s11, %s11
        %s65 = sphi [#allocation2], [#allocation2]
      $region68: #{b_seq_forward.5} parent=64 // loop_header_branch
        %62 = sbr.rel (%p60) target = $region72
      $region69: #{b_seq_forward.5} parent=64 // loop_body
        %v66 = vld [vmem:[%s64] sm:%s57]
        %67 = vst [vmem:[%s65] sm:%s57] %v66
      $region70: #{b_seq_forward.5} parent=64 // loop_footer
        %s63 = sadd.s32 1, %s59
      $region71: #{b_seq_forward.5} parent=64 // loop_footer_branch
        %58 = sbr.rel target = $region67
      $region72: #{b_seq_forward.5} parent=64 // loop_exit
        _
    $region65: #{b_seq_forward.5} parent=1 // pred_fallthru
      _
    // Predicated region
    $region88: #{b_seq_forward.5} parent=1 // pred_check
      _
    $region89: #{b_seq_forward.5} parent=1 // pred_check_branch
      %1751 = sbr.rel (0) target = $region91
    $region90: #{b_seq_forward.5} parent=1 // pred_region
      %1752 = vsyncadd [#allocation3], 106496
    $region91: #{b_seq_forward.5} parent=1 // pred_fallthru
      _
    %v1753 = vld [vmem:[%s0] sm:$0xff]
    %v1754 = vld [vmem:[%s0 + $0x8] sm:$0xff]
    %v1755 = vld [vmem:[%s0 + $0x10] sm:$0xff]
    %v1756 = vld [vmem:[%s0 + $0x18] sm:$0xff]
    %v1757 = vld [vmem:[%s0 + $0x20] sm:$0xff]
    %v1758 = vld [vmem:[%s0 + $0x28] sm:$0xff]
    %v1759 = vld [vmem:[%s0 + $0x30] sm:$0xff]
    %v1760 = vld [vmem:[%s0 + $0x38] sm:$0xff]
    %v1761 = vld [vmem:[%s0 + $0x40] sm:$0xff]
    %v1762 = vld [vmem:[%s0 + $0x48] sm:$0xff]
    %v1763 = vld [vmem:[%s0 + $0x50] sm:$0xff]
    %v1764 = vld [vmem:[%s0 + $0x58] sm:$0xff]
    %v1765 = vld [vmem:[%s0 + $0x60] sm:$0xff]
    %v1766 = vld [vmem:[%s0 + $0x68] sm:$0xff]
    %v1767 = vld [vmem:[%s1] sm:$0xff]
    %v1768 = vld [vmem:[%s1 + $0x8] sm:$0xff]
    %v1769 = vld [vmem:[%s1 + $0x10] sm:$0xff]
    %v1770 = vld [vmem:[%s1 + $0x18] sm:$0xff]
    %v1771 = vld [vmem:[%s1 + $0x20] sm:$0x3]
    %v1772 = vld [vmem:[%s1 + $0x28] sm:$0x3]
    %v1773 = vld [vmem:[%s3] sm:$0x3]
    %v1775 = vlaneseq
    %v1776 = vshrl.u32 %v1775, 7
    %v1777 = vsub.s32 0, %v1776
    %v1778 = vrot.slane %v1773, %v1777
    %v1779 = vlaneseq
    %v1780 = vshrl.u32 %v1779, 7
    %v1781 = vsub.s32 1, %v1780
    %v1782 = vrot.slane %v1773, %v1781
    %vm1785 = vcmask 146432
    %v1787 = vsel %vm1785, %v1753, 0
    %v1790 = vsel %vm1785, %v1754, 0
    %v1793 = vsel %vm1785, %v1755, 0
    %v1796 = vsel %vm1785, %v1756, 0
    %v1799 = vsel %vm1785, %v1757, 0
    %v1802 = vsel %vm1785, %v1758, 0
    %v1805 = vsel %vm1785, %v1759, 0
    %v1808 = vsel %vm1785, %v1760, 0
    %v1811 = vsel %vm1785, %v1761, 0
    %v1814 = vsel %vm1785, %v1762, 0
    %v1817 = vsel %vm1785, %v1763, 0
    %v1820 = vsel %vm1785, %v1764, 0
    %v1823 = vsel %vm1785, %v1765, 0
    %v1826 = vsel %vm1785, %v1766, 0
    %vm1828 = vcmask 1041408
    %v1830 = vsel %vm1828, %v1771, 0
    %v1833 = vsel %vm1828, %v1772, 0
    %1835 = vmatprep.subr.mxu0 %v1768
    %1836 = vmatpush1.msra.mxu0 %v1767
    %1837 = vmatprep.subr.mxu0 %v1770
    %1838 = vmatpush1.msra.mxu0 %v1769
    %1839 = vmatprep.subr.mxu0 %v1833
    %1840 = vmatpush1.msra.mxu0 %v1830
    %1841 = vmatprep.subr.mxu0 0.0
    %1842 = vmatpush1.msra.mxu0 0.0
    %1843 = vmatprep.subr.mxu0 0.0
    %1844 = vmatpush1.msra.mxu0 0.0
    %1845 = vmatprep.subr.mxu0 0.0
    %1846 = vmatpush1.msra.mxu0 0.0
    %1847 = vmatprep.subr.mxu0 0.0
    %1848 = vmatpush1.msra.mxu0 0.0
    %1849 = vmatprep.subr.mxu0 0.0
    %1850 = vmatpush1.msra.mxu0 0.0
    %1851 = vmatprep.subr.mxu0 0.0
    %1852 = vmatpush1.msra.mxu0 0.0
    %1853 = vmatprep.subr.mxu0 0.0
    %1854 = vmatpush1.msra.mxu0 0.0
    %1855 = vmatprep.subr.mxu0 0.0
    %1856 = vmatpush1.msra.mxu0 0.0
    %1857 = vmatprep.subr.mxu0 0.0
    %1858 = vmatpush1.msra.mxu0 0.0
    %1859 = vmatprep.subr.mxu0 0.0
    %1860 = vmatpush1.msra.mxu0 0.0
    %1861 = vmatprep.subr.mxu0 0.0
    %1862 = vmatpush1.msra.mxu0 0.0
    %1863 = vmatprep.subr.mxu0 0.0
    %1864 = vmatpush1.msra.mxu0 0.0
    %1865 = vmatprep.subr.mxu0 0.0
    %1866 = vmatpush1.msra.mxu0 0.0
    %1867 = vmatprep.subr.mxu0 0.0
    %1868 = vmatpush1.msra.mxu0 0.0
    %1869 = vmatprep.subr.mxu0 0.0
    %1870 = vmatpush1.msra.mxu0 0.0
    %1871 = vmatprep.subr.mxu0 0.0
    %1872 = vmatpush1.msra.mxu0 0.0
    %1873 = vmatprep.subr.mxu0 0.0
    %1874 = vmatpush1.msra.mxu0 0.0
    %1875 = vmatprep.subr.mxu0 0.0
    %1876 = vmatpush1.msra.mxu0 0.0
    %1877 = vmatprep.subr.mxu0 0.0
    %1878 = vmatpush1.msra.mxu0 0.0
    %1879 = vmatprep.subr.mxu0 0.0
    %1880 = vmatpush1.msra.mxu0 0.0
    %1881 = vmatprep.subr.mxu0 0.0
    %1882 = vmatpush1.msra.mxu0 0.0
    %1883 = vmatprep.subr.mxu0 0.0
    %1884 = vmatpush1.msra.mxu0 0.0
    %1885 = vmatprep.subr.mxu0 0.0
    %1886 = vmatpush1.msra.mxu0 0.0
    %1887 = vmatprep.subr.mxu0 0.0
    %1888 = vmatpush1.msra.mxu0 0.0
    %1889 = vmatprep.subr.mxu0 0.0
    %1890 = vmatpush1.msra.mxu0 0.0
    %1891 = vmatprep.subr.mxu0 0.0
    %1892 = vmatpush1.msra.mxu0 0.0
    %1893 = vmatprep.subr.mxu0 0.0
    %1894 = vmatpush1.msra.mxu0 0.0
    %1895 = vmatprep.subr.mxu0 0.0
    %1896 = vmatpush1.msra.mxu0 0.0
    %1897 = vmatprep.subr.mxu0 0.0
    %1898 = vmatpush1.msra.mxu0 0.0
    %1899 = vmatprep.mubr.f32.mxu0 0.0
    %1900 = vmatmul.mubr.f32.gmra.mrb[0].mxu0 %v1787
    %v1901 = vpop.f32.mrb[0].mxu0
    %v1902 = vadd.f32 %v1778, %v1901
    %v1903 = vpop.f32.mrb[0].mxu0
    %v1904 = vadd.f32 %v1782, %v1903
    %1905 = vmatprep.mubr.f32.mxu0 0.0
    %1906 = vmatmul.mubr.f32.gmra.mrb[0].mxu0 %v1790
    %v1907 = vpop.f32.mrb[0].mxu0
    %v1908 = vadd.f32 %v1778, %v1907
    %v1909 = vpop.f32.mrb[0].mxu0
    %v1910 = vadd.f32 %v1782, %v1909
    %1911 = vmatprep.mubr.f32.mxu0 0.0
    %1912 = vmatmul.mubr.f32.gmra.mrb[0].mxu0 %v1793
    %v1913 = vpop.f32.mrb[0].mxu0
    %v1914 = vadd.f32 %v1778, %v1913
    %v1915 = vpop.f32.mrb[0].mxu0
    %v1916 = vadd.f32 %v1782, %v1915
    %1917 = vmatprep.mubr.f32.mxu0 0.0
    %1918 = vmatmul.mubr.f32.gmra.mrb[0].mxu0 %v1796
    %v1919 = vpop.f32.mrb[0].mxu0
    %v1920 = vadd.f32 %v1778, %v1919
    %v1921 = vpop.f32.mrb[0].mxu0
    %v1922 = vadd.f32 %v1782, %v1921
    %1923 = vmatprep.mubr.f32.mxu0 0.0
    %1924 = vmatmul.mubr.f32.gmra.mrb[0].mxu0 %v1799
    %v1925 = vpop.f32.mrb[0].mxu0
    %v1926 = vadd.f32 %v1778, %v1925
    %v1927 = vpop.f32.mrb[0].mxu0
    %v1928 = vadd.f32 %v1782, %v1927
    %1929 = vmatprep.mubr.f32.mxu0 0.0
    %1930 = vmatmul.mubr.f32.gmra.mrb[0].mxu0 %v1802
    %v1931 = vpop.f32.mrb[0].mxu0
    %v1932 = vadd.f32 %v1778, %v1931
    %v1933 = vpop.f32.mrb[0].mxu0
    %v1934 = vadd.f32 %v1782, %v1933
    %1935 = vmatprep.mubr.f32.mxu0 0.0
    %1936 = vmatmul.mubr.f32.gmra.mrb[0].mxu0 %v1805
    %v1937 = vpop.f32.mrb[0].mxu0
    %v1938 = vadd.f32 %v1778, %v1937
    %v1939 = vpop.f32.mrb[0].mxu0
    %v1940 = vadd.f32 %v1782, %v1939
    %1941 = vmatprep.mubr.f32.mxu0 0.0
    %1942 = vmatmul.mubr.f32.gmra.mrb[0].mxu0 %v1808
    %v1943 = vpop.f32.mrb[0].mxu0
    %v1944 = vadd.f32 %v1778, %v1943
    %v1945 = vpop.f32.mrb[0].mxu0
    %v1946 = vadd.f32 %v1782, %v1945
    %1947 = vmatprep.mubr.f32.mxu0 0.0
    %1948 = vmatmul.mubr.f32.gmra.mrb[0].mxu0 %v1811
    %v1949 = vpop.f32.mrb[0].mxu0
    %v1950 = vadd.f32 %v1778, %v1949
    %v1951 = vpop.f32.mrb[0].mxu0
    %v1952 = vadd.f32 %v1782, %v1951
    %1953 = vmatprep.mubr.f32.mxu0 0.0
    %1954 = vmatmul.mubr.f32.gmra.mrb[0].mxu0 %v1814
    %v1955 = vpop.f32.mrb[0].mxu0
    %v1956 = vadd.f32 %v1778, %v1955
    %v1957 = vpop.f32.mrb[0].mxu0
    %v1958 = vadd.f32 %v1782, %v1957
    %1959 = vmatprep.mubr.f32.mxu0 0.0
    %1960 = vmatmul.mubr.f32.gmra.mrb[0].mxu0 %v1817
    %v1961 = vpop.f32.mrb[0].mxu0
    %v1962 = vadd.f32 %v1778, %v1961
    %v1963 = vpop.f32.mrb[0].mxu0
    %v1964 = vadd.f32 %v1782, %v1963
    %1965 = vmatprep.mubr.f32.mxu0 0.0
    %1966 = vmatmul.mubr.f32.gmra.mrb[0].mxu0 %v1820
    %v1967 = vpop.f32.mrb[0].mxu0
    %v1968 = vadd.f32 %v1778, %v1967
    %v1969 = vpop.f32.mrb[0].mxu0
    %v1970 = vadd.f32 %v1782, %v1969
    %1971 = vmatprep.mubr.f32.mxu0 0.0
    %1972 = vmatmul.mubr.f32.gmra.mrb[0].mxu0 %v1823
    %v1973 = vpop.f32.mrb[0].mxu0
    %v1974 = vadd.f32 %v1778, %v1973
    %v1975 = vpop.f32.mrb[0].mxu0
    %v1976 = vadd.f32 %v1782, %v1975
    %1977 = vmatprep.mubr.f32.mxu0 0.0
    %1978 = vmatmul.mubr.f32.gmra.mrb[0].mxu0 %v1826
    %v1979 = vpop.f32.mrb[0].mxu0
    %v1980 = vadd.f32 %v1778, %v1979
    %v1981 = vpop.f32.mrb[0].mxu0
    %v1982 = vadd.f32 %v1782, %v1981
    %1983 = vdwg.mxu0
    %v1984 = vld [vmem:[%s5] sm:$0x3]
    %v1986 = vlaneseq
    %v1987 = vshrl.u32 %v1986, 7
    %v1988 = vsub.s32 0, %v1987
    %v1989 = vrot.slane %v1984, %v1988
    %v1990 = vlaneseq
    %v1991 = vshrl.u32 %v1990, 7
    %v1992 = vsub.s32 1, %v1991
    %v1993 = vrot.slane %v1984, %v1992
    %v1996 = vld [vmem:[%s2] sm:$0xff]
    %v1997 = vld [vmem:[%s2 + $0x8] sm:$0xff]
    %v1998 = vld [vmem:[%s2 + $0x10] sm:$0xff]
    %v1999 = vld [vmem:[%s2 + $0x18] sm:$0xff]
    %v2000 = vld [vmem:[%s2 + $0x20] sm:$0xff]
    %v2001 = vld [vmem:[%s2 + $0x28] sm:$0xff]
    %v2002 = vld [vmem:[%s2 + $0x30] sm:$0xff]
    %v2003 = vld [vmem:[%s2 + $0x38] sm:$0xff]
    %v2004 = vld [vmem:[%s2 + $0x40] sm:$0xff]
    %v2005 = vld [vmem:[%s2 + $0x48] sm:$0xff]
    %v2006 = vld [vmem:[%s2 + $0x50] sm:$0xff]
    %v2007 = vld [vmem:[%s2 + $0x58] sm:$0xff]
    %v2008 = vld [vmem:[%s2 + $0x60] sm:$0xff]
    %v2009 = vld [vmem:[%s2 + $0x68] sm:$0xff]
    %v2010 = vld [vmem:[%s2 + $0x70] sm:$0xff]
    %v2011 = vld [vmem:[%s2 + $0x78] sm:$0xff]
    %vm2012 = vcmask 523264
    %v2014 = vsel %vm2012, 0.0, 0
    %2016 = vmatprep.subr.mxu0 %v1997
    %2017 = vmatpush1.msra.mxu0 %v1996
    %2018 = vmatprep.subr.mxu0 %v1999
    %2019 = vmatpush1.msra.mxu0 %v1998
    %2020 = vmatprep.subr.mxu0 %v2001
    %2021 = vmatpush1.msra.mxu0 %v2000
    %2022 = vmatprep.subr.mxu0 %v2003
    %2023 = vmatpush1.msra.mxu0 %v2002
    %2024 = vmatprep.subr.mxu0 %v2005
    %2025 = vmatpush1.msra.mxu0 %v2004
    %2026 = vmatprep.subr.mxu0 %v2007
    %2027 = vmatpush1.msra.mxu0 %v2006
    %2028 = vmatprep.subr.mxu0 %v2009
    %2029 = vmatpush1.msra.mxu0 %v2008
    %2030 = vmatprep.subr.mxu0 %v2011
    %2031 = vmatpush1.msra.mxu0 %v2010
    %2032 = vmatprep.subr.mxu0 0.0
    %2033 = vmatpush1.msra.mxu0 0.0
    %2034 = vmatprep.subr.mxu0 0.0
    %2035 = vmatpush1.msra.mxu0 0.0
    %2036 = vmatprep.subr.mxu0 0.0
    %2037 = vmatpush1.msra.mxu0 0.0
    %2038 = vmatprep.subr.mxu0 0.0
    %2039 = vmatpush1.msra.mxu0 0.0
    %2040 = vmatprep.subr.mxu0 0.0
    %2041 = vmatpush1.msra.mxu0 0.0
    %2042 = vmatprep.subr.mxu0 0.0
    %2043 = vmatpush1.msra.mxu0 0.0
    %2044 = vmatprep.subr.mxu0 0.0
    %2045 = vmatpush1.msra.mxu0 0.0
    %2046 = vmatprep.subr.mxu0 0.0
    %2047 = vmatpush1.msra.mxu0 0.0
    %2048 = vmatprep.subr.mxu0 0.0
    %2049 = vmatpush1.msra.mxu0 0.0
    %2050 = vmatprep.subr.mxu0 0.0
    %2051 = vmatpush1.msra.mxu0 0.0
    %2052 = vmatprep.subr.mxu0 0.0
    %2053 = vmatpush1.msra.mxu0 0.0
    %2054 = vmatprep.subr.mxu0 0.0
    %2055 = vmatpush1.msra.mxu0 0.0
    %2056 = vmatprep.subr.mxu0 0.0
    %2057 = vmatpush1.msra.mxu0 0.0
    %2058 = vmatprep.subr.mxu0 0.0
    %2059 = vmatpush1.msra.mxu0 0.0
    %2060 = vmatprep.subr.mxu0 0.0
    %2061 = vmatpush1.msra.mxu0 0.0
    %2062 = vmatprep.subr.mxu0 0.0
    %2063 = vmatpush1.msra.mxu0 0.0
    %2064 = vmatprep.subr.mxu0 0.0
    %2065 = vmatpush1.msra.mxu0 0.0
    %2066 = vmatprep.subr.mxu0 0.0
    %2067 = vmatpush1.msra.mxu0 0.0
    %2068 = vmatprep.subr.mxu0 0.0
    %2069 = vmatpush1.msra.mxu0 0.0
    %2070 = vmatprep.subr.mxu0 0.0
    %2071 = vmatpush1.msra.mxu0 0.0
    %2072 = vmatprep.subr.mxu0 0.0
    %2073 = vmatpush1.msra.mxu0 0.0
    %2074 = vmatprep.subr.mxu0 0.0
    %2075 = vmatpush1.msra.mxu0 0.0
    %2076 = vmatprep.subr.mxu0 0.0
    %2077 = vmatpush1.msra.mxu0 0.0
    %2078 = vmatprep.subr.mxu0 0.0
    %2079 = vmatpush1.msra.mxu0 0.0
    %2080 = vmatprep.mubr.f32.mxu0 0.0
    %2081 = vmatmul.mubr.f32.gmra.mrb[0].mxu0 %v2014
    %v2082 = vpop.f32.mrb[0].mxu0
    %v2083 = vadd.f32 0.0, %v2082
    %v2084 = vpop.f32.mrb[0].mxu0
    %v2085 = vadd.f32 0.0, %v2084
    %2086 = vdwg.mxu0
    %v2087 = vadd.f32 %v1902, %v2083
    %v2088 = vadd.f32 %v1904, %v2085
    %v2089 = vxor.u32 %v2087, 2147483648
    %v2090 = vxor.u32 %v2088, 2147483648
    %v2091 = vmul.f32 %v2089, 1.442695
    %v2092 = vpow.pop %v2091
    %v2093 = vmul.f32 %v2090, 1.442695
    %v2094 = vpow.pop %v2093
    %v2095 = vadd.f32 %v2092, 1.0
    %v2096 = vadd.f32 %v2094, 1.0
    %v2097 = vrcp.pop %v2095
    %v2098 = vmul.f32 1.0, %v2097
    %v2099 = vrcp.pop %v2096
    %v2100 = vmul.f32 1.0, %v2099
    %v2101 = vtanh.pop %v2088
    %v2102 = vmul.f32 %v2098, 0.0
    %v2103 = vmul.f32 %v2098, %v2101
    %2105 = vrot.lane.b32.xlu0 %v2103, 64
    %v2106 = vpop.permute.xlu0 %2105
    %v2108 = vadd.f32 %v2102, %v2106
    %v2109 = vtanh.pop %v2108
    %v2110 = vmul.f32 %v2100, %v2109
    %2112 = vrot.lane.b32.xlu0 %v2110, 64
    %v2113 = vpop.permute.xlu0 %2112
    %v2115 = vsel %vm2012, %v2113, 0.0
    %v2116 = vld [vmem:[%s4] sm:$0xff]
    %v2117 = vld [vmem:[%s4 + $0x8] sm:$0xff]
    %v2118 = vld [vmem:[%s4 + $0x10] sm:$0xff]
    %v2119 = vld [vmem:[%s4 + $0x18] sm:$0xff]
    %v2120 = vld [vmem:[%s4 + $0x20] sm:$0xff]
    %v2121 = vld [vmem:[%s4 + $0x28] sm:$0xff]
    %v2122 = vld [vmem:[%s4 + $0x30] sm:$0xff]
    %v2123 = vld [vmem:[%s4 + $0x38] sm:$0xff]
    %v2124 = vld [vmem:[%s4 + $0x40] sm:$0xff]
    %v2125 = vld [vmem:[%s4 + $0x48] sm:$0xff]
    %v2126 = vld [vmem:[%s4 + $0x50] sm:$0xff]
    %v2127 = vld [vmem:[%s4 + $0x58] sm:$0xff]
    %v2128 = vld [vmem:[%s4 + $0x60] sm:$0xff]
    %v2129 = vld [vmem:[%s4 + $0x68] sm:$0xff]
    %v2130 = vld [vmem:[%s4 + $0x70] sm:$0xff]
    %v2131 = vld [vmem:[%s4 + $0x78] sm:$0xff]
    %v2132 = vld [vmem:[%s4 + $0x80] sm:$0xff]
    %v2133 = vld [vmem:[%s4 + $0x88] sm:$0xff]
    %v2134 = vld [vmem:[%s4 + $0x90] sm:$0xff]
    %v2135 = vld [vmem:[%s4 + $0x98] sm:$0xff]
    %v2136 = vld [vmem:[%s4 + $0xa0] sm:$0xff]
    %v2137 = vld [vmem:[%s4 + $0xa8] sm:$0xff]
    %v2138 = vld [vmem:[%s4 + $0xb0] sm:$0xff]
    %v2139 = vld [vmem:[%s4 + $0xb8] sm:$0xff]
    %v2140 = vld [vmem:[%s4 + $0xc0] sm:$0xff]
    %v2141 = vld [vmem:[%s4 + $0xc8] sm:$0xff]
    %v2142 = vld [vmem:[%s4 + $0xd0] sm:$0xff]
    %v2143 = vld [vmem:[%s4 + $0xd8] sm:$0xff]
    %v2144 = vld [vmem:[%s4 + $0xe0] sm:$0xff]
    %v2145 = vld [vmem:[%s4 + $0xe8] sm:$0xff]
    %v2146 = vld [vmem:[%s4 + $0xf0] sm:$0xff]
    %v2147 = vld [vmem:[%s4 + $0xf8] sm:$0xff]
    %2148 = vmatprep.subr.mxu0 %v2117
    %2149 = vmatpush1.msra.mxu0 %v2116
    %2150 = vmatprep.subr.mxu0 %v2119
    %2151 = vmatpush1.msra.mxu0 %v2118
    %2152 = vmatprep.subr.mxu0 %v2121
    %2153 = vmatpush1.msra.mxu0 %v2120
    %2154 = vmatprep.subr.mxu0 %v2123
    %2155 = vmatpush1.msra.mxu0 %v2122
    %2156 = vmatprep.subr.mxu0 %v2125
    %2157 = vmatpush1.msra.mxu0 %v2124
    %2158 = vmatprep.subr.mxu0 %v2127
    %2159 = vmatpush1.msra.mxu0 %v2126
    %2160 = vmatprep.subr.mxu0 %v2129
    %2161 = vmatpush1.msra.mxu0 %v2128
    %2162 = vmatprep.subr.mxu0 %v2131
    %2163 = vmatpush1.msra.mxu0 %v2130
    %2164 = vmatprep.subr.mxu0 %v2133
    %2165 = vmatpush1.msra.mxu0 %v2132
    %2166 = vmatprep.subr.mxu0 %v2135
    %2167 = vmatpush1.msra.mxu0 %v2134
    %2168 = vmatprep.subr.mxu0 %v2137
    %2169 = vmatpush1.msra.mxu0 %v2136
    %2170 = vmatprep.subr.mxu0 %v2139
    %2171 = vmatpush1.msra.mxu0 %v2138
    %2172 = vmatprep.subr.mxu0 %v2141
    %2173 = vmatpush1.msra.mxu0 %v2140
    %2174 = vmatprep.subr.mxu0 %v2143
    %2175 = vmatpush1.msra.mxu0 %v2142
    %2176 = vmatprep.subr.mxu0 %v2145
    %2177 = vmatpush1.msra.mxu0 %v2144
    %2178 = vmatprep.subr.mxu0 %v2147
    %2179 = vmatpush1.msra.mxu0 %v2146
    %2180 = vmatprep.subr.mxu0 0.0
    %2181 = vmatpush1.msra.mxu0 0.0
    %2182 = vmatprep.subr.mxu0 0.0
    %2183 = vmatpush1.msra.mxu0 0.0
    %2184 = vmatprep.subr.mxu0 0.0
    %2185 = vmatpush1.msra.mxu0 0.0
    %2186 = vmatprep.subr.mxu0 0.0
    %2187 = vmatpush1.msra.mxu0 0.0
    %2188 = vmatprep.subr.mxu0 0.0
    %2189 = vmatpush1.msra.mxu0 0.0
    %2190 = vmatprep.subr.mxu0 0.0
    %2191 = vmatpush1.msra.mxu0 0.0
    %2192 = vmatprep.subr.mxu0 0.0
    %2193 = vmatpush1.msra.mxu0 0.0
    %2194 = vmatprep.subr.mxu0 0.0
    %2195 = vmatpush1.msra.mxu0 0.0
    %2196 = vmatprep.subr.mxu0 0.0
    %2197 = vmatpush1.msra.mxu0 0.0
    %2198 = vmatprep.subr.mxu0 0.0
    %2199 = vmatpush1.msra.mxu0 0.0
    %2200 = vmatprep.subr.mxu0 0.0
    %2201 = vmatpush1.msra.mxu0 0.0
    %2202 = vmatprep.subr.mxu0 0.0
    %2203 = vmatpush1.msra.mxu0 0.0
    %2204 = vmatprep.subr.mxu0 0.0
    %2205 = vmatpush1.msra.mxu0 0.0
    %2206 = vmatprep.subr.mxu0 0.0
    %2207 = vmatpush1.msra.mxu0 0.0
    %2208 = vmatprep.subr.mxu0 0.0
    %2209 = vmatpush1.msra.mxu0 0.0
    %2210 = vmatprep.subr.mxu0 0.0
    %2211 = vmatpush1.msra.mxu0 0.0
    %2212 = vmatprep.mubr.f32.mxu0 0.0
    %2213 = vmatmul.mubr.f32.gmra.mrb[0].mxu0 %v2115
    %v2214 = vpop.f32.mrb[0].mxu0
    %v2215 = vadd.f32 %v1989, %v2214
    %v2216 = vpop.f32.mrb[0].mxu0
    %v2217 = vadd.f32 %v1993, %v2216
    %2218 = vdwg.mxu0
    %v2219 = vxor.u32 %v2215, 2147483648
    %v2220 = vxor.u32 %v2217, 2147483648
    %v2221 = vmul.f32 %v2219, 1.442695
    %v2222 = vpow.pop %v2221
    %v2223 = vmul.f32 %v2220, 1.442695
    %v2224 = vpow.pop %v2223
    %v2225 = vadd.f32 %v2222, 1.0
    %v2226 = vadd.f32 %v2224, 1.0
    %v2227 = vrcp.pop %v2225
    %v2228 = vmul.f32 1.0, %v2227
    %v2229 = vrcp.pop %v2226
    %v2230 = vmul.f32 1.0, %v2229
    %v2231 = vtanh.pop %v2217
    %v2232 = vmul.f32 %v2228, 0.0
    %v2233 = vmul.f32 %v2228, %v2231
    %2235 = vrot.lane.b32.xlu0 %v2233, 64
    %v2236 = vpop.permute.xlu0 %2235
    %v2238 = vadd.f32 %v2232, %v2236
    %v2239 = vtanh.pop %v2238
    %v2240 = vmul.f32 %v2230, %v2239
    %v2241 = vsel %vm2012, %v2113, 0
    %2243 = vmatprep.subr.mxu0 %v1997
    %2244 = vmatpush1.msra.mxu0 %v1996
    %2245 = vmatprep.subr.mxu0 %v1999
    %2246 = vmatpush1.msra.mxu0 %v1998
    %2247 = vmatprep.subr.mxu0 %v2001
    %2248 = vmatpush1.msra.mxu0 %v2000
    %2249 = vmatprep.subr.mxu0 %v2003
    %2250 = vmatpush1.msra.mxu0 %v2002
    %2251 = vmatprep.subr.mxu0 %v2005
    %2252 = vmatpush1.msra.mxu0 %v2004
    %2253 = vmatprep.subr.mxu0 %v2007
    %2254 = vmatpush1.msra.mxu0 %v2006
    %2255 = vmatprep.subr.mxu0 %v2009
    %2256 = vmatpush1.msra.mxu0 %v2008
    %2257 = vmatprep.subr.mxu0 %v2011
    %2258 = vmatpush1.msra.mxu0 %v2010
    %2259 = vmatprep.subr.mxu0 0.0
    %2260 = vmatpush1.msra.mxu0 0.0
    %2261 = vmatprep.subr.mxu0 0.0
    %2262 = vmatpush1.msra.mxu0 0.0
    %2263 = vmatprep.subr.mxu0 0.0
    %2264 = vmatpush1.msra.mxu0 0.0
    %2265 = vmatprep.subr.mxu0 0.0
    %2266 = vmatpush1.msra.mxu0 0.0
    %2267 = vmatprep.subr.mxu0 0.0
    %2268 = vmatpush1.msra.mxu0 0.0
    %2269 = vmatprep.subr.mxu0 0.0
    %2270 = vmatpush1.msra.mxu0 0.0
    %2271 = vmatprep.subr.mxu0 0.0
    %2272 = vmatpush1.msra.mxu0 0.0
    %2273 = vmatprep.subr.mxu0 0.0
    %2274 = vmatpush1.msra.mxu0 0.0
    %2275 = vmatprep.subr.mxu0 0.0
    %2276 = vmatpush1.msra.mxu0 0.0
    %2277 = vmatprep.subr.mxu0 0.0
    %2278 = vmatpush1.msra.mxu0 0.0
    %2279 = vmatprep.subr.mxu0 0.0
    %2280 = vmatpush1.msra.mxu0 0.0
    %2281 = vmatprep.subr.mxu0 0.0
    %2282 = vmatpush1.msra.mxu0 0.0
    %2283 = vmatprep.subr.mxu0 0.0
    %2284 = vmatpush1.msra.mxu0 0.0
    %2285 = vmatprep.subr.mxu0 0.0
    %2286 = vmatpush1.msra.mxu0 0.0
    %2287 = vmatprep.subr.mxu0 0.0
    %2288 = vmatpush1.msra.mxu0 0.0
    %2289 = vmatprep.subr.mxu0 0.0
    %2290 = vmatpush1.msra.mxu0 0.0
    %2291 = vmatprep.subr.mxu0 0.0
    %2292 = vmatpush1.msra.mxu0 0.0
    %2293 = vmatprep.subr.mxu0 0.0
    %2294 = vmatpush1.msra.mxu0 0.0
    %2295 = vmatprep.subr.mxu0 0.0
    %2296 = vmatpush1.msra.mxu0 0.0
    %2297 = vmatprep.subr.mxu0 0.0
    %2298 = vmatpush1.msra.mxu0 0.0
    %2299 = vmatprep.subr.mxu0 0.0
    %2300 = vmatpush1.msra.mxu0 0.0
    %2301 = vmatprep.subr.mxu0 0.0
    %2302 = vmatpush1.msra.mxu0 0.0
    %2303 = vmatprep.subr.mxu0 0.0
    %2304 = vmatpush1.msra.mxu0 0.0
    %2305 = vmatprep.subr.mxu0 0.0
    %2306 = vmatpush1.msra.mxu0 0.0
    %2307 = vmatprep.mubr.f32.mxu0 0.0
    %2308 = vmatmul.mubr.f32.gmra.mrb[0].mxu0 %v2241
    %v2309 = vpop.f32.mrb[0].mxu0
    %v2310 = vadd.f32 0.0, %v2309
    %v2311 = vpop.f32.mrb[0].mxu0
    %v2312 = vadd.f32 0.0, %v2311
    %2313 = vdwg.mxu0
    %v2314 = vadd.f32 %v1908, %v2310
    %v2315 = vadd.f32 %v1910, %v2312
    %v2316 = vxor.u32 %v2314, 2147483648
    %v2317 = vxor.u32 %v2315, 2147483648
    %v2318 = vmul.f32 %v2316, 1.442695
    %v2319 = vpow.pop %v2318
    %v2320 = vmul.f32 %v2317, 1.442695
    %v2321 = vpow.pop %v2320
    %v2322 = vadd.f32 %v2319, 1.0
    %v2323 = vadd.f32 %v2321, 1.0
    %v2324 = vrcp.pop %v2322
    %v2325 = vmul.f32 1.0, %v2324
    %v2326 = vrcp.pop %v2323
    %v2327 = vmul.f32 1.0, %v2326
    %v2328 = vtanh.pop %v2315
    %v2329 = vmul.f32 %v2325, %v2108
    %v2330 = vmul.f32 %v2325, %v2328
    %2332 = vrot.lane.b32.xlu0 %v2330, 64
    %v2333 = vpop.permute.xlu0 %2332
    %v2335 = vadd.f32 %v2329, %v2333
    %v2336 = vtanh.pop %v2335
    %v2337 = vmul.f32 %v2327, %v2336
    %2339 = vrot.lane.b32.xlu0 %v2337, 64
    %v2340 = vpop.permute.xlu0 %2339
    %v2342 = vsel %vm2012, %v2340, %v2240
    %2343 = vmatprep.subr.mxu0 %v2117
    %2344 = vmatpush1.msra.mxu0 %v2116
    %2345 = vmatprep.subr.mxu0 %v2119
    %2346 = vmatpush1.msra.mxu0 %v2118
    %2347 = vmatprep.subr.mxu0 %v2121
    %2348 = vmatpush1.msra.mxu0 %v2120
    %2349 = vmatprep.subr.mxu0 %v2123
    %2350 = vmatpush1.msra.mxu0 %v2122
    %2351 = vmatprep.subr.mxu0 %v2125
    %2352 = vmatpush1.msra.mxu0 %v2124
    %2353 = vmatprep.subr.mxu0 %v2127
    %2354 = vmatpush1.msra.mxu0 %v2126
    %2355 = vmatprep.subr.mxu0 %v2129
    %2356 = vmatpush1.msra.mxu0 %v2128
    %2357 = vmatprep.subr.mxu0 %v2131
    %2358 = vmatpush1.msra.mxu0 %v2130
    %2359 = vmatprep.subr.mxu0 %v2133
    %2360 = vmatpush1.msra.mxu0 %v2132
    %2361 = vmatprep.subr.mxu0 %v2135
    %2362 = vmatpush1.msra.mxu0 %v2134
    %2363 = vmatprep.subr.mxu0 %v2137
    %2364 = vmatpush1.msra.mxu0 %v2136
    %2365 = vmatprep.subr.mxu0 %v2139
    %2366 = vmatpush1.msra.mxu0 %v2138
    %2367 = vmatprep.subr.mxu0 %v2141
    %2368 = vmatpush1.msra.mxu0 %v2140
    %2369 = vmatprep.subr.mxu0 %v2143
    %2370 = vmatpush1.msra.mxu0 %v2142
    %2371 = vmatprep.subr.mxu0 %v2145
    %2372 = vmatpush1.msra.mxu0 %v2144
    %2373 = vmatprep.subr.mxu0 %v2147
    %2374 = vmatpush1.msra.mxu0 %v2146
    %2375 = vmatprep.subr.mxu0 0.0
    %2376 = vmatpush1.msra.mxu0 0.0
    %2377 = vmatprep.subr.mxu0 0.0
    %2378 = vmatpush1.msra.mxu0 0.0
    %2379 = vmatprep.subr.mxu0 0.0
    %2380 = vmatpush1.msra.mxu0 0.0
    %2381 = vmatprep.subr.mxu0 0.0
    %2382 = vmatpush1.msra.mxu0 0.0
    %2383 = vmatprep.subr.mxu0 0.0
    %2384 = vmatpush1.msra.mxu0 0.0
    %2385 = vmatprep.subr.mxu0 0.0
    %2386 = vmatpush1.msra.mxu0 0.0
    %2387 = vmatprep.subr.mxu0 0.0
    %2388 = vmatpush1.msra.mxu0 0.0
    %2389 = vmatprep.subr.mxu0 0.0
    %2390 = vmatpush1.msra.mxu0 0.0
    %2391 = vmatprep.subr.mxu0 0.0
    %2392 = vmatpush1.msra.mxu0 0.0
    %2393 = vmatprep.subr.mxu0 0.0
    %2394 = vmatpush1.msra.mxu0 0.0
    %2395 = vmatprep.subr.mxu0 0.0
    %2396 = vmatpush1.msra.mxu0 0.0
    %2397 = vmatprep.subr.mxu0 0.0
    %2398 = vmatpush1.msra.mxu0 0.0
    %2399 = vmatprep.subr.mxu0 0.0
    %2400 = vmatpush1.msra.mxu0 0.0
    %2401 = vmatprep.subr.mxu0 0.0
    %2402 = vmatpush1.msra.mxu0 0.0
    %2403 = vmatprep.subr.mxu0 0.0
    %2404 = vmatpush1.msra.mxu0 0.0
    %2405 = vmatprep.subr.mxu0 0.0
    %2406 = vmatpush1.msra.mxu0 0.0
    %2407 = vmatprep.mubr.f32.mxu0 0.0
    %2408 = vmatmul.mubr.f32.gmra.mrb[0].mxu0 %v2342
    %v2409 = vpop.f32.mrb[0].mxu0
    %v2410 = vadd.f32 %v1989, %v2409
    %v2411 = vpop.f32.mrb[0].mxu0
    %v2412 = vadd.f32 %v1993, %v2411
    %2413 = vdwg.mxu0
    %v2414 = vxor.u32 %v2410, 2147483648
    %v2415 = vxor.u32 %v2412, 2147483648
    %v2416 = vmul.f32 %v2414, 1.442695
    %v2417 = vpow.pop %v2416
    %v2418 = vmul.f32 %v2415, 1.442695
    %v2419 = vpow.pop %v2418
    %v2420 = vadd.f32 %v2417, 1.0
    %v2421 = vadd.f32 %v2419, 1.0
    %v2422 = vrcp.pop %v2420
    %v2423 = vmul.f32 1.0, %v2422
    %v2424 = vrcp.pop %v2421
    %v2425 = vmul.f32 1.0, %v2424
    %v2426 = vtanh.pop %v2412
    %v2427 = vmul.f32 %v2423, %v2238
    %v2428 = vmul.f32 %v2423, %v2426
    %2430 = vrot.lane.b32.xlu0 %v2428, 64
    %v2431 = vpop.permute.xlu0 %2430
    %v2433 = vadd.f32 %v2427, %v2431
    %v2434 = vtanh.pop %v2433
    %v2435 = vmul.f32 %v2425, %v2434
    %v2436 = vsel %vm2012, %v2340, 0
    %2438 = vmatprep.subr.mxu0 %v1997
    %2439 = vmatpush1.msra.mxu0 %v1996
    %2440 = vmatprep.subr.mxu0 %v1999
    %2441 = vmatpush1.msra.mxu0 %v1998
    %2442 = vmatprep.subr.mxu0 %v2001
    %2443 = vmatpush1.msra.mxu0 %v2000
    %2444 = vmatprep.subr.mxu0 %v2003
    %2445 = vmatpush1.msra.mxu0 %v2002
    %2446 = vmatprep.subr.mxu0 %v2005
    %2447 = vmatpush1.msra.mxu0 %v2004
    %2448 = vmatprep.subr.mxu0 %v2007
    %2449 = vmatpush1.msra.mxu0 %v2006
    %2450 = vmatprep.subr.mxu0 %v2009
    %2451 = vmatpush1.msra.mxu0 %v2008
    %2452 = vmatprep.subr.mxu0 %v2011
    %2453 = vmatpush1.msra.mxu0 %v2010
    %2454 = vmatprep.subr.mxu0 0.0
    %2455 = vmatpush1.msra.mxu0 0.0
    %2456 = vmatprep.subr.mxu0 0.0
    %2457 = vmatpush1.msra.mxu0 0.0
    %2458 = vmatprep.subr.mxu0 0.0
    %2459 = vmatpush1.msra.mxu0 0.0
    %2460 = vmatprep.subr.mxu0 0.0
    %2461 = vmatpush1.msra.mxu0 0.0
    %2462 = vmatprep.subr.mxu0 0.0
    %2463 = vmatpush1.msra.mxu0 0.0
    %2464 = vmatprep.subr.mxu0 0.0
    %2465 = vmatpush1.msra.mxu0 0.0
    %2466 = vmatprep.subr.mxu0 0.0
    %2467 = vmatpush1.msra.mxu0 0.0
    %2468 = vmatprep.subr.mxu0 0.0
    %2469 = vmatpush1.msra.mxu0 0.0
    %2470 = vmatprep.subr.mxu0 0.0
    %2471 = vmatpush1.msra.mxu0 0.0
    %2472 = vmatprep.subr.mxu0 0.0
    %2473 = vmatpush1.msra.mxu0 0.0
    %2474 = vmatprep.subr.mxu0 0.0
    %2475 = vmatpush1.msra.mxu0 0.0
    %2476 = vmatprep.subr.mxu0 0.0
    %2477 = vmatpush1.msra.mxu0 0.0
    %2478 = vmatprep.subr.mxu0 0.0
    %2479 = vmatpush1.msra.mxu0 0.0
    %2480 = vmatprep.subr.mxu0 0.0
    %2481 = vmatpush1.msra.mxu0 0.0
    %2482 = vmatprep.subr.mxu0 0.0
    %2483 = vmatpush1.msra.mxu0 0.0
    %2484 = vmatprep.subr.mxu0 0.0
    %2485 = vmatpush1.msra.mxu0 0.0
    %2486 = vmatprep.subr.mxu0 0.0
    %2487 = vmatpush1.msra.mxu0 0.0
    %2488 = vmatprep.subr.mxu0 0.0
    %2489 = vmatpush1.msra.mxu0 0.0
    %2490 = vmatprep.subr.mxu0 0.0
    %2491 = vmatpush1.msra.mxu0 0.0
    %2492 = vmatprep.subr.mxu0 0.0
    %2493 = vmatpush1.msra.mxu0 0.0
    %2494 = vmatprep.subr.mxu0 0.0
    %2495 = vmatpush1.msra.mxu0 0.0
    %2496 = vmatprep.subr.mxu0 0.0
    %2497 = vmatpush1.msra.mxu0 0.0
    %2498 = vmatprep.subr.mxu0 0.0
    %2499 = vmatpush1.msra.mxu0 0.0
    %2500 = vmatprep.subr.mxu0 0.0
    %2501 = vmatpush1.msra.mxu0 0.0
    %2502 = vmatprep.mubr.f32.mxu0 0.0
    %2503 = vmatmul.mubr.f32.gmra.mrb[0].mxu0 %v2436
    %v2504 = vpop.f32.mrb[0].mxu0
    %v2505 = vadd.f32 0.0, %v2504
    %v2506 = vpop.f32.mrb[0].mxu0
    %v2507 = vadd.f32 0.0, %v2506
    %2508 = vdwg.mxu0
    %v2509 = vadd.f32 %v1914, %v2505
    %v2510 = vadd.f32 %v1916, %v2507
    %v2511 = vxor.u32 %v2509, 2147483648
    %v2512 = vxor.u32 %v2510, 2147483648
    %v2513 = vmul.f32 %v2511, 1.442695
    %v2514 = vpow.pop %v2513
    %v2515 = vmul.f32 %v2512, 1.442695
    %v2516 = vpow.pop %v2515
    %v2517 = vadd.f32 %v2514, 1.0
    %v2518 = vadd.f32 %v2516, 1.0
    %v2519 = vrcp.pop %v2517
    %v2520 = vmul.f32 1.0, %v2519
    %v2521 = vrcp.pop %v2518
    %v2522 = vmul.f32 1.0, %v2521
    %v2523 = vtanh.pop %v2510
    %v2524 = vmul.f32 %v2520, %v2335
    %v2525 = vmul.f32 %v2520, %v2523
    %2527 = vrot.lane.b32.xlu0 %v2525, 64
    %v2528 = vpop.permute.xlu0 %2527
    %v2530 = vadd.f32 %v2524, %v2528
    %v2531 = vtanh.pop %v2530
    %v2532 = vmul.f32 %v2522, %v2531
    %2534 = vrot.lane.b32.xlu0 %v2532, 64
    %v2535 = vpop.permute.xlu0 %2534
    %v2537 = vsel %vm2012, %v2535, %v2435
    %2538 = vmatprep.subr.mxu0 %v2117
    %2539 = vmatpush1.msra.mxu0 %v2116
    %2540 = vmatprep.subr.mxu0 %v2119
    %2541 = vmatpush1.msra.mxu0 %v2118
    %2542 = vmatprep.subr.mxu0 %v2121
    %2543 = vmatpush1.msra.mxu0 %v2120
    %2544 = vmatprep.subr.mxu0 %v2123
    %2545 = vmatpush1.msra.mxu0 %v2122
    %2546 = vmatprep.subr.mxu0 %v2125
    %2547 = vmatpush1.msra.mxu0 %v2124
    %2548 = vmatprep.subr.mxu0 %v2127
    %2549 = vmatpush1.msra.mxu0 %v2126
    %2550 = vmatprep.subr.mxu0 %v2129
    %2551 = vmatpush1.msra.mxu0 %v2128
    %2552 = vmatprep.subr.mxu0 %v2131
    %2553 = vmatpush1.msra.mxu0 %v2130
    %2554 = vmatprep.subr.mxu0 %v2133
    %2555 = vmatpush1.msra.mxu0 %v2132
    %2556 = vmatprep.subr.mxu0 %v2135
    %2557 = vmatpush1.msra.mxu0 %v2134
    %2558 = vmatprep.subr.mxu0 %v2137
    %2559 = vmatpush1.msra.mxu0 %v2136
    %2560 = vmatprep.subr.mxu0 %v2139
    %2561 = vmatpush1.msra.mxu0 %v2138
    %2562 = vmatprep.subr.mxu0 %v2141
    %2563 = vmatpush1.msra.mxu0 %v2140
    %2564 = vmatprep.subr.mxu0 %v2143
    %2565 = vmatpush1.msra.mxu0 %v2142
    %2566 = vmatprep.subr.mxu0 %v2145
    %2567 = vmatpush1.msra.mxu0 %v2144
    %2568 = vmatprep.subr.mxu0 %v2147
    %2569 = vmatpush1.msra.mxu0 %v2146
    %2570 = vmatprep.subr.mxu0 0.0
    %2571 = vmatpush1.msra.mxu0 0.0
    %2572 = vmatprep.subr.mxu0 0.0
    %2573 = vmatpush1.msra.mxu0 0.0
    %2574 = vmatprep.subr.mxu0 0.0
    %2575 = vmatpush1.msra.mxu0 0.0
    %2576 = vmatprep.subr.mxu0 0.0
    %2577 = vmatpush1.msra.mxu0 0.0
    %2578 = vmatprep.subr.mxu0 0.0
    %2579 = vmatpush1.msra.mxu0 0.0
    %2580 = vmatprep.subr.mxu0 0.0
    %2581 = vmatpush1.msra.mxu0 0.0
    %2582 = vmatprep.subr.mxu0 0.0
    %2583 = vmatpush1.msra.mxu0 0.0
    %2584 = vmatprep.subr.mxu0 0.0
    %2585 = vmatpush1.msra.mxu0 0.0
    %2586 = vmatprep.subr.mxu0 0.0
    %2587 = vmatpush1.msra.mxu0 0.0
    %2588 = vmatprep.subr.mxu0 0.0
    %2589 = vmatpush1.msra.mxu0 0.0
    %2590 = vmatprep.subr.mxu0 0.0
    %2591 = vmatpush1.msra.mxu0 0.0
    %2592 = vmatprep.subr.mxu0 0.0
    %2593 = vmatpush1.msra.mxu0 0.0
    %2594 = vmatprep.subr.mxu0 0.0
    %2595 = vmatpush1.msra.mxu0 0.0
    %2596 = vmatprep.subr.mxu0 0.0
    %2597 = vmatpush1.msra.mxu0 0.0
    %2598 = vmatprep.subr.mxu0 0.0
    %2599 = vmatpush1.msra.mxu0 0.0
    %2600 = vmatprep.subr.mxu0 0.0
    %2601 = vmatpush1.msra.mxu0 0.0
    %2602 = vmatprep.mubr.f32.mxu0 0.0
    %2603 = vmatmul.mubr.f32.gmra.mrb[0].mxu0 %v2537
    %v2604 = vpop.f32.mrb[0].mxu0
    %v2605 = vadd.f32 %v1989, %v2604
    %v2606 = vpop.f32.mrb[0].mxu0
    %v2607 = vadd.f32 %v1993, %v2606
    %2608 = vdwg.mxu0
    %v2609 = vxor.u32 %v2605, 2147483648
    %v2610 = vxor.u32 %v2607, 2147483648
    %v2611 = vmul.f32 %v2609, 1.442695
    %v2612 = vpow.pop %v2611
    %v2613 = vmul.f32 %v2610, 1.442695
    %v2614 = vpow.pop %v2613
    %v2615 = vadd.f32 %v2612, 1.0
    %v2616 = vadd.f32 %v2614, 1.0
    %v2617 = vrcp.pop %v2615
    %v2618 = vmul.f32 1.0, %v2617
    %v2619 = vrcp.pop %v2616
    %v2620 = vmul.f32 1.0, %v2619
    %v2621 = vtanh.pop %v2607
    %v2622 = vmul.f32 %v2618, %v2433
    %v2623 = vmul.f32 %v2618, %v2621
    %2625 = vrot.lane.b32.xlu0 %v2623, 64
    %v2626 = vpop.permute.xlu0 %2625
    %v2628 = vadd.f32 %v2622, %v2626
    %v2629 = vtanh.pop %v2628
    %v2630 = vmul.f32 %v2620, %v2629
    %v2631 = vsel %vm2012, %v2535, 0
    %2633 = vmatprep.subr.mxu0 %v1997
    %2634 = vmatpush1.msra.mxu0 %v1996
    %2635 = vmatprep.subr.mxu0 %v1999
    %2636 = vmatpush1.msra.mxu0 %v1998
    %2637 = vmatprep.subr.mxu0 %v2001
    %2638 = vmatpush1.msra.mxu0 %v2000
    %2639 = vmatprep.subr.mxu0 %v2003
    %2640 = vmatpush1.msra.mxu0 %v2002
    %2641 = vmatprep.subr.mxu0 %v2005
    %2642 = vmatpush1.msra.mxu0 %v2004
    %2643 = vmatprep.subr.mxu0 %v2007
    %2644 = vmatpush1.msra.mxu0 %v2006
    %2645 = vmatprep.subr.mxu0 %v2009
    %2646 = vmatpush1.msra.mxu0 %v2008
    %2647 = vmatprep.subr.mxu0 %v2011
    %2648 = vmatpush1.msra.mxu0 %v2010
    %2649 = vmatprep.subr.mxu0 0.0
    %2650 = vmatpush1.msra.mxu0 0.0
    %2651 = vmatprep.subr.mxu0 0.0
    %2652 = vmatpush1.msra.mxu0 0.0
    %2653 = vmatprep.subr.mxu0 0.0
    %2654 = vmatpush1.msra.mxu0 0.0
    %2655 = vmatprep.subr.mxu0 0.0
    %2656 = vmatpush1.msra.mxu0 0.0
    %2657 = vmatprep.subr.mxu0 0.0
    %2658 = vmatpush1.msra.mxu0 0.0
    %2659 = vmatprep.subr.mxu0 0.0
    %2660 = vmatpush1.msra.mxu0 0.0
    %2661 = vmatprep.subr.mxu0 0.0
    %2662 = vmatpush1.msra.mxu0 0.0
    %2663 = vmatprep.subr.mxu0 0.0
    %2664 = vmatpush1.msra.mxu0 0.0
    %2665 = vmatprep.subr.mxu0 0.0
    %2666 = vmatpush1.msra.mxu0 0.0
    %2667 = vmatprep.subr.mxu0 0.0
    %2668 = vmatpush1.msra.mxu0 0.0
    %2669 = vmatprep.subr.mxu0 0.0
    %2670 = vmatpush1.msra.mxu0 0.0
    %2671 = vmatprep.subr.mxu0 0.0
    %2672 = vmatpush1.msra.mxu0 0.0
    %2673 = vmatprep.subr.mxu0 0.0
    %2674 = vmatpush1.msra.mxu0 0.0
    %2675 = vmatprep.subr.mxu0 0.0
    %2676 = vmatpush1.msra.mxu0 0.0
    %2677 = vmatprep.subr.mxu0 0.0
    %2678 = vmatpush1.msra.mxu0 0.0
    %2679 = vmatprep.subr.mxu0 0.0
    %2680 = vmatpush1.msra.mxu0 0.0
    %2681 = vmatprep.subr.mxu0 0.0
    %2682 = vmatpush1.msra.mxu0 0.0
    %2683 = vmatprep.subr.mxu0 0.0
    %2684 = vmatpush1.msra.mxu0 0.0
    %2685 = vmatprep.subr.mxu0 0.0
    %2686 = vmatpush1.msra.mxu0 0.0
    %2687 = vmatprep.subr.mxu0 0.0
    %2688 = vmatpush1.msra.mxu0 0.0
    %2689 = vmatprep.subr.mxu0 0.0
    %2690 = vmatpush1.msra.mxu0 0.0
    %2691 = vmatprep.subr.mxu0 0.0
    %2692 = vmatpush1.msra.mxu0 0.0
    %2693 = vmatprep.subr.mxu0 0.0
    %2694 = vmatpush1.msra.mxu0 0.0
    %2695 = vmatprep.subr.mxu0 0.0
    %2696 = vmatpush1.msra.mxu0 0.0
    %2697 = vmatprep.mubr.f32.mxu0 0.0
    %2698 = vmatmul.mubr.f32.gmra.mrb[0].mxu0 %v2631
    %v2699 = vpop.f32.mrb[0].mxu0
    %v2700 = vadd.f32 0.0, %v2699
    %v2701 = vpop.f32.mrb[0].mxu0
    %v2702 = vadd.f32 0.0, %v2701
    %2703 = vdwg.mxu0
    %v2704 = vadd.f32 %v1920, %v2700
    %v2705 = vadd.f32 %v1922, %v2702
    %v2706 = vxor.u32 %v2704, 2147483648
    %v2707 = vxor.u32 %v2705, 2147483648
    %v2708 = vmul.f32 %v2706, 1.442695
    %v2709 = vpow.pop %v2708
    %v2710 = vmul.f32 %v2707, 1.442695
    %v2711 = vpow.pop %v2710
    %v2712 = vadd.f32 %v2709, 1.0
    %v2713 = vadd.f32 %v2711, 1.0
    %v2714 = vrcp.pop %v2712
    %v2715 = vmul.f32 1.0, %v2714
    %v2716 = vrcp.pop %v2713
    %v2717 = vmul.f32 1.0, %v2716
    %v2718 = vtanh.pop %v2705
    %v2719 = vmul.f32 %v2715, %v2530
    %v2720 = vmul.f32 %v2715, %v2718
    %2722 = vrot.lane.b32.xlu0 %v2720, 64
    %v2723 = vpop.permute.xlu0 %2722
    %v2725 = vadd.f32 %v2719, %v2723
    %v2726 = vtanh.pop %v2725
    %v2727 = vmul.f32 %v2717, %v2726
    %2729 = vrot.lane.b32.xlu0 %v2727, 64
    %v2730 = vpop.permute.xlu0 %2729
    %v2732 = vsel %vm2012, %v2730, %v2630
    %2733 = vmatprep.subr.mxu0 %v2117
    %2734 = vmatpush1.msra.mxu0 %v2116
    %2735 = vmatprep.subr.mxu0 %v2119
    %2736 = vmatpush1.msra.mxu0 %v2118
    %2737 = vmatprep.subr.mxu0 %v2121
    %2738 = vmatpush1.msra.mxu0 %v2120
    %2739 = vmatprep.subr.mxu0 %v2123
    %2740 = vmatpush1.msra.mxu0 %v2122
    %2741 = vmatprep.subr.mxu0 %v2125
    %2742 = vmatpush1.msra.mxu0 %v2124
    %2743 = vmatprep.subr.mxu0 %v2127
    %2744 = vmatpush1.msra.mxu0 %v2126
    %2745 = vmatprep.subr.mxu0 %v2129
    %2746 = vmatpush1.msra.mxu0 %v2128
    %2747 = vmatprep.subr.mxu0 %v2131
    %2748 = vmatpush1.msra.mxu0 %v2130
    %2749 = vmatprep.subr.mxu0 %v2133
    %2750 = vmatpush1.msra.mxu0 %v2132
    %2751 = vmatprep.subr.mxu0 %v2135
    %2752 = vmatpush1.msra.mxu0 %v2134
    %2753 = vmatprep.subr.mxu0 %v2137
    %2754 = vmatpush1.msra.mxu0 %v2136
    %2755 = vmatprep.subr.mxu0 %v2139
    %2756 = vmatpush1.msra.mxu0 %v2138
    %2757 = vmatprep.subr.mxu0 %v2141
    %2758 = vmatpush1.msra.mxu0 %v2140
    %2759 = vmatprep.subr.mxu0 %v2143
    %2760 = vmatpush1.msra.mxu0 %v2142
    %2761 = vmatprep.subr.mxu0 %v2145
    %2762 = vmatpush1.msra.mxu0 %v2144
    %2763 = vmatprep.subr.mxu0 %v2147
    %2764 = vmatpush1.msra.mxu0 %v2146
    %2765 = vmatprep.subr.mxu0 0.0
    %2766 = vmatpush1.msra.mxu0 0.0
    %2767 = vmatprep.subr.mxu0 0.0
    %2768 = vmatpush1.msra.mxu0 0.0
    %2769 = vmatprep.subr.mxu0 0.0
    %2770 = vmatpush1.msra.mxu0 0.0
    %2771 = vmatprep.subr.mxu0 0.0
    %2772 = vmatpush1.msra.mxu0 0.0
    %2773 = vmatprep.subr.mxu0 0.0
    %2774 = vmatpush1.msra.mxu0 0.0
    %2775 = vmatprep.subr.mxu0 0.0
    %2776 = vmatpush1.msra.mxu0 0.0
    %2777 = vmatprep.subr.mxu0 0.0
    %2778 = vmatpush1.msra.mxu0 0.0
    %2779 = vmatprep.subr.mxu0 0.0
    %2780 = vmatpush1.msra.mxu0 0.0
    %2781 = vmatprep.subr.mxu0 0.0
    %2782 = vmatpush1.msra.mxu0 0.0
    %2783 = vmatprep.subr.mxu0 0.0
    %2784 = vmatpush1.msra.mxu0 0.0
    %2785 = vmatprep.subr.mxu0 0.0
    %2786 = vmatpush1.msra.mxu0 0.0
    %2787 = vmatprep.subr.mxu0 0.0
    %2788 = vmatpush1.msra.mxu0 0.0
    %2789 = vmatprep.subr.mxu0 0.0
    %2790 = vmatpush1.msra.mxu0 0.0
    %2791 = vmatprep.subr.mxu0 0.0
    %2792 = vmatpush1.msra.mxu0 0.0
    %2793 = vmatprep.subr.mxu0 0.0
    %2794 = vmatpush1.msra.mxu0 0.0
    %2795 = vmatprep.subr.mxu0 0.0
    %2796 = vmatpush1.msra.mxu0 0.0
    %2797 = vmatprep.mubr.f32.mxu0 0.0
    %2798 = vmatmul.mubr.f32.gmra.mrb[0].mxu0 %v2732
    %v2799 = vpop.f32.mrb[0].mxu0
    %v2800 = vadd.f32 %v1989, %v2799
    %v2801 = vpop.f32.mrb[0].mxu0
    %v2802 = vadd.f32 %v1993, %v2801
    %2803 = vdwg.mxu0
    %v2804 = vxor.u32 %v2800, 2147483648
    %v2805 = vxor.u32 %v2802, 2147483648
    %v2806 = vmul.f32 %v2804, 1.442695
    %v2807 = vpow.pop %v2806
    %v2808 = vmul.f32 %v2805, 1.442695
    %v2809 = vpow.pop %v2808
    %v2810 = vadd.f32 %v2807, 1.0
    %v2811 = vadd.f32 %v2809, 1.0
    %v2812 = vrcp.pop %v2810
    %v2813 = vmul.f32 1.0, %v2812
    %v2814 = vrcp.pop %v2811
    %v2815 = vmul.f32 1.0, %v2814
    %v2816 = vtanh.pop %v2802
    %v2817 = vmul.f32 %v2813, %v2628
    %v2818 = vmul.f32 %v2813, %v2816
    %2820 = vrot.lane.b32.xlu0 %v2818, 64
    %v2821 = vpop.permute.xlu0 %2820
    %v2823 = vadd.f32 %v2817, %v2821
    %v2824 = vtanh.pop %v2823
    %v2825 = vmul.f32 %v2815, %v2824
    %v2826 = vsel %vm2012, %v2730, 0
    %2828 = vmatprep.subr.mxu0 %v1997
    %2829 = vmatpush1.msra.mxu0 %v1996
    %2830 = vmatprep.subr.mxu0 %v1999
    %2831 = vmatpush1.msra.mxu0 %v1998
    %2832 = vmatprep.subr.mxu0 %v2001
    %2833 = vmatpush1.msra.mxu0 %v2000
    %2834 = vmatprep.subr.mxu0 %v2003
    %2835 = vmatpush1.msra.mxu0 %v2002
    %2836 = vmatprep.subr.mxu0 %v2005
    %2837 = vmatpush1.msra.mxu0 %v2004
    %2838 = vmatprep.subr.mxu0 %v2007
    %2839 = vmatpush1.msra.mxu0 %v2006
    %2840 = vmatprep.subr.mxu0 %v2009
    %2841 = vmatpush1.msra.mxu0 %v2008
    %2842 = vmatprep.subr.mxu0 %v2011
    %2843 = vmatpush1.msra.mxu0 %v2010
    %2844 = vmatprep.subr.mxu0 0.0
    %2845 = vmatpush1.msra.mxu0 0.0
    %2846 = vmatprep.subr.mxu0 0.0
    %2847 = vmatpush1.msra.mxu0 0.0
    %2848 = vmatprep.subr.mxu0 0.0
    %2849 = vmatpush1.msra.mxu0 0.0
    %2850 = vmatprep.subr.mxu0 0.0
    %2851 = vmatpush1.msra.mxu0 0.0
    %2852 = vmatprep.subr.mxu0 0.0
    %2853 = vmatpush1.msra.mxu0 0.0
    %2854 = vmatprep.subr.mxu0 0.0
    %2855 = vmatpush1.msra.mxu0 0.0
    %2856 = vmatprep.subr.mxu0 0.0
    %2857 = vmatpush1.msra.mxu0 0.0
    %2858 = vmatprep.subr.mxu0 0.0
    %2859 = vmatpush1.msra.mxu0 0.0
    %2860 = vmatprep.subr.mxu0 0.0
    %2861 = vmatpush1.msra.mxu0 0.0
    %2862 = vmatprep.subr.mxu0 0.0
    %2863 = vmatpush1.msra.mxu0 0.0
    %2864 = vmatprep.subr.mxu0 0.0
    %2865 = vmatpush1.msra.mxu0 0.0
    %2866 = vmatprep.subr.mxu0 0.0
    %2867 = vmatpush1.msra.mxu0 0.0
    %2868 = vmatprep.subr.mxu0 0.0
    %2869 = vmatpush1.msra.mxu0 0.0
    %2870 = vmatprep.subr.mxu0 0.0
    %2871 = vmatpush1.msra.mxu0 0.0
    %2872 = vmatprep.subr.mxu0 0.0
    %2873 = vmatpush1.msra.mxu0 0.0
    %2874 = vmatprep.subr.mxu0 0.0
    %2875 = vmatpush1.msra.mxu0 0.0
    %2876 = vmatprep.subr.mxu0 0.0
    %2877 = vmatpush1.msra.mxu0 0.0
    %2878 = vmatprep.subr.mxu0 0.0
    %2879 = vmatpush1.msra.mxu0 0.0
    %2880 = vmatprep.subr.mxu0 0.0
    %2881 = vmatpush1.msra.mxu0 0.0
    %2882 = vmatprep.subr.mxu0 0.0
    %2883 = vmatpush1.msra.mxu0 0.0
    %2884 = vmatprep.subr.mxu0 0.0
    %2885 = vmatpush1.msra.mxu0 0.0
    %2886 = vmatprep.subr.mxu0 0.0
    %2887 = vmatpush1.msra.mxu0 0.0
    %2888 = vmatprep.subr.mxu0 0.0
    %2889 = vmatpush1.msra.mxu0 0.0
    %2890 = vmatprep.subr.mxu0 0.0
    %2891 = vmatpush1.msra.mxu0 0.0
    %2892 = vmatprep.mubr.f32.mxu0 0.0
    %2893 = vmatmul.mubr.f32.gmra.mrb[0].mxu0 %v2826
    %v2894 = vpop.f32.mrb[0].mxu0
    %v2895 = vadd.f32 0.0, %v2894
    %v2896 = vpop.f32.mrb[0].mxu0
    %v2897 = vadd.f32 0.0, %v2896
    %2898 = vdwg.mxu0
    %v2899 = vadd.f32 %v1926, %v2895
    %v2900 = vadd.f32 %v1928, %v2897
    %v2901 = vxor.u32 %v2899, 2147483648
    %v2902 = vxor.u32 %v2900, 2147483648
    %v2903 = vmul.f32 %v2901, 1.442695
    %v2904 = vpow.pop %v2903
    %v2905 = vmul.f32 %v2902, 1.442695
    %v2906 = vpow.pop %v2905
    %v2907 = vadd.f32 %v2904, 1.0
    %v2908 = vadd.f32 %v2906, 1.0
    %v2909 = vrcp.pop %v2907
    %v2910 = vmul.f32 1.0, %v2909
    %v2911 = vrcp.pop %v2908
    %v2912 = vmul.f32 1.0, %v2911
    %v2913 = vtanh.pop %v2900
    %v2914 = vmul.f32 %v2910, %v2725
    %v2915 = vmul.f32 %v2910, %v2913
    %2917 = vrot.lane.b32.xlu0 %v2915, 64
    %v2918 = vpop.permute.xlu0 %2917
    %v2920 = vadd.f32 %v2914, %v2918
    %v2921 = vtanh.pop %v2920
    %v2922 = vmul.f32 %v2912, %v2921
    %2924 = vrot.lane.b32.xlu0 %v2922, 64
    %v2925 = vpop.permute.xlu0 %2924
    %v2927 = vsel %vm2012, %v2925, %v2825
    %2928 = vmatprep.subr.mxu0 %v2117
    %2929 = vmatpush1.msra.mxu0 %v2116
    %2930 = vmatprep.subr.mxu0 %v2119
    %2931 = vmatpush1.msra.mxu0 %v2118
    %2932 = vmatprep.subr.mxu0 %v2121
    %2933 = vmatpush1.msra.mxu0 %v2120
    %2934 = vmatprep.subr.mxu0 %v2123
    %2935 = vmatpush1.msra.mxu0 %v2122
    %2936 = vmatprep.subr.mxu0 %v2125
    %2937 = vmatpush1.msra.mxu0 %v2124
    %2938 = vmatprep.subr.mxu0 %v2127
    %2939 = vmatpush1.msra.mxu0 %v2126
    %2940 = vmatprep.subr.mxu0 %v2129
    %2941 = vmatpush1.msra.mxu0 %v2128
    %2942 = vmatprep.subr.mxu0 %v2131
    %2943 = vmatpush1.msra.mxu0 %v2130
    %2944 = vmatprep.subr.mxu0 %v2133
    %2945 = vmatpush1.msra.mxu0 %v2132
    %2946 = vmatprep.subr.mxu0 %v2135
    %2947 = vmatpush1.msra.mxu0 %v2134
    %2948 = vmatprep.subr.mxu0 %v2137
    %2949 = vmatpush1.msra.mxu0 %v2136
    %2950 = vmatprep.subr.mxu0 %v2139
    %2951 = vmatpush1.msra.mxu0 %v2138
    %2952 = vmatprep.subr.mxu0 %v2141
    %2953 = vmatpush1.msra.mxu0 %v2140
    %2954 = vmatprep.subr.mxu0 %v2143
    %2955 = vmatpush1.msra.mxu0 %v2142
    %2956 = vmatprep.subr.mxu0 %v2145
    %2957 = vmatpush1.msra.mxu0 %v2144
    %2958 = vmatprep.subr.mxu0 %v2147
    %2959 = vmatpush1.msra.mxu0 %v2146
    %2960 = vmatprep.subr.mxu0 0.0
    %2961 = vmatpush1.msra.mxu0 0.0
    %2962 = vmatprep.subr.mxu0 0.0
    %2963 = vmatpush1.msra.mxu0 0.0
    %2964 = vmatprep.subr.mxu0 0.0
    %2965 = vmatpush1.msra.mxu0 0.0
    %2966 = vmatprep.subr.mxu0 0.0
    %2967 = vmatpush1.msra.mxu0 0.0
    %2968 = vmatprep.subr.mxu0 0.0
    %2969 = vmatpush1.msra.mxu0 0.0
    %2970 = vmatprep.subr.mxu0 0.0
    %2971 = vmatpush1.msra.mxu0 0.0
    %2972 = vmatprep.subr.mxu0 0.0
    %2973 = vmatpush1.msra.mxu0 0.0
    %2974 = vmatprep.subr.mxu0 0.0
    %2975 = vmatpush1.msra.mxu0 0.0
    %2976 = vmatprep.subr.mxu0 0.0
    %2977 = vmatpush1.msra.mxu0 0.0
    %2978 = vmatprep.subr.mxu0 0.0
    %2979 = vmatpush1.msra.mxu0 0.0
    %2980 = vmatprep.subr.mxu0 0.0
    %2981 = vmatpush1.msra.mxu0 0.0
    %2982 = vmatprep.subr.mxu0 0.0
    %2983 = vmatpush1.msra.mxu0 0.0
    %2984 = vmatprep.subr.mxu0 0.0
    %2985 = vmatpush1.msra.mxu0 0.0
    %2986 = vmatprep.subr.mxu0 0.0
    %2987 = vmatpush1.msra.mxu0 0.0
    %2988 = vmatprep.subr.mxu0 0.0
    %2989 = vmatpush1.msra.mxu0 0.0
    %2990 = vmatprep.subr.mxu0 0.0
    %2991 = vmatpush1.msra.mxu0 0.0
    %2992 = vmatprep.mubr.f32.mxu0 0.0
    %2993 = vmatmul.mubr.f32.gmra.mrb[0].mxu0 %v2927
    %v2994 = vpop.f32.mrb[0].mxu0
    %v2995 = vadd.f32 %v1989, %v2994
    %v2996 = vpop.f32.mrb[0].mxu0
    %v2997 = vadd.f32 %v1993, %v2996
    %2998 = vdwg.mxu0
    %v2999 = vxor.u32 %v2995, 2147483648
    %v3000 = vxor.u32 %v2997, 2147483648
    %v3001 = vmul.f32 %v2999, 1.442695
    %v3002 = vpow.pop %v3001
    %v3003 = vmul.f32 %v3000, 1.442695
    %v3004 = vpow.pop %v3003
    %v3005 = vadd.f32 %v3002, 1.0
    %v3006 = vadd.f32 %v3004, 1.0
    %v3007 = vrcp.pop %v3005
    %v3008 = vmul.f32 1.0, %v3007
    %v3009 = vrcp.pop %v3006
    %v3010 = vmul.f32 1.0, %v3009
    %v3011 = vtanh.pop %v2997
    %v3012 = vmul.f32 %v3008, %v2823
    %v3013 = vmul.f32 %v3008, %v3011
    %3015 = vrot.lane.b32.xlu0 %v3013, 64
    %v3016 = vpop.permute.xlu0 %3015
    %v3018 = vadd.f32 %v3012, %v3016
    %v3019 = vtanh.pop %v3018
    %v3020 = vmul.f32 %v3010, %v3019
    %v3021 = vsel %vm2012, %v2925, 0
    %3023 = vmatprep.subr.mxu0 %v1997
    %3024 = vmatpush1.msra.mxu0 %v1996
    %3025 = vmatprep.subr.mxu0 %v1999
    %3026 = vmatpush1.msra.mxu0 %v1998
    %3027 = vmatprep.subr.mxu0 %v2001
    %3028 = vmatpush1.msra.mxu0 %v2000
    %3029 = vmatprep.subr.mxu0 %v2003
    %3030 = vmatpush1.msra.mxu0 %v2002
    %3031 = vmatprep.subr.mxu0 %v2005
    %3032 = vmatpush1.msra.mxu0 %v2004
    %3033 = vmatprep.subr.mxu0 %v2007
    %3034 = vmatpush1.msra.mxu0 %v2006
    %3035 = vmatprep.subr.mxu0 %v2009
    %3036 = vmatpush1.msra.mxu0 %v2008
    %3037 = vmatprep.subr.mxu0 %v2011
    %3038 = vmatpush1.msra.mxu0 %v2010
    %3039 = vmatprep.subr.mxu0 0.0
    %3040 = vmatpush1.msra.mxu0 0.0
    %3041 = vmatprep.subr.mxu0 0.0
    %3042 = vmatpush1.msra.mxu0 0.0
    %3043 = vmatprep.subr.mxu0 0.0
    %3044 = vmatpush1.msra.mxu0 0.0
    %3045 = vmatprep.subr.mxu0 0.0
    %3046 = vmatpush1.msra.mxu0 0.0
    %3047 = vmatprep.subr.mxu0 0.0
    %3048 = vmatpush1.msra.mxu0 0.0
    %3049 = vmatprep.subr.mxu0 0.0
    %3050 = vmatpush1.msra.mxu0 0.0
    %3051 = vmatprep.subr.mxu0 0.0
    %3052 = vmatpush1.msra.mxu0 0.0
    %3053 = vmatprep.subr.mxu0 0.0
    %3054 = vmatpush1.msra.mxu0 0.0
    %3055 = vmatprep.subr.mxu0 0.0
    %3056 = vmatpush1.msra.mxu0 0.0
    %3057 = vmatprep.subr.mxu0 0.0
    %3058 = vmatpush1.msra.mxu0 0.0
    %3059 = vmatprep.subr.mxu0 0.0
    %3060 = vmatpush1.msra.mxu0 0.0
    %3061 = vmatprep.subr.mxu0 0.0
    %3062 = vmatpush1.msra.mxu0 0.0
    %3063 = vmatprep.subr.mxu0 0.0
    %3064 = vmatpush1.msra.mxu0 0.0
    %3065 = vmatprep.subr.mxu0 0.0
    %3066 = vmatpush1.msra.mxu0 0.0
    %3067 = vmatprep.subr.mxu0 0.0
    %3068 = vmatpush1.msra.mxu0 0.0
    %3069 = vmatprep.subr.mxu0 0.0
    %3070 = vmatpush1.msra.mxu0 0.0
    %3071 = vmatprep.subr.mxu0 0.0
    %3072 = vmatpush1.msra.mxu0 0.0
    %3073 = vmatprep.subr.mxu0 0.0
    %3074 = vmatpush1.msra.mxu0 0.0
    %3075 = vmatprep.subr.mxu0 0.0
    %3076 = vmatpush1.msra.mxu0 0.0
    %3077 = vmatprep.subr.mxu0 0.0
    %3078 = vmatpush1.msra.mxu0 0.0
    %3079 = vmatprep.subr.mxu0 0.0
    %3080 = vmatpush1.msra.mxu0 0.0
    %3081 = vmatprep.subr.mxu0 0.0
    %3082 = vmatpush1.msra.mxu0 0.0
    %3083 = vmatprep.subr.mxu0 0.0
    %3084 = vmatpush1.msra.mxu0 0.0
    %3085 = vmatprep.subr.mxu0 0.0
    %3086 = vmatpush1.msra.mxu0 0.0
    %3087 = vmatprep.mubr.f32.mxu0 0.0
    %3088 = vmatmul.mubr.f32.gmra.mrb[0].mxu0 %v3021
    %v3089 = vpop.f32.mrb[0].mxu0
    %v3090 = vadd.f32 0.0, %v3089
    %v3091 = vpop.f32.mrb[0].mxu0
    %v3092 = vadd.f32 0.0, %v3091
    %3093 = vdwg.mxu0
    %v3094 = vadd.f32 %v1932, %v3090
    %v3095 = vadd.f32 %v1934, %v3092
    %v3096 = vxor.u32 %v3094, 2147483648
    %v3097 = vxor.u32 %v3095, 2147483648
    %v3098 = vmul.f32 %v3096, 1.442695
    %v3099 = vpow.pop %v3098
    %v3100 = vmul.f32 %v3097, 1.442695
    %v3101 = vpow.pop %v3100
    %v3102 = vadd.f32 %v3099, 1.0
    %v3103 = vadd.f32 %v3101, 1.0
    %v3104 = vrcp.pop %v3102
    %v3105 = vmul.f32 1.0, %v3104
    %v3106 = vrcp.pop %v3103
    %v3107 = vmul.f32 1.0, %v3106
    %v3108 = vtanh.pop %v3095
    %v3109 = vmul.f32 %v3105, %v2920
    %v3110 = vmul.f32 %v3105, %v3108
    %3112 = vrot.lane.b32.xlu0 %v3110, 64
    %v3113 = vpop.permute.xlu0 %3112
    %v3115 = vadd.f32 %v3109, %v3113
    %v3116 = vtanh.pop %v3115
    %v3117 = vmul.f32 %v3107, %v3116
    %3119 = vrot.lane.b32.xlu0 %v3117, 64
    %v3120 = vpop.permute.xlu0 %3119
    %v3122 = vsel %vm2012, %v3120, %v3020
    %3123 = vmatprep.subr.mxu0 %v2117
    %3124 = vmatpush1.msra.mxu0 %v2116
    %3125 = vmatprep.subr.mxu0 %v2119
    %3126 = vmatpush1.msra.mxu0 %v2118
    %3127 = vmatprep.subr.mxu0 %v2121
    %3128 = vmatpush1.msra.mxu0 %v2120
    %3129 = vmatprep.subr.mxu0 %v2123
    %3130 = vmatpush1.msra.mxu0 %v2122
    %3131 = vmatprep.subr.mxu0 %v2125
    %3132 = vmatpush1.msra.mxu0 %v2124
    %3133 = vmatprep.subr.mxu0 %v2127
    %3134 = vmatpush1.msra.mxu0 %v2126
    %3135 = vmatprep.subr.mxu0 %v2129
    %3136 = vmatpush1.msra.mxu0 %v2128
    %3137 = vmatprep.subr.mxu0 %v2131
    %3138 = vmatpush1.msra.mxu0 %v2130
    %3139 = vmatprep.subr.mxu0 %v2133
    %3140 = vmatpush1.msra.mxu0 %v2132
    %3141 = vmatprep.subr.mxu0 %v2135
    %3142 = vmatpush1.msra.mxu0 %v2134
    %3143 = vmatprep.subr.mxu0 %v2137
    %3144 = vmatpush1.msra.mxu0 %v2136
    %3145 = vmatprep.subr.mxu0 %v2139
    %3146 = vmatpush1.msra.mxu0 %v2138
    %3147 = vmatprep.subr.mxu0 %v2141
    %3148 = vmatpush1.msra.mxu0 %v2140
    %3149 = vmatprep.subr.mxu0 %v2143
    %3150 = vmatpush1.msra.mxu0 %v2142
    %3151 = vmatprep.subr.mxu0 %v2145
    %3152 = vmatpush1.msra.mxu0 %v2144
    %3153 = vmatprep.subr.mxu0 %v2147
    %3154 = vmatpush1.msra.mxu0 %v2146
    %3155 = vmatprep.subr.mxu0 0.0
    %3156 = vmatpush1.msra.mxu0 0.0
    %3157 = vmatprep.subr.mxu0 0.0
    %3158 = vmatpush1.msra.mxu0 0.0
    %3159 = vmatprep.subr.mxu0 0.0
    %3160 = vmatpush1.msra.mxu0 0.0
    %3161 = vmatprep.subr.mxu0 0.0
    %3162 = vmatpush1.msra.mxu0 0.0
    %3163 = vmatprep.subr.mxu0 0.0
    %3164 = vmatpush1.msra.mxu0 0.0
    %3165 = vmatprep.subr.mxu0 0.0
    %3166 = vmatpush1.msra.mxu0 0.0
    %3167 = vmatprep.subr.mxu0 0.0
    %3168 = vmatpush1.msra.mxu0 0.0
    %3169 = vmatprep.subr.mxu0 0.0
    %3170 = vmatpush1.msra.mxu0 0.0
    %3171 = vmatprep.subr.mxu0 0.0
    %3172 = vmatpush1.msra.mxu0 0.0
    %3173 = vmatprep.subr.mxu0 0.0
    %3174 = vmatpush1.msra.mxu0 0.0
    %3175 = vmatprep.subr.mxu0 0.0
    %3176 = vmatpush1.msra.mxu0 0.0
    %3177 = vmatprep.subr.mxu0 0.0
    %3178 = vmatpush1.msra.mxu0 0.0
    %3179 = vmatprep.subr.mxu0 0.0
    %3180 = vmatpush1.msra.mxu0 0.0
    %3181 = vmatprep.subr.mxu0 0.0
    %3182 = vmatpush1.msra.mxu0 0.0
    %3183 = vmatprep.subr.mxu0 0.0
    %3184 = vmatpush1.msra.mxu0 0.0
    %3185 = vmatprep.subr.mxu0 0.0
    %3186 = vmatpush1.msra.mxu0 0.0
    %3187 = vmatprep.mubr.f32.mxu0 0.0
    %3188 = vmatmul.mubr.f32.gmra.mrb[0].mxu0 %v3122
    %v3189 = vpop.f32.mrb[0].mxu0
    %v3190 = vadd.f32 %v1989, %v3189
    %v3191 = vpop.f32.mrb[0].mxu0
    %v3192 = vadd.f32 %v1993, %v3191
    %3193 = vdwg.mxu0
    %v3194 = vxor.u32 %v3190, 2147483648
    %v3195 = vxor.u32 %v3192, 2147483648
    %v3196 = vmul.f32 %v3194, 1.442695
    %v3197 = vpow.pop %v3196
    %v3198 = vmul.f32 %v3195, 1.442695
    %v3199 = vpow.pop %v3198
    %v3200 = vadd.f32 %v3197, 1.0
    %v3201 = vadd.f32 %v3199, 1.0
    %v3202 = vrcp.pop %v3200
    %v3203 = vmul.f32 1.0, %v3202
    %v3204 = vrcp.pop %v3201
    %v3205 = vmul.f32 1.0, %v3204
    %v3206 = vtanh.pop %v3192
    %v3207 = vmul.f32 %v3203, %v3018
    %v3208 = vmul.f32 %v3203, %v3206
    %3210 = vrot.lane.b32.xlu0 %v3208, 64
    %v3211 = vpop.permute.xlu0 %3210
    %v3213 = vadd.f32 %v3207, %v3211
    %v3214 = vtanh.pop %v3213
    %v3215 = vmul.f32 %v3205, %v3214
    %v3216 = vsel %vm2012, %v3120, 0
    %3218 = vmatprep.subr.mxu0 %v1997
    %3219 = vmatpush1.msra.mxu0 %v1996
    %3220 = vmatprep.subr.mxu0 %v1999
    %3221 = vmatpush1.msra.mxu0 %v1998
    %3222 = vmatprep.subr.mxu0 %v2001
    %3223 = vmatpush1.msra.mxu0 %v2000
    %3224 = vmatprep.subr.mxu0 %v2003
    %3225 = vmatpush1.msra.mxu0 %v2002
    %3226 = vmatprep.subr.mxu0 %v2005
    %3227 = vmatpush1.msra.mxu0 %v2004
    %3228 = vmatprep.subr.mxu0 %v2007
    %3229 = vmatpush1.msra.mxu0 %v2006
    %3230 = vmatprep.subr.mxu0 %v2009
    %3231 = vmatpush1.msra.mxu0 %v2008
    %3232 = vmatprep.subr.mxu0 %v2011
    %3233 = vmatpush1.msra.mxu0 %v2010
    %3234 = vmatprep.subr.mxu0 0.0
    %3235 = vmatpush1.msra.mxu0 0.0
    %3236 = vmatprep.subr.mxu0 0.0
    %3237 = vmatpush1.msra.mxu0 0.0
    %3238 = vmatprep.subr.mxu0 0.0
    %3239 = vmatpush1.msra.mxu0 0.0
    %3240 = vmatprep.subr.mxu0 0.0
    %3241 = vmatpush1.msra.mxu0 0.0
    %3242 = vmatprep.subr.mxu0 0.0
    %3243 = vmatpush1.msra.mxu0 0.0
    %3244 = vmatprep.subr.mxu0 0.0
    %3245 = vmatpush1.msra.mxu0 0.0
    %3246 = vmatprep.subr.mxu0 0.0
    %3247 = vmatpush1.msra.mxu0 0.0
    %3248 = vmatprep.subr.mxu0 0.0
    %3249 = vmatpush1.msra.mxu0 0.0
    %3250 = vmatprep.subr.mxu0 0.0
    %3251 = vmatpush1.msra.mxu0 0.0
    %3252 = vmatprep.subr.mxu0 0.0
    %3253 = vmatpush1.msra.mxu0 0.0
    %3254 = vmatprep.subr.mxu0 0.0
    %3255 = vmatpush1.msra.mxu0 0.0
    %3256 = vmatprep.subr.mxu0 0.0
    %3257 = vmatpush1.msra.mxu0 0.0
    %3258 = vmatprep.subr.mxu0 0.0
    %3259 = vmatpush1.msra.mxu0 0.0
    %3260 = vmatprep.subr.mxu0 0.0
    %3261 = vmatpush1.msra.mxu0 0.0
    %3262 = vmatprep.subr.mxu0 0.0
    %3263 = vmatpush1.msra.mxu0 0.0
    %3264 = vmatprep.subr.mxu0 0.0
    %3265 = vmatpush1.msra.mxu0 0.0
    %3266 = vmatprep.subr.mxu0 0.0
    %3267 = vmatpush1.msra.mxu0 0.0
    %3268 = vmatprep.subr.mxu0 0.0
    %3269 = vmatpush1.msra.mxu0 0.0
    %3270 = vmatprep.subr.mxu0 0.0
    %3271 = vmatpush1.msra.mxu0 0.0
    %3272 = vmatprep.subr.mxu0 0.0
    %3273 = vmatpush1.msra.mxu0 0.0
    %3274 = vmatprep.subr.mxu0 0.0
    %3275 = vmatpush1.msra.mxu0 0.0
    %3276 = vmatprep.subr.mxu0 0.0
    %3277 = vmatpush1.msra.mxu0 0.0
    %3278 = vmatprep.subr.mxu0 0.0
    %3279 = vmatpush1.msra.mxu0 0.0
    %3280 = vmatprep.subr.mxu0 0.0
    %3281 = vmatpush1.msra.mxu0 0.0
    %3282 = vmatprep.mubr.f32.mxu0 0.0
    %3283 = vmatmul.mubr.f32.gmra.mrb[0].mxu0 %v3216
    %v3284 = vpop.f32.mrb[0].mxu0
    %v3285 = vadd.f32 0.0, %v3284
    %v3286 = vpop.f32.mrb[0].mxu0
    %v3287 = vadd.f32 0.0, %v3286
    %3288 = vdwg.mxu0
    %v3289 = vadd.f32 %v1938, %v3285
    %v3290 = vadd.f32 %v1940, %v3287
    %v3291 = vxor.u32 %v3289, 2147483648
    %v3292 = vxor.u32 %v3290, 2147483648
    %v3293 = vmul.f32 %v3291, 1.442695
    %v3294 = vpow.pop %v3293
    %v3295 = vmul.f32 %v3292, 1.442695
    %v3296 = vpow.pop %v3295
    %v3297 = vadd.f32 %v3294, 1.0
    %v3298 = vadd.f32 %v3296, 1.0
    %v3299 = vrcp.pop %v3297
    %v3300 = vmul.f32 1.0, %v3299
    %v3301 = vrcp.pop %v3298
    %v3302 = vmul.f32 1.0, %v3301
    %v3303 = vtanh.pop %v3290
    %v3304 = vmul.f32 %v3300, %v3115
    %v3305 = vmul.f32 %v3300, %v3303
    %3307 = vrot.lane.b32.xlu0 %v3305, 64
    %v3308 = vpop.permute.xlu0 %3307
    %v3310 = vadd.f32 %v3304, %v3308
    %v3311 = vtanh.pop %v3310
    %v3312 = vmul.f32 %v3302, %v3311
    %3314 = vrot.lane.b32.xlu0 %v3312, 64
    %v3315 = vpop.permute.xlu0 %3314
    %v3317 = vsel %vm2012, %v3315, %v3215
    %3318 = vmatprep.subr.mxu0 %v2117
    %3319 = vmatpush1.msra.mxu0 %v2116
    %3320 = vmatprep.subr.mxu0 %v2119
    %3321 = vmatpush1.msra.mxu0 %v2118
    %3322 = vmatprep.subr.mxu0 %v2121
    %3323 = vmatpush1.msra.mxu0 %v2120
    %3324 = vmatprep.subr.mxu0 %v2123
    %3325 = vmatpush1.msra.mxu0 %v2122
    %3326 = vmatprep.subr.mxu0 %v2125
    %3327 = vmatpush1.msra.mxu0 %v2124
    %3328 = vmatprep.subr.mxu0 %v2127
    %3329 = vmatpush1.msra.mxu0 %v2126
    %3330 = vmatprep.subr.mxu0 %v2129
    %3331 = vmatpush1.msra.mxu0 %v2128
    %3332 = vmatprep.subr.mxu0 %v2131
    %3333 = vmatpush1.msra.mxu0 %v2130
    %3334 = vmatprep.subr.mxu0 %v2133
    %3335 = vmatpush1.msra.mxu0 %v2132
    %3336 = vmatprep.subr.mxu0 %v2135
    %3337 = vmatpush1.msra.mxu0 %v2134
    %3338 = vmatprep.subr.mxu0 %v2137
    %3339 = vmatpush1.msra.mxu0 %v2136
    %3340 = vmatprep.subr.mxu0 %v2139
    %3341 = vmatpush1.msra.mxu0 %v2138
    %3342 = vmatprep.subr.mxu0 %v2141
    %3343 = vmatpush1.msra.mxu0 %v2140
    %3344 = vmatprep.subr.mxu0 %v2143
    %3345 = vmatpush1.msra.mxu0 %v2142
    %3346 = vmatprep.subr.mxu0 %v2145
    %3347 = vmatpush1.msra.mxu0 %v2144
    %3348 = vmatprep.subr.mxu0 %v2147
    %3349 = vmatpush1.msra.mxu0 %v2146
    %3350 = vmatprep.subr.mxu0 0.0
    %3351 = vmatpush1.msra.mxu0 0.0
    %3352 = vmatprep.subr.mxu0 0.0
    %3353 = vmatpush1.msra.mxu0 0.0
    %3354 = vmatprep.subr.mxu0 0.0
    %3355 = vmatpush1.msra.mxu0 0.0
    %3356 = vmatprep.subr.mxu0 0.0
    %3357 = vmatpush1.msra.mxu0 0.0
    %3358 = vmatprep.subr.mxu0 0.0
    %3359 = vmatpush1.msra.mxu0 0.0
    %3360 = vmatprep.subr.mxu0 0.0
    %3361 = vmatpush1.msra.mxu0 0.0
    %3362 = vmatprep.subr.mxu0 0.0
    %3363 = vmatpush1.msra.mxu0 0.0
    %3364 = vmatprep.subr.mxu0 0.0
    %3365 = vmatpush1.msra.mxu0 0.0
    %3366 = vmatprep.subr.mxu0 0.0
    %3367 = vmatpush1.msra.mxu0 0.0
    %3368 = vmatprep.subr.mxu0 0.0
    %3369 = vmatpush1.msra.mxu0 0.0
    %3370 = vmatprep.subr.mxu0 0.0
    %3371 = vmatpush1.msra.mxu0 0.0
    %3372 = vmatprep.subr.mxu0 0.0
    %3373 = vmatpush1.msra.mxu0 0.0
    %3374 = vmatprep.subr.mxu0 0.0
    %3375 = vmatpush1.msra.mxu0 0.0
    %3376 = vmatprep.subr.mxu0 0.0
    %3377 = vmatpush1.msra.mxu0 0.0
    %3378 = vmatprep.subr.mxu0 0.0
    %3379 = vmatpush1.msra.mxu0 0.0
    %3380 = vmatprep.subr.mxu0 0.0
    %3381 = vmatpush1.msra.mxu0 0.0
    %3382 = vmatprep.mubr.f32.mxu0 0.0
    %3383 = vmatmul.mubr.f32.gmra.mrb[0].mxu0 %v3317
    %v3384 = vpop.f32.mrb[0].mxu0
    %v3385 = vadd.f32 %v1989, %v3384
    %v3386 = vpop.f32.mrb[0].mxu0
    %v3387 = vadd.f32 %v1993, %v3386
    %3388 = vdwg.mxu0
    %v3389 = vxor.u32 %v3385, 2147483648
    %v3390 = vxor.u32 %v3387, 2147483648
    %v3391 = vmul.f32 %v3389, 1.442695
    %v3392 = vpow.pop %v3391
    %v3393 = vmul.f32 %v3390, 1.442695
    %v3394 = vpow.pop %v3393
    %v3395 = vadd.f32 %v3392, 1.0
    %v3396 = vadd.f32 %v3394, 1.0
    %v3397 = vrcp.pop %v3395
    %v3398 = vmul.f32 1.0, %v3397
    %v3399 = vrcp.pop %v3396
    %v3400 = vmul.f32 1.0, %v3399
    %v3401 = vtanh.pop %v3387
    %v3402 = vmul.f32 %v3398, %v3213
    %v3403 = vmul.f32 %v3398, %v3401
    %3405 = vrot.lane.b32.xlu0 %v3403, 64
    %v3406 = vpop.permute.xlu0 %3405
    %v3408 = vadd.f32 %v3402, %v3406
    %v3409 = vtanh.pop %v3408
    %v3410 = vmul.f32 %v3400, %v3409
    %v3411 = vsel %vm2012, %v3315, 0
    %3413 = vmatprep.subr.mxu0 %v1997
    %3414 = vmatpush1.msra.mxu0 %v1996
    %3415 = vmatprep.subr.mxu0 %v1999
    %3416 = vmatpush1.msra.mxu0 %v1998
    %3417 = vmatprep.subr.mxu0 %v2001
    %3418 = vmatpush1.msra.mxu0 %v2000
    %3419 = vmatprep.subr.mxu0 %v2003
    %3420 = vmatpush1.msra.mxu0 %v2002
    %3421 = vmatprep.subr.mxu0 %v2005
    %3422 = vmatpush1.msra.mxu0 %v2004
    %3423 = vmatprep.subr.mxu0 %v2007
    %3424 = vmatpush1.msra.mxu0 %v2006
    %3425 = vmatprep.subr.mxu0 %v2009
    %3426 = vmatpush1.msra.mxu0 %v2008
    %3427 = vmatprep.subr.mxu0 %v2011
    %3428 = vmatpush1.msra.mxu0 %v2010
    %3429 = vmatprep.subr.mxu0 0.0
    %3430 = vmatpush1.msra.mxu0 0.0
    %3431 = vmatprep.subr.mxu0 0.0
    %3432 = vmatpush1.msra.mxu0 0.0
    %3433 = vmatprep.subr.mxu0 0.0
    %3434 = vmatpush1.msra.mxu0 0.0
    %3435 = vmatprep.subr.mxu0 0.0
    %3436 = vmatpush1.msra.mxu0 0.0
    %3437 = vmatprep.subr.mxu0 0.0
    %3438 = vmatpush1.msra.mxu0 0.0
    %3439 = vmatprep.subr.mxu0 0.0
    %3440 = vmatpush1.msra.mxu0 0.0
    %3441 = vmatprep.subr.mxu0 0.0
    %3442 = vmatpush1.msra.mxu0 0.0
    %3443 = vmatprep.subr.mxu0 0.0
    %3444 = vmatpush1.msra.mxu0 0.0
    %3445 = vmatprep.subr.mxu0 0.0
    %3446 = vmatpush1.msra.mxu0 0.0
    %3447 = vmatprep.subr.mxu0 0.0
    %3448 = vmatpush1.msra.mxu0 0.0
    %3449 = vmatprep.subr.mxu0 0.0
    %3450 = vmatpush1.msra.mxu0 0.0
    %3451 = vmatprep.subr.mxu0 0.0
    %3452 = vmatpush1.msra.mxu0 0.0
    %3453 = vmatprep.subr.mxu0 0.0
    %3454 = vmatpush1.msra.mxu0 0.0
    %3455 = vmatprep.subr.mxu0 0.0
    %3456 = vmatpush1.msra.mxu0 0.0
    %3457 = vmatprep.subr.mxu0 0.0
    %3458 = vmatpush1.msra.mxu0 0.0
    %3459 = vmatprep.subr.mxu0 0.0
    %3460 = vmatpush1.msra.mxu0 0.0
    %3461 = vmatprep.subr.mxu0 0.0
    %3462 = vmatpush1.msra.mxu0 0.0
    %3463 = vmatprep.subr.mxu0 0.0
    %3464 = vmatpush1.msra.mxu0 0.0
    %3465 = vmatprep.subr.mxu0 0.0
    %3466 = vmatpush1.msra.mxu0 0.0
    %3467 = vmatprep.subr.mxu0 0.0
    %3468 = vmatpush1.msra.mxu0 0.0
    %3469 = vmatprep.subr.mxu0 0.0
    %3470 = vmatpush1.msra.mxu0 0.0
    %3471 = vmatprep.subr.mxu0 0.0
    %3472 = vmatpush1.msra.mxu0 0.0
    %3473 = vmatprep.subr.mxu0 0.0
    %3474 = vmatpush1.msra.mxu0 0.0
    %3475 = vmatprep.subr.mxu0 0.0
    %3476 = vmatpush1.msra.mxu0 0.0
    %3477 = vmatprep.mubr.f32.mxu0 0.0
    %3478 = vmatmul.mubr.f32.gmra.mrb[0].mxu0 %v3411
    %v3479 = vpop.f32.mrb[0].mxu0
    %v3480 = vadd.f32 0.0, %v3479
    %v3481 = vpop.f32.mrb[0].mxu0
    %v3482 = vadd.f32 0.0, %v3481
    %3483 = vdwg.mxu0
    %v3484 = vadd.f32 %v1944, %v3480
    %v3485 = vadd.f32 %v1946, %v3482
    %v3486 = vxor.u32 %v3484, 2147483648
    %v3487 = vxor.u32 %v3485, 2147483648
    %v3488 = vmul.f32 %v3486, 1.442695
    %v3489 = vpow.pop %v3488
    %v3490 = vmul.f32 %v3487, 1.442695
    %v3491 = vpow.pop %v3490
    %v3492 = vadd.f32 %v3489, 1.0
    %v3493 = vadd.f32 %v3491, 1.0
    %v3494 = vrcp.pop %v3492
    %v3495 = vmul.f32 1.0, %v3494
    %v3496 = vrcp.pop %v3493
    %v3497 = vmul.f32 1.0, %v3496
    %v3498 = vtanh.pop %v3485
    %v3499 = vmul.f32 %v3495, %v3310
    %v3500 = vmul.f32 %v3495, %v3498
    %3502 = vrot.lane.b32.xlu0 %v3500, 64
    %v3503 = vpop.permute.xlu0 %3502
    %v3505 = vadd.f32 %v3499, %v3503
    %v3506 = vtanh.pop %v3505
    %v3507 = vmul.f32 %v3497, %v3506
    %3509 = vrot.lane.b32.xlu0 %v3507, 64
    %v3510 = vpop.permute.xlu0 %3509
    %v3512 = vsel %vm2012, %v3510, %v3410
    %3513 = vmatprep.subr.mxu0 %v2117
    %3514 = vmatpush1.msra.mxu0 %v2116
    %3515 = vmatprep.subr.mxu0 %v2119
    %3516 = vmatpush1.msra.mxu0 %v2118
    %3517 = vmatprep.subr.mxu0 %v2121
    %3518 = vmatpush1.msra.mxu0 %v2120
    %3519 = vmatprep.subr.mxu0 %v2123
    %3520 = vmatpush1.msra.mxu0 %v2122
    %3521 = vmatprep.subr.mxu0 %v2125
    %3522 = vmatpush1.msra.mxu0 %v2124
    %3523 = vmatprep.subr.mxu0 %v2127
    %3524 = vmatpush1.msra.mxu0 %v2126
    %3525 = vmatprep.subr.mxu0 %v2129
    %3526 = vmatpush1.msra.mxu0 %v2128
    %3527 = vmatprep.subr.mxu0 %v2131
    %3528 = vmatpush1.msra.mxu0 %v2130
    %3529 = vmatprep.subr.mxu0 %v2133
    %3530 = vmatpush1.msra.mxu0 %v2132
    %3531 = vmatprep.subr.mxu0 %v2135
    %3532 = vmatpush1.msra.mxu0 %v2134
    %3533 = vmatprep.subr.mxu0 %v2137
    %3534 = vmatpush1.msra.mxu0 %v2136
    %3535 = vmatprep.subr.mxu0 %v2139
    %3536 = vmatpush1.msra.mxu0 %v2138
    %3537 = vmatprep.subr.mxu0 %v2141
    %3538 = vmatpush1.msra.mxu0 %v2140
    %3539 = vmatprep.subr.mxu0 %v2143
    %3540 = vmatpush1.msra.mxu0 %v2142
    %3541 = vmatprep.subr.mxu0 %v2145
    %3542 = vmatpush1.msra.mxu0 %v2144
    %3543 = vmatprep.subr.mxu0 %v2147
    %3544 = vmatpush1.msra.mxu0 %v2146
    %3545 = vmatprep.subr.mxu0 0.0
    %3546 = vmatpush1.msra.mxu0 0.0
    %3547 = vmatprep.subr.mxu0 0.0
    %3548 = vmatpush1.msra.mxu0 0.0
    %3549 = vmatprep.subr.mxu0 0.0
    %3550 = vmatpush1.msra.mxu0 0.0
    %3551 = vmatprep.subr.mxu0 0.0
    %3552 = vmatpush1.msra.mxu0 0.0
    %3553 = vmatprep.subr.mxu0 0.0
    %3554 = vmatpush1.msra.mxu0 0.0
    %3555 = vmatprep.subr.mxu0 0.0
    %3556 = vmatpush1.msra.mxu0 0.0
    %3557 = vmatprep.subr.mxu0 0.0
    %3558 = vmatpush1.msra.mxu0 0.0
    %3559 = vmatprep.subr.mxu0 0.0
    %3560 = vmatpush1.msra.mxu0 0.0
    %3561 = vmatprep.subr.mxu0 0.0
    %3562 = vmatpush1.msra.mxu0 0.0
    %3563 = vmatprep.subr.mxu0 0.0
    %3564 = vmatpush1.msra.mxu0 0.0
    %3565 = vmatprep.subr.mxu0 0.0
    %3566 = vmatpush1.msra.mxu0 0.0
    %3567 = vmatprep.subr.mxu0 0.0
    %3568 = vmatpush1.msra.mxu0 0.0
    %3569 = vmatprep.subr.mxu0 0.0
    %3570 = vmatpush1.msra.mxu0 0.0
    %3571 = vmatprep.subr.mxu0 0.0
    %3572 = vmatpush1.msra.mxu0 0.0
    %3573 = vmatprep.subr.mxu0 0.0
    %3574 = vmatpush1.msra.mxu0 0.0
    %3575 = vmatprep.subr.mxu0 0.0
    %3576 = vmatpush1.msra.mxu0 0.0
    %3577 = vmatprep.mubr.f32.mxu0 0.0
    %3578 = vmatmul.mubr.f32.gmra.mrb[0].mxu0 %v3512
    %v3579 = vpop.f32.mrb[0].mxu0
    %v3580 = vadd.f32 %v1989, %v3579
    %v3581 = vpop.f32.mrb[0].mxu0
    %v3582 = vadd.f32 %v1993, %v3581
    %3583 = vdwg.mxu0
    %v3584 = vxor.u32 %v3580, 2147483648
    %v3585 = vxor.u32 %v3582, 2147483648
    %v3586 = vmul.f32 %v3584, 1.442695
    %v3587 = vpow.pop %v3586
    %v3588 = vmul.f32 %v3585, 1.442695
    %v3589 = vpow.pop %v3588
    %v3590 = vadd.f32 %v3587, 1.0
    %v3591 = vadd.f32 %v3589, 1.0
    %v3592 = vrcp.pop %v3590
    %v3593 = vmul.f32 1.0, %v3592
    %v3594 = vrcp.pop %v3591
    %v3595 = vmul.f32 1.0, %v3594
    %v3596 = vtanh.pop %v3582
    %v3597 = vmul.f32 %v3593, %v3408
    %v3598 = vmul.f32 %v3593, %v3596
    %3600 = vrot.lane.b32.xlu0 %v3598, 64
    %v3601 = vpop.permute.xlu0 %3600
    %v3603 = vadd.f32 %v3597, %v3601
    %v3604 = vtanh.pop %v3603
    %v3605 = vmul.f32 %v3595, %v3604
    %v3606 = vsel %vm2012, %v3510, 0
    %3608 = vmatprep.subr.mxu0 %v1997
    %3609 = vmatpush1.msra.mxu0 %v1996
    %3610 = vmatprep.subr.mxu0 %v1999
    %3611 = vmatpush1.msra.mxu0 %v1998
    %3612 = vmatprep.subr.mxu0 %v2001
    %3613 = vmatpush1.msra.mxu0 %v2000
    %3614 = vmatprep.subr.mxu0 %v2003
    %3615 = vmatpush1.msra.mxu0 %v2002
    %3616 = vmatprep.subr.mxu0 %v2005
    %3617 = vmatpush1.msra.mxu0 %v2004
    %3618 = vmatprep.subr.mxu0 %v2007
    %3619 = vmatpush1.msra.mxu0 %v2006
    %3620 = vmatprep.subr.mxu0 %v2009
    %3621 = vmatpush1.msra.mxu0 %v2008
    %3622 = vmatprep.subr.mxu0 %v2011
    %3623 = vmatpush1.msra.mxu0 %v2010
    %3624 = vmatprep.subr.mxu0 0.0
    %3625 = vmatpush1.msra.mxu0 0.0
    %3626 = vmatprep.subr.mxu0 0.0
    %3627 = vmatpush1.msra.mxu0 0.0
    %3628 = vmatprep.subr.mxu0 0.0
    %3629 = vmatpush1.msra.mxu0 0.0
    %3630 = vmatprep.subr.mxu0 0.0
    %3631 = vmatpush1.msra.mxu0 0.0
    %3632 = vmatprep.subr.mxu0 0.0
    %3633 = vmatpush1.msra.mxu0 0.0
    %3634 = vmatprep.subr.mxu0 0.0
    %3635 = vmatpush1.msra.mxu0 0.0
    %3636 = vmatprep.subr.mxu0 0.0
    %3637 = vmatpush1.msra.mxu0 0.0
    %3638 = vmatprep.subr.mxu0 0.0
    %3639 = vmatpush1.msra.mxu0 0.0
    %3640 = vmatprep.subr.mxu0 0.0
    %3641 = vmatpush1.msra.mxu0 0.0
    %3642 = vmatprep.subr.mxu0 0.0
    %3643 = vmatpush1.msra.mxu0 0.0
    %3644 = vmatprep.subr.mxu0 0.0
    %3645 = vmatpush1.msra.mxu0 0.0
    %3646 = vmatprep.subr.mxu0 0.0
    %3647 = vmatpush1.msra.mxu0 0.0
    %3648 = vmatprep.subr.mxu0 0.0
    %3649 = vmatpush1.msra.mxu0 0.0
    %3650 = vmatprep.subr.mxu0 0.0
    %3651 = vmatpush1.msra.mxu0 0.0
    %3652 = vmatprep.subr.mxu0 0.0
    %3653 = vmatpush1.msra.mxu0 0.0
    %3654 = vmatprep.subr.mxu0 0.0
    %3655 = vmatpush1.msra.mxu0 0.0
    %3656 = vmatprep.subr.mxu0 0.0
    %3657 = vmatpush1.msra.mxu0 0.0
    %3658 = vmatprep.subr.mxu0 0.0
    %3659 = vmatpush1.msra.mxu0 0.0
    %3660 = vmatprep.subr.mxu0 0.0
    %3661 = vmatpush1.msra.mxu0 0.0
    %3662 = vmatprep.subr.mxu0 0.0
    %3663 = vmatpush1.msra.mxu0 0.0
    %3664 = vmatprep.subr.mxu0 0.0
    %3665 = vmatpush1.msra.mxu0 0.0
    %3666 = vmatprep.subr.mxu0 0.0
    %3667 = vmatpush1.msra.mxu0 0.0
    %3668 = vmatprep.subr.mxu0 0.0
    %3669 = vmatpush1.msra.mxu0 0.0
    %3670 = vmatprep.subr.mxu0 0.0
    %3671 = vmatpush1.msra.mxu0 0.0
    %3672 = vmatprep.mubr.f32.mxu0 0.0
    %3673 = vmatmul.mubr.f32.gmra.mrb[0].mxu0 %v3606
    %v3674 = vpop.f32.mrb[0].mxu0
    %v3675 = vadd.f32 0.0, %v3674
    %v3676 = vpop.f32.mrb[0].mxu0
    %v3677 = vadd.f32 0.0, %v3676
    %3678 = vdwg.mxu0
    %v3679 = vadd.f32 %v1950, %v3675
    %v3680 = vadd.f32 %v1952, %v3677
    %v3681 = vxor.u32 %v3679, 2147483648
    %v3682 = vxor.u32 %v3680, 2147483648
    %v3683 = vmul.f32 %v3681, 1.442695
    %v3684 = vpow.pop %v3683
    %v3685 = vmul.f32 %v3682, 1.442695
    %v3686 = vpow.pop %v3685
    %v3687 = vadd.f32 %v3684, 1.0
    %v3688 = vadd.f32 %v3686, 1.0
    %v3689 = vrcp.pop %v3687
    %v3690 = vmul.f32 1.0, %v3689
    %v3691 = vrcp.pop %v3688
    %v3692 = vmul.f32 1.0, %v3691
    %v3693 = vtanh.pop %v3680
    %v3694 = vmul.f32 %v3690, %v3505
    %v3695 = vmul.f32 %v3690, %v3693
    %3697 = vrot.lane.b32.xlu0 %v3695, 64
    %v3698 = vpop.permute.xlu0 %3697
    %v3700 = vadd.f32 %v3694, %v3698
    %v3701 = vtanh.pop %v3700
    %v3702 = vmul.f32 %v3692, %v3701
    %3704 = vrot.lane.b32.xlu0 %v3702, 64
    %v3705 = vpop.permute.xlu0 %3704
    %v3707 = vsel %vm2012, %v3705, %v3605
    %3708 = vmatprep.subr.mxu0 %v2117
    %3709 = vmatpush1.msra.mxu0 %v2116
    %3710 = vmatprep.subr.mxu0 %v2119
    %3711 = vmatpush1.msra.mxu0 %v2118
    %3712 = vmatprep.subr.mxu0 %v2121
    %3713 = vmatpush1.msra.mxu0 %v2120
    %3714 = vmatprep.subr.mxu0 %v2123
    %3715 = vmatpush1.msra.mxu0 %v2122
    %3716 = vmatprep.subr.mxu0 %v2125
    %3717 = vmatpush1.msra.mxu0 %v2124
    %3718 = vmatprep.subr.mxu0 %v2127
    %3719 = vmatpush1.msra.mxu0 %v2126
    %3720 = vmatprep.subr.mxu0 %v2129
    %3721 = vmatpush1.msra.mxu0 %v2128
    %3722 = vmatprep.subr.mxu0 %v2131
    %3723 = vmatpush1.msra.mxu0 %v2130
    %3724 = vmatprep.subr.mxu0 %v2133
    %3725 = vmatpush1.msra.mxu0 %v2132
    %3726 = vmatprep.subr.mxu0 %v2135
    %3727 = vmatpush1.msra.mxu0 %v2134
    %3728 = vmatprep.subr.mxu0 %v2137
    %3729 = vmatpush1.msra.mxu0 %v2136
    %3730 = vmatprep.subr.mxu0 %v2139
    %3731 = vmatpush1.msra.mxu0 %v2138
    %3732 = vmatprep.subr.mxu0 %v2141
    %3733 = vmatpush1.msra.mxu0 %v2140
    %3734 = vmatprep.subr.mxu0 %v2143
    %3735 = vmatpush1.msra.mxu0 %v2142
    %3736 = vmatprep.subr.mxu0 %v2145
    %3737 = vmatpush1.msra.mxu0 %v2144
    %3738 = vmatprep.subr.mxu0 %v2147
    %3739 = vmatpush1.msra.mxu0 %v2146
    %3740 = vmatprep.subr.mxu0 0.0
    %3741 = vmatpush1.msra.mxu0 0.0
    %3742 = vmatprep.subr.mxu0 0.0
    %3743 = vmatpush1.msra.mxu0 0.0
    %3744 = vmatprep.subr.mxu0 0.0
    %3745 = vmatpush1.msra.mxu0 0.0
    %3746 = vmatprep.subr.mxu0 0.0
    %3747 = vmatpush1.msra.mxu0 0.0
    %3748 = vmatprep.subr.mxu0 0.0
    %3749 = vmatpush1.msra.mxu0 0.0
    %3750 = vmatprep.subr.mxu0 0.0
    %3751 = vmatpush1.msra.mxu0 0.0
    %3752 = vmatprep.subr.mxu0 0.0
    %3753 = vmatpush1.msra.mxu0 0.0
    %3754 = vmatprep.subr.mxu0 0.0
    %3755 = vmatpush1.msra.mxu0 0.0
    %3756 = vmatprep.subr.mxu0 0.0
    %3757 = vmatpush1.msra.mxu0 0.0
    %3758 = vmatprep.subr.mxu0 0.0
    %3759 = vmatpush1.msra.mxu0 0.0
    %3760 = vmatprep.subr.mxu0 0.0
    %3761 = vmatpush1.msra.mxu0 0.0
    %3762 = vmatprep.subr.mxu0 0.0
    %3763 = vmatpush1.msra.mxu0 0.0
    %3764 = vmatprep.subr.mxu0 0.0
    %3765 = vmatpush1.msra.mxu0 0.0
    %3766 = vmatprep.subr.mxu0 0.0
    %3767 = vmatpush1.msra.mxu0 0.0
    %3768 = vmatprep.subr.mxu0 0.0
    %3769 = vmatpush1.msra.mxu0 0.0
    %3770 = vmatprep.subr.mxu0 0.0
    %3771 = vmatpush1.msra.mxu0 0.0
    %3772 = vmatprep.mubr.f32.mxu0 0.0
    %3773 = vmatmul.mubr.f32.gmra.mrb[0].mxu0 %v3707
    %v3774 = vpop.f32.mrb[0].mxu0
    %v3775 = vadd.f32 %v1989, %v3774
    %v3776 = vpop.f32.mrb[0].mxu0
    %v3777 = vadd.f32 %v1993, %v3776
    %3778 = vdwg.mxu0
    %v3779 = vxor.u32 %v3775, 2147483648
    %v3780 = vxor.u32 %v3777, 2147483648
    %v3781 = vmul.f32 %v3779, 1.442695
    %v3782 = vpow.pop %v3781
    %v3783 = vmul.f32 %v3780, 1.442695
    %v3784 = vpow.pop %v3783
    %v3785 = vadd.f32 %v3782, 1.0
    %v3786 = vadd.f32 %v3784, 1.0
    %v3787 = vrcp.pop %v3785
    %v3788 = vmul.f32 1.0, %v3787
    %v3789 = vrcp.pop %v3786
    %v3790 = vmul.f32 1.0, %v3789
    %v3791 = vtanh.pop %v3777
    %v3792 = vmul.f32 %v3788, %v3603
    %v3793 = vmul.f32 %v3788, %v3791
    %3795 = vrot.lane.b32.xlu0 %v3793, 64
    %v3796 = vpop.permute.xlu0 %3795
    %v3798 = vadd.f32 %v3792, %v3796
    %v3799 = vtanh.pop %v3798
    %v3800 = vmul.f32 %v3790, %v3799
    %v3801 = vsel %vm2012, %v3705, 0
    %3803 = vmatprep.subr.mxu0 %v1997
    %3804 = vmatpush1.msra.mxu0 %v1996
    %3805 = vmatprep.subr.mxu0 %v1999
    %3806 = vmatpush1.msra.mxu0 %v1998
    %3807 = vmatprep.subr.mxu0 %v2001
    %3808 = vmatpush1.msra.mxu0 %v2000
    %3809 = vmatprep.subr.mxu0 %v2003
    %3810 = vmatpush1.msra.mxu0 %v2002
    %3811 = vmatprep.subr.mxu0 %v2005
    %3812 = vmatpush1.msra.mxu0 %v2004
    %3813 = vmatprep.subr.mxu0 %v2007
    %3814 = vmatpush1.msra.mxu0 %v2006
    %3815 = vmatprep.subr.mxu0 %v2009
    %3816 = vmatpush1.msra.mxu0 %v2008
    %3817 = vmatprep.subr.mxu0 %v2011
    %3818 = vmatpush1.msra.mxu0 %v2010
    %3819 = vmatprep.subr.mxu0 0.0
    %3820 = vmatpush1.msra.mxu0 0.0
    %3821 = vmatprep.subr.mxu0 0.0
    %3822 = vmatpush1.msra.mxu0 0.0
    %3823 = vmatprep.subr.mxu0 0.0
    %3824 = vmatpush1.msra.mxu0 0.0
    %3825 = vmatprep.subr.mxu0 0.0
    %3826 = vmatpush1.msra.mxu0 0.0
    %3827 = vmatprep.subr.mxu0 0.0
    %3828 = vmatpush1.msra.mxu0 0.0
    %3829 = vmatprep.subr.mxu0 0.0
    %3830 = vmatpush1.msra.mxu0 0.0
    %3831 = vmatprep.subr.mxu0 0.0
    %3832 = vmatpush1.msra.mxu0 0.0
    %3833 = vmatprep.subr.mxu0 0.0
    %3834 = vmatpush1.msra.mxu0 0.0
    %3835 = vmatprep.subr.mxu0 0.0
    %3836 = vmatpush1.msra.mxu0 0.0
    %3837 = vmatprep.subr.mxu0 0.0
    %3838 = vmatpush1.msra.mxu0 0.0
    %3839 = vmatprep.subr.mxu0 0.0
    %3840 = vmatpush1.msra.mxu0 0.0
    %3841 = vmatprep.subr.mxu0 0.0
    %3842 = vmatpush1.msra.mxu0 0.0
    %3843 = vmatprep.subr.mxu0 0.0
    %3844 = vmatpush1.msra.mxu0 0.0
    %3845 = vmatprep.subr.mxu0 0.0
    %3846 = vmatpush1.msra.mxu0 0.0
    %3847 = vmatprep.subr.mxu0 0.0
    %3848 = vmatpush1.msra.mxu0 0.0
    %3849 = vmatprep.subr.mxu0 0.0
    %3850 = vmatpush1.msra.mxu0 0.0
    %3851 = vmatprep.subr.mxu0 0.0
    %3852 = vmatpush1.msra.mxu0 0.0
    %3853 = vmatprep.subr.mxu0 0.0
    %3854 = vmatpush1.msra.mxu0 0.0
    %3855 = vmatprep.subr.mxu0 0.0
    %3856 = vmatpush1.msra.mxu0 0.0
    %3857 = vmatprep.subr.mxu0 0.0
    %3858 = vmatpush1.msra.mxu0 0.0
    %3859 = vmatprep.subr.mxu0 0.0
    %3860 = vmatpush1.msra.mxu0 0.0
    %3861 = vmatprep.subr.mxu0 0.0
    %3862 = vmatpush1.msra.mxu0 0.0
    %3863 = vmatprep.subr.mxu0 0.0
    %3864 = vmatpush1.msra.mxu0 0.0
    %3865 = vmatprep.subr.mxu0 0.0
    %3866 = vmatpush1.msra.mxu0 0.0
    %3867 = vmatprep.mubr.f32.mxu0 0.0
    %3868 = vmatmul.mubr.f32.gmra.mrb[0].mxu0 %v3801
    %v3869 = vpop.f32.mrb[0].mxu0
    %v3870 = vadd.f32 0.0, %v3869
    %v3871 = vpop.f32.mrb[0].mxu0
    %v3872 = vadd.f32 0.0, %v3871
    %3873 = vdwg.mxu0
    %v3874 = vadd.f32 %v1956, %v3870
    %v3875 = vadd.f32 %v1958, %v3872
    %v3876 = vxor.u32 %v3874, 2147483648
    %v3877 = vxor.u32 %v3875, 2147483648
    %v3878 = vmul.f32 %v3876, 1.442695
    %v3879 = vpow.pop %v3878
    %v3880 = vmul.f32 %v3877, 1.442695
    %v3881 = vpow.pop %v3880
    %v3882 = vadd.f32 %v3879, 1.0
    %v3883 = vadd.f32 %v3881, 1.0
    %v3884 = vrcp.pop %v3882
    %v3885 = vmul.f32 1.0, %v3884
    %v3886 = vrcp.pop %v3883
    %v3887 = vmul.f32 1.0, %v3886
    %v3888 = vtanh.pop %v3875
    %v3889 = vmul.f32 %v3885, %v3700
    %v3890 = vmul.f32 %v3885, %v3888
    %3892 = vrot.lane.b32.xlu0 %v3890, 64
    %v3893 = vpop.permute.xlu0 %3892
    %v3895 = vadd.f32 %v3889, %v3893
    %v3896 = vtanh.pop %v3895
    %v3897 = vmul.f32 %v3887, %v3896
    %3899 = vrot.lane.b32.xlu0 %v3897, 64
    %v3900 = vpop.permute.xlu0 %3899
    %v3902 = vsel %vm2012, %v3900, %v3800
    %3903 = vmatprep.subr.mxu0 %v2117
    %3904 = vmatpush1.msra.mxu0 %v2116
    %3905 = vmatprep.subr.mxu0 %v2119
    %3906 = vmatpush1.msra.mxu0 %v2118
    %3907 = vmatprep.subr.mxu0 %v2121
    %3908 = vmatpush1.msra.mxu0 %v2120
    %3909 = vmatprep.subr.mxu0 %v2123
    %3910 = vmatpush1.msra.mxu0 %v2122
    %3911 = vmatprep.subr.mxu0 %v2125
    %3912 = vmatpush1.msra.mxu0 %v2124
    %3913 = vmatprep.subr.mxu0 %v2127
    %3914 = vmatpush1.msra.mxu0 %v2126
    %3915 = vmatprep.subr.mxu0 %v2129
    %3916 = vmatpush1.msra.mxu0 %v2128
    %3917 = vmatprep.subr.mxu0 %v2131
    %3918 = vmatpush1.msra.mxu0 %v2130
    %3919 = vmatprep.subr.mxu0 %v2133
    %3920 = vmatpush1.msra.mxu0 %v2132
    %3921 = vmatprep.subr.mxu0 %v2135
    %3922 = vmatpush1.msra.mxu0 %v2134
    %3923 = vmatprep.subr.mxu0 %v2137
    %3924 = vmatpush1.msra.mxu0 %v2136
    %3925 = vmatprep.subr.mxu0 %v2139
    %3926 = vmatpush1.msra.mxu0 %v2138
    %3927 = vmatprep.subr.mxu0 %v2141
    %3928 = vmatpush1.msra.mxu0 %v2140
    %3929 = vmatprep.subr.mxu0 %v2143
    %3930 = vmatpush1.msra.mxu0 %v2142
    %3931 = vmatprep.subr.mxu0 %v2145
    %3932 = vmatpush1.msra.mxu0 %v2144
    %3933 = vmatprep.subr.mxu0 %v2147
    %3934 = vmatpush1.msra.mxu0 %v2146
    %3935 = vmatprep.subr.mxu0 0.0
    %3936 = vmatpush1.msra.mxu0 0.0
    %3937 = vmatprep.subr.mxu0 0.0
    %3938 = vmatpush1.msra.mxu0 0.0
    %3939 = vmatprep.subr.mxu0 0.0
    %3940 = vmatpush1.msra.mxu0 0.0
    %3941 = vmatprep.subr.mxu0 0.0
    %3942 = vmatpush1.msra.mxu0 0.0
    %3943 = vmatprep.subr.mxu0 0.0
    %3944 = vmatpush1.msra.mxu0 0.0
    %3945 = vmatprep.subr.mxu0 0.0
    %3946 = vmatpush1.msra.mxu0 0.0
    %3947 = vmatprep.subr.mxu0 0.0
    %3948 = vmatpush1.msra.mxu0 0.0
    %3949 = vmatprep.subr.mxu0 0.0
    %3950 = vmatpush1.msra.mxu0 0.0
    %3951 = vmatprep.subr.mxu0 0.0
    %3952 = vmatpush1.msra.mxu0 0.0
    %3953 = vmatprep.subr.mxu0 0.0
    %3954 = vmatpush1.msra.mxu0 0.0
    %3955 = vmatprep.subr.mxu0 0.0
    %3956 = vmatpush1.msra.mxu0 0.0
    %3957 = vmatprep.subr.mxu0 0.0
    %3958 = vmatpush1.msra.mxu0 0.0
    %3959 = vmatprep.subr.mxu0 0.0
    %3960 = vmatpush1.msra.mxu0 0.0
    %3961 = vmatprep.subr.mxu0 0.0
    %3962 = vmatpush1.msra.mxu0 0.0
    %3963 = vmatprep.subr.mxu0 0.0
    %3964 = vmatpush1.msra.mxu0 0.0
    %3965 = vmatprep.subr.mxu0 0.0
    %3966 = vmatpush1.msra.mxu0 0.0
    %3967 = vmatprep.mubr.f32.mxu0 0.0
    %3968 = vmatmul.mubr.f32.gmra.mrb[0].mxu0 %v3902
    %v3969 = vpop.f32.mrb[0].mxu0
    %v3970 = vadd.f32 %v1989, %v3969
    %v3971 = vpop.f32.mrb[0].mxu0
    %v3972 = vadd.f32 %v1993, %v3971
    %3973 = vdwg.mxu0
    %v3974 = vxor.u32 %v3970, 2147483648
    %v3975 = vxor.u32 %v3972, 2147483648
    %v3976 = vmul.f32 %v3974, 1.442695
    %v3977 = vpow.pop %v3976
    %v3978 = vmul.f32 %v3975, 1.442695
    %v3979 = vpow.pop %v3978
    %v3980 = vadd.f32 %v3977, 1.0
    %v3981 = vadd.f32 %v3979, 1.0
    %v3982 = vrcp.pop %v3980
    %v3983 = vmul.f32 1.0, %v3982
    %v3984 = vrcp.pop %v3981
    %v3985 = vmul.f32 1.0, %v3984
    %v3986 = vtanh.pop %v3972
    %v3987 = vmul.f32 %v3983, %v3798
    %v3988 = vmul.f32 %v3983, %v3986
    %3990 = vrot.lane.b32.xlu0 %v3988, 64
    %v3991 = vpop.permute.xlu0 %3990
    %v3993 = vadd.f32 %v3987, %v3991
    %v3994 = vtanh.pop %v3993
    %v3995 = vmul.f32 %v3985, %v3994
    %v3996 = vsel %vm2012, %v3900, 0
    %3998 = vmatprep.subr.mxu0 %v1997
    %3999 = vmatpush1.msra.mxu0 %v1996
    %4000 = vmatprep.subr.mxu0 %v1999
    %4001 = vmatpush1.msra.mxu0 %v1998
    %4002 = vmatprep.subr.mxu0 %v2001
    %4003 = vmatpush1.msra.mxu0 %v2000
    %4004 = vmatprep.subr.mxu0 %v2003
    %4005 = vmatpush1.msra.mxu0 %v2002
    %4006 = vmatprep.subr.mxu0 %v2005
    %4007 = vmatpush1.msra.mxu0 %v2004
    %4008 = vmatprep.subr.mxu0 %v2007
    %4009 = vmatpush1.msra.mxu0 %v2006
    %4010 = vmatprep.subr.mxu0 %v2009
    %4011 = vmatpush1.msra.mxu0 %v2008
    %4012 = vmatprep.subr.mxu0 %v2011
    %4013 = vmatpush1.msra.mxu0 %v2010
    %4014 = vmatprep.subr.mxu0 0.0
    %4015 = vmatpush1.msra.mxu0 0.0
    %4016 = vmatprep.subr.mxu0 0.0
    %4017 = vmatpush1.msra.mxu0 0.0
    %4018 = vmatprep.subr.mxu0 0.0
    %4019 = vmatpush1.msra.mxu0 0.0
    %4020 = vmatprep.subr.mxu0 0.0
    %4021 = vmatpush1.msra.mxu0 0.0
    %4022 = vmatprep.subr.mxu0 0.0
    %4023 = vmatpush1.msra.mxu0 0.0
    %4024 = vmatprep.subr.mxu0 0.0
    %4025 = vmatpush1.msra.mxu0 0.0
    %4026 = vmatprep.subr.mxu0 0.0
    %4027 = vmatpush1.msra.mxu0 0.0
    %4028 = vmatprep.subr.mxu0 0.0
    %4029 = vmatpush1.msra.mxu0 0.0
    %4030 = vmatprep.subr.mxu0 0.0
    %4031 = vmatpush1.msra.mxu0 0.0
    %4032 = vmatprep.subr.mxu0 0.0
    %4033 = vmatpush1.msra.mxu0 0.0
    %4034 = vmatprep.subr.mxu0 0.0
    %4035 = vmatpush1.msra.mxu0 0.0
    %4036 = vmatprep.subr.mxu0 0.0
    %4037 = vmatpush1.msra.mxu0 0.0
    %4038 = vmatprep.subr.mxu0 0.0
    %4039 = vmatpush1.msra.mxu0 0.0
    %4040 = vmatprep.subr.mxu0 0.0
    %4041 = vmatpush1.msra.mxu0 0.0
    %4042 = vmatprep.subr.mxu0 0.0
    %4043 = vmatpush1.msra.mxu0 0.0
    %4044 = vmatprep.subr.mxu0 0.0
    %4045 = vmatpush1.msra.mxu0 0.0
    %4046 = vmatprep.subr.mxu0 0.0
    %4047 = vmatpush1.msra.mxu0 0.0
    %4048 = vmatprep.subr.mxu0 0.0
    %4049 = vmatpush1.msra.mxu0 0.0
    %4050 = vmatprep.subr.mxu0 0.0
    %4051 = vmatpush1.msra.mxu0 0.0
    %4052 = vmatprep.subr.mxu0 0.0
    %4053 = vmatpush1.msra.mxu0 0.0
    %4054 = vmatprep.subr.mxu0 0.0
    %4055 = vmatpush1.msra.mxu0 0.0
    %4056 = vmatprep.subr.mxu0 0.0
    %4057 = vmatpush1.msra.mxu0 0.0
    %4058 = vmatprep.subr.mxu0 0.0
    %4059 = vmatpush1.msra.mxu0 0.0
    %4060 = vmatprep.subr.mxu0 0.0
    %4061 = vmatpush1.msra.mxu0 0.0
    %4062 = vmatprep.mubr.f32.mxu0 0.0
    %4063 = vmatmul.mubr.f32.gmra.mrb[0].mxu0 %v3996
    %v4064 = vpop.f32.mrb[0].mxu0
    %v4065 = vadd.f32 0.0, %v4064
    %v4066 = vpop.f32.mrb[0].mxu0
    %v4067 = vadd.f32 0.0, %v4066
    %4068 = vdwg.mxu0
    %v4069 = vadd.f32 %v1962, %v4065
    %v4070 = vadd.f32 %v1964, %v4067
    %v4071 = vxor.u32 %v4069, 2147483648
    %v4072 = vxor.u32 %v4070, 2147483648
    %v4073 = vmul.f32 %v4071, 1.442695
    %v4074 = vpow.pop %v4073
    %v4075 = vmul.f32 %v4072, 1.442695
    %v4076 = vpow.pop %v4075
    %v4077 = vadd.f32 %v4074, 1.0
    %v4078 = vadd.f32 %v4076, 1.0
    %v4079 = vrcp.pop %v4077
    %v4080 = vmul.f32 1.0, %v4079
    %v4081 = vrcp.pop %v4078
    %v4082 = vmul.f32 1.0, %v4081
    %v4083 = vtanh.pop %v4070
    %v4084 = vmul.f32 %v4080, %v3895
    %v4085 = vmul.f32 %v4080, %v4083
    %4087 = vrot.lane.b32.xlu0 %v4085, 64
    %v4088 = vpop.permute.xlu0 %4087
    %v4090 = vadd.f32 %v4084, %v4088
    %v4091 = vtanh.pop %v4090
    %v4092 = vmul.f32 %v4082, %v4091
    %4094 = vrot.lane.b32.xlu0 %v4092, 64
    %v4095 = vpop.permute.xlu0 %4094
    %v4097 = vsel %vm2012, %v4095, %v3995
    %4098 = vmatprep.subr.mxu0 %v2117
    %4099 = vmatpush1.msra.mxu0 %v2116
    %4100 = vmatprep.subr.mxu0 %v2119
    %4101 = vmatpush1.msra.mxu0 %v2118
    %4102 = vmatprep.subr.mxu0 %v2121
    %4103 = vmatpush1.msra.mxu0 %v2120
    %4104 = vmatprep.subr.mxu0 %v2123
    %4105 = vmatpush1.msra.mxu0 %v2122
    %4106 = vmatprep.subr.mxu0 %v2125
    %4107 = vmatpush1.msra.mxu0 %v2124
    %4108 = vmatprep.subr.mxu0 %v2127
    %4109 = vmatpush1.msra.mxu0 %v2126
    %4110 = vmatprep.subr.mxu0 %v2129
    %4111 = vmatpush1.msra.mxu0 %v2128
    %4112 = vmatprep.subr.mxu0 %v2131
    %4113 = vmatpush1.msra.mxu0 %v2130
    %4114 = vmatprep.subr.mxu0 %v2133
    %4115 = vmatpush1.msra.mxu0 %v2132
    %4116 = vmatprep.subr.mxu0 %v2135
    %4117 = vmatpush1.msra.mxu0 %v2134
    %4118 = vmatprep.subr.mxu0 %v2137
    %4119 = vmatpush1.msra.mxu0 %v2136
    %4120 = vmatprep.subr.mxu0 %v2139
    %4121 = vmatpush1.msra.mxu0 %v2138
    %4122 = vmatprep.subr.mxu0 %v2141
    %4123 = vmatpush1.msra.mxu0 %v2140
    %4124 = vmatprep.subr.mxu0 %v2143
    %4125 = vmatpush1.msra.mxu0 %v2142
    %4126 = vmatprep.subr.mxu0 %v2145
    %4127 = vmatpush1.msra.mxu0 %v2144
    %4128 = vmatprep.subr.mxu0 %v2147
    %4129 = vmatpush1.msra.mxu0 %v2146
    %4130 = vmatprep.subr.mxu0 0.0
    %4131 = vmatpush1.msra.mxu0 0.0
    %4132 = vmatprep.subr.mxu0 0.0
    %4133 = vmatpush1.msra.mxu0 0.0
    %4134 = vmatprep.subr.mxu0 0.0
    %4135 = vmatpush1.msra.mxu0 0.0
    %4136 = vmatprep.subr.mxu0 0.0
    %4137 = vmatpush1.msra.mxu0 0.0
    %4138 = vmatprep.subr.mxu0 0.0
    %4139 = vmatpush1.msra.mxu0 0.0
    %4140 = vmatprep.subr.mxu0 0.0
    %4141 = vmatpush1.msra.mxu0 0.0
    %4142 = vmatprep.subr.mxu0 0.0
    %4143 = vmatpush1.msra.mxu0 0.0
    %4144 = vmatprep.subr.mxu0 0.0
    %4145 = vmatpush1.msra.mxu0 0.0
    %4146 = vmatprep.subr.mxu0 0.0
    %4147 = vmatpush1.msra.mxu0 0.0
    %4148 = vmatprep.subr.mxu0 0.0
    %4149 = vmatpush1.msra.mxu0 0.0
    %4150 = vmatprep.subr.mxu0 0.0
    %4151 = vmatpush1.msra.mxu0 0.0
    %4152 = vmatprep.subr.mxu0 0.0
    %4153 = vmatpush1.msra.mxu0 0.0
    %4154 = vmatprep.subr.mxu0 0.0
    %4155 = vmatpush1.msra.mxu0 0.0
    %4156 = vmatprep.subr.mxu0 0.0
    %4157 = vmatpush1.msra.mxu0 0.0
    %4158 = vmatprep.subr.mxu0 0.0
    %4159 = vmatpush1.msra.mxu0 0.0
    %4160 = vmatprep.subr.mxu0 0.0
    %4161 = vmatpush1.msra.mxu0 0.0
    %4162 = vmatprep.mubr.f32.mxu0 0.0
    %4163 = vmatmul.mubr.f32.gmra.mrb[0].mxu0 %v4097
    %v4164 = vpop.f32.mrb[0].mxu0
    %v4165 = vadd.f32 %v1989, %v4164
    %v4166 = vpop.f32.mrb[0].mxu0
    %v4167 = vadd.f32 %v1993, %v4166
    %4168 = vdwg.mxu0
    %v4169 = vxor.u32 %v4165, 2147483648
    %v4170 = vxor.u32 %v4167, 2147483648
    %v4171 = vmul.f32 %v4169, 1.442695
    %v4172 = vpow.pop %v4171
    %v4173 = vmul.f32 %v4170, 1.442695
    %v4174 = vpow.pop %v4173
    %v4175 = vadd.f32 %v4172, 1.0
    %v4176 = vadd.f32 %v4174, 1.0
    %v4177 = vrcp.pop %v4175
    %v4178 = vmul.f32 1.0, %v4177
    %v4179 = vrcp.pop %v4176
    %v4180 = vmul.f32 1.0, %v4179
    %v4181 = vtanh.pop %v4167
    %v4182 = vmul.f32 %v4178, %v3993
    %v4183 = vmul.f32 %v4178, %v4181
    %4185 = vrot.lane.b32.xlu0 %v4183, 64
    %v4186 = vpop.permute.xlu0 %4185
    %v4188 = vadd.f32 %v4182, %v4186
    %v4189 = vtanh.pop %v4188
    %v4190 = vmul.f32 %v4180, %v4189
    %v4191 = vsel %vm2012, %v4095, 0
    %4193 = vmatprep.subr.mxu0 %v1997
    %4194 = vmatpush1.msra.mxu0 %v1996
    %4195 = vmatprep.subr.mxu0 %v1999
    %4196 = vmatpush1.msra.mxu0 %v1998
    %4197 = vmatprep.subr.mxu0 %v2001
    %4198 = vmatpush1.msra.mxu0 %v2000
    %4199 = vmatprep.subr.mxu0 %v2003
    %4200 = vmatpush1.msra.mxu0 %v2002
    %4201 = vmatprep.subr.mxu0 %v2005
    %4202 = vmatpush1.msra.mxu0 %v2004
    %4203 = vmatprep.subr.mxu0 %v2007
    %4204 = vmatpush1.msra.mxu0 %v2006
    %4205 = vmatprep.subr.mxu0 %v2009
    %4206 = vmatpush1.msra.mxu0 %v2008
    %4207 = vmatprep.subr.mxu0 %v2011
    %4208 = vmatpush1.msra.mxu0 %v2010
    %4209 = vmatprep.subr.mxu0 0.0
    %4210 = vmatpush1.msra.mxu0 0.0
    %4211 = vmatprep.subr.mxu0 0.0
    %4212 = vmatpush1.msra.mxu0 0.0
    %4213 = vmatprep.subr.mxu0 0.0
    %4214 = vmatpush1.msra.mxu0 0.0
    %4215 = vmatprep.subr.mxu0 0.0
    %4216 = vmatpush1.msra.mxu0 0.0
    %4217 = vmatprep.subr.mxu0 0.0
    %4218 = vmatpush1.msra.mxu0 0.0
    %4219 = vmatprep.subr.mxu0 0.0
    %4220 = vmatpush1.msra.mxu0 0.0
    %4221 = vmatprep.subr.mxu0 0.0
    %4222 = vmatpush1.msra.mxu0 0.0
    %4223 = vmatprep.subr.mxu0 0.0
    %4224 = vmatpush1.msra.mxu0 0.0
    %4225 = vmatprep.subr.mxu0 0.0
    %4226 = vmatpush1.msra.mxu0 0.0
    %4227 = vmatprep.subr.mxu0 0.0
    %4228 = vmatpush1.msra.mxu0 0.0
    %4229 = vmatprep.subr.mxu0 0.0
    %4230 = vmatpush1.msra.mxu0 0.0
    %4231 = vmatprep.subr.mxu0 0.0
    %4232 = vmatpush1.msra.mxu0 0.0
    %4233 = vmatprep.subr.mxu0 0.0
    %4234 = vmatpush1.msra.mxu0 0.0
    %4235 = vmatprep.subr.mxu0 0.0
    %4236 = vmatpush1.msra.mxu0 0.0
    %4237 = vmatprep.subr.mxu0 0.0
    %4238 = vmatpush1.msra.mxu0 0.0
    %4239 = vmatprep.subr.mxu0 0.0
    %4240 = vmatpush1.msra.mxu0 0.0
    %4241 = vmatprep.subr.mxu0 0.0
    %4242 = vmatpush1.msra.mxu0 0.0
    %4243 = vmatprep.subr.mxu0 0.0
    %4244 = vmatpush1.msra.mxu0 0.0
    %4245 = vmatprep.subr.mxu0 0.0
    %4246 = vmatpush1.msra.mxu0 0.0
    %4247 = vmatprep.subr.mxu0 0.0
    %4248 = vmatpush1.msra.mxu0 0.0
    %4249 = vmatprep.subr.mxu0 0.0
    %4250 = vmatpush1.msra.mxu0 0.0
    %4251 = vmatprep.subr.mxu0 0.0
    %4252 = vmatpush1.msra.mxu0 0.0
    %4253 = vmatprep.subr.mxu0 0.0
    %4254 = vmatpush1.msra.mxu0 0.0
    %4255 = vmatprep.subr.mxu0 0.0
    %4256 = vmatpush1.msra.mxu0 0.0
    %4257 = vmatprep.mubr.f32.mxu0 0.0
    %4258 = vmatmul.mubr.f32.gmra.mrb[0].mxu0 %v4191
    %v4259 = vpop.f32.mrb[0].mxu0
    %v4260 = vadd.f32 0.0, %v4259
    %v4261 = vpop.f32.mrb[0].mxu0
    %v4262 = vadd.f32 0.0, %v4261
    %4263 = vdwg.mxu0
    %v4264 = vadd.f32 %v1968, %v4260
    %v4265 = vadd.f32 %v1970, %v4262
    %v4266 = vxor.u32 %v4264, 2147483648
    %v4267 = vxor.u32 %v4265, 2147483648
    %v4268 = vmul.f32 %v4266, 1.442695
    %v4269 = vpow.pop %v4268
    %v4270 = vmul.f32 %v4267, 1.442695
    %v4271 = vpow.pop %v4270
    %v4272 = vadd.f32 %v4269, 1.0
    %v4273 = vadd.f32 %v4271, 1.0
    %v4274 = vrcp.pop %v4272
    %v4275 = vmul.f32 1.0, %v4274
    %v4276 = vrcp.pop %v4273
    %v4277 = vmul.f32 1.0, %v4276
    %v4278 = vtanh.pop %v4265
    %v4279 = vmul.f32 %v4275, %v4090
    %v4280 = vmul.f32 %v4275, %v4278
    %4282 = vrot.lane.b32.xlu0 %v4280, 64
    %v4283 = vpop.permute.xlu0 %4282
    %v4285 = vadd.f32 %v4279, %v4283
    %v4286 = vtanh.pop %v4285
    %v4287 = vmul.f32 %v4277, %v4286
    %4289 = vrot.lane.b32.xlu0 %v4287, 64
    %v4290 = vpop.permute.xlu0 %4289
    %v4292 = vsel %vm2012, %v4290, %v4190
    %4293 = vmatprep.subr.mxu0 %v2117
    %4294 = vmatpush1.msra.mxu0 %v2116
    %4295 = vmatprep.subr.mxu0 %v2119
    %4296 = vmatpush1.msra.mxu0 %v2118
    %4297 = vmatprep.subr.mxu0 %v2121
    %4298 = vmatpush1.msra.mxu0 %v2120
    %4299 = vmatprep.subr.mxu0 %v2123
    %4300 = vmatpush1.msra.mxu0 %v2122
    %4301 = vmatprep.subr.mxu0 %v2125
    %4302 = vmatpush1.msra.mxu0 %v2124
    %4303 = vmatprep.subr.mxu0 %v2127
    %4304 = vmatpush1.msra.mxu0 %v2126
    %4305 = vmatprep.subr.mxu0 %v2129
    %4306 = vmatpush1.msra.mxu0 %v2128
    %4307 = vmatprep.subr.mxu0 %v2131
    %4308 = vmatpush1.msra.mxu0 %v2130
    %4309 = vmatprep.subr.mxu0 %v2133
    %4310 = vmatpush1.msra.mxu0 %v2132
    %4311 = vmatprep.subr.mxu0 %v2135
    %4312 = vmatpush1.msra.mxu0 %v2134
    %4313 = vmatprep.subr.mxu0 %v2137
    %4314 = vmatpush1.msra.mxu0 %v2136
    %4315 = vmatprep.subr.mxu0 %v2139
    %4316 = vmatpush1.msra.mxu0 %v2138
    %4317 = vmatprep.subr.mxu0 %v2141
    %4318 = vmatpush1.msra.mxu0 %v2140
    %4319 = vmatprep.subr.mxu0 %v2143
    %4320 = vmatpush1.msra.mxu0 %v2142
    %4321 = vmatprep.subr.mxu0 %v2145
    %4322 = vmatpush1.msra.mxu0 %v2144
    %4323 = vmatprep.subr.mxu0 %v2147
    %4324 = vmatpush1.msra.mxu0 %v2146
    %4325 = vmatprep.subr.mxu0 0.0
    %4326 = vmatpush1.msra.mxu0 0.0
    %4327 = vmatprep.subr.mxu0 0.0
    %4328 = vmatpush1.msra.mxu0 0.0
    %4329 = vmatprep.subr.mxu0 0.0
    %4330 = vmatpush1.msra.mxu0 0.0
    %4331 = vmatprep.subr.mxu0 0.0
    %4332 = vmatpush1.msra.mxu0 0.0
    %4333 = vmatprep.subr.mxu0 0.0
    %4334 = vmatpush1.msra.mxu0 0.0
    %4335 = vmatprep.subr.mxu0 0.0
    %4336 = vmatpush1.msra.mxu0 0.0
    %4337 = vmatprep.subr.mxu0 0.0
    %4338 = vmatpush1.msra.mxu0 0.0
    %4339 = vmatprep.subr.mxu0 0.0
    %4340 = vmatpush1.msra.mxu0 0.0
    %4341 = vmatprep.subr.mxu0 0.0
    %4342 = vmatpush1.msra.mxu0 0.0
    %4343 = vmatprep.subr.mxu0 0.0
    %4344 = vmatpush1.msra.mxu0 0.0
    %4345 = vmatprep.subr.mxu0 0.0
    %4346 = vmatpush1.msra.mxu0 0.0
    %4347 = vmatprep.subr.mxu0 0.0
    %4348 = vmatpush1.msra.mxu0 0.0
    %4349 = vmatprep.subr.mxu0 0.0
    %4350 = vmatpush1.msra.mxu0 0.0
    %4351 = vmatprep.subr.mxu0 0.0
    %4352 = vmatpush1.msra.mxu0 0.0
    %4353 = vmatprep.subr.mxu0 0.0
    %4354 = vmatpush1.msra.mxu0 0.0
    %4355 = vmatprep.subr.mxu0 0.0
    %4356 = vmatpush1.msra.mxu0 0.0
    %4357 = vmatprep.mubr.f32.mxu0 0.0
    %4358 = vmatmul.mubr.f32.gmra.mrb[0].mxu0 %v4292
    %v4359 = vpop.f32.mrb[0].mxu0
    %v4360 = vadd.f32 %v1989, %v4359
    %v4361 = vpop.f32.mrb[0].mxu0
    %v4362 = vadd.f32 %v1993, %v4361
    %4363 = vdwg.mxu0
    %v4364 = vxor.u32 %v4360, 2147483648
    %v4365 = vxor.u32 %v4362, 2147483648
    %v4366 = vmul.f32 %v4364, 1.442695
    %v4367 = vpow.pop %v4366
    %v4368 = vmul.f32 %v4365, 1.442695
    %v4369 = vpow.pop %v4368
    %v4370 = vadd.f32 %v4367, 1.0
    %v4371 = vadd.f32 %v4369, 1.0
    %v4372 = vrcp.pop %v4370
    %v4373 = vmul.f32 1.0, %v4372
    %v4374 = vrcp.pop %v4371
    %v4375 = vmul.f32 1.0, %v4374
    %v4376 = vtanh.pop %v4362
    %v4377 = vmul.f32 %v4373, %v4188
    %v4378 = vmul.f32 %v4373, %v4376
    %4380 = vrot.lane.b32.xlu0 %v4378, 64
    %v4381 = vpop.permute.xlu0 %4380
    %v4383 = vadd.f32 %v4377, %v4381
    %v4384 = vtanh.pop %v4383
    %v4385 = vmul.f32 %v4375, %v4384
    %v4386 = vsel %vm2012, %v4290, 0
    %4388 = vmatprep.subr.mxu0 %v1997
    %4389 = vmatpush1.msra.mxu0 %v1996
    %4390 = vmatprep.subr.mxu0 %v1999
    %4391 = vmatpush1.msra.mxu0 %v1998
    %4392 = vmatprep.subr.mxu0 %v2001
    %4393 = vmatpush1.msra.mxu0 %v2000
    %4394 = vmatprep.subr.mxu0 %v2003
    %4395 = vmatpush1.msra.mxu0 %v2002
    %4396 = vmatprep.subr.mxu0 %v2005
    %4397 = vmatpush1.msra.mxu0 %v2004
    %4398 = vmatprep.subr.mxu0 %v2007
    %4399 = vmatpush1.msra.mxu0 %v2006
    %4400 = vmatprep.subr.mxu0 %v2009
    %4401 = vmatpush1.msra.mxu0 %v2008
    %4402 = vmatprep.subr.mxu0 %v2011
    %4403 = vmatpush1.msra.mxu0 %v2010
    %4404 = vmatprep.subr.mxu0 0.0
    %4405 = vmatpush1.msra.mxu0 0.0
    %4406 = vmatprep.subr.mxu0 0.0
    %4407 = vmatpush1.msra.mxu0 0.0
    %4408 = vmatprep.subr.mxu0 0.0
    %4409 = vmatpush1.msra.mxu0 0.0
    %4410 = vmatprep.subr.mxu0 0.0
    %4411 = vmatpush1.msra.mxu0 0.0
    %4412 = vmatprep.subr.mxu0 0.0
    %4413 = vmatpush1.msra.mxu0 0.0
    %4414 = vmatprep.subr.mxu0 0.0
    %4415 = vmatpush1.msra.mxu0 0.0
    %4416 = vmatprep.subr.mxu0 0.0
    %4417 = vmatpush1.msra.mxu0 0.0
    %4418 = vmatprep.subr.mxu0 0.0
    %4419 = vmatpush1.msra.mxu0 0.0
    %4420 = vmatprep.subr.mxu0 0.0
    %4421 = vmatpush1.msra.mxu0 0.0
    %4422 = vmatprep.subr.mxu0 0.0
    %4423 = vmatpush1.msra.mxu0 0.0
    %4424 = vmatprep.subr.mxu0 0.0
    %4425 = vmatpush1.msra.mxu0 0.0
    %4426 = vmatprep.subr.mxu0 0.0
    %4427 = vmatpush1.msra.mxu0 0.0
    %4428 = vmatprep.subr.mxu0 0.0
    %4429 = vmatpush1.msra.mxu0 0.0
    %4430 = vmatprep.subr.mxu0 0.0
    %4431 = vmatpush1.msra.mxu0 0.0
    %4432 = vmatprep.subr.mxu0 0.0
    %4433 = vmatpush1.msra.mxu0 0.0
    %4434 = vmatprep.subr.mxu0 0.0
    %4435 = vmatpush1.msra.mxu0 0.0
    %4436 = vmatprep.subr.mxu0 0.0
    %4437 = vmatpush1.msra.mxu0 0.0
    %4438 = vmatprep.subr.mxu0 0.0
    %4439 = vmatpush1.msra.mxu0 0.0
    %4440 = vmatprep.subr.mxu0 0.0
    %4441 = vmatpush1.msra.mxu0 0.0
    %4442 = vmatprep.subr.mxu0 0.0
    %4443 = vmatpush1.msra.mxu0 0.0
    %4444 = vmatprep.subr.mxu0 0.0
    %4445 = vmatpush1.msra.mxu0 0.0
    %4446 = vmatprep.subr.mxu0 0.0
    %4447 = vmatpush1.msra.mxu0 0.0
    %4448 = vmatprep.subr.mxu0 0.0
    %4449 = vmatpush1.msra.mxu0 0.0
    %4450 = vmatprep.subr.mxu0 0.0
    %4451 = vmatpush1.msra.mxu0 0.0
    %4452 = vmatprep.mubr.f32.mxu0 0.0
    %4453 = vmatmul.mubr.f32.gmra.mrb[0].mxu0 %v4386
    %v4454 = vpop.f32.mrb[0].mxu0
    %v4455 = vadd.f32 0.0, %v4454
    %v4456 = vpop.f32.mrb[0].mxu0
    %v4457 = vadd.f32 0.0, %v4456
    %4458 = vdwg.mxu0
    %v4459 = vadd.f32 %v1974, %v4455
    %v4460 = vadd.f32 %v1976, %v4457
    %v4461 = vxor.u32 %v4459, 2147483648
    %v4462 = vxor.u32 %v4460, 2147483648
    %v4463 = vmul.f32 %v4461, 1.442695
    %v4464 = vpow.pop %v4463
    %v4465 = vmul.f32 %v4462, 1.442695
    %v4466 = vpow.pop %v4465
    %v4467 = vadd.f32 %v4464, 1.0
    %v4468 = vadd.f32 %v4466, 1.0
    %v4469 = vrcp.pop %v4467
    %v4470 = vmul.f32 1.0, %v4469
    %v4471 = vrcp.pop %v4468
    %v4472 = vmul.f32 1.0, %v4471
    %v4473 = vtanh.pop %v4460
    %v4474 = vmul.f32 %v4470, %v4285
    %v4475 = vmul.f32 %v4470, %v4473
    %4477 = vrot.lane.b32.xlu0 %v4475, 64
    %v4478 = vpop.permute.xlu0 %4477
    %v4480 = vadd.f32 %v4474, %v4478
    %v4481 = vtanh.pop %v4480
    %v4482 = vmul.f32 %v4472, %v4481
    %4484 = vrot.lane.b32.xlu0 %v4482, 64
    %v4485 = vpop.permute.xlu0 %4484
    %v4487 = vsel %vm2012, %v4485, %v4385
    %4488 = vmatprep.subr.mxu0 %v2117
    %4489 = vmatpush1.msra.mxu0 %v2116
    %4490 = vmatprep.subr.mxu0 %v2119
    %4491 = vmatpush1.msra.mxu0 %v2118
    %4492 = vmatprep.subr.mxu0 %v2121
    %4493 = vmatpush1.msra.mxu0 %v2120
    %4494 = vmatprep.subr.mxu0 %v2123
    %4495 = vmatpush1.msra.mxu0 %v2122
    %4496 = vmatprep.subr.mxu0 %v2125
    %4497 = vmatpush1.msra.mxu0 %v2124
    %4498 = vmatprep.subr.mxu0 %v2127
    %4499 = vmatpush1.msra.mxu0 %v2126
    %4500 = vmatprep.subr.mxu0 %v2129
    %4501 = vmatpush1.msra.mxu0 %v2128
    %4502 = vmatprep.subr.mxu0 %v2131
    %4503 = vmatpush1.msra.mxu0 %v2130
    %4504 = vmatprep.subr.mxu0 %v2133
    %4505 = vmatpush1.msra.mxu0 %v2132
    %4506 = vmatprep.subr.mxu0 %v2135
    %4507 = vmatpush1.msra.mxu0 %v2134
    %4508 = vmatprep.subr.mxu0 %v2137
    %4509 = vmatpush1.msra.mxu0 %v2136
    %4510 = vmatprep.subr.mxu0 %v2139
    %4511 = vmatpush1.msra.mxu0 %v2138
    %4512 = vmatprep.subr.mxu0 %v2141
    %4513 = vmatpush1.msra.mxu0 %v2140
    %4514 = vmatprep.subr.mxu0 %v2143
    %4515 = vmatpush1.msra.mxu0 %v2142
    %4516 = vmatprep.subr.mxu0 %v2145
    %4517 = vmatpush1.msra.mxu0 %v2144
    %4518 = vmatprep.subr.mxu0 %v2147
    %4519 = vmatpush1.msra.mxu0 %v2146
    %4520 = vmatprep.subr.mxu0 0.0
    %4521 = vmatpush1.msra.mxu0 0.0
    %4522 = vmatprep.subr.mxu0 0.0
    %4523 = vmatpush1.msra.mxu0 0.0
    %4524 = vmatprep.subr.mxu0 0.0
    %4525 = vmatpush1.msra.mxu0 0.0
    %4526 = vmatprep.subr.mxu0 0.0
    %4527 = vmatpush1.msra.mxu0 0.0
    %4528 = vmatprep.subr.mxu0 0.0
    %4529 = vmatpush1.msra.mxu0 0.0
    %4530 = vmatprep.subr.mxu0 0.0
    %4531 = vmatpush1.msra.mxu0 0.0
    %4532 = vmatprep.subr.mxu0 0.0
    %4533 = vmatpush1.msra.mxu0 0.0
    %4534 = vmatprep.subr.mxu0 0.0
    %4535 = vmatpush1.msra.mxu0 0.0
    %4536 = vmatprep.subr.mxu0 0.0
    %4537 = vmatpush1.msra.mxu0 0.0
    %4538 = vmatprep.subr.mxu0 0.0
    %4539 = vmatpush1.msra.mxu0 0.0
    %4540 = vmatprep.subr.mxu0 0.0
    %4541 = vmatpush1.msra.mxu0 0.0
    %4542 = vmatprep.subr.mxu0 0.0
    %4543 = vmatpush1.msra.mxu0 0.0
    %4544 = vmatprep.subr.mxu0 0.0
    %4545 = vmatpush1.msra.mxu0 0.0
    %4546 = vmatprep.subr.mxu0 0.0
    %4547 = vmatpush1.msra.mxu0 0.0
    %4548 = vmatprep.subr.mxu0 0.0
    %4549 = vmatpush1.msra.mxu0 0.0
    %4550 = vmatprep.subr.mxu0 0.0
    %4551 = vmatpush1.msra.mxu0 0.0
    %4552 = vmatprep.mubr.f32.mxu0 0.0
    %4553 = vmatmul.mubr.f32.gmra.mrb[0].mxu0 %v4487
    %v4554 = vpop.f32.mrb[0].mxu0
    %v4555 = vadd.f32 %v1989, %v4554
    %v4556 = vpop.f32.mrb[0].mxu0
    %v4557 = vadd.f32 %v1993, %v4556
    %4558 = vdwg.mxu0
    %v4559 = vxor.u32 %v4555, 2147483648
    %v4560 = vxor.u32 %v4557, 2147483648
    %v4561 = vmul.f32 %v4559, 1.442695
    %v4562 = vpow.pop %v4561
    %v4563 = vmul.f32 %v4560, 1.442695
    %v4564 = vpow.pop %v4563
    %v4565 = vadd.f32 %v4562, 1.0
    %v4566 = vadd.f32 %v4564, 1.0
    %v4567 = vrcp.pop %v4565
    %v4568 = vmul.f32 1.0, %v4567
    %v4569 = vrcp.pop %v4566
    %v4570 = vmul.f32 1.0, %v4569
    %v4571 = vtanh.pop %v4557
    %v4572 = vmul.f32 %v4568, %v4383
    %v4573 = vmul.f32 %v4568, %v4571
    %4575 = vrot.lane.b32.xlu0 %v4573, 64
    %v4576 = vpop.permute.xlu0 %4575
    %v4578 = vadd.f32 %v4572, %v4576
    %v4579 = vtanh.pop %v4578
    %v4580 = vmul.f32 %v4570, %v4579
    %v4581 = vsel %vm2012, %v4485, 0
    %4583 = vmatprep.subr.mxu0 %v1997
    %4584 = vmatpush1.msra.mxu0 %v1996
    %4585 = vmatprep.subr.mxu0 %v1999
    %4586 = vmatpush1.msra.mxu0 %v1998
    %4587 = vmatprep.subr.mxu0 %v2001
    %4588 = vmatpush1.msra.mxu0 %v2000
    %4589 = vmatprep.subr.mxu0 %v2003
    %4590 = vmatpush1.msra.mxu0 %v2002
    %4591 = vmatprep.subr.mxu0 %v2005
    %4592 = vmatpush1.msra.mxu0 %v2004
    %4593 = vmatprep.subr.mxu0 %v2007
    %4594 = vmatpush1.msra.mxu0 %v2006
    %4595 = vmatprep.subr.mxu0 %v2009
    %4596 = vmatpush1.msra.mxu0 %v2008
    %4597 = vmatprep.subr.mxu0 %v2011
    %4598 = vmatpush1.msra.mxu0 %v2010
    %4599 = vmatprep.subr.mxu0 0.0
    %4600 = vmatpush1.msra.mxu0 0.0
    %4601 = vmatprep.subr.mxu0 0.0
    %4602 = vmatpush1.msra.mxu0 0.0
    %4603 = vmatprep.subr.mxu0 0.0
    %4604 = vmatpush1.msra.mxu0 0.0
    %4605 = vmatprep.subr.mxu0 0.0
    %4606 = vmatpush1.msra.mxu0 0.0
    %4607 = vmatprep.subr.mxu0 0.0
    %4608 = vmatpush1.msra.mxu0 0.0
    %4609 = vmatprep.subr.mxu0 0.0
    %4610 = vmatpush1.msra.mxu0 0.0
    %4611 = vmatprep.subr.mxu0 0.0
    %4612 = vmatpush1.msra.mxu0 0.0
    %4613 = vmatprep.subr.mxu0 0.0
    %4614 = vmatpush1.msra.mxu0 0.0
    %4615 = vmatprep.subr.mxu0 0.0
    %4616 = vmatpush1.msra.mxu0 0.0
    %4617 = vmatprep.subr.mxu0 0.0
    %4618 = vmatpush1.msra.mxu0 0.0
    %4619 = vmatprep.subr.mxu0 0.0
    %4620 = vmatpush1.msra.mxu0 0.0
    %4621 = vmatprep.subr.mxu0 0.0
    %4622 = vmatpush1.msra.mxu0 0.0
    %4623 = vmatprep.subr.mxu0 0.0
    %4624 = vmatpush1.msra.mxu0 0.0
    %4625 = vmatprep.subr.mxu0 0.0
    %4626 = vmatpush1.msra.mxu0 0.0
    %4627 = vmatprep.subr.mxu0 0.0
    %4628 = vmatpush1.msra.mxu0 0.0
    %4629 = vmatprep.subr.mxu0 0.0
    %4630 = vmatpush1.msra.mxu0 0.0
    %4631 = vmatprep.subr.mxu0 0.0
    %4632 = vmatpush1.msra.mxu0 0.0
    %4633 = vmatprep.subr.mxu0 0.0
    %4634 = vmatpush1.msra.mxu0 0.0
    %4635 = vmatprep.subr.mxu0 0.0
    %4636 = vmatpush1.msra.mxu0 0.0
    %4637 = vmatprep.subr.mxu0 0.0
    %4638 = vmatpush1.msra.mxu0 0.0
    %4639 = vmatprep.subr.mxu0 0.0
    %4640 = vmatpush1.msra.mxu0 0.0
    %4641 = vmatprep.subr.mxu0 0.0
    %4642 = vmatpush1.msra.mxu0 0.0
    %4643 = vmatprep.subr.mxu0 0.0
    %4644 = vmatpush1.msra.mxu0 0.0
    %4645 = vmatprep.subr.mxu0 0.0
    %4646 = vmatpush1.msra.mxu0 0.0
    %4647 = vmatprep.mubr.f32.mxu0 0.0
    %4648 = vmatmul.mubr.f32.gmra.mrb[0].mxu0 %v4581
    %v4649 = vpop.f32.mrb[0].mxu0
    %v4650 = vadd.f32 0.0, %v4649
    %v4651 = vpop.f32.mrb[0].mxu0
    %v4652 = vadd.f32 0.0, %v4651
    %4653 = vdwg.mxu0
    %v4654 = vadd.f32 %v1980, %v4650
    %v4655 = vadd.f32 %v1982, %v4652
    %v4656 = vxor.u32 %v4654, 2147483648
    %v4657 = vxor.u32 %v4655, 2147483648
    %v4658 = vmul.f32 %v4656, 1.442695
    %v4659 = vpow.pop %v4658
    %v4660 = vmul.f32 %v4657, 1.442695
    %v4661 = vpow.pop %v4660
    %v4662 = vadd.f32 %v4659, 1.0
    %v4663 = vadd.f32 %v4661, 1.0
    %v4664 = vrcp.pop %v4662
    %v4665 = vmul.f32 1.0, %v4664
    %v4666 = vrcp.pop %v4663
    %v4667 = vmul.f32 1.0, %v4666
    %v4668 = vtanh.pop %v4655
    %v4669 = vmul.f32 %v4665, %v4480
    %v4670 = vmul.f32 %v4665, %v4668
    %4672 = vrot.lane.b32.xlu0 %v4670, 64
    %v4673 = vpop.permute.xlu0 %4672
    %v4675 = vadd.f32 %v4669, %v4673
    %v4676 = vtanh.pop %v4675
    %v4677 = vmul.f32 %v4667, %v4676
    %4679 = vrot.lane.b32.xlu0 %v4677, 64
    %v4680 = vpop.permute.xlu0 %4679
    %v4682 = vsel %vm2012, %v4680, %v4580
    %4683 = vmatprep.subr.mxu0 %v2117
    %4684 = vmatpush1.msra.mxu0 %v2116
    %4685 = vmatprep.subr.mxu0 %v2119
    %4686 = vmatpush1.msra.mxu0 %v2118
    %4687 = vmatprep.subr.mxu0 %v2121
    %4688 = vmatpush1.msra.mxu0 %v2120
    %4689 = vmatprep.subr.mxu0 %v2123
    %4690 = vmatpush1.msra.mxu0 %v2122
    %4691 = vmatprep.subr.mxu0 %v2125
    %4692 = vmatpush1.msra.mxu0 %v2124
    %4693 = vmatprep.subr.mxu0 %v2127
    %4694 = vmatpush1.msra.mxu0 %v2126
    %4695 = vmatprep.subr.mxu0 %v2129
    %4696 = vmatpush1.msra.mxu0 %v2128
    %4697 = vmatprep.subr.mxu0 %v2131
    %4698 = vmatpush1.msra.mxu0 %v2130
    %4699 = vmatprep.subr.mxu0 %v2133
    %4700 = vmatpush1.msra.mxu0 %v2132
    %4701 = vmatprep.subr.mxu0 %v2135
    %4702 = vmatpush1.msra.mxu0 %v2134
    %4703 = vmatprep.subr.mxu0 %v2137
    %4704 = vmatpush1.msra.mxu0 %v2136
    %4705 = vmatprep.subr.mxu0 %v2139
    %4706 = vmatpush1.msra.mxu0 %v2138
    %4707 = vmatprep.subr.mxu0 %v2141
    %4708 = vmatpush1.msra.mxu0 %v2140
    %4709 = vmatprep.subr.mxu0 %v2143
    %4710 = vmatpush1.msra.mxu0 %v2142
    %4711 = vmatprep.subr.mxu0 %v2145
    %4712 = vmatpush1.msra.mxu0 %v2144
    %4713 = vmatprep.subr.mxu0 %v2147
    %4714 = vmatpush1.msra.mxu0 %v2146
    %4715 = vmatprep.subr.mxu0 0.0
    %4716 = vmatpush1.msra.mxu0 0.0
    %4717 = vmatprep.subr.mxu0 0.0
    %4718 = vmatpush1.msra.mxu0 0.0
    %4719 = vmatprep.subr.mxu0 0.0
    %4720 = vmatpush1.msra.mxu0 0.0
    %4721 = vmatprep.subr.mxu0 0.0
    %4722 = vmatpush1.msra.mxu0 0.0
    %4723 = vmatprep.subr.mxu0 0.0
    %4724 = vmatpush1.msra.mxu0 0.0
    %4725 = vmatprep.subr.mxu0 0.0
    %4726 = vmatpush1.msra.mxu0 0.0
    %4727 = vmatprep.subr.mxu0 0.0
    %4728 = vmatpush1.msra.mxu0 0.0
    %4729 = vmatprep.subr.mxu0 0.0
    %4730 = vmatpush1.msra.mxu0 0.0
    %4731 = vmatprep.subr.mxu0 0.0
    %4732 = vmatpush1.msra.mxu0 0.0
    %4733 = vmatprep.subr.mxu0 0.0
    %4734 = vmatpush1.msra.mxu0 0.0
    %4735 = vmatprep.subr.mxu0 0.0
    %4736 = vmatpush1.msra.mxu0 0.0
    %4737 = vmatprep.subr.mxu0 0.0
    %4738 = vmatpush1.msra.mxu0 0.0
    %4739 = vmatprep.subr.mxu0 0.0
    %4740 = vmatpush1.msra.mxu0 0.0
    %4741 = vmatprep.subr.mxu0 0.0
    %4742 = vmatpush1.msra.mxu0 0.0
    %4743 = vmatprep.subr.mxu0 0.0
    %4744 = vmatpush1.msra.mxu0 0.0
    %4745 = vmatprep.subr.mxu0 0.0
    %4746 = vmatpush1.msra.mxu0 0.0
    %4747 = vmatprep.mubr.f32.mxu0 0.0
    %4748 = vmatmul.mubr.f32.gmra.mrb[0].mxu0 %v4682
    %v4749 = vpop.f32.mrb[0].mxu0
    %v4750 = vadd.f32 %v1989, %v4749
    %v4751 = vpop.f32.mrb[0].mxu0
    %v4752 = vadd.f32 %v1993, %v4751
    %4753 = vdwg.mxu0
    %v4754 = vxor.u32 %v4750, 2147483648
    %v4755 = vxor.u32 %v4752, 2147483648
    %v4756 = vmul.f32 %v4754, 1.442695
    %v4757 = vpow.pop %v4756
    %v4758 = vmul.f32 %v4755, 1.442695
    %v4759 = vpow.pop %v4758
    %v4760 = vadd.f32 %v4757, 1.0
    %v4761 = vadd.f32 %v4759, 1.0
    %v4762 = vrcp.pop %v4760
    %v4763 = vmul.f32 1.0, %v4762
    %v4764 = vrcp.pop %v4761
    %v4765 = vmul.f32 1.0, %v4764
    %v4766 = vtanh.pop %v4752
    %v4767 = vmul.f32 %v4763, %v4578
    %v4768 = vmul.f32 %v4763, %v4766
    %4770 = vrot.lane.b32.xlu0 %v4768, 64
    %v4771 = vpop.permute.xlu0 %4770
    %v4773 = vadd.f32 %v4767, %v4771
    %v4774 = vtanh.pop %v4773
    %v4775 = vmul.f32 %v4765, %v4774
    %v4776 = vld [vmem:[%s6] sm:$0xff]
    %v4777 = vld [vmem:[%s6 + $0x8] sm:$0xff]
    %v4778 = vld [vmem:[%s6 + $0x10] sm:$0xff]
    %v4779 = vld [vmem:[%s6 + $0x18] sm:$0xff]
    %v4780 = vld [vmem:[%s6 + $0x20] sm:$0xff]
    %v4781 = vld [vmem:[%s6 + $0x28] sm:$0xff]
    %v4782 = vld [vmem:[%s6 + $0x30] sm:$0xff]
    %v4783 = vld [vmem:[%s6 + $0x38] sm:$0xff]
    %v4784 = vld [vmem:[%s7] sm:$0x1]
    %v4786 = vlaneseq
    %v4787 = vshrl.u32 %v4786, 7
    %v4788 = vsub.s32 0, %v4787
    %v4789 = vrot.slane %v4784, %v4788
    %4792 = vrot.lane.b32.xlu0 %v4775, 64
    %v4793 = vpop.permute.xlu0 %4792
    %v4794 = vsel %vm2012, %v4793, 0
    %4796 = vmatprep.subr.mxu0 0.0
    %4797 = vmatpush1.msra.mxu0 %v4776
    %4798 = vmatprep.subr.mxu0 0.0
    %4799 = vmatpush1.msra.mxu0 %v4777
    %4800 = vmatprep.subr.mxu0 0.0
    %4801 = vmatpush1.msra.mxu0 %v4778
    %4802 = vmatprep.subr.mxu0 0.0
    %4803 = vmatpush1.msra.mxu0 %v4779
    %4804 = vmatprep.subr.mxu0 0.0
    %4805 = vmatpush1.msra.mxu0 %v4780
    %4806 = vmatprep.subr.mxu0 0.0
    %4807 = vmatpush1.msra.mxu0 %v4781
    %4808 = vmatprep.subr.mxu0 0.0
    %4809 = vmatpush1.msra.mxu0 %v4782
    %4810 = vmatprep.subr.mxu0 0.0
    %4811 = vmatpush1.msra.mxu0 %v4783
    %4812 = vmatprep.subr.mxu0 0.0
    %4813 = vmatpush1.msra.mxu0 0.0
    %4814 = vmatprep.subr.mxu0 0.0
    %4815 = vmatpush1.msra.mxu0 0.0
    %4816 = vmatprep.subr.mxu0 0.0
    %4817 = vmatpush1.msra.mxu0 0.0
    %4818 = vmatprep.subr.mxu0 0.0
    %4819 = vmatpush1.msra.mxu0 0.0
    %4820 = vmatprep.subr.mxu0 0.0
    %4821 = vmatpush1.msra.mxu0 0.0
    %4822 = vmatprep.subr.mxu0 0.0
    %4823 = vmatpush1.msra.mxu0 0.0
    %4824 = vmatprep.subr.mxu0 0.0
    %4825 = vmatpush1.msra.mxu0 0.0
    %4826 = vmatprep.subr.mxu0 0.0
    %4827 = vmatpush1.msra.mxu0 0.0
    %4828 = vmatprep.subr.mxu0 0.0
    %4829 = vmatpush1.msra.mxu0 0.0
    %4830 = vmatprep.subr.mxu0 0.0
    %4831 = vmatpush1.msra.mxu0 0.0
    %4832 = vmatprep.subr.mxu0 0.0
    %4833 = vmatpush1.msra.mxu0 0.0
    %4834 = vmatprep.subr.mxu0 0.0
    %4835 = vmatpush1.msra.mxu0 0.0
    %4836 = vmatprep.subr.mxu0 0.0
    %4837 = vmatpush1.msra.mxu0 0.0
    %4838 = vmatprep.subr.mxu0 0.0
    %4839 = vmatpush1.msra.mxu0 0.0
    %4840 = vmatprep.subr.mxu0 0.0
    %4841 = vmatpush1.msra.mxu0 0.0
    %4842 = vmatprep.subr.mxu0 0.0
    %4843 = vmatpush1.msra.mxu0 0.0
    %4844 = vmatprep.subr.mxu0 0.0
    %4845 = vmatpush1.msra.mxu0 0.0
    %4846 = vmatprep.subr.mxu0 0.0
    %4847 = vmatpush1.msra.mxu0 0.0
    %4848 = vmatprep.subr.mxu0 0.0
    %4849 = vmatpush1.msra.mxu0 0.0
    %4850 = vmatprep.subr.mxu0 0.0
    %4851 = vmatpush1.msra.mxu0 0.0
    %4852 = vmatprep.subr.mxu0 0.0
    %4853 = vmatpush1.msra.mxu0 0.0
    %4854 = vmatprep.subr.mxu0 0.0
    %4855 = vmatpush1.msra.mxu0 0.0
    %4856 = vmatprep.subr.mxu0 0.0
    %4857 = vmatpush1.msra.mxu0 0.0
    %4858 = vmatprep.subr.mxu0 0.0
    %4859 = vmatpush1.msra.mxu0 0.0
    %4860 = vmatprep.mubr.f32.mxu0 0.0
    %4861 = vmatmul.mubr.f32.gmra.mrb[0].mxu0 %v4794
    %v4862 = vpop.f32.mrb[0].mxu0
    %v4863 = vadd.f32 %v4789, %v4862
    %v4864 = vpop.f32.mrb[0].mxu0
    %4865 = vdwg.mxu0
    %s4866 = smul.u32 8, 208
    %s4867 = smul.u32 %s4866, 4
    %s4868 = sshll.u32 %s4867, 4
    %4869 = dma.done [#allocation3], %s4868
    %v4870 = vld [vmem:[%s8] sm:$0xff]
    %v4871 = vld [vmem:[#allocation2] sm:$0xff]
    %v4872 = vld [vmem:[#allocation2 + $0x8] sm:$0xff]
    %v4873 = vld [vmem:[#allocation2 + $0x10] sm:$0xff]
    %v4874 = vld [vmem:[#allocation2 + $0x18] sm:$0xff]
    %v4875 = vld [vmem:[#allocation2 + $0x20] sm:$0xff]
    %v4876 = vld [vmem:[#allocation2 + $0x28] sm:$0xff]
    %v4877 = vld [vmem:[#allocation2 + $0x30] sm:$0xff]
    %v4878 = vld [vmem:[#allocation2 + $0x38] sm:$0xff]
    %v4879 = vld [vmem:[#allocation2 + $0x40] sm:$0xff]
    %v4880 = vld [vmem:[#allocation2 + $0x48] sm:$0xff]
    %v4881 = vld [vmem:[#allocation2 + $0x50] sm:$0xff]
    %v4882 = vld [vmem:[#allocation2 + $0x58] sm:$0xff]
    %v4883 = vld [vmem:[#allocation2 + $0x60] sm:$0xff]
    %v4884 = vld [vmem:[#allocation2 + $0x68] sm:$0xff]
    %v4885 = vld [vmem:[#allocation2 + $0x70] sm:$0xff]
    %v4886 = vld [vmem:[#allocation2 + $0x78] sm:$0xff]
    %v4887 = vld [vmem:[#allocation2 + $0x80] sm:$0xff]
    %v4888 = vld [vmem:[#allocation2 + $0x88] sm:$0xff]
    %v4889 = vld [vmem:[#allocation2 + $0x90] sm:$0xff]
    %v4890 = vld [vmem:[#allocation2 + $0x98] sm:$0xff]
    %v4891 = vld [vmem:[#allocation2 + $0xa0] sm:$0xff]
    %v4892 = vld [vmem:[#allocation2 + $0xa8] sm:$0xff]
    %v4893 = vld [vmem:[#allocation2 + $0xb0] sm:$0xff]
    %v4894 = vld [vmem:[#allocation2 + $0xb8] sm:$0xff]
    %v4895 = vld [vmem:[#allocation2 + $0xc0] sm:$0xff]
    %v4896 = vld [vmem:[#allocation2 + $0xc8] sm:$0xff]
    %v4897 = vld [vmem:[#allocation2 + $0xd0] sm:$0xff]
    %v4898 = vld [vmem:[#allocation2 + $0xd8] sm:$0xff]
    %v4899 = vld [vmem:[#allocation2 + $0xe0] sm:$0xff]
    %v4900 = vld [vmem:[#allocation2 + $0xe8] sm:$0xff]
    %v4901 = vld [vmem:[#allocation2 + $0xf0] sm:$0xff]
    %v4902 = vld [vmem:[#allocation2 + $0xf8] sm:$0xff]
    %v4903 = vld [vmem:[#allocation2 + $0x100] sm:$0xff]
    %v4904 = vld [vmem:[#allocation2 + $0x108] sm:$0xff]
    %v4905 = vld [vmem:[#allocation2 + $0x110] sm:$0xff]
    %v4906 = vld [vmem:[#allocation2 + $0x118] sm:$0xff]
    %v4907 = vld [vmem:[#allocation2 + $0x120] sm:$0xff]
    %v4908 = vld [vmem:[#allocation2 + $0x128] sm:$0xff]
    %v4909 = vld [vmem:[#allocation2 + $0x130] sm:$0xff]
    %v4910 = vld [vmem:[#allocation2 + $0x138] sm:$0xff]
    %v4911 = vld [vmem:[#allocation2 + $0x140] sm:$0xff]
    %v4912 = vld [vmem:[#allocation2 + $0x148] sm:$0xff]
    %v4913 = vld [vmem:[#allocation2 + $0x150] sm:$0xff]
    %v4914 = vld [vmem:[#allocation2 + $0x158] sm:$0xff]
    %v4915 = vld [vmem:[#allocation2 + $0x160] sm:$0xff]
    %v4916 = vld [vmem:[#allocation2 + $0x168] sm:$0xff]
    %v4917 = vld [vmem:[#allocation2 + $0x170] sm:$0xff]
    %v4918 = vld [vmem:[#allocation2 + $0x178] sm:$0xff]
    %v4919 = vld [vmem:[#allocation2 + $0x180] sm:$0xff]
    %v4920 = vld [vmem:[#allocation2 + $0x188] sm:$0xff]
    %v4921 = vld [vmem:[#allocation2 + $0x190] sm:$0xff]
    %v4922 = vld [vmem:[#allocation2 + $0x198] sm:$0xff]
    %v4923 = vld [vmem:[#allocation2 + $0x1a0] sm:$0xff]
    %v4924 = vld [vmem:[#allocation2 + $0x1a8] sm:$0xff]
    %v4925 = vld [vmem:[#allocation2 + $0x1b0] sm:$0xff]
    %v4926 = vld [vmem:[#allocation2 + $0x1b8] sm:$0xff]
    %v4927 = vld [vmem:[#allocation2 + $0x1c0] sm:$0xff]
    %v4928 = vld [vmem:[#allocation2 + $0x1c8] sm:$0xff]
    %v4929 = vld [vmem:[#allocation2 + $0x1d0] sm:$0xff]
    %v4930 = vld [vmem:[#allocation2 + $0x1d8] sm:$0xff]
    %v4931 = vld [vmem:[#allocation2 + $0x1e0] sm:$0xff]
    %v4932 = vld [vmem:[#allocation2 + $0x1e8] sm:$0xff]
    %v4933 = vld [vmem:[#allocation2 + $0x1f0] sm:$0xff]
    %v4934 = vld [vmem:[#allocation2 + $0x1f8] sm:$0xff]
    %v4935 = vld [vmem:[#allocation2 + $0x200] sm:$0xff]
    %v4936 = vld [vmem:[#allocation2 + $0x208] sm:$0xff]
    %v4937 = vld [vmem:[#allocation2 + $0x210] sm:$0xff]
    %v4938 = vld [vmem:[#allocation2 + $0x218] sm:$0xff]
    %v4939 = vld [vmem:[#allocation2 + $0x220] sm:$0xff]
    %v4940 = vld [vmem:[#allocation2 + $0x228] sm:$0xff]
    %v4941 = vld [vmem:[#allocation2 + $0x230] sm:$0xff]
    %v4942 = vld [vmem:[#allocation2 + $0x238] sm:$0xff]
    %v4943 = vld [vmem:[#allocation2 + $0x240] sm:$0xff]
    %v4944 = vld [vmem:[#allocation2 + $0x248] sm:$0xff]
    %v4945 = vld [vmem:[#allocation2 + $0x250] sm:$0xff]
    %v4946 = vld [vmem:[#allocation2 + $0x258] sm:$0xff]
    %v4947 = vld [vmem:[#allocation2 + $0x260] sm:$0xff]
    %v4948 = vld [vmem:[#allocation2 + $0x268] sm:$0xff]
    %v4949 = vld [vmem:[#allocation2 + $0x270] sm:$0xff]
    %v4950 = vld [vmem:[#allocation2 + $0x278] sm:$0xff]
    %v4951 = vld [vmem:[#allocation2 + $0x280] sm:$0xff]
    %v4952 = vld [vmem:[#allocation2 + $0x288] sm:$0xff]
    %v4953 = vld [vmem:[#allocation2 + $0x290] sm:$0xff]
    %v4954 = vld [vmem:[#allocation2 + $0x298] sm:$0xff]
    %v4955 = vld [vmem:[#allocation2 + $0x2a0] sm:$0xff]
    %v4956 = vld [vmem:[#allocation2 + $0x2a8] sm:$0xff]
    %v4957 = vld [vmem:[#allocation2 + $0x2b0] sm:$0xff]
    %v4958 = vld [vmem:[#allocation2 + $0x2b8] sm:$0xff]
    %v4959 = vld [vmem:[#allocation2 + $0x2c0] sm:$0xff]
    %v4960 = vld [vmem:[#allocation2 + $0x2c8] sm:$0xff]
    %v4961 = vld [vmem:[#allocation2 + $0x2d0] sm:$0xff]
    %v4962 = vld [vmem:[#allocation2 + $0x2d8] sm:$0xff]
    %v4963 = vld [vmem:[#allocation2 + $0x2e0] sm:$0xff]
    %v4964 = vld [vmem:[#allocation2 + $0x2e8] sm:$0xff]
    %v4965 = vld [vmem:[#allocation2 + $0x2f0] sm:$0xff]
    %v4966 = vld [vmem:[#allocation2 + $0x2f8] sm:$0xff]
    %v4967 = vld [vmem:[#allocation2 + $0x300] sm:$0xff]
    %v4968 = vld [vmem:[#allocation2 + $0x308] sm:$0xff]
    %v4969 = vld [vmem:[#allocation2 + $0x310] sm:$0xff]
    %v4970 = vld [vmem:[#allocation2 + $0x318] sm:$0xff]
    %v4971 = vld [vmem:[#allocation2 + $0x320] sm:$0xff]
    %v4972 = vld [vmem:[#allocation2 + $0x328] sm:$0xff]
    %v4973 = vld [vmem:[#allocation2 + $0x330] sm:$0xff]
    %v4974 = vld [vmem:[#allocation2 + $0x338] sm:$0xff]
    %v4975 = vld [vmem:[#allocation2 + $0x340] sm:$0xff]
    %v4976 = vld [vmem:[#allocation2 + $0x348] sm:$0xff]
    %v4977 = vld [vmem:[#allocation2 + $0x350] sm:$0xff]
    %v4978 = vld [vmem:[#allocation2 + $0x358] sm:$0xff]
    %v4979 = vld [vmem:[#allocation2 + $0x360] sm:$0xff]
    %v4980 = vld [vmem:[#allocation2 + $0x368] sm:$0xff]
    %v4981 = vld [vmem:[#allocation2 + $0x370] sm:$0xff]
    %v4982 = vld [vmem:[#allocation2 + $0x378] sm:$0xff]
    %v4983 = vld [vmem:[#allocation2 + $0x380] sm:$0xff]
    %v4984 = vld [vmem:[#allocation2 + $0x388] sm:$0xff]
    %v4985 = vld [vmem:[#allocation2 + $0x390] sm:$0xff]
    %v4986 = vld [vmem:[#allocation2 + $0x398] sm:$0xff]
    %v4987 = vld [vmem:[#allocation2 + $0x3a0] sm:$0xff]
    %v4988 = vld [vmem:[#allocation2 + $0x3a8] sm:$0xff]
    %v4989 = vld [vmem:[#allocation2 + $0x3b0] sm:$0xff]
    %v4990 = vld [vmem:[#allocation2 + $0x3b8] sm:$0xff]
    %v4991 = vld [vmem:[#allocation2 + $0x3c0] sm:$0xff]
    %v4992 = vld [vmem:[#allocation2 + $0x3c8] sm:$0xff]
    %v4993 = vld [vmem:[#allocation2 + $0x3d0] sm:$0xff]
    %v4994 = vld [vmem:[#allocation2 + $0x3d8] sm:$0xff]
    %v4995 = vld [vmem:[#allocation2 + $0x3e0] sm:$0xff]
    %v4996 = vld [vmem:[#allocation2 + $0x3e8] sm:$0xff]
    %v4997 = vld [vmem:[#allocation2 + $0x3f0] sm:$0xff]
    %v4998 = vld [vmem:[#allocation2 + $0x3f8] sm:$0xff]
    %v4999 = vld [vmem:[#allocation2 + $0x400] sm:$0xff]
    %v5000 = vld [vmem:[#allocation2 + $0x408] sm:$0xff]
    %v5001 = vld [vmem:[#allocation2 + $0x410] sm:$0xff]
    %v5002 = vld [vmem:[#allocation2 + $0x418] sm:$0xff]
    %v5003 = vld [vmem:[#allocation2 + $0x420] sm:$0xff]
    %v5004 = vld [vmem:[#allocation2 + $0x428] sm:$0xff]
    %v5005 = vld [vmem:[#allocation2 + $0x430] sm:$0xff]
    %v5006 = vld [vmem:[#allocation2 + $0x438] sm:$0xff]
    %v5007 = vld [vmem:[#allocation2 + $0x440] sm:$0xff]
    %v5008 = vld [vmem:[#allocation2 + $0x448] sm:$0xff]
    %v5009 = vld [vmem:[#allocation2 + $0x450] sm:$0xff]
    %v5010 = vld [vmem:[#allocation2 + $0x458] sm:$0xff]
    %v5011 = vld [vmem:[#allocation2 + $0x460] sm:$0xff]
    %v5012 = vld [vmem:[#allocation2 + $0x468] sm:$0xff]
    %v5013 = vld [vmem:[#allocation2 + $0x470] sm:$0xff]
    %v5014 = vld [vmem:[#allocation2 + $0x478] sm:$0xff]
    %v5015 = vld [vmem:[#allocation2 + $0x480] sm:$0xff]
    %v5016 = vld [vmem:[#allocation2 + $0x488] sm:$0xff]
    %v5017 = vld [vmem:[#allocation2 + $0x490] sm:$0xff]
    %v5018 = vld [vmem:[#allocation2 + $0x498] sm:$0xff]
    %v5019 = vld [vmem:[#allocation2 + $0x4a0] sm:$0xff]
    %v5020 = vld [vmem:[#allocation2 + $0x4a8] sm:$0xff]
    %v5021 = vld [vmem:[#allocation2 + $0x4b0] sm:$0xff]
    %v5022 = vld [vmem:[#allocation2 + $0x4b8] sm:$0xff]
    %v5023 = vld [vmem:[#allocation2 + $0x4c0] sm:$0xff]
    %v5024 = vld [vmem:[#allocation2 + $0x4c8] sm:$0xff]
    %v5025 = vld [vmem:[#allocation2 + $0x4d0] sm:$0xff]
    %v5026 = vld [vmem:[#allocation2 + $0x4d8] sm:$0xff]
    %v5027 = vld [vmem:[#allocation2 + $0x4e0] sm:$0xff]
    %v5028 = vld [vmem:[#allocation2 + $0x4e8] sm:$0xff]
    %v5029 = vld [vmem:[#allocation2 + $0x4f0] sm:$0xff]
    %v5030 = vld [vmem:[#allocation2 + $0x4f8] sm:$0xff]
    %v5031 = vld [vmem:[#allocation2 + $0x500] sm:$0xff]
    %v5032 = vld [vmem:[#allocation2 + $0x508] sm:$0xff]
    %v5033 = vld [vmem:[#allocation2 + $0x510] sm:$0xff]
    %v5034 = vld [vmem:[#allocation2 + $0x518] sm:$0xff]
    %v5035 = vld [vmem:[#allocation2 + $0x520] sm:$0xff]
    %v5036 = vld [vmem:[#allocation2 + $0x528] sm:$0xff]
    %v5037 = vld [vmem:[#allocation2 + $0x530] sm:$0xff]
    %v5038 = vld [vmem:[#allocation2 + $0x538] sm:$0xff]
    %v5039 = vld [vmem:[#allocation2 + $0x540] sm:$0xff]
    %v5040 = vld [vmem:[#allocation2 + $0x548] sm:$0xff]
    %v5041 = vld [vmem:[#allocation2 + $0x550] sm:$0xff]
    %v5042 = vld [vmem:[#allocation2 + $0x558] sm:$0xff]
    %v5043 = vld [vmem:[#allocation2 + $0x560] sm:$0xff]
    %v5044 = vld [vmem:[#allocation2 + $0x568] sm:$0xff]
    %v5045 = vld [vmem:[#allocation2 + $0x570] sm:$0xff]
    %v5046 = vld [vmem:[#allocation2 + $0x578] sm:$0xff]
    %v5047 = vld [vmem:[#allocation2 + $0x580] sm:$0xff]
    %v5048 = vld [vmem:[#allocation2 + $0x588] sm:$0xff]
    %v5049 = vld [vmem:[#allocation2 + $0x590] sm:$0xff]
    %v5050 = vld [vmem:[#allocation2 + $0x598] sm:$0xff]
    %v5051 = vld [vmem:[#allocation2 + $0x5a0] sm:$0xff]
    %v5052 = vld [vmem:[#allocation2 + $0x5a8] sm:$0xff]
    %v5053 = vld [vmem:[#allocation2 + $0x5b0] sm:$0xff]
    %v5054 = vld [vmem:[#allocation2 + $0x5b8] sm:$0xff]
    %v5055 = vld [vmem:[#allocation2 + $0x5c0] sm:$0xff]
    %v5056 = vld [vmem:[#allocation2 + $0x5c8] sm:$0xff]
    %v5057 = vld [vmem:[#allocation2 + $0x5d0] sm:$0xff]
    %v5058 = vld [vmem:[#allocation2 + $0x5d8] sm:$0xff]
    %v5059 = vld [vmem:[#allocation2 + $0x5e0] sm:$0xff]
    %v5060 = vld [vmem:[#allocation2 + $0x5e8] sm:$0xff]
    %v5061 = vld [vmem:[#allocation2 + $0x5f0] sm:$0xff]
    %v5062 = vld [vmem:[#allocation2 + $0x5f8] sm:$0xff]
    %v5063 = vld [vmem:[#allocation2 + $0x600] sm:$0xff]
    %v5064 = vld [vmem:[#allocation2 + $0x608] sm:$0xff]
    %v5065 = vld [vmem:[#allocation2 + $0x610] sm:$0xff]
    %v5066 = vld [vmem:[#allocation2 + $0x618] sm:$0xff]
    %v5067 = vld [vmem:[#allocation2 + $0x620] sm:$0xff]
    %v5068 = vld [vmem:[#allocation2 + $0x628] sm:$0xff]
    %v5069 = vld [vmem:[#allocation2 + $0x630] sm:$0xff]
    %v5070 = vld [vmem:[#allocation2 + $0x638] sm:$0xff]
    %v5071 = vld [vmem:[#allocation2 + $0x640] sm:$0xff]
    %v5072 = vld [vmem:[#allocation2 + $0x648] sm:$0xff]
    %v5073 = vld [vmem:[#allocation2 + $0x650] sm:$0xff]
    %v5074 = vld [vmem:[#allocation2 + $0x658] sm:$0xff]
    %v5075 = vld [vmem:[#allocation2 + $0x660] sm:$0xff]
    %v5076 = vld [vmem:[#allocation2 + $0x668] sm:$0xff]
    %v5077 = vld [vmem:[#allocation2 + $0x670] sm:$0xff]
    %v5078 = vld [vmem:[#allocation2 + $0x678] sm:$0xff]
    %v5079 = vld [vmem:[#allocation2 + $0x680] sm:$0xff]
    %v5080 = vld [vmem:[#allocation2 + $0x688] sm:$0xff]
    %v5081 = vld [vmem:[#allocation2 + $0x690] sm:$0xff]
    %v5082 = vld [vmem:[#allocation2 + $0x698] sm:$0xff]
    %v5083 = vld [vmem:[#allocation2 + $0x6a0] sm:$0xff]
    %v5084 = vld [vmem:[#allocation2 + $0x6a8] sm:$0xff]
    %v5085 = vld [vmem:[#allocation2 + $0x6b0] sm:$0xff]
    %v5086 = vld [vmem:[#allocation2 + $0x6b8] sm:$0xff]
    %v5087 = vld [vmem:[#allocation2 + $0x6c0] sm:$0xff]
    %v5088 = vld [vmem:[#allocation2 + $0x6c8] sm:$0xff]
    %v5089 = vld [vmem:[#allocation2 + $0x6d0] sm:$0xff]
    %v5090 = vld [vmem:[#allocation2 + $0x6d8] sm:$0xff]
    %v5091 = vld [vmem:[#allocation2 + $0x6e0] sm:$0xff]
    %v5092 = vld [vmem:[#allocation2 + $0x6e8] sm:$0xff]
    %v5093 = vld [vmem:[#allocation2 + $0x6f0] sm:$0xff]
    %v5094 = vld [vmem:[#allocation2 + $0x6f8] sm:$0xff]
    %v5095 = vld [vmem:[#allocation2 + $0x700] sm:$0xff]
    %v5096 = vld [vmem:[#allocation2 + $0x708] sm:$0xff]
    %v5097 = vld [vmem:[#allocation2 + $0x710] sm:$0xff]
    %v5098 = vld [vmem:[#allocation2 + $0x718] sm:$0xff]
    %v5099 = vld [vmem:[#allocation2 + $0x720] sm:$0xff]
    %v5100 = vld [vmem:[#allocation2 + $0x728] sm:$0xff]
    %v5101 = vld [vmem:[#allocation2 + $0x730] sm:$0xff]
    %v5102 = vld [vmem:[#allocation2 + $0x738] sm:$0xff]
    %v5103 = vld [vmem:[#allocation2 + $0x740] sm:$0xff]
    %v5104 = vld [vmem:[#allocation2 + $0x748] sm:$0xff]
    %v5105 = vld [vmem:[#allocation2 + $0x750] sm:$0xff]
    %v5106 = vld [vmem:[#allocation2 + $0x758] sm:$0xff]
    %v5107 = vld [vmem:[#allocation2 + $0x760] sm:$0xff]
    %v5108 = vld [vmem:[#allocation2 + $0x768] sm:$0xff]
    %v5109 = vld [vmem:[#allocation2 + $0x770] sm:$0xff]
    %v5110 = vld [vmem:[#allocation2 + $0x778] sm:$0xff]
    %v5111 = vld [vmem:[%s9] sm:$0xff]
    %v5112 = vld [vmem:[#allocation2 + $0x780] sm:$0xff]
    %v5113 = vld [vmem:[#allocation2 + $0x788] sm:$0xff]
    %v5114 = vld [vmem:[#allocation2 + $0x790] sm:$0xff]
    %v5115 = vld [vmem:[#allocation2 + $0x798] sm:$0xff]
    %v5116 = vld [vmem:[#allocation2 + $0x7a0] sm:$0xff]
    %v5117 = vld [vmem:[#allocation2 + $0x7a8] sm:$0xff]
    %v5118 = vld [vmem:[#allocation2 + $0x7b0] sm:$0xff]
    %v5119 = vld [vmem:[#allocation2 + $0x7b8] sm:$0xff]
    %v5120 = vld [vmem:[#allocation2 + $0x7c0] sm:$0xff]
    %v5121 = vld [vmem:[#allocation2 + $0x7c8] sm:$0xff]
    %v5122 = vld [vmem:[#allocation2 + $0x7d0] sm:$0xff]
    %v5123 = vld [vmem:[#allocation2 + $0x7d8] sm:$0xff]
    %v5124 = vld [vmem:[#allocation2 + $0x7e0] sm:$0xff]
    %v5125 = vld [vmem:[#allocation2 + $0x7e8] sm:$0xff]
    %v5126 = vld [vmem:[#allocation2 + $0x7f0] sm:$0xff]
    %v5127 = vld [vmem:[#allocation2 + $0x7f8] sm:$0xff]
    %v5128 = vld [vmem:[#allocation2 + $0x800] sm:$0xff]
    %v5129 = vld [vmem:[#allocation2 + $0x808] sm:$0xff]
    %v5130 = vld [vmem:[#allocation2 + $0x810] sm:$0xff]
    %v5131 = vld [vmem:[#allocation2 + $0x818] sm:$0xff]
    %v5132 = vld [vmem:[#allocation2 + $0x820] sm:$0xff]
    %v5133 = vld [vmem:[#allocation2 + $0x828] sm:$0xff]
    %v5134 = vld [vmem:[#allocation2 + $0x830] sm:$0xff]
    %v5135 = vld [vmem:[#allocation2 + $0x838] sm:$0xff]
    %v5136 = vld [vmem:[#allocation2 + $0x840] sm:$0xff]
    %v5137 = vld [vmem:[#allocation2 + $0x848] sm:$0xff]
    %v5138 = vld [vmem:[#allocation2 + $0x850] sm:$0xff]
    %v5139 = vld [vmem:[#allocation2 + $0x858] sm:$0xff]
    %v5140 = vld [vmem:[#allocation2 + $0x860] sm:$0xff]
    %v5141 = vld [vmem:[#allocation2 + $0x868] sm:$0xff]
    %v5142 = vld [vmem:[#allocation2 + $0x870] sm:$0xff]
    %v5143 = vld [vmem:[#allocation2 + $0x878] sm:$0xff]
    %v5144 = vld [vmem:[#allocation2 + $0x880] sm:$0xff]
    %v5145 = vld [vmem:[#allocation2 + $0x888] sm:$0xff]
    %v5146 = vld [vmem:[#allocation2 + $0x890] sm:$0xff]
    %v5147 = vld [vmem:[#allocation2 + $0x898] sm:$0xff]
    %v5148 = vld [vmem:[#allocation2 + $0x8a0] sm:$0xff]
    %v5149 = vld [vmem:[#allocation2 + $0x8a8] sm:$0xff]
    %v5150 = vld [vmem:[#allocation2 + $0x8b0] sm:$0xff]
    %v5151 = vld [vmem:[#allocation2 + $0x8b8] sm:$0xff]
    %v5152 = vld [vmem:[#allocation2 + $0x8c0] sm:$0xff]
    %v5153 = vld [vmem:[#allocation2 + $0x8c8] sm:$0xff]
    %v5154 = vld [vmem:[#allocation2 + $0x8d0] sm:$0xff]
    %v5155 = vld [vmem:[#allocation2 + $0x8d8] sm:$0xff]
    %v5156 = vld [vmem:[#allocation2 + $0x8e0] sm:$0xff]
    %v5157 = vld [vmem:[#allocation2 + $0x8e8] sm:$0xff]
    %v5158 = vld [vmem:[#allocation2 + $0x8f0] sm:$0xff]
    %v5159 = vld [vmem:[#allocation2 + $0x8f8] sm:$0xff]
    %v5160 = vld [vmem:[#allocation2 + $0x900] sm:$0xff]
    %v5161 = vld [vmem:[#allocation2 + $0x908] sm:$0xff]
    %v5162 = vld [vmem:[#allocation2 + $0x910] sm:$0xff]
    %v5163 = vld [vmem:[#allocation2 + $0x918] sm:$0xff]
    %v5164 = vld [vmem:[#allocation2 + $0x920] sm:$0xff]
    %v5165 = vld [vmem:[#allocation2 + $0x928] sm:$0xff]
    %v5166 = vld [vmem:[#allocation2 + $0x930] sm:$0xff]
    %v5167 = vld [vmem:[#allocation2 + $0x938] sm:$0xff]
    %v5168 = vld [vmem:[#allocation2 + $0x940] sm:$0xff]
    %v5169 = vld [vmem:[#allocation2 + $0x948] sm:$0xff]
    %v5170 = vld [vmem:[#allocation2 + $0x950] sm:$0xff]
    %v5171 = vld [vmem:[#allocation2 + $0x958] sm:$0xff]
    %v5172 = vld [vmem:[#allocation2 + $0x960] sm:$0xff]
    %v5173 = vld [vmem:[#allocation2 + $0x968] sm:$0xff]
    %v5174 = vld [vmem:[#allocation2 + $0x970] sm:$0xff]
    %v5175 = vld [vmem:[#allocation2 + $0x978] sm:$0xff]
    %v5176 = vld [vmem:[#allocation2 + $0x980] sm:$0xff]
    %v5177 = vld [vmem:[#allocation2 + $0x988] sm:$0xff]
    %v5178 = vld [vmem:[#allocation2 + $0x990] sm:$0xff]
    %v5179 = vld [vmem:[#allocation2 + $0x998] sm:$0xff]
    %v5180 = vld [vmem:[#allocation2 + $0x9a0] sm:$0xff]
    %v5181 = vld [vmem:[#allocation2 + $0x9a8] sm:$0xff]
    %v5182 = vld [vmem:[#allocation2 + $0x9b0] sm:$0xff]
    %v5183 = vld [vmem:[#allocation2 + $0x9b8] sm:$0xff]
    %v5184 = vld [vmem:[#allocation2 + $0x9c0] sm:$0xff]
    %v5185 = vld [vmem:[#allocation2 + $0x9c8] sm:$0xff]
    %v5186 = vld [vmem:[#allocation2 + $0x9d0] sm:$0xff]
    %v5187 = vld [vmem:[#allocation2 + $0x9d8] sm:$0xff]
    %v5188 = vld [vmem:[#allocation2 + $0x9e0] sm:$0xff]
    %v5189 = vld [vmem:[#allocation2 + $0x9e8] sm:$0xff]
    %v5190 = vld [vmem:[#allocation2 + $0x9f0] sm:$0xff]
    %v5191 = vld [vmem:[#allocation2 + $0x9f8] sm:$0xff]
    %v5192 = vld [vmem:[#allocation2 + $0xa00] sm:$0xff]
    %v5193 = vld [vmem:[#allocation2 + $0xa08] sm:$0xff]
    %v5194 = vld [vmem:[#allocation2 + $0xa10] sm:$0xff]
    %v5195 = vld [vmem:[#allocation2 + $0xa18] sm:$0xff]
    %v5196 = vld [vmem:[#allocation2 + $0xa20] sm:$0xff]
    %v5197 = vld [vmem:[#allocation2 + $0xa28] sm:$0xff]
    %v5198 = vld [vmem:[#allocation2 + $0xa30] sm:$0xff]
    %v5199 = vld [vmem:[#allocation2 + $0xa38] sm:$0xff]
    %v5200 = vld [vmem:[#allocation2 + $0xa40] sm:$0xff]
    %v5201 = vld [vmem:[#allocation2 + $0xa48] sm:$0xff]
    %v5202 = vld [vmem:[#allocation2 + $0xa50] sm:$0xff]
    %v5203 = vld [vmem:[#allocation2 + $0xa58] sm:$0xff]
    %v5204 = vld [vmem:[#allocation2 + $0xa60] sm:$0xff]
    %v5205 = vld [vmem:[#allocation2 + $0xa68] sm:$0xff]
    %v5206 = vld [vmem:[#allocation2 + $0xa70] sm:$0xff]
    %v5207 = vld [vmem:[#allocation2 + $0xa78] sm:$0xff]
    %v5208 = vld [vmem:[#allocation2 + $0xa80] sm:$0xff]
    %v5209 = vld [vmem:[#allocation2 + $0xa88] sm:$0xff]
    %v5210 = vld [vmem:[#allocation2 + $0xa90] sm:$0xff]
    %v5211 = vld [vmem:[#allocation2 + $0xa98] sm:$0xff]
    %v5212 = vld [vmem:[#allocation2 + $0xaa0] sm:$0xff]
    %v5213 = vld [vmem:[#allocation2 + $0xaa8] sm:$0xff]
    %v5214 = vld [vmem:[#allocation2 + $0xab0] sm:$0xff]
    %v5215 = vld [vmem:[#allocation2 + $0xab8] sm:$0xff]
    %v5216 = vld [vmem:[#allocation2 + $0xac0] sm:$0xff]
    %v5217 = vld [vmem:[#allocation2 + $0xac8] sm:$0xff]
    %v5218 = vld [vmem:[#allocation2 + $0xad0] sm:$0xff]
    %v5219 = vld [vmem:[#allocation2 + $0xad8] sm:$0xff]
    %v5220 = vld [vmem:[#allocation2 + $0xae0] sm:$0xff]
    %v5221 = vld [vmem:[#allocation2 + $0xae8] sm:$0xff]
    %v5222 = vld [vmem:[#allocation2 + $0xaf0] sm:$0xff]
    %v5223 = vld [vmem:[#allocation2 + $0xaf8] sm:$0xff]
    %v5224 = vld [vmem:[#allocation2 + $0xb00] sm:$0xff]
    %v5225 = vld [vmem:[#allocation2 + $0xb08] sm:$0xff]
    %v5226 = vld [vmem:[#allocation2 + $0xb10] sm:$0xff]
    %v5227 = vld [vmem:[#allocation2 + $0xb18] sm:$0xff]
    %v5228 = vld [vmem:[#allocation2 + $0xb20] sm:$0xff]
    %v5229 = vld [vmem:[#allocation2 + $0xb28] sm:$0xff]
    %v5230 = vld [vmem:[#allocation2 + $0xb30] sm:$0xff]
    %v5231 = vld [vmem:[#allocation2 + $0xb38] sm:$0xff]
    %v5232 = vld [vmem:[#allocation2 + $0xb40] sm:$0xff]
    %v5233 = vld [vmem:[#allocation2 + $0xb48] sm:$0xff]
    %v5234 = vld [vmem:[#allocation2 + $0xb50] sm:$0xff]
    %v5235 = vld [vmem:[#allocation2 + $0xb58] sm:$0xff]
    %v5236 = vld [vmem:[#allocation2 + $0xb60] sm:$0xff]
    %v5237 = vld [vmem:[#allocation2 + $0xb68] sm:$0xff]
    %v5238 = vld [vmem:[#allocation2 + $0xb70] sm:$0xff]
    %v5239 = vld [vmem:[#allocation2 + $0xb78] sm:$0xff]
    %v5240 = vld [vmem:[#allocation2 + $0xb80] sm:$0xff]
    %v5241 = vld [vmem:[#allocation2 + $0xb88] sm:$0xff]
    %v5242 = vld [vmem:[#allocation2 + $0xb90] sm:$0xff]
    %v5243 = vld [vmem:[#allocation2 + $0xb98] sm:$0xff]
    %v5244 = vld [vmem:[#allocation2 + $0xba0] sm:$0xff]
    %v5245 = vld [vmem:[#allocation2 + $0xba8] sm:$0xff]
    %v5246 = vld [vmem:[#allocation2 + $0xbb0] sm:$0xff]
    %v5247 = vld [vmem:[#allocation2 + $0xbb8] sm:$0xff]
    %v5248 = vld [vmem:[#allocation2 + $0xbc0] sm:$0xff]
    %v5249 = vld [vmem:[#allocation2 + $0xbc8] sm:$0xff]
    %v5250 = vld [vmem:[#allocation2 + $0xbd0] sm:$0xff]
    %v5251 = vld [vmem:[#allocation2 + $0xbd8] sm:$0xff]
    %v5252 = vld [vmem:[#allocation2 + $0xbe0] sm:$0xff]
    %v5253 = vld [vmem:[#allocation2 + $0xbe8] sm:$0xff]
    %v5254 = vld [vmem:[#allocation2 + $0xbf0] sm:$0xff]
    %v5255 = vld [vmem:[#allocation2 + $0xbf8] sm:$0xff]
    %v5256 = vld [vmem:[#allocation2 + $0xc00] sm:$0xff]
    %v5257 = vld [vmem:[#allocation2 + $0xc08] sm:$0xff]
    %v5258 = vld [vmem:[#allocation2 + $0xc10] sm:$0xff]
    %v5259 = vld [vmem:[#allocation2 + $0xc18] sm:$0xff]
    %v5260 = vld [vmem:[#allocation2 + $0xc20] sm:$0xff]
    %v5261 = vld [vmem:[#allocation2 + $0xc28] sm:$0xff]
    %v5262 = vld [vmem:[#allocation2 + $0xc30] sm:$0xff]
    %v5263 = vld [vmem:[#allocation2 + $0xc38] sm:$0xff]
    %v5264 = vld [vmem:[#allocation2 + $0xc40] sm:$0xff]
    %v5265 = vld [vmem:[#allocation2 + $0xc48] sm:$0xff]
    %v5266 = vld [vmem:[#allocation2 + $0xc50] sm:$0xff]
    %v5267 = vld [vmem:[#allocation2 + $0xc58] sm:$0xff]
    %v5268 = vld [vmem:[#allocation2 + $0xc60] sm:$0xff]
    %v5269 = vld [vmem:[#allocation2 + $0xc68] sm:$0xff]
    %v5270 = vld [vmem:[#allocation2 + $0xc70] sm:$0xff]
    %v5271 = vld [vmem:[#allocation2 + $0xc78] sm:$0xff]
    %v5272 = vld [vmem:[#allocation2 + $0xc80] sm:$0xff]
    %v5273 = vld [vmem:[#allocation2 + $0xc88] sm:$0xff]
    %v5274 = vld [vmem:[#allocation2 + $0xc90] sm:$0xff]
    %v5275 = vld [vmem:[#allocation2 + $0xc98] sm:$0xff]
    %v5276 = vld [vmem:[#allocation2 + $0xca0] sm:$0xff]
    %v5277 = vld [vmem:[#allocation2 + $0xca8] sm:$0xff]
    %v5278 = vld [vmem:[#allocation2 + $0xcb0] sm:$0xff]
    %v5279 = vld [vmem:[#allocation2 + $0xcb8] sm:$0xff]
    %v5280 = vld [vmem:[#allocation2 + $0xcc0] sm:$0xff]
    %v5281 = vld [vmem:[#allocation2 + $0xcc8] sm:$0xff]
    %v5282 = vld [vmem:[#allocation2 + $0xcd0] sm:$0xff]
    %v5283 = vld [vmem:[#allocation2 + $0xcd8] sm:$0xff]
    %v5284 = vld [vmem:[#allocation2 + $0xce0] sm:$0xff]
    %v5285 = vld [vmem:[#allocation2 + $0xce8] sm:$0xff]
    %v5286 = vld [vmem:[#allocation2 + $0xcf0] sm:$0xff]
    %v5287 = vld [vmem:[#allocation2 + $0xcf8] sm:$0xff]
    %v5288 = vld [vmem:[#allocation2 + $0xd00] sm:$0xff]
    %v5289 = vld [vmem:[#allocation2 + $0xd08] sm:$0xff]
    %v5290 = vld [vmem:[#allocation2 + $0xd10] sm:$0xff]
    %v5291 = vld [vmem:[#allocation2 + $0xd18] sm:$0xff]
    %v5292 = vld [vmem:[#allocation2 + $0xd20] sm:$0xff]
    %v5293 = vld [vmem:[#allocation2 + $0xd28] sm:$0xff]
    %v5294 = vld [vmem:[#allocation2 + $0xd30] sm:$0xff]
    %v5295 = vld [vmem:[#allocation2 + $0xd38] sm:$0xff]
    %v5296 = vld [vmem:[#allocation2 + $0xd40] sm:$0xff]
    %v5297 = vld [vmem:[#allocation2 + $0xd48] sm:$0xff]
    %v5298 = vld [vmem:[#allocation2 + $0xd50] sm:$0xff]
    %v5299 = vld [vmem:[#allocation2 + $0xd58] sm:$0xff]
    %v5300 = vld [vmem:[#allocation2 + $0xd60] sm:$0xff]
    %v5301 = vld [vmem:[#allocation2 + $0xd68] sm:$0xff]
    %v5302 = vld [vmem:[#allocation2 + $0xd70] sm:$0xff]
    %v5303 = vld [vmem:[#allocation2 + $0xd78] sm:$0xff]
    %v5304 = vld [vmem:[#allocation2 + $0xd80] sm:$0xff]
    %v5305 = vld [vmem:[#allocation2 + $0xd88] sm:$0xff]
    %v5306 = vld [vmem:[#allocation2 + $0xd90] sm:$0xff]
    %v5307 = vld [vmem:[#allocation2 + $0xd98] sm:$0xff]
    %v5308 = vld [vmem:[#allocation2 + $0xda0] sm:$0xff]
    %v5309 = vld [vmem:[#allocation2 + $0xda8] sm:$0xff]
    %v5310 = vld [vmem:[#allocation2 + $0xdb0] sm:$0xff]
    %v5311 = vld [vmem:[#allocation2 + $0xdb8] sm:$0xff]
    %v5312 = vld [vmem:[#allocation2 + $0xdc0] sm:$0xff]
    %v5313 = vld [vmem:[#allocation2 + $0xdc8] sm:$0xff]
    %v5314 = vld [vmem:[#allocation2 + $0xdd0] sm:$0xff]
    %v5315 = vld [vmem:[#allocation2 + $0xdd8] sm:$0xff]
    %v5316 = vld [vmem:[#allocation2 + $0xde0] sm:$0xff]
    %v5317 = vld [vmem:[#allocation2 + $0xde8] sm:$0xff]
    %v5318 = vld [vmem:[#allocation2 + $0xdf0] sm:$0xff]
    %v5319 = vld [vmem:[#allocation2 + $0xdf8] sm:$0xff]
    %v5320 = vld [vmem:[#allocation2 + $0xe00] sm:$0xff]
    %v5321 = vld [vmem:[#allocation2 + $0xe08] sm:$0xff]
    %v5322 = vld [vmem:[#allocation2 + $0xe10] sm:$0xff]
    %v5323 = vld [vmem:[#allocation2 + $0xe18] sm:$0xff]
    %v5324 = vld [vmem:[#allocation2 + $0xe20] sm:$0xff]
    %v5325 = vld [vmem:[#allocation2 + $0xe28] sm:$0xff]
    %v5326 = vld [vmem:[#allocation2 + $0xe30] sm:$0xff]
    %v5327 = vld [vmem:[#allocation2 + $0xe38] sm:$0xff]
    %v5328 = vld [vmem:[#allocation2 + $0xe40] sm:$0xff]
    %v5329 = vld [vmem:[#allocation2 + $0xe48] sm:$0xff]
    %v5330 = vld [vmem:[#allocation2 + $0xe50] sm:$0xff]
    %v5331 = vld [vmem:[#allocation2 + $0xe58] sm:$0xff]
    %v5332 = vld [vmem:[#allocation2 + $0xe60] sm:$0xff]
    %v5333 = vld [vmem:[#allocation2 + $0xe68] sm:$0xff]
    %v5334 = vld [vmem:[#allocation2 + $0xe70] sm:$0xff]
    %v5335 = vld [vmem:[#allocation2 + $0xe78] sm:$0xff]
    %v5336 = vld [vmem:[#allocation2 + $0xe80] sm:$0xff]
    %v5337 = vld [vmem:[#allocation2 + $0xe88] sm:$0xff]
    %v5338 = vld [vmem:[#allocation2 + $0xe90] sm:$0xff]
    %v5339 = vld [vmem:[#allocation2 + $0xe98] sm:$0xff]
    %v5340 = vld [vmem:[#allocation2 + $0xea0] sm:$0xff]
    %v5341 = vld [vmem:[#allocation2 + $0xea8] sm:$0xff]
    %v5342 = vld [vmem:[#allocation2 + $0xeb0] sm:$0xff]
    %v5343 = vld [vmem:[#allocation2 + $0xeb8] sm:$0xff]
    %v5344 = vld [vmem:[#allocation2 + $0xec0] sm:$0xff]
    %v5345 = vld [vmem:[#allocation2 + $0xec8] sm:$0xff]
    %v5346 = vld [vmem:[#allocation2 + $0xed0] sm:$0xff]
    %v5347 = vld [vmem:[#allocation2 + $0xed8] sm:$0xff]
    %v5348 = vld [vmem:[#allocation2 + $0xee0] sm:$0xff]
    %v5349 = vld [vmem:[#allocation2 + $0xee8] sm:$0xff]
    %v5350 = vld [vmem:[#allocation2 + $0xef0] sm:$0xff]
    %v5351 = vld [vmem:[#allocation2 + $0xef8] sm:$0xff]
    %v5353 = vcombine.high %v5111, %v5111
    %v5355 = vunpack.c.l.s4 1983009808
    %v5356 = vunpack.c.0.s8 %v5355
    %v5357 = vlaneseq
    %v5358 = vshrl.u32 %v5357, 7
    %v5359 = vsub.s32 %v5356, %v5358
    %v5360 = vrot.slane %v5111, %v5359
    %v5362 = vunpack.c.l.s4 1983009808
    %v5363 = vunpack.c.0.s8 %v5362
    %v5364 = vlaneseq
    %v5365 = vshrl.u32 %v5364, 7
    %v5366 = vsub.s32 %v5363, %v5365
    %v5367 = vrot.slane %v5353, %v5366
    %v5368 = vcombine.high %v5360, %v5360
    %v5369 = vcombine.high %v5367, %v5367
    %vm5373 = vcmask 785408
    %v5374 = vsel %vm5373, %v5369, 0
    %5376 = vmatprep.subr.mxu0 %v5113
    %5377 = vmatpush1.msra.mxu0 %v5112
    %5378 = vmatprep.subr.mxu0 %v5117
    %5379 = vmatpush1.msra.mxu0 %v5116
    %5380 = vmatprep.subr.mxu0 %v5121
    %5381 = vmatpush1.msra.mxu0 %v5120
    %5382 = vmatprep.subr.mxu0 %v5125
    %5383 = vmatpush1.msra.mxu0 %v5124
    %5384 = vmatprep.subr.mxu0 %v5129
    %5385 = vmatpush1.msra.mxu0 %v5128
    %5386 = vmatprep.subr.mxu0 %v5133
    %5387 = vmatpush1.msra.mxu0 %v5132
    %5388 = vmatprep.subr.mxu0 %v5137
    %5389 = vmatpush1.msra.mxu0 %v5136
    %5390 = vmatprep.subr.mxu0 %v5141
    %5391 = vmatpush1.msra.mxu0 %v5140
    %5392 = vmatprep.subr.mxu0 %v5145
    %5393 = vmatpush1.msra.mxu0 %v5144
    %5394 = vmatprep.subr.mxu0 %v5149
    %5395 = vmatpush1.msra.mxu0 %v5148
    %5396 = vmatprep.subr.mxu0 %v5153
    %5397 = vmatpush1.msra.mxu0 %v5152
    %5398 = vmatprep.subr.mxu0 %v5157
    %5399 = vmatpush1.msra.mxu0 %v5156
    %5400 = vmatprep.subr.mxu0 %v5161
    %5401 = vmatpush1.msra.mxu0 %v5160
    %5402 = vmatprep.subr.mxu0 %v5165
    %5403 = vmatpush1.msra.mxu0 %v5164
    %5404 = vmatprep.subr.mxu0 %v5169
    %5405 = vmatpush1.msra.mxu0 %v5168
    %5406 = vmatprep.subr.mxu0 %v5173
    %5407 = vmatpush1.msra.mxu0 %v5172
    %5408 = vmatprep.subr.mxu0 %v5177
    %5409 = vmatpush1.msra.mxu0 %v5176
    %5410 = vmatprep.subr.mxu0 %v5181
    %5411 = vmatpush1.msra.mxu0 %v5180
    %5412 = vmatprep.subr.mxu0 %v5185
    %5413 = vmatpush1.msra.mxu0 %v5184
    %5414 = vmatprep.subr.mxu0 %v5189
    %5415 = vmatpush1.msra.mxu0 %v5188
    %5416 = vmatprep.subr.mxu0 %v5193
    %5417 = vmatpush1.msra.mxu0 %v5192
    %5418 = vmatprep.subr.mxu0 %v5197
    %5419 = vmatpush1.msra.mxu0 %v5196
    %5420 = vmatprep.subr.mxu0 %v5201
    %5421 = vmatpush1.msra.mxu0 %v5200
    %5422 = vmatprep.subr.mxu0 %v5205
    %5423 = vmatpush1.msra.mxu0 %v5204
    %5424 = vmatprep.subr.mxu0 %v5209
    %5425 = vmatpush1.msra.mxu0 %v5208
    %5426 = vmatprep.subr.mxu0 %v5213
    %5427 = vmatpush1.msra.mxu0 %v5212
    %5428 = vmatprep.subr.mxu0 %v5217
    %5429 = vmatpush1.msra.mxu0 %v5216
    %5430 = vmatprep.subr.mxu0 %v5221
    %5431 = vmatpush1.msra.mxu0 %v5220
    %5432 = vmatprep.subr.mxu0 %v5225
    %5433 = vmatpush1.msra.mxu0 %v5224
    %5434 = vmatprep.subr.mxu0 %v5229
    %5435 = vmatpush1.msra.mxu0 %v5228
    %5436 = vmatprep.subr.mxu0 %v5233
    %5437 = vmatpush1.msra.mxu0 %v5232
    %5438 = vmatprep.subr.mxu0 %v5237
    %5439 = vmatpush1.msra.mxu0 %v5236
    %5440 = vmatprep.mubr.f32.mxu0 %v5368
    %5441 = vmatmul.mubr.f32.gmra.mrb[0].mxu0 %v5360
    %v5442 = vpop.f32.mrb[0].mxu0
    %v5443 = vadd.f32 0.0, %v5442
    %v5444 = vpop.f32.mrb[0].mxu0
    %v5445 = vadd.f32 0.0, %v5444
    %5446 = vdwg.mxu0
    %5447 = vmatprep.subr.mxu0 %v5241
    %5448 = vmatpush1.msra.mxu0 %v5240
    %5449 = vmatprep.subr.mxu0 %v5245
    %5450 = vmatpush1.msra.mxu0 %v5244
    %5451 = vmatprep.subr.mxu0 %v5249
    %5452 = vmatpush1.msra.mxu0 %v5248
    %5453 = vmatprep.subr.mxu0 %v5253
    %5454 = vmatpush1.msra.mxu0 %v5252
    %5455 = vmatprep.subr.mxu0 %v5257
    %5456 = vmatpush1.msra.mxu0 %v5256
    %5457 = vmatprep.subr.mxu0 %v5261
    %5458 = vmatpush1.msra.mxu0 %v5260
    %5459 = vmatprep.subr.mxu0 %v5265
    %5460 = vmatpush1.msra.mxu0 %v5264
    %5461 = vmatprep.subr.mxu0 %v5269
    %5462 = vmatpush1.msra.mxu0 %v5268
    %5463 = vmatprep.subr.mxu0 %v5273
    %5464 = vmatpush1.msra.mxu0 %v5272
    %5465 = vmatprep.subr.mxu0 %v5277
    %5466 = vmatpush1.msra.mxu0 %v5276
    %5467 = vmatprep.subr.mxu0 %v5281
    %5468 = vmatpush1.msra.mxu0 %v5280
    %5469 = vmatprep.subr.mxu0 %v5285
    %5470 = vmatpush1.msra.mxu0 %v5284
    %5471 = vmatprep.subr.mxu0 %v5289
    %5472 = vmatpush1.msra.mxu0 %v5288
    %5473 = vmatprep.subr.mxu0 %v5293
    %5474 = vmatpush1.msra.mxu0 %v5292
    %5475 = vmatprep.subr.mxu0 %v5297
    %5476 = vmatpush1.msra.mxu0 %v5296
    %5477 = vmatprep.subr.mxu0 %v5301
    %5478 = vmatpush1.msra.mxu0 %v5300
    %5479 = vmatprep.subr.mxu0 %v5305
    %5480 = vmatpush1.msra.mxu0 %v5304
    %5481 = vmatprep.subr.mxu0 %v5309
    %5482 = vmatpush1.msra.mxu0 %v5308
    %5483 = vmatprep.subr.mxu0 %v5313
    %5484 = vmatpush1.msra.mxu0 %v5312
    %5485 = vmatprep.subr.mxu0 %v5317
    %5486 = vmatpush1.msra.mxu0 %v5316
    %5487 = vmatprep.subr.mxu0 %v5321
    %5488 = vmatpush1.msra.mxu0 %v5320
    %5489 = vmatprep.subr.mxu0 %v5325
    %5490 = vmatpush1.msra.mxu0 %v5324
    %5491 = vmatprep.subr.mxu0 %v5329
    %5492 = vmatpush1.msra.mxu0 %v5328
    %5493 = vmatprep.subr.mxu0 %v5333
    %5494 = vmatpush1.msra.mxu0 %v5332
    %5495 = vmatprep.subr.mxu0 %v5337
    %5496 = vmatpush1.msra.mxu0 %v5336
    %5497 = vmatprep.subr.mxu0 %v5341
    %5498 = vmatpush1.msra.mxu0 %v5340
    %5499 = vmatprep.subr.mxu0 %v5345
    %5500 = vmatpush1.msra.mxu0 %v5344
    %5501 = vmatprep.subr.mxu0 %v5349
    %5502 = vmatpush1.msra.mxu0 %v5348
    %5503 = vmatprep.subr.mxu0 0.0
    %5504 = vmatpush1.msra.mxu0 0.0
    %5505 = vmatprep.subr.mxu0 0.0
    %5506 = vmatpush1.msra.mxu0 0.0
    %5507 = vmatprep.subr.mxu0 0.0
    %5508 = vmatpush1.msra.mxu0 0.0
    %5509 = vmatprep.subr.mxu0 0.0
    %5510 = vmatpush1.msra.mxu0 0.0
    %5511 = vmatprep.mubr.f32.mxu0 %v5374
    %5512 = vmatmul.mubr.f32.gmra.mrb[0].mxu0 %v5367
    %v5513 = vpop.f32.mrb[0].mxu0
    %v5514 = vadd.f32 %v5443, %v5513
    %v5515 = vpop.f32.mrb[0].mxu0
    %v5516 = vadd.f32 %v5445, %v5515
    %5517 = vdwg.mxu0
    %5518 = vmatprep.subr.mxu0 %v5115
    %5519 = vmatpush1.msra.mxu0 %v5114
    %5520 = vmatprep.subr.mxu0 %v5119
    %5521 = vmatpush1.msra.mxu0 %v5118
    %5522 = vmatprep.subr.mxu0 %v5123
    %5523 = vmatpush1.msra.mxu0 %v5122
    %5524 = vmatprep.subr.mxu0 %v5127
    %5525 = vmatpush1.msra.mxu0 %v5126
    %5526 = vmatprep.subr.mxu0 %v5131
    %5527 = vmatpush1.msra.mxu0 %v5130
    %5528 = vmatprep.subr.mxu0 %v5135
    %5529 = vmatpush1.msra.mxu0 %v5134
    %5530 = vmatprep.subr.mxu0 %v5139
    %5531 = vmatpush1.msra.mxu0 %v5138
    %5532 = vmatprep.subr.mxu0 %v5143
    %5533 = vmatpush1.msra.mxu0 %v5142
    %5534 = vmatprep.subr.mxu0 %v5147
    %5535 = vmatpush1.msra.mxu0 %v5146
    %5536 = vmatprep.subr.mxu0 %v5151
    %5537 = vmatpush1.msra.mxu0 %v5150
    %5538 = vmatprep.subr.mxu0 %v5155
    %5539 = vmatpush1.msra.mxu0 %v5154
    %5540 = vmatprep.subr.mxu0 %v5159
    %5541 = vmatpush1.msra.mxu0 %v5158
    %5542 = vmatprep.subr.mxu0 %v5163
    %5543 = vmatpush1.msra.mxu0 %v5162
    %5544 = vmatprep.subr.mxu0 %v5167
    %5545 = vmatpush1.msra.mxu0 %v5166
    %5546 = vmatprep.subr.mxu0 %v5171
    %5547 = vmatpush1.msra.mxu0 %v5170
    %5548 = vmatprep.subr.mxu0 %v5175
    %5549 = vmatpush1.msra.mxu0 %v5174
    %5550 = vmatprep.subr.mxu0 %v5179
    %5551 = vmatpush1.msra.mxu0 %v5178
    %5552 = vmatprep.subr.mxu0 %v5183
    %5553 = vmatpush1.msra.mxu0 %v5182
    %5554 = vmatprep.subr.mxu0 %v5187
    %5555 = vmatpush1.msra.mxu0 %v5186
    %5556 = vmatprep.subr.mxu0 %v5191
    %5557 = vmatpush1.msra.mxu0 %v5190
    %5558 = vmatprep.subr.mxu0 %v5195
    %5559 = vmatpush1.msra.mxu0 %v5194
    %5560 = vmatprep.subr.mxu0 %v5199
    %5561 = vmatpush1.msra.mxu0 %v5198
    %5562 = vmatprep.subr.mxu0 %v5203
    %5563 = vmatpush1.msra.mxu0 %v5202
    %5564 = vmatprep.subr.mxu0 %v5207
    %5565 = vmatpush1.msra.mxu0 %v5206
    %5566 = vmatprep.subr.mxu0 %v5211
    %5567 = vmatpush1.msra.mxu0 %v5210
    %5568 = vmatprep.subr.mxu0 %v5215
    %5569 = vmatpush1.msra.mxu0 %v5214
    %5570 = vmatprep.subr.mxu0 %v5219
    %5571 = vmatpush1.msra.mxu0 %v5218
    %5572 = vmatprep.subr.mxu0 %v5223
    %5573 = vmatpush1.msra.mxu0 %v5222
    %5574 = vmatprep.subr.mxu0 %v5227
    %5575 = vmatpush1.msra.mxu0 %v5226
    %5576 = vmatprep.subr.mxu0 %v5231
    %5577 = vmatpush1.msra.mxu0 %v5230
    %5578 = vmatprep.subr.mxu0 %v5235
    %5579 = vmatpush1.msra.mxu0 %v5234
    %5580 = vmatprep.subr.mxu0 %v5239
    %5581 = vmatpush1.msra.mxu0 %v5238
    %5582 = vmatprep.mubr.f32.mxu0 %v5368
    %5583 = vmatmul.mubr.f32.gmra.mrb[0].mxu0 %v5360
    %v5584 = vpop.f32.mrb[0].mxu0
    %v5585 = vadd.f32 0.0, %v5584
    %v5586 = vpop.f32.mrb[0].mxu0
    %v5587 = vadd.f32 0.0, %v5586
    %5588 = vdwg.mxu0
    %5589 = vmatprep.subr.mxu0 %v5243
    %5590 = vmatpush1.msra.mxu0 %v5242
    %5591 = vmatprep.subr.mxu0 %v5247
    %5592 = vmatpush1.msra.mxu0 %v5246
    %5593 = vmatprep.subr.mxu0 %v5251
    %5594 = vmatpush1.msra.mxu0 %v5250
    %5595 = vmatprep.subr.mxu0 %v5255
    %5596 = vmatpush1.msra.mxu0 %v5254
    %5597 = vmatprep.subr.mxu0 %v5259
    %5598 = vmatpush1.msra.mxu0 %v5258
    %5599 = vmatprep.subr.mxu0 %v5263
    %5600 = vmatpush1.msra.mxu0 %v5262
    %5601 = vmatprep.subr.mxu0 %v5267
    %5602 = vmatpush1.msra.mxu0 %v5266
    %5603 = vmatprep.subr.mxu0 %v5271
    %5604 = vmatpush1.msra.mxu0 %v5270
    %5605 = vmatprep.subr.mxu0 %v5275
    %5606 = vmatpush1.msra.mxu0 %v5274
    %5607 = vmatprep.subr.mxu0 %v5279
    %5608 = vmatpush1.msra.mxu0 %v5278
    %5609 = vmatprep.subr.mxu0 %v5283
    %5610 = vmatpush1.msra.mxu0 %v5282
    %5611 = vmatprep.subr.mxu0 %v5287
    %5612 = vmatpush1.msra.mxu0 %v5286
    %5613 = vmatprep.subr.mxu0 %v5291
    %5614 = vmatpush1.msra.mxu0 %v5290
    %5615 = vmatprep.subr.mxu0 %v5295
    %5616 = vmatpush1.msra.mxu0 %v5294
    %5617 = vmatprep.subr.mxu0 %v5299
    %5618 = vmatpush1.msra.mxu0 %v5298
    %5619 = vmatprep.subr.mxu0 %v5303
    %5620 = vmatpush1.msra.mxu0 %v5302
    %5621 = vmatprep.subr.mxu0 %v5307
    %5622 = vmatpush1.msra.mxu0 %v5306
    %5623 = vmatprep.subr.mxu0 %v5311
    %5624 = vmatpush1.msra.mxu0 %v5310
    %5625 = vmatprep.subr.mxu0 %v5315
    %5626 = vmatpush1.msra.mxu0 %v5314
    %5627 = vmatprep.subr.mxu0 %v5319
    %5628 = vmatpush1.msra.mxu0 %v5318
    %5629 = vmatprep.subr.mxu0 %v5323
    %5630 = vmatpush1.msra.mxu0 %v5322
    %5631 = vmatprep.subr.mxu0 %v5327
    %5632 = vmatpush1.msra.mxu0 %v5326
    %5633 = vmatprep.subr.mxu0 %v5331
    %5634 = vmatpush1.msra.mxu0 %v5330
    %5635 = vmatprep.subr.mxu0 %v5335
    %5636 = vmatpush1.msra.mxu0 %v5334
    %5637 = vmatprep.subr.mxu0 %v5339
    %5638 = vmatpush1.msra.mxu0 %v5338
    %5639 = vmatprep.subr.mxu0 %v5343
    %5640 = vmatpush1.msra.mxu0 %v5342
    %5641 = vmatprep.subr.mxu0 %v5347
    %5642 = vmatpush1.msra.mxu0 %v5346
    %5643 = vmatprep.subr.mxu0 %v5351
    %5644 = vmatpush1.msra.mxu0 %v5350
    %5645 = vmatprep.subr.mxu0 0.0
    %5646 = vmatpush1.msra.mxu0 0.0
    %5647 = vmatprep.subr.mxu0 0.0
    %5648 = vmatpush1.msra.mxu0 0.0
    %5649 = vmatprep.subr.mxu0 0.0
    %5650 = vmatpush1.msra.mxu0 0.0
    %5651 = vmatprep.subr.mxu0 0.0
    %5652 = vmatpush1.msra.mxu0 0.0
    %5653 = vmatprep.mubr.f32.mxu0 %v5374
    %5654 = vmatmul.mubr.f32.gmra.mrb[0].mxu0 %v5367
    %v5655 = vpop.f32.mrb[0].mxu0
    %v5656 = vadd.f32 %v5585, %v5655
    %v5657 = vpop.f32.mrb[0].mxu0
    %v5658 = vadd.f32 %v5587, %v5657
    %5659 = vdwg.mxu0
    %v5661 = vcombine.high %v4870, %v4870
    %v5663 = vunpack.c.l.s4 1983009808
    %v5664 = vunpack.c.0.s8 %v5663
    %v5665 = vlaneseq
    %v5666 = vshrl.u32 %v5665, 7
    %v5667 = vsub.s32 %v5664, %v5666
    %v5668 = vrot.slane %v4870, %v5667
    %v5670 = vunpack.c.l.s4 1983009808
    %v5671 = vunpack.c.0.s8 %v5670
    %v5672 = vlaneseq
    %v5673 = vshrl.u32 %v5672, 7
    %v5674 = vsub.s32 %v5671, %v5673
    %v5675 = vrot.slane %v5661, %v5674
    %v5676 = vcombine.high %v5668, %v5668
    %v5677 = vcombine.high %v5675, %v5675
    %v5681 = vsel %vm5373, %v5677, 0
    %5683 = vmatprep.subr.mxu0 %v4872
    %5684 = vmatpush1.msra.mxu0 %v4871
    %5685 = vmatprep.subr.mxu0 %v4876
    %5686 = vmatpush1.msra.mxu0 %v4875
    %5687 = vmatprep.subr.mxu0 %v4880
    %5688 = vmatpush1.msra.mxu0 %v4879
    %5689 = vmatprep.subr.mxu0 %v4884
    %5690 = vmatpush1.msra.mxu0 %v4883
    %5691 = vmatprep.subr.mxu0 %v4888
    %5692 = vmatpush1.msra.mxu0 %v4887
    %5693 = vmatprep.subr.mxu0 %v4892
    %5694 = vmatpush1.msra.mxu0 %v4891
    %5695 = vmatprep.subr.mxu0 %v4896
    %5696 = vmatpush1.msra.mxu0 %v4895
    %5697 = vmatprep.subr.mxu0 %v4900
    %5698 = vmatpush1.msra.mxu0 %v4899
    %5699 = vmatprep.subr.mxu0 %v4904
    %5700 = vmatpush1.msra.mxu0 %v4903
    %5701 = vmatprep.subr.mxu0 %v4908
    %5702 = vmatpush1.msra.mxu0 %v4907
    %5703 = vmatprep.subr.mxu0 %v4912
    %5704 = vmatpush1.msra.mxu0 %v4911
    %5705 = vmatprep.subr.mxu0 %v4916
    %5706 = vmatpush1.msra.mxu0 %v4915
    %5707 = vmatprep.subr.mxu0 %v4920
    %5708 = vmatpush1.msra.mxu0 %v4919
    %5709 = vmatprep.subr.mxu0 %v4924
    %5710 = vmatpush1.msra.mxu0 %v4923
    %5711 = vmatprep.subr.mxu0 %v4928
    %5712 = vmatpush1.msra.mxu0 %v4927
    %5713 = vmatprep.subr.mxu0 %v4932
    %5714 = vmatpush1.msra.mxu0 %v4931
    %5715 = vmatprep.subr.mxu0 %v4936
    %5716 = vmatpush1.msra.mxu0 %v4935
    %5717 = vmatprep.subr.mxu0 %v4940
    %5718 = vmatpush1.msra.mxu0 %v4939
    %5719 = vmatprep.subr.mxu0 %v4944
    %5720 = vmatpush1.msra.mxu0 %v4943
    %5721 = vmatprep.subr.mxu0 %v4948
    %5722 = vmatpush1.msra.mxu0 %v4947
    %5723 = vmatprep.subr.mxu0 %v4952
    %5724 = vmatpush1.msra.mxu0 %v4951
    %5725 = vmatprep.subr.mxu0 %v4956
    %5726 = vmatpush1.msra.mxu0 %v4955
    %5727 = vmatprep.subr.mxu0 %v4960
    %5728 = vmatpush1.msra.mxu0 %v4959
    %5729 = vmatprep.subr.mxu0 %v4964
    %5730 = vmatpush1.msra.mxu0 %v4963
    %5731 = vmatprep.subr.mxu0 %v4968
    %5732 = vmatpush1.msra.mxu0 %v4967
    %5733 = vmatprep.subr.mxu0 %v4972
    %5734 = vmatpush1.msra.mxu0 %v4971
    %5735 = vmatprep.subr.mxu0 %v4976
    %5736 = vmatpush1.msra.mxu0 %v4975
    %5737 = vmatprep.subr.mxu0 %v4980
    %5738 = vmatpush1.msra.mxu0 %v4979
    %5739 = vmatprep.subr.mxu0 %v4984
    %5740 = vmatpush1.msra.mxu0 %v4983
    %5741 = vmatprep.subr.mxu0 %v4988
    %5742 = vmatpush1.msra.mxu0 %v4987
    %5743 = vmatprep.subr.mxu0 %v4992
    %5744 = vmatpush1.msra.mxu0 %v4991
    %5745 = vmatprep.subr.mxu0 %v4996
    %5746 = vmatpush1.msra.mxu0 %v4995
    %5747 = vmatprep.mubr.f32.mxu0 %v5676
    %5748 = vmatmul.mubr.f32.gmra.mrb[0].mxu0 %v5668
    %v5749 = vpop.f32.mrb[0].mxu0
    %v5750 = vadd.f32 %v5514, %v5749
    %v5751 = vpop.f32.mrb[0].mxu0
    %v5752 = vadd.f32 %v5516, %v5751
    %5753 = vdwg.mxu0
    %5754 = vmatprep.subr.mxu0 %v5000
    %5755 = vmatpush1.msra.mxu0 %v4999
    %5756 = vmatprep.subr.mxu0 %v5004
    %5757 = vmatpush1.msra.mxu0 %v5003
    %5758 = vmatprep.subr.mxu0 %v5008
    %5759 = vmatpush1.msra.mxu0 %v5007
    %5760 = vmatprep.subr.mxu0 %v5012
    %5761 = vmatpush1.msra.mxu0 %v5011
    %5762 = vmatprep.subr.mxu0 %v5016
    %5763 = vmatpush1.msra.mxu0 %v5015
    %5764 = vmatprep.subr.mxu0 %v5020
    %5765 = vmatpush1.msra.mxu0 %v5019
    %5766 = vmatprep.subr.mxu0 %v5024
    %5767 = vmatpush1.msra.mxu0 %v5023
    %5768 = vmatprep.subr.mxu0 %v5028
    %5769 = vmatpush1.msra.mxu0 %v5027
    %5770 = vmatprep.subr.mxu0 %v5032
    %5771 = vmatpush1.msra.mxu0 %v5031
    %5772 = vmatprep.subr.mxu0 %v5036
    %5773 = vmatpush1.msra.mxu0 %v5035
    %5774 = vmatprep.subr.mxu0 %v5040
    %5775 = vmatpush1.msra.mxu0 %v5039
    %5776 = vmatprep.subr.mxu0 %v5044
    %5777 = vmatpush1.msra.mxu0 %v5043
    %5778 = vmatprep.subr.mxu0 %v5048
    %5779 = vmatpush1.msra.mxu0 %v5047
    %5780 = vmatprep.subr.mxu0 %v5052
    %5781 = vmatpush1.msra.mxu0 %v5051
    %5782 = vmatprep.subr.mxu0 %v5056
    %5783 = vmatpush1.msra.mxu0 %v5055
    %5784 = vmatprep.subr.mxu0 %v5060
    %5785 = vmatpush1.msra.mxu0 %v5059
    %5786 = vmatprep.subr.mxu0 %v5064
    %5787 = vmatpush1.msra.mxu0 %v5063
    %5788 = vmatprep.subr.mxu0 %v5068
    %5789 = vmatpush1.msra.mxu0 %v5067
    %5790 = vmatprep.subr.mxu0 %v5072
    %5791 = vmatpush1.msra.mxu0 %v5071
    %5792 = vmatprep.subr.mxu0 %v5076
    %5793 = vmatpush1.msra.mxu0 %v5075
    %5794 = vmatprep.subr.mxu0 %v5080
    %5795 = vmatpush1.msra.mxu0 %v5079
    %5796 = vmatprep.subr.mxu0 %v5084
    %5797 = vmatpush1.msra.mxu0 %v5083
    %5798 = vmatprep.subr.mxu0 %v5088
    %5799 = vmatpush1.msra.mxu0 %v5087
    %5800 = vmatprep.subr.mxu0 %v5092
    %5801 = vmatpush1.msra.mxu0 %v5091
    %5802 = vmatprep.subr.mxu0 %v5096
    %5803 = vmatpush1.msra.mxu0 %v5095
    %5804 = vmatprep.subr.mxu0 %v5100
    %5805 = vmatpush1.msra.mxu0 %v5099
    %5806 = vmatprep.subr.mxu0 %v5104
    %5807 = vmatpush1.msra.mxu0 %v5103
    %5808 = vmatprep.subr.mxu0 %v5108
    %5809 = vmatpush1.msra.mxu0 %v5107
    %5810 = vmatprep.subr.mxu0 0.0
    %5811 = vmatpush1.msra.mxu0 0.0
    %5812 = vmatprep.subr.mxu0 0.0
    %5813 = vmatpush1.msra.mxu0 0.0
    %5814 = vmatprep.subr.mxu0 0.0
    %5815 = vmatpush1.msra.mxu0 0.0
    %5816 = vmatprep.subr.mxu0 0.0
    %5817 = vmatpush1.msra.mxu0 0.0
    %5818 = vmatprep.mubr.f32.mxu0 %v5681
    %5819 = vmatmul.mubr.f32.gmra.mrb[0].mxu0 %v5675
    %v5820 = vpop.f32.mrb[0].mxu0
    %v5821 = vadd.f32 %v5750, %v5820
    %v5822 = vpop.f32.mrb[0].mxu0
    %v5823 = vadd.f32 %v5752, %v5822
    %5824 = vdwg.mxu0
    %5825 = vmatprep.subr.mxu0 %v4874
    %5826 = vmatpush1.msra.mxu0 %v4873
    %5827 = vmatprep.subr.mxu0 %v4878
    %5828 = vmatpush1.msra.mxu0 %v4877
    %5829 = vmatprep.subr.mxu0 %v4882
    %5830 = vmatpush1.msra.mxu0 %v4881
    %5831 = vmatprep.subr.mxu0 %v4886
    %5832 = vmatpush1.msra.mxu0 %v4885
    %5833 = vmatprep.subr.mxu0 %v4890
    %5834 = vmatpush1.msra.mxu0 %v4889
    %5835 = vmatprep.subr.mxu0 %v4894
    %5836 = vmatpush1.msra.mxu0 %v4893
    %5837 = vmatprep.subr.mxu0 %v4898
    %5838 = vmatpush1.msra.mxu0 %v4897
    %5839 = vmatprep.subr.mxu0 %v4902
    %5840 = vmatpush1.msra.mxu0 %v4901
    %5841 = vmatprep.subr.mxu0 %v4906
    %5842 = vmatpush1.msra.mxu0 %v4905
    %5843 = vmatprep.subr.mxu0 %v4910
    %5844 = vmatpush1.msra.mxu0 %v4909
    %5845 = vmatprep.subr.mxu0 %v4914
    %5846 = vmatpush1.msra.mxu0 %v4913
    %5847 = vmatprep.subr.mxu0 %v4918
    %5848 = vmatpush1.msra.mxu0 %v4917
    %5849 = vmatprep.subr.mxu0 %v4922
    %5850 = vmatpush1.msra.mxu0 %v4921
    %5851 = vmatprep.subr.mxu0 %v4926
    %5852 = vmatpush1.msra.mxu0 %v4925
    %5853 = vmatprep.subr.mxu0 %v4930
    %5854 = vmatpush1.msra.mxu0 %v4929
    %5855 = vmatprep.subr.mxu0 %v4934
    %5856 = vmatpush1.msra.mxu0 %v4933
    %5857 = vmatprep.subr.mxu0 %v4938
    %5858 = vmatpush1.msra.mxu0 %v4937
    %5859 = vmatprep.subr.mxu0 %v4942
    %5860 = vmatpush1.msra.mxu0 %v4941
    %5861 = vmatprep.subr.mxu0 %v4946
    %5862 = vmatpush1.msra.mxu0 %v4945
    %5863 = vmatprep.subr.mxu0 %v4950
    %5864 = vmatpush1.msra.mxu0 %v4949
    %5865 = vmatprep.subr.mxu0 %v4954
    %5866 = vmatpush1.msra.mxu0 %v4953
    %5867 = vmatprep.subr.mxu0 %v4958
    %5868 = vmatpush1.msra.mxu0 %v4957
    %5869 = vmatprep.subr.mxu0 %v4962
    %5870 = vmatpush1.msra.mxu0 %v4961
    %5871 = vmatprep.subr.mxu0 %v4966
    %5872 = vmatpush1.msra.mxu0 %v4965
    %5873 = vmatprep.subr.mxu0 %v4970
    %5874 = vmatpush1.msra.mxu0 %v4969
    %5875 = vmatprep.subr.mxu0 %v4974
    %5876 = vmatpush1.msra.mxu0 %v4973
    %5877 = vmatprep.subr.mxu0 %v4978
    %5878 = vmatpush1.msra.mxu0 %v4977
    %5879 = vmatprep.subr.mxu0 %v4982
    %5880 = vmatpush1.msra.mxu0 %v4981
    %5881 = vmatprep.subr.mxu0 %v4986
    %5882 = vmatpush1.msra.mxu0 %v4985
    %5883 = vmatprep.subr.mxu0 %v4990
    %5884 = vmatpush1.msra.mxu0 %v4989
    %5885 = vmatprep.subr.mxu0 %v4994
    %5886 = vmatpush1.msra.mxu0 %v4993
    %5887 = vmatprep.subr.mxu0 %v4998
    %5888 = vmatpush1.msra.mxu0 %v4997
    %5889 = vmatprep.mubr.f32.mxu0 %v5676
    %5890 = vmatmul.mubr.f32.gmra.mrb[0].mxu0 %v5668
    %v5891 = vpop.f32.mrb[0].mxu0
    %v5892 = vadd.f32 %v5656, %v5891
    %v5893 = vpop.f32.mrb[0].mxu0
    %v5894 = vadd.f32 %v5658, %v5893
    %5895 = vdwg.mxu0
    %5896 = vmatprep.subr.mxu0 %v5002
    %5897 = vmatpush1.msra.mxu0 %v5001
    %5898 = vmatprep.subr.mxu0 %v5006
    %5899 = vmatpush1.msra.mxu0 %v5005
    %5900 = vmatprep.subr.mxu0 %v5010
    %5901 = vmatpush1.msra.mxu0 %v5009
    %5902 = vmatprep.subr.mxu0 %v5014
    %5903 = vmatpush1.msra.mxu0 %v5013
    %5904 = vmatprep.subr.mxu0 %v5018
    %5905 = vmatpush1.msra.mxu0 %v5017
    %5906 = vmatprep.subr.mxu0 %v5022
    %5907 = vmatpush1.msra.mxu0 %v5021
    %5908 = vmatprep.subr.mxu0 %v5026
    %5909 = vmatpush1.msra.mxu0 %v5025
    %5910 = vmatprep.subr.mxu0 %v5030
    %5911 = vmatpush1.msra.mxu0 %v5029
    %5912 = vmatprep.subr.mxu0 %v5034
    %5913 = vmatpush1.msra.mxu0 %v5033
    %5914 = vmatprep.subr.mxu0 %v5038
    %5915 = vmatpush1.msra.mxu0 %v5037
    %5916 = vmatprep.subr.mxu0 %v5042
    %5917 = vmatpush1.msra.mxu0 %v5041
    %5918 = vmatprep.subr.mxu0 %v5046
    %5919 = vmatpush1.msra.mxu0 %v5045
    %5920 = vmatprep.subr.mxu0 %v5050
    %5921 = vmatpush1.msra.mxu0 %v5049
    %5922 = vmatprep.subr.mxu0 %v5054
    %5923 = vmatpush1.msra.mxu0 %v5053
    %5924 = vmatprep.subr.mxu0 %v5058
    %5925 = vmatpush1.msra.mxu0 %v5057
    %5926 = vmatprep.subr.mxu0 %v5062
    %5927 = vmatpush1.msra.mxu0 %v5061
    %5928 = vmatprep.subr.mxu0 %v5066
    %5929 = vmatpush1.msra.mxu0 %v5065
    %5930 = vmatprep.subr.mxu0 %v5070
    %5931 = vmatpush1.msra.mxu0 %v5069
    %5932 = vmatprep.subr.mxu0 %v5074
    %5933 = vmatpush1.msra.mxu0 %v5073
    %5934 = vmatprep.subr.mxu0 %v5078
    %5935 = vmatpush1.msra.mxu0 %v5077
    %5936 = vmatprep.subr.mxu0 %v5082
    %5937 = vmatpush1.msra.mxu0 %v5081
    %5938 = vmatprep.subr.mxu0 %v5086
    %5939 = vmatpush1.msra.mxu0 %v5085
    %5940 = vmatprep.subr.mxu0 %v5090
    %5941 = vmatpush1.msra.mxu0 %v5089
    %5942 = vmatprep.subr.mxu0 %v5094
    %5943 = vmatpush1.msra.mxu0 %v5093
    %5944 = vmatprep.subr.mxu0 %v5098
    %5945 = vmatpush1.msra.mxu0 %v5097
    %5946 = vmatprep.subr.mxu0 %v5102
    %5947 = vmatpush1.msra.mxu0 %v5101
    %5948 = vmatprep.subr.mxu0 %v5106
    %5949 = vmatpush1.msra.mxu0 %v5105
    %5950 = vmatprep.subr.mxu0 %v5110
    %5951 = vmatpush1.msra.mxu0 %v5109
    %5952 = vmatprep.subr.mxu0 0.0
    %5953 = vmatpush1.msra.mxu0 0.0
    %5954 = vmatprep.subr.mxu0 0.0
    %5955 = vmatpush1.msra.mxu0 0.0
    %5956 = vmatprep.subr.mxu0 0.0
    %5957 = vmatpush1.msra.mxu0 0.0
    %5958 = vmatprep.subr.mxu0 0.0
    %5959 = vmatpush1.msra.mxu0 0.0
    %5960 = vmatprep.mubr.f32.mxu0 %v5681
    %5961 = vmatmul.mubr.f32.gmra.mrb[0].mxu0 %v5675
    %v5962 = vpop.f32.mrb[0].mxu0
    %v5963 = vadd.f32 %v5892, %v5962
    %v5964 = vpop.f32.mrb[0].mxu0
    %v5965 = vadd.f32 %v5894, %v5964
    %5966 = vdwg.mxu0
    %v5967 = vld [vmem:[%s10] sm:$0xff]
    %v5968 = vld [vmem:[%s10 + $0x8] sm:$0xf]
    %v5969 = vld [vmem:[#allocation2 + $0xf00] sm:$0xff]
    %v5970 = vld [vmem:[#allocation2 + $0xf08] sm:$0xff]
    %v5971 = vld [vmem:[#allocation2 + $0xf10] sm:$0xff]
    %v5972 = vld [vmem:[#allocation2 + $0xf18] sm:$0xff]
    %v5973 = vld [vmem:[#allocation2 + $0xf20] sm:$0xff]
    %v5974 = vld [vmem:[#allocation2 + $0xf28] sm:$0xff]
    %v5975 = vld [vmem:[#allocation2 + $0xf30] sm:$0xff]
    %v5976 = vld [vmem:[#allocation2 + $0xf38] sm:$0xff]
    %v5977 = vld [vmem:[#allocation2 + $0xf40] sm:$0xff]
    %v5978 = vld [vmem:[#allocation2 + $0xf48] sm:$0xff]
    %v5979 = vld [vmem:[#allocation2 + $0xf50] sm:$0xff]
    %v5980 = vld [vmem:[#allocation2 + $0xf58] sm:$0xff]
    %v5981 = vld [vmem:[#allocation2 + $0xf60] sm:$0xff]
    %v5982 = vld [vmem:[#allocation2 + $0xf68] sm:$0xff]
    %v5983 = vld [vmem:[#allocation2 + $0xf70] sm:$0xff]
    %v5984 = vld [vmem:[#allocation2 + $0xf78] sm:$0xff]
    %v5985 = vld [vmem:[#allocation2 + $0xf80] sm:$0xff]
    %v5986 = vld [vmem:[#allocation2 + $0xf88] sm:$0xff]
    %v5987 = vld [vmem:[#allocation2 + $0xf90] sm:$0xff]
    %v5988 = vld [vmem:[#allocation2 + $0xf98] sm:$0xff]
    %v5989 = vld [vmem:[#allocation2 + $0xfa0] sm:$0xff]
    %v5990 = vld [vmem:[#allocation2 + $0xfa8] sm:$0xff]
    %v5991 = vld [vmem:[#allocation2 + $0xfb0] sm:$0xff]
    %v5992 = vld [vmem:[#allocation2 + $0xfb8] sm:$0xff]
    %v5993 = vld [vmem:[#allocation2 + $0xfc0] sm:$0xff]
    %v5994 = vld [vmem:[#allocation2 + $0xfc8] sm:$0xff]
    %v5995 = vld [vmem:[#allocation2 + $0xfd0] sm:$0xff]
    %v5996 = vld [vmem:[#allocation2 + $0xfd8] sm:$0xff]
    %v5997 = vld [vmem:[#allocation2 + $0xfe0] sm:$0xff]
    %v5998 = vld [vmem:[#allocation2 + $0xfe8] sm:$0xff]
    %v5999 = vld [vmem:[#allocation2 + $0xff0] sm:$0xff]
    %v6000 = vld [vmem:[#allocation2 + $0xff8] sm:$0xff]
    %v6001 = vld [vmem:[#allocation2 + $0x1000] sm:$0xff]
    %v6002 = vld [vmem:[#allocation2 + $0x1008] sm:$0xff]
    %v6003 = vld [vmem:[#allocation2 + $0x1010] sm:$0xff]
    %v6004 = vld [vmem:[#allocation2 + $0x1018] sm:$0xff]
    %v6005 = vld [vmem:[#allocation2 + $0x1020] sm:$0xff]
    %v6006 = vld [vmem:[#allocation2 + $0x1028] sm:$0xff]
    %v6007 = vld [vmem:[#allocation2 + $0x1030] sm:$0xff]
    %v6008 = vld [vmem:[#allocation2 + $0x1038] sm:$0xff]
    %v6009 = vld [vmem:[#allocation2 + $0x1040] sm:$0xff]
    %v6010 = vld [vmem:[#allocation2 + $0x1048] sm:$0xff]
    %v6011 = vld [vmem:[#allocation2 + $0x1050] sm:$0xff]
    %v6012 = vld [vmem:[#allocation2 + $0x1058] sm:$0xff]
    %v6013 = vld [vmem:[#allocation2 + $0x1060] sm:$0xff]
    %v6014 = vld [vmem:[#allocation2 + $0x1068] sm:$0xff]
    %v6015 = vld [vmem:[#allocation2 + $0x1070] sm:$0xff]
    %v6016 = vld [vmem:[#allocation2 + $0x1078] sm:$0xff]
    %v6017 = vld [vmem:[#allocation2 + $0x1080] sm:$0xff]
    %v6018 = vld [vmem:[#allocation2 + $0x1088] sm:$0xff]
    %v6019 = vld [vmem:[#allocation2 + $0x1090] sm:$0xff]
    %v6020 = vld [vmem:[#allocation2 + $0x1098] sm:$0xff]
    %v6021 = vld [vmem:[#allocation2 + $0x10a0] sm:$0xff]
    %v6022 = vld [vmem:[#allocation2 + $0x10a8] sm:$0xff]
    %v6023 = vld [vmem:[#allocation2 + $0x10b0] sm:$0xff]
    %v6024 = vld [vmem:[#allocation2 + $0x10b8] sm:$0xff]
    %v6025 = vld [vmem:[#allocation2 + $0x10c0] sm:$0xff]
    %v6026 = vld [vmem:[#allocation2 + $0x10c8] sm:$0xff]
    %v6027 = vld [vmem:[#allocation2 + $0x10d0] sm:$0xff]
    %v6028 = vld [vmem:[#allocation2 + $0x10d8] sm:$0xff]
    %v6029 = vld [vmem:[#allocation2 + $0x10e0] sm:$0xff]
    %v6030 = vld [vmem:[#allocation2 + $0x10e8] sm:$0xff]
    %v6031 = vld [vmem:[#allocation2 + $0x10f0] sm:$0xff]
    %v6032 = vld [vmem:[#allocation2 + $0x10f8] sm:$0xff]
    %v6033 = vld [vmem:[#allocation2 + $0x1100] sm:$0xff]
    %v6034 = vld [vmem:[#allocation2 + $0x1108] sm:$0xff]
    %v6035 = vld [vmem:[#allocation2 + $0x1110] sm:$0xff]
    %v6036 = vld [vmem:[#allocation2 + $0x1118] sm:$0xff]
    %v6037 = vld [vmem:[#allocation2 + $0x1120] sm:$0xff]
    %v6038 = vld [vmem:[#allocation2 + $0x1128] sm:$0xff]
    %v6039 = vld [vmem:[#allocation2 + $0x1130] sm:$0xff]
    %v6040 = vld [vmem:[#allocation2 + $0x1138] sm:$0xff]
    %v6041 = vld [vmem:[#allocation2 + $0x1140] sm:$0xff]
    %v6042 = vld [vmem:[#allocation2 + $0x1148] sm:$0xff]
    %v6043 = vld [vmem:[#allocation2 + $0x1150] sm:$0xff]
    %v6044 = vld [vmem:[#allocation2 + $0x1158] sm:$0xff]
    %v6045 = vld [vmem:[#allocation2 + $0x1160] sm:$0xff]
    %v6046 = vld [vmem:[#allocation2 + $0x1168] sm:$0xff]
    %v6047 = vld [vmem:[#allocation2 + $0x1170] sm:$0xff]
    %v6048 = vld [vmem:[#allocation2 + $0x1178] sm:$0xff]
    %v6049 = vld [vmem:[#allocation2 + $0x1180] sm:$0xff]
    %v6050 = vld [vmem:[#allocation2 + $0x1188] sm:$0xff]
    %v6051 = vld [vmem:[#allocation2 + $0x1190] sm:$0xff]
    %v6052 = vld [vmem:[#allocation2 + $0x1198] sm:$0xff]
    %v6053 = vld [vmem:[#allocation2 + $0x11a0] sm:$0xff]
    %v6054 = vld [vmem:[#allocation2 + $0x11a8] sm:$0xff]
    %v6055 = vld [vmem:[#allocation2 + $0x11b0] sm:$0xff]
    %v6056 = vld [vmem:[#allocation2 + $0x11b8] sm:$0xff]
    %v6057 = vld [vmem:[#allocation2 + $0x11c0] sm:$0xff]
    %v6058 = vld [vmem:[#allocation2 + $0x11c8] sm:$0xff]
    %v6059 = vld [vmem:[#allocation2 + $0x11d0] sm:$0xff]
    %v6060 = vld [vmem:[#allocation2 + $0x11d8] sm:$0xff]
    %v6061 = vld [vmem:[#allocation2 + $0x11e0] sm:$0xff]
    %v6062 = vld [vmem:[#allocation2 + $0x11e8] sm:$0xff]
    %v6063 = vld [vmem:[#allocation2 + $0x11f0] sm:$0xff]
    %v6064 = vld [vmem:[#allocation2 + $0x11f8] sm:$0xff]
    %v6065 = vld [vmem:[#allocation2 + $0x1200] sm:$0xff]
    %v6066 = vld [vmem:[#allocation2 + $0x1208] sm:$0xff]
    %v6067 = vld [vmem:[#allocation2 + $0x1210] sm:$0xff]
    %v6068 = vld [vmem:[#allocation2 + $0x1218] sm:$0xff]
    %v6069 = vld [vmem:[#allocation2 + $0x1220] sm:$0xff]
    %v6070 = vld [vmem:[#allocation2 + $0x1228] sm:$0xff]
    %v6071 = vld [vmem:[#allocation2 + $0x1230] sm:$0xff]
    %v6072 = vld [vmem:[#allocation2 + $0x1238] sm:$0xff]
    %v6073 = vld [vmem:[#allocation2 + $0x1240] sm:$0xff]
    %v6074 = vld [vmem:[#allocation2 + $0x1248] sm:$0xff]
    %v6075 = vld [vmem:[#allocation2 + $0x1250] sm:$0xff]
    %v6076 = vld [vmem:[#allocation2 + $0x1258] sm:$0xff]
    %v6077 = vld [vmem:[#allocation2 + $0x1260] sm:$0xff]
    %v6078 = vld [vmem:[#allocation2 + $0x1268] sm:$0xff]
    %v6079 = vld [vmem:[#allocation2 + $0x1270] sm:$0xff]
    %v6080 = vld [vmem:[#allocation2 + $0x1278] sm:$0xff]
    %v6081 = vld [vmem:[#allocation2 + $0x1280] sm:$0xff]
    %v6082 = vld [vmem:[#allocation2 + $0x1288] sm:$0xff]
    %v6083 = vld [vmem:[#allocation2 + $0x1290] sm:$0xff]
    %v6084 = vld [vmem:[#allocation2 + $0x1298] sm:$0xff]
    %v6085 = vld [vmem:[#allocation2 + $0x12a0] sm:$0xff]
    %v6086 = vld [vmem:[#allocation2 + $0x12a8] sm:$0xff]
    %v6087 = vld [vmem:[#allocation2 + $0x12b0] sm:$0xff]
    %v6088 = vld [vmem:[#allocation2 + $0x12b8] sm:$0xff]
    %v6089 = vld [vmem:[#allocation2 + $0x12c0] sm:$0xff]
    %v6090 = vld [vmem:[#allocation2 + $0x12c8] sm:$0xff]
    %v6091 = vld [vmem:[#allocation2 + $0x12d0] sm:$0xff]
    %v6092 = vld [vmem:[#allocation2 + $0x12d8] sm:$0xff]
    %v6093 = vld [vmem:[#allocation2 + $0x12e0] sm:$0xff]
    %v6094 = vld [vmem:[#allocation2 + $0x12e8] sm:$0xff]
    %v6095 = vld [vmem:[#allocation2 + $0x12f0] sm:$0xff]
    %v6096 = vld [vmem:[#allocation2 + $0x12f8] sm:$0xff]
    %v6097 = vld [vmem:[#allocation2 + $0x1300] sm:$0xff]
    %v6098 = vld [vmem:[#allocation2 + $0x1308] sm:$0xff]
    %v6099 = vld [vmem:[#allocation2 + $0x1310] sm:$0xff]
    %v6100 = vld [vmem:[#allocation2 + $0x1318] sm:$0xff]
    %v6101 = vld [vmem:[#allocation2 + $0x1320] sm:$0xff]
    %v6102 = vld [vmem:[#allocation2 + $0x1328] sm:$0xff]
    %v6103 = vld [vmem:[#allocation2 + $0x1330] sm:$0xff]
    %v6104 = vld [vmem:[#allocation2 + $0x1338] sm:$0xff]
    %v6105 = vld [vmem:[#allocation2 + $0x1340] sm:$0xff]
    %v6106 = vld [vmem:[#allocation2 + $0x1348] sm:$0xff]
    %v6107 = vld [vmem:[#allocation2 + $0x1350] sm:$0xff]
    %v6108 = vld [vmem:[#allocation2 + $0x1358] sm:$0xff]
    %v6109 = vld [vmem:[#allocation2 + $0x1360] sm:$0xff]
    %v6110 = vld [vmem:[#allocation2 + $0x1368] sm:$0xff]
    %v6111 = vld [vmem:[#allocation2 + $0x1370] sm:$0xff]
    %v6112 = vld [vmem:[#allocation2 + $0x1378] sm:$0xff]
    %v6113 = vld [vmem:[#allocation2 + $0x1380] sm:$0xff]
    %v6114 = vld [vmem:[#allocation2 + $0x1388] sm:$0xff]
    %v6115 = vld [vmem:[#allocation2 + $0x1390] sm:$0xff]
    %v6116 = vld [vmem:[#allocation2 + $0x1398] sm:$0xff]
    %v6117 = vld [vmem:[#allocation2 + $0x13a0] sm:$0xff]
    %v6118 = vld [vmem:[#allocation2 + $0x13a8] sm:$0xff]
    %v6119 = vld [vmem:[#allocation2 + $0x13b0] sm:$0xff]
    %v6120 = vld [vmem:[#allocation2 + $0x13b8] sm:$0xff]
    %v6121 = vld [vmem:[#allocation2 + $0x13c0] sm:$0xff]
    %v6122 = vld [vmem:[#allocation2 + $0x13c8] sm:$0xff]
    %v6123 = vld [vmem:[#allocation2 + $0x13d0] sm:$0xff]
    %v6124 = vld [vmem:[#allocation2 + $0x13d8] sm:$0xff]
    %v6125 = vld [vmem:[#allocation2 + $0x13e0] sm:$0xff]
    %v6126 = vld [vmem:[#allocation2 + $0x13e8] sm:$0xff]
    %v6127 = vld [vmem:[#allocation2 + $0x13f0] sm:$0xff]
    %v6128 = vld [vmem:[#allocation2 + $0x13f8] sm:$0xff]
    %v6129 = vld [vmem:[#allocation2 + $0x1400] sm:$0xff]
    %v6130 = vld [vmem:[#allocation2 + $0x1408] sm:$0xff]
    %v6131 = vld [vmem:[#allocation2 + $0x1410] sm:$0xff]
    %v6132 = vld [vmem:[#allocation2 + $0x1418] sm:$0xff]
    %v6133 = vld [vmem:[#allocation2 + $0x1420] sm:$0xff]
    %v6134 = vld [vmem:[#allocation2 + $0x1428] sm:$0xff]
    %v6135 = vld [vmem:[#allocation2 + $0x1430] sm:$0xff]
    %v6136 = vld [vmem:[#allocation2 + $0x1438] sm:$0xff]
    %v6137 = vld [vmem:[#allocation2 + $0x1440] sm:$0xff]
    %v6138 = vld [vmem:[#allocation2 + $0x1448] sm:$0xff]
    %v6139 = vld [vmem:[#allocation2 + $0x1450] sm:$0xff]
    %v6140 = vld [vmem:[#allocation2 + $0x1458] sm:$0xff]
    %v6141 = vld [vmem:[#allocation2 + $0x1460] sm:$0xff]
    %v6142 = vld [vmem:[#allocation2 + $0x1468] sm:$0xff]
    %v6143 = vld [vmem:[#allocation2 + $0x1470] sm:$0xff]
    %v6144 = vld [vmem:[#allocation2 + $0x1478] sm:$0xff]
    %v6145 = vld [vmem:[#allocation2 + $0x1480] sm:$0xff]
    %v6146 = vld [vmem:[#allocation2 + $0x1488] sm:$0xff]
    %v6147 = vld [vmem:[#allocation2 + $0x1490] sm:$0xff]
    %v6148 = vld [vmem:[#allocation2 + $0x1498] sm:$0xff]
    %v6149 = vld [vmem:[#allocation2 + $0x14a0] sm:$0xff]
    %v6150 = vld [vmem:[#allocation2 + $0x14a8] sm:$0xff]
    %v6151 = vld [vmem:[#allocation2 + $0x14b0] sm:$0xff]
    %v6152 = vld [vmem:[#allocation2 + $0x14b8] sm:$0xff]
    %v6153 = vld [vmem:[#allocation2 + $0x14c0] sm:$0xff]
    %v6154 = vld [vmem:[#allocation2 + $0x14c8] sm:$0xff]
    %v6155 = vld [vmem:[#allocation2 + $0x14d0] sm:$0xff]
    %v6156 = vld [vmem:[#allocation2 + $0x14d8] sm:$0xff]
    %v6157 = vld [vmem:[#allocation2 + $0x14e0] sm:$0xff]
    %v6158 = vld [vmem:[#allocation2 + $0x14e8] sm:$0xff]
    %v6159 = vld [vmem:[#allocation2 + $0x14f0] sm:$0xff]
    %v6160 = vld [vmem:[#allocation2 + $0x14f8] sm:$0xff]
    %v6161 = vld [vmem:[#allocation2 + $0x1500] sm:$0xff]
    %v6162 = vld [vmem:[#allocation2 + $0x1508] sm:$0xff]
    %v6163 = vld [vmem:[#allocation2 + $0x1510] sm:$0xff]
    %v6164 = vld [vmem:[#allocation2 + $0x1518] sm:$0xff]
    %v6165 = vld [vmem:[#allocation2 + $0x1520] sm:$0xff]
    %v6166 = vld [vmem:[#allocation2 + $0x1528] sm:$0xff]
    %v6167 = vld [vmem:[#allocation2 + $0x1530] sm:$0xff]
    %v6168 = vld [vmem:[#allocation2 + $0x1538] sm:$0xff]
    %v6169 = vld [vmem:[#allocation2 + $0x1540] sm:$0xff]
    %v6170 = vld [vmem:[#allocation2 + $0x1548] sm:$0xff]
    %v6171 = vld [vmem:[#allocation2 + $0x1550] sm:$0xff]
    %v6172 = vld [vmem:[#allocation2 + $0x1558] sm:$0xff]
    %v6173 = vld [vmem:[#allocation2 + $0x1560] sm:$0xff]
    %v6174 = vld [vmem:[#allocation2 + $0x1568] sm:$0xff]
    %v6175 = vld [vmem:[#allocation2 + $0x1570] sm:$0xff]
    %v6176 = vld [vmem:[#allocation2 + $0x1578] sm:$0xff]
    %v6177 = vld [vmem:[#allocation2 + $0x1580] sm:$0xff]
    %v6178 = vld [vmem:[#allocation2 + $0x1588] sm:$0xff]
    %v6179 = vld [vmem:[#allocation2 + $0x1590] sm:$0xff]
    %v6180 = vld [vmem:[#allocation2 + $0x1598] sm:$0xff]
    %v6181 = vld [vmem:[#allocation2 + $0x15a0] sm:$0xff]
    %v6182 = vld [vmem:[#allocation2 + $0x15a8] sm:$0xff]
    %v6183 = vld [vmem:[#allocation2 + $0x15b0] sm:$0xff]
    %v6184 = vld [vmem:[#allocation2 + $0x15b8] sm:$0xff]
    %v6185 = vld [vmem:[#allocation2 + $0x15c0] sm:$0xff]
    %v6186 = vld [vmem:[#allocation2 + $0x15c8] sm:$0xff]
    %v6187 = vld [vmem:[#allocation2 + $0x15d0] sm:$0xff]
    %v6188 = vld [vmem:[#allocation2 + $0x15d8] sm:$0xff]
    %v6189 = vld [vmem:[#allocation2 + $0x15e0] sm:$0xff]
    %v6190 = vld [vmem:[#allocation2 + $0x15e8] sm:$0xff]
    %v6191 = vld [vmem:[#allocation2 + $0x15f0] sm:$0xff]
    %v6192 = vld [vmem:[#allocation2 + $0x15f8] sm:$0xff]
    %v6193 = vld [vmem:[#allocation2 + $0x1600] sm:$0xff]
    %v6194 = vld [vmem:[#allocation2 + $0x1608] sm:$0xff]
    %v6195 = vld [vmem:[#allocation2 + $0x1610] sm:$0xff]
    %v6196 = vld [vmem:[#allocation2 + $0x1618] sm:$0xff]
    %v6197 = vld [vmem:[#allocation2 + $0x1620] sm:$0xff]
    %v6198 = vld [vmem:[#allocation2 + $0x1628] sm:$0xff]
    %v6199 = vld [vmem:[#allocation2 + $0x1630] sm:$0xff]
    %v6200 = vld [vmem:[#allocation2 + $0x1638] sm:$0xff]
    %v6201 = vld [vmem:[#allocation2 + $0x1640] sm:$0xff]
    %v6202 = vld [vmem:[#allocation2 + $0x1648] sm:$0xff]
    %v6203 = vld [vmem:[#allocation2 + $0x1650] sm:$0xff]
    %v6204 = vld [vmem:[#allocation2 + $0x1658] sm:$0xff]
    %v6205 = vld [vmem:[#allocation2 + $0x1660] sm:$0xff]
    %v6206 = vld [vmem:[#allocation2 + $0x1668] sm:$0xff]
    %v6207 = vld [vmem:[#allocation2 + $0x1670] sm:$0xff]
    %v6208 = vld [vmem:[#allocation2 + $0x1678] sm:$0xff]
    %v6209 = vld [vmem:[#allocation2 + $0x1680] sm:$0xff]
    %v6210 = vld [vmem:[#allocation2 + $0x1688] sm:$0xff]
    %v6211 = vld [vmem:[#allocation2 + $0x1690] sm:$0xff]
    %v6212 = vld [vmem:[#allocation2 + $0x1698] sm:$0xff]
    %v6213 = vld [vmem:[#allocation2 + $0x16a0] sm:$0xff]
    %v6214 = vld [vmem:[#allocation2 + $0x16a8] sm:$0xff]
    %v6215 = vld [vmem:[#allocation2 + $0x16b0] sm:$0xff]
    %v6216 = vld [vmem:[#allocation2 + $0x16b8] sm:$0xff]
    %v6217 = vld [vmem:[#allocation2 + $0x16c0] sm:$0xff]
    %v6218 = vld [vmem:[#allocation2 + $0x16c8] sm:$0xff]
    %v6219 = vld [vmem:[#allocation2 + $0x16d0] sm:$0xff]
    %v6220 = vld [vmem:[#allocation2 + $0x16d8] sm:$0xff]
    %v6221 = vld [vmem:[#allocation2 + $0x16e0] sm:$0xff]
    %v6222 = vld [vmem:[#allocation2 + $0x16e8] sm:$0xff]
    %v6223 = vld [vmem:[#allocation2 + $0x16f0] sm:$0xff]
    %v6224 = vld [vmem:[#allocation2 + $0x16f8] sm:$0xff]
    %v6225 = vld [vmem:[#allocation2 + $0x1700] sm:$0xff]
    %v6226 = vld [vmem:[#allocation2 + $0x1708] sm:$0xff]
    %v6227 = vld [vmem:[#allocation2 + $0x1710] sm:$0xff]
    %v6228 = vld [vmem:[#allocation2 + $0x1718] sm:$0xff]
    %v6229 = vld [vmem:[#allocation2 + $0x1720] sm:$0xff]
    %v6230 = vld [vmem:[#allocation2 + $0x1728] sm:$0xff]
    %v6231 = vld [vmem:[#allocation2 + $0x1730] sm:$0xff]
    %v6232 = vld [vmem:[#allocation2 + $0x1738] sm:$0xff]
    %v6233 = vld [vmem:[#allocation2 + $0x1740] sm:$0xff]
    %v6234 = vld [vmem:[#allocation2 + $0x1748] sm:$0xff]
    %v6235 = vld [vmem:[#allocation2 + $0x1750] sm:$0xff]
    %v6236 = vld [vmem:[#allocation2 + $0x1758] sm:$0xff]
    %v6237 = vld [vmem:[#allocation2 + $0x1760] sm:$0xff]
    %v6238 = vld [vmem:[#allocation2 + $0x1768] sm:$0xff]
    %v6239 = vld [vmem:[#allocation2 + $0x1770] sm:$0xff]
    %v6240 = vld [vmem:[#allocation2 + $0x1778] sm:$0xff]
    %v6241 = vld [vmem:[#allocation2 + $0x1780] sm:$0xff]
    %v6242 = vld [vmem:[#allocation2 + $0x1788] sm:$0xff]
    %v6243 = vld [vmem:[#allocation2 + $0x1790] sm:$0xff]
    %v6244 = vld [vmem:[#allocation2 + $0x1798] sm:$0xff]
    %v6245 = vld [vmem:[#allocation2 + $0x17a0] sm:$0xff]
    %v6246 = vld [vmem:[#allocation2 + $0x17a8] sm:$0xff]
    %v6247 = vld [vmem:[#allocation2 + $0x17b0] sm:$0xff]
    %v6248 = vld [vmem:[#allocation2 + $0x17b8] sm:$0xff]
    %v6249 = vld [vmem:[#allocation2 + $0x17c0] sm:$0xff]
    %v6250 = vld [vmem:[#allocation2 + $0x17c8] sm:$0xff]
    %v6251 = vld [vmem:[#allocation2 + $0x17d0] sm:$0xff]
    %v6252 = vld [vmem:[#allocation2 + $0x17d8] sm:$0xff]
    %v6253 = vld [vmem:[#allocation2 + $0x17e0] sm:$0xff]
    %v6254 = vld [vmem:[#allocation2 + $0x17e8] sm:$0xff]
    %v6255 = vld [vmem:[#allocation2 + $0x17f0] sm:$0xff]
    %v6256 = vld [vmem:[#allocation2 + $0x17f8] sm:$0xff]
    %v6257 = vld [vmem:[#allocation2 + $0x1800] sm:$0xff]
    %v6258 = vld [vmem:[#allocation2 + $0x1808] sm:$0xff]
    %v6259 = vld [vmem:[#allocation2 + $0x1810] sm:$0xff]
    %v6260 = vld [vmem:[#allocation2 + $0x1818] sm:$0xff]
    %v6261 = vld [vmem:[#allocation2 + $0x1820] sm:$0xff]
    %v6262 = vld [vmem:[#allocation2 + $0x1828] sm:$0xff]
    %v6263 = vld [vmem:[#allocation2 + $0x1830] sm:$0xff]
    %v6264 = vld [vmem:[#allocation2 + $0x1838] sm:$0xff]
    %v6265 = vld [vmem:[#allocation2 + $0x1840] sm:$0xff]
    %v6266 = vld [vmem:[#allocation2 + $0x1848] sm:$0xff]
    %v6267 = vld [vmem:[#allocation2 + $0x1850] sm:$0xff]
    %v6268 = vld [vmem:[#allocation2 + $0x1858] sm:$0xff]
    %v6269 = vld [vmem:[#allocation2 + $0x1860] sm:$0xff]
    %v6270 = vld [vmem:[#allocation2 + $0x1868] sm:$0xff]
    %v6271 = vld [vmem:[#allocation2 + $0x1870] sm:$0xff]
    %v6272 = vld [vmem:[#allocation2 + $0x1878] sm:$0xff]
    %v6273 = vld [vmem:[#allocation2 + $0x1880] sm:$0xff]
    %v6274 = vld [vmem:[#allocation2 + $0x1888] sm:$0xff]
    %v6275 = vld [vmem:[#allocation2 + $0x1890] sm:$0xff]
    %v6276 = vld [vmem:[#allocation2 + $0x1898] sm:$0xff]
    %v6277 = vld [vmem:[#allocation2 + $0x18a0] sm:$0xff]
    %v6278 = vld [vmem:[#allocation2 + $0x18a8] sm:$0xff]
    %v6279 = vld [vmem:[#allocation2 + $0x18b0] sm:$0xff]
    %v6280 = vld [vmem:[#allocation2 + $0x18b8] sm:$0xff]
    %v6281 = vld [vmem:[#allocation2 + $0x18c0] sm:$0xff]
    %v6282 = vld [vmem:[#allocation2 + $0x18c8] sm:$0xff]
    %v6283 = vld [vmem:[#allocation2 + $0x18d0] sm:$0xff]
    %v6284 = vld [vmem:[#allocation2 + $0x18d8] sm:$0xff]
    %v6285 = vld [vmem:[#allocation2 + $0x18e0] sm:$0xff]
    %v6286 = vld [vmem:[#allocation2 + $0x18e8] sm:$0xff]
    %v6287 = vld [vmem:[#allocation2 + $0x18f0] sm:$0xff]
    %v6288 = vld [vmem:[#allocation2 + $0x18f8] sm:$0xff]
    %v6289 = vld [vmem:[#allocation2 + $0x1900] sm:$0xff]
    %v6290 = vld [vmem:[#allocation2 + $0x1908] sm:$0xff]
    %v6291 = vld [vmem:[#allocation2 + $0x1910] sm:$0xff]
    %v6292 = vld [vmem:[#allocation2 + $0x1918] sm:$0xff]
    %v6293 = vld [vmem:[#allocation2 + $0x1920] sm:$0xff]
    %v6294 = vld [vmem:[#allocation2 + $0x1928] sm:$0xff]
    %v6295 = vld [vmem:[#allocation2 + $0x1930] sm:$0xff]
    %v6296 = vld [vmem:[#allocation2 + $0x1938] sm:$0xff]
    %v6297 = vld [vmem:[#allocation2 + $0x1940] sm:$0xff]
    %v6298 = vld [vmem:[#allocation2 + $0x1948] sm:$0xff]
    %v6299 = vld [vmem:[#allocation2 + $0x1950] sm:$0xff]
    %v6300 = vld [vmem:[#allocation2 + $0x1958] sm:$0xff]
    %v6301 = vld [vmem:[#allocation2 + $0x1960] sm:$0xff]
    %v6302 = vld [vmem:[#allocation2 + $0x1968] sm:$0xff]
    %v6303 = vld [vmem:[#allocation2 + $0x1970] sm:$0xff]
    %v6304 = vld [vmem:[#allocation2 + $0x1978] sm:$0xff]
    %v6307 = vcombine.high %v5967, %v5967
    %v6309 = vunpack.c.l.s4 1983009808
    %v6310 = vunpack.c.0.s8 %v6309
    %v6311 = vlaneseq
    %v6312 = vshrl.u32 %v6311, 7
    %v6313 = vsub.s32 %v6310, %v6312
    %v6314 = vrot.slane %v5967, %v6313
    %v6316 = vunpack.c.l.s4 1983009808
    %v6317 = vunpack.c.0.s8 %v6316
    %v6318 = vlaneseq
    %v6319 = vshrl.u32 %v6318, 7
    %v6320 = vsub.s32 %v6317, %v6319
    %v6321 = vrot.slane %v6307, %v6320
    %v6322 = vcombine.high %v6314, %v6314
    %v6323 = vcombine.high %v6321, %v6321
    %v6325 = vunpack.c.l.s4 1983009808
    %v6326 = vunpack.c.0.s8 %v6325
    %v6327 = vlaneseq
    %v6328 = vshrl.u32 %v6327, 7
    %v6329 = vsub.s32 %v6326, %v6328
    %v6330 = vrot.slane %v5968, %v6329
    %v6331 = vcombine.high %v6330, %v6330
    %vm6337 = vcmask 261120
    %v6338 = vsel %vm6337, %v6331, 0
    %6340 = vmatprep.subr.mxu0 %v5970
    %6341 = vmatpush1.msra.mxu0 %v5969
    %6342 = vmatprep.subr.mxu0 %v5974
    %6343 = vmatpush1.msra.mxu0 %v5973
    %6344 = vmatprep.subr.mxu0 %v5978
    %6345 = vmatpush1.msra.mxu0 %v5977
    %6346 = vmatprep.subr.mxu0 %v5982
    %6347 = vmatpush1.msra.mxu0 %v5981
    %6348 = vmatprep.subr.mxu0 %v5986
    %6349 = vmatpush1.msra.mxu0 %v5985
    %6350 = vmatprep.subr.mxu0 %v5990
    %6351 = vmatpush1.msra.mxu0 %v5989
    %6352 = vmatprep.subr.mxu0 %v5994
    %6353 = vmatpush1.msra.mxu0 %v5993
    %6354 = vmatprep.subr.mxu0 %v5998
    %6355 = vmatpush1.msra.mxu0 %v5997
    %6356 = vmatprep.subr.mxu0 %v6002
    %6357 = vmatpush1.msra.mxu0 %v6001
    %6358 = vmatprep.subr.mxu0 %v6006
    %6359 = vmatpush1.msra.mxu0 %v6005
    %6360 = vmatprep.subr.mxu0 %v6010
    %6361 = vmatpush1.msra.mxu0 %v6009
    %6362 = vmatprep.subr.mxu0 %v6014
    %6363 = vmatpush1.msra.mxu0 %v6013
    %6364 = vmatprep.subr.mxu0 %v6018
    %6365 = vmatpush1.msra.mxu0 %v6017
    %6366 = vmatprep.subr.mxu0 %v6022
    %6367 = vmatpush1.msra.mxu0 %v6021
    %6368 = vmatprep.subr.mxu0 %v6026
    %6369 = vmatpush1.msra.mxu0 %v6025
    %6370 = vmatprep.subr.mxu0 %v6030
    %6371 = vmatpush1.msra.mxu0 %v6029
    %6372 = vmatprep.subr.mxu0 %v6034
    %6373 = vmatpush1.msra.mxu0 %v6033
    %6374 = vmatprep.subr.mxu0 %v6038
    %6375 = vmatpush1.msra.mxu0 %v6037
    %6376 = vmatprep.subr.mxu0 %v6042
    %6377 = vmatpush1.msra.mxu0 %v6041
    %6378 = vmatprep.subr.mxu0 %v6046
    %6379 = vmatpush1.msra.mxu0 %v6045
    %6380 = vmatprep.subr.mxu0 %v6050
    %6381 = vmatpush1.msra.mxu0 %v6049
    %6382 = vmatprep.subr.mxu0 %v6054
    %6383 = vmatpush1.msra.mxu0 %v6053
    %6384 = vmatprep.subr.mxu0 %v6058
    %6385 = vmatpush1.msra.mxu0 %v6057
    %6386 = vmatprep.subr.mxu0 %v6062
    %6387 = vmatpush1.msra.mxu0 %v6061
    %6388 = vmatprep.subr.mxu0 %v6066
    %6389 = vmatpush1.msra.mxu0 %v6065
    %6390 = vmatprep.subr.mxu0 %v6070
    %6391 = vmatpush1.msra.mxu0 %v6069
    %6392 = vmatprep.subr.mxu0 %v6074
    %6393 = vmatpush1.msra.mxu0 %v6073
    %6394 = vmatprep.subr.mxu0 %v6078
    %6395 = vmatpush1.msra.mxu0 %v6077
    %6396 = vmatprep.subr.mxu0 %v6082
    %6397 = vmatpush1.msra.mxu0 %v6081
    %6398 = vmatprep.subr.mxu0 %v6086
    %6399 = vmatpush1.msra.mxu0 %v6085
    %6400 = vmatprep.subr.mxu0 %v6090
    %6401 = vmatpush1.msra.mxu0 %v6089
    %6402 = vmatprep.subr.mxu0 %v6094
    %6403 = vmatpush1.msra.mxu0 %v6093
    %6404 = vmatprep.mubr.f32.mxu0 %v6322
    %6405 = vmatmul.mubr.f32.gmra.mrb[0].mxu0 %v6314
    %v6406 = vpop.f32.mrb[0].mxu0
    %v6407 = vadd.f32 0.0, %v6406
    %v6408 = vpop.f32.mrb[0].mxu0
    %v6409 = vadd.f32 0.0, %v6408
    %6410 = vdwg.mxu0
    %6411 = vmatprep.subr.mxu0 %v6098
    %6412 = vmatpush1.msra.mxu0 %v6097
    %6413 = vmatprep.subr.mxu0 %v6102
    %6414 = vmatpush1.msra.mxu0 %v6101
    %6415 = vmatprep.subr.mxu0 %v6106
    %6416 = vmatpush1.msra.mxu0 %v6105
    %6417 = vmatprep.subr.mxu0 %v6110
    %6418 = vmatpush1.msra.mxu0 %v6109
    %6419 = vmatprep.subr.mxu0 %v6114
    %6420 = vmatpush1.msra.mxu0 %v6113
    %6421 = vmatprep.subr.mxu0 %v6118
    %6422 = vmatpush1.msra.mxu0 %v6117
    %6423 = vmatprep.subr.mxu0 %v6122
    %6424 = vmatpush1.msra.mxu0 %v6121
    %6425 = vmatprep.subr.mxu0 %v6126
    %6426 = vmatpush1.msra.mxu0 %v6125
    %6427 = vmatprep.subr.mxu0 %v6130
    %6428 = vmatpush1.msra.mxu0 %v6129
    %6429 = vmatprep.subr.mxu0 %v6134
    %6430 = vmatpush1.msra.mxu0 %v6133
    %6431 = vmatprep.subr.mxu0 %v6138
    %6432 = vmatpush1.msra.mxu0 %v6137
    %6433 = vmatprep.subr.mxu0 %v6142
    %6434 = vmatpush1.msra.mxu0 %v6141
    %6435 = vmatprep.subr.mxu0 %v6146
    %6436 = vmatpush1.msra.mxu0 %v6145
    %6437 = vmatprep.subr.mxu0 %v6150
    %6438 = vmatpush1.msra.mxu0 %v6149
    %6439 = vmatprep.subr.mxu0 %v6154
    %6440 = vmatpush1.msra.mxu0 %v6153
    %6441 = vmatprep.subr.mxu0 %v6158
    %6442 = vmatpush1.msra.mxu0 %v6157
    %6443 = vmatprep.subr.mxu0 %v6162
    %6444 = vmatpush1.msra.mxu0 %v6161
    %6445 = vmatprep.subr.mxu0 %v6166
    %6446 = vmatpush1.msra.mxu0 %v6165
    %6447 = vmatprep.subr.mxu0 %v6170
    %6448 = vmatpush1.msra.mxu0 %v6169
    %6449 = vmatprep.subr.mxu0 %v6174
    %6450 = vmatpush1.msra.mxu0 %v6173
    %6451 = vmatprep.subr.mxu0 %v6178
    %6452 = vmatpush1.msra.mxu0 %v6177
    %6453 = vmatprep.subr.mxu0 %v6182
    %6454 = vmatpush1.msra.mxu0 %v6181
    %6455 = vmatprep.subr.mxu0 %v6186
    %6456 = vmatpush1.msra.mxu0 %v6185
    %6457 = vmatprep.subr.mxu0 %v6190
    %6458 = vmatpush1.msra.mxu0 %v6189
    %6459 = vmatprep.subr.mxu0 %v6194
    %6460 = vmatpush1.msra.mxu0 %v6193
    %6461 = vmatprep.subr.mxu0 %v6198
    %6462 = vmatpush1.msra.mxu0 %v6197
    %6463 = vmatprep.subr.mxu0 %v6202
    %6464 = vmatpush1.msra.mxu0 %v6201
    %6465 = vmatprep.subr.mxu0 %v6206
    %6466 = vmatpush1.msra.mxu0 %v6205
    %6467 = vmatprep.subr.mxu0 %v6210
    %6468 = vmatpush1.msra.mxu0 %v6209
    %6469 = vmatprep.subr.mxu0 %v6214
    %6470 = vmatpush1.msra.mxu0 %v6213
    %6471 = vmatprep.subr.mxu0 %v6218
    %6472 = vmatpush1.msra.mxu0 %v6217
    %6473 = vmatprep.subr.mxu0 %v6222
    %6474 = vmatpush1.msra.mxu0 %v6221
    %6475 = vmatprep.mubr.f32.mxu0 %v6323
    %6476 = vmatmul.mubr.f32.gmra.mrb[0].mxu0 %v6321
    %v6477 = vpop.f32.mrb[0].mxu0
    %v6478 = vadd.f32 %v6407, %v6477
    %v6479 = vpop.f32.mrb[0].mxu0
    %v6480 = vadd.f32 %v6409, %v6479
    %6481 = vdwg.mxu0
    %6482 = vmatprep.subr.mxu0 %v6226
    %6483 = vmatpush1.msra.mxu0 %v6225
    %6484 = vmatprep.subr.mxu0 %v6230
    %6485 = vmatpush1.msra.mxu0 %v6229
    %6486 = vmatprep.subr.mxu0 %v6234
    %6487 = vmatpush1.msra.mxu0 %v6233
    %6488 = vmatprep.subr.mxu0 %v6238
    %6489 = vmatpush1.msra.mxu0 %v6237
    %6490 = vmatprep.subr.mxu0 %v6242
    %6491 = vmatpush1.msra.mxu0 %v6241
    %6492 = vmatprep.subr.mxu0 %v6246
    %6493 = vmatpush1.msra.mxu0 %v6245
    %6494 = vmatprep.subr.mxu0 %v6250
    %6495 = vmatpush1.msra.mxu0 %v6249
    %6496 = vmatprep.subr.mxu0 %v6254
    %6497 = vmatpush1.msra.mxu0 %v6253
    %6498 = vmatprep.subr.mxu0 %v6258
    %6499 = vmatpush1.msra.mxu0 %v6257
    %6500 = vmatprep.subr.mxu0 %v6262
    %6501 = vmatpush1.msra.mxu0 %v6261
    %6502 = vmatprep.subr.mxu0 %v6266
    %6503 = vmatpush1.msra.mxu0 %v6265
    %6504 = vmatprep.subr.mxu0 %v6270
    %6505 = vmatpush1.msra.mxu0 %v6269
    %6506 = vmatprep.subr.mxu0 %v6274
    %6507 = vmatpush1.msra.mxu0 %v6273
    %6508 = vmatprep.subr.mxu0 %v6278
    %6509 = vmatpush1.msra.mxu0 %v6277
    %6510 = vmatprep.subr.mxu0 %v6282
    %6511 = vmatpush1.msra.mxu0 %v6281
    %6512 = vmatprep.subr.mxu0 %v6286
    %6513 = vmatpush1.msra.mxu0 %v6285
    %6514 = vmatprep.subr.mxu0 %v6290
    %6515 = vmatpush1.msra.mxu0 %v6289
    %6516 = vmatprep.subr.mxu0 %v6294
    %6517 = vmatpush1.msra.mxu0 %v6293
    %6518 = vmatprep.subr.mxu0 %v6298
    %6519 = vmatpush1.msra.mxu0 %v6297
    %6520 = vmatprep.subr.mxu0 %v6302
    %6521 = vmatpush1.msra.mxu0 %v6301
    %6522 = vmatprep.subr.mxu0 0.0
    %6523 = vmatpush1.msra.mxu0 0.0
    %6524 = vmatprep.subr.mxu0 0.0
    %6525 = vmatpush1.msra.mxu0 0.0
    %6526 = vmatprep.subr.mxu0 0.0
    %6527 = vmatpush1.msra.mxu0 0.0
    %6528 = vmatprep.subr.mxu0 0.0
    %6529 = vmatpush1.msra.mxu0 0.0
    %6530 = vmatprep.subr.mxu0 0.0
    %6531 = vmatpush1.msra.mxu0 0.0
    %6532 = vmatprep.subr.mxu0 0.0
    %6533 = vmatpush1.msra.mxu0 0.0
    %6534 = vmatprep.subr.mxu0 0.0
    %6535 = vmatpush1.msra.mxu0 0.0
    %6536 = vmatprep.subr.mxu0 0.0
    %6537 = vmatpush1.msra.mxu0 0.0
    %6538 = vmatprep.subr.mxu0 0.0
    %6539 = vmatpush1.msra.mxu0 0.0
    %6540 = vmatprep.subr.mxu0 0.0
    %6541 = vmatpush1.msra.mxu0 0.0
    %6542 = vmatprep.subr.mxu0 0.0
    %6543 = vmatpush1.msra.mxu0 0.0
    %6544 = vmatprep.subr.mxu0 0.0
    %6545 = vmatpush1.msra.mxu0 0.0
    %6546 = vmatprep.mubr.f32.mxu0 %v6338
    %6547 = vmatmul.mubr.f32.gmra.mrb[0].mxu0 %v6330
    %v6548 = vpop.f32.mrb[0].mxu0
    %v6549 = vadd.f32 %v6478, %v6548
    %v6550 = vpop.f32.mrb[0].mxu0
    %v6551 = vadd.f32 %v6480, %v6550
    %6552 = vdwg.mxu0
    %6553 = vmatprep.subr.mxu0 %v5972
    %6554 = vmatpush1.msra.mxu0 %v5971
    %6555 = vmatprep.subr.mxu0 %v5976
    %6556 = vmatpush1.msra.mxu0 %v5975
    %6557 = vmatprep.subr.mxu0 %v5980
    %6558 = vmatpush1.msra.mxu0 %v5979
    %6559 = vmatprep.subr.mxu0 %v5984
    %6560 = vmatpush1.msra.mxu0 %v5983
    %6561 = vmatprep.subr.mxu0 %v5988
    %6562 = vmatpush1.msra.mxu0 %v5987
    %6563 = vmatprep.subr.mxu0 %v5992
    %6564 = vmatpush1.msra.mxu0 %v5991
    %6565 = vmatprep.subr.mxu0 %v5996
    %6566 = vmatpush1.msra.mxu0 %v5995
    %6567 = vmatprep.subr.mxu0 %v6000
    %6568 = vmatpush1.msra.mxu0 %v5999
    %6569 = vmatprep.subr.mxu0 %v6004
    %6570 = vmatpush1.msra.mxu0 %v6003
    %6571 = vmatprep.subr.mxu0 %v6008
    %6572 = vmatpush1.msra.mxu0 %v6007
    %6573 = vmatprep.subr.mxu0 %v6012
    %6574 = vmatpush1.msra.mxu0 %v6011
    %6575 = vmatprep.subr.mxu0 %v6016
    %6576 = vmatpush1.msra.mxu0 %v6015
    %6577 = vmatprep.subr.mxu0 %v6020
    %6578 = vmatpush1.msra.mxu0 %v6019
    %6579 = vmatprep.subr.mxu0 %v6024
    %6580 = vmatpush1.msra.mxu0 %v6023
    %6581 = vmatprep.subr.mxu0 %v6028
    %6582 = vmatpush1.msra.mxu0 %v6027
    %6583 = vmatprep.subr.mxu0 %v6032
    %6584 = vmatpush1.msra.mxu0 %v6031
    %6585 = vmatprep.subr.mxu0 %v6036
    %6586 = vmatpush1.msra.mxu0 %v6035
    %6587 = vmatprep.subr.mxu0 %v6040
    %6588 = vmatpush1.msra.mxu0 %v6039
    %6589 = vmatprep.subr.mxu0 %v6044
    %6590 = vmatpush1.msra.mxu0 %v6043
    %6591 = vmatprep.subr.mxu0 %v6048
    %6592 = vmatpush1.msra.mxu0 %v6047
    %6593 = vmatprep.subr.mxu0 %v6052
    %6594 = vmatpush1.msra.mxu0 %v6051
    %6595 = vmatprep.subr.mxu0 %v6056
    %6596 = vmatpush1.msra.mxu0 %v6055
    %6597 = vmatprep.subr.mxu0 %v6060
    %6598 = vmatpush1.msra.mxu0 %v6059
    %6599 = vmatprep.subr.mxu0 %v6064
    %6600 = vmatpush1.msra.mxu0 %v6063
    %6601 = vmatprep.subr.mxu0 %v6068
    %6602 = vmatpush1.msra.mxu0 %v6067
    %6603 = vmatprep.subr.mxu0 %v6072
    %6604 = vmatpush1.msra.mxu0 %v6071
    %6605 = vmatprep.subr.mxu0 %v6076
    %6606 = vmatpush1.msra.mxu0 %v6075
    %6607 = vmatprep.subr.mxu0 %v6080
    %6608 = vmatpush1.msra.mxu0 %v6079
    %6609 = vmatprep.subr.mxu0 %v6084
    %6610 = vmatpush1.msra.mxu0 %v6083
    %6611 = vmatprep.subr.mxu0 %v6088
    %6612 = vmatpush1.msra.mxu0 %v6087
    %6613 = vmatprep.subr.mxu0 %v6092
    %6614 = vmatpush1.msra.mxu0 %v6091
    %6615 = vmatprep.subr.mxu0 %v6096
    %6616 = vmatpush1.msra.mxu0 %v6095
    %6617 = vmatprep.mubr.f32.mxu0 %v6322
    %6618 = vmatmul.mubr.f32.gmra.mrb[0].mxu0 %v6314
    %v6619 = vpop.f32.mrb[0].mxu0
    %v6620 = vadd.f32 0.0, %v6619
    %v6621 = vpop.f32.mrb[0].mxu0
    %v6622 = vadd.f32 0.0, %v6621
    %6623 = vdwg.mxu0
    %6624 = vmatprep.subr.mxu0 %v6100
    %6625 = vmatpush1.msra.mxu0 %v6099
    %6626 = vmatprep.subr.mxu0 %v6104
    %6627 = vmatpush1.msra.mxu0 %v6103
    %6628 = vmatprep.subr.mxu0 %v6108
    %6629 = vmatpush1.msra.mxu0 %v6107
    %6630 = vmatprep.subr.mxu0 %v6112
    %6631 = vmatpush1.msra.mxu0 %v6111
    %6632 = vmatprep.subr.mxu0 %v6116
    %6633 = vmatpush1.msra.mxu0 %v6115
    %6634 = vmatprep.subr.mxu0 %v6120
    %6635 = vmatpush1.msra.mxu0 %v6119
    %6636 = vmatprep.subr.mxu0 %v6124
    %6637 = vmatpush1.msra.mxu0 %v6123
    %6638 = vmatprep.subr.mxu0 %v6128
    %6639 = vmatpush1.msra.mxu0 %v6127
    %6640 = vmatprep.subr.mxu0 %v6132
    %6641 = vmatpush1.msra.mxu0 %v6131
    %6642 = vmatprep.subr.mxu0 %v6136
    %6643 = vmatpush1.msra.mxu0 %v6135
    %6644 = vmatprep.subr.mxu0 %v6140
    %6645 = vmatpush1.msra.mxu0 %v6139
    %6646 = vmatprep.subr.mxu0 %v6144
    %6647 = vmatpush1.msra.mxu0 %v6143
    %6648 = vmatprep.subr.mxu0 %v6148
    %6649 = vmatpush1.msra.mxu0 %v6147
    %6650 = vmatprep.subr.mxu0 %v6152
    %6651 = vmatpush1.msra.mxu0 %v6151
    %6652 = vmatprep.subr.mxu0 %v6156
    %6653 = vmatpush1.msra.mxu0 %v6155
    %6654 = vmatprep.subr.mxu0 %v6160
    %6655 = vmatpush1.msra.mxu0 %v6159
    %6656 = vmatprep.subr.mxu0 %v6164
    %6657 = vmatpush1.msra.mxu0 %v6163
    %6658 = vmatprep.subr.mxu0 %v6168
    %6659 = vmatpush1.msra.mxu0 %v6167
    %6660 = vmatprep.subr.mxu0 %v6172
    %6661 = vmatpush1.msra.mxu0 %v6171
    %6662 = vmatprep.subr.mxu0 %v6176
    %6663 = vmatpush1.msra.mxu0 %v6175
    %6664 = vmatprep.subr.mxu0 %v6180
    %6665 = vmatpush1.msra.mxu0 %v6179
    %6666 = vmatprep.subr.mxu0 %v6184
    %6667 = vmatpush1.msra.mxu0 %v6183
    %6668 = vmatprep.subr.mxu0 %v6188
    %6669 = vmatpush1.msra.mxu0 %v6187
    %6670 = vmatprep.subr.mxu0 %v6192
    %6671 = vmatpush1.msra.mxu0 %v6191
    %6672 = vmatprep.subr.mxu0 %v6196
    %6673 = vmatpush1.msra.mxu0 %v6195
    %6674 = vmatprep.subr.mxu0 %v6200
    %6675 = vmatpush1.msra.mxu0 %v6199
    %6676 = vmatprep.subr.mxu0 %v6204
    %6677 = vmatpush1.msra.mxu0 %v6203
    %6678 = vmatprep.subr.mxu0 %v6208
    %6679 = vmatpush1.msra.mxu0 %v6207
    %6680 = vmatprep.subr.mxu0 %v6212
    %6681 = vmatpush1.msra.mxu0 %v6211
    %6682 = vmatprep.subr.mxu0 %v6216
    %6683 = vmatpush1.msra.mxu0 %v6215
    %6684 = vmatprep.subr.mxu0 %v6220
    %6685 = vmatpush1.msra.mxu0 %v6219
    %6686 = vmatprep.subr.mxu0 %v6224
    %6687 = vmatpush1.msra.mxu0 %v6223
    %6688 = vmatprep.mubr.f32.mxu0 %v6323
    %6689 = vmatmul.mubr.f32.gmra.mrb[0].mxu0 %v6321
    %v6690 = vpop.f32.mrb[0].mxu0
    %v6691 = vadd.f32 %v6620, %v6690
    %v6692 = vpop.f32.mrb[0].mxu0
    %v6693 = vadd.f32 %v6622, %v6692
    %6694 = vdwg.mxu0
    %6695 = vmatprep.subr.mxu0 %v6228
    %6696 = vmatpush1.msra.mxu0 %v6227
    %6697 = vmatprep.subr.mxu0 %v6232
    %6698 = vmatpush1.msra.mxu0 %v6231
    %6699 = vmatprep.subr.mxu0 %v6236
    %6700 = vmatpush1.msra.mxu0 %v6235
    %6701 = vmatprep.subr.mxu0 %v6240
    %6702 = vmatpush1.msra.mxu0 %v6239
    %6703 = vmatprep.subr.mxu0 %v6244
    %6704 = vmatpush1.msra.mxu0 %v6243
    %6705 = vmatprep.subr.mxu0 %v6248
    %6706 = vmatpush1.msra.mxu0 %v6247
    %6707 = vmatprep.subr.mxu0 %v6252
    %6708 = vmatpush1.msra.mxu0 %v6251
    %6709 = vmatprep.subr.mxu0 %v6256
    %6710 = vmatpush1.msra.mxu0 %v6255
    %6711 = vmatprep.subr.mxu0 %v6260
    %6712 = vmatpush1.msra.mxu0 %v6259
    %6713 = vmatprep.subr.mxu0 %v6264
    %6714 = vmatpush1.msra.mxu0 %v6263
    %6715 = vmatprep.subr.mxu0 %v6268
    %6716 = vmatpush1.msra.mxu0 %v6267
    %6717 = vmatprep.subr.mxu0 %v6272
    %6718 = vmatpush1.msra.mxu0 %v6271
    %6719 = vmatprep.subr.mxu0 %v6276
    %6720 = vmatpush1.msra.mxu0 %v6275
    %6721 = vmatprep.subr.mxu0 %v6280
    %6722 = vmatpush1.msra.mxu0 %v6279
    %6723 = vmatprep.subr.mxu0 %v6284
    %6724 = vmatpush1.msra.mxu0 %v6283
    %6725 = vmatprep.subr.mxu0 %v6288
    %6726 = vmatpush1.msra.mxu0 %v6287
    %6727 = vmatprep.subr.mxu0 %v6292
    %6728 = vmatpush1.msra.mxu0 %v6291
    %6729 = vmatprep.subr.mxu0 %v6296
    %6730 = vmatpush1.msra.mxu0 %v6295
    %6731 = vmatprep.subr.mxu0 %v6300
    %6732 = vmatpush1.msra.mxu0 %v6299
    %6733 = vmatprep.subr.mxu0 %v6304
    %6734 = vmatpush1.msra.mxu0 %v6303
    %6735 = vmatprep.subr.mxu0 0.0
    %6736 = vmatpush1.msra.mxu0 0.0
    %6737 = vmatprep.subr.mxu0 0.0
    %6738 = vmatpush1.msra.mxu0 0.0
    %6739 = vmatprep.subr.mxu0 0.0
    %6740 = vmatpush1.msra.mxu0 0.0
    %6741 = vmatprep.subr.mxu0 0.0
    %6742 = vmatpush1.msra.mxu0 0.0
    %6743 = vmatprep.subr.mxu0 0.0
    %6744 = vmatpush1.msra.mxu0 0.0
    %6745 = vmatprep.subr.mxu0 0.0
    %6746 = vmatpush1.msra.mxu0 0.0
    %6747 = vmatprep.subr.mxu0 0.0
    %6748 = vmatpush1.msra.mxu0 0.0
    %6749 = vmatprep.subr.mxu0 0.0
    %6750 = vmatpush1.msra.mxu0 0.0
    %6751 = vmatprep.subr.mxu0 0.0
    %6752 = vmatpush1.msra.mxu0 0.0
    %6753 = vmatprep.subr.mxu0 0.0
    %6754 = vmatpush1.msra.mxu0 0.0
    %6755 = vmatprep.subr.mxu0 0.0
    %6756 = vmatpush1.msra.mxu0 0.0
    %6757 = vmatprep.subr.mxu0 0.0
    %6758 = vmatpush1.msra.mxu0 0.0
    %6759 = vmatprep.mubr.f32.mxu0 %v6338
    %6760 = vmatmul.mubr.f32.gmra.mrb[0].mxu0 %v6330
    %v6761 = vpop.f32.mrb[0].mxu0
    %v6762 = vadd.f32 %v6691, %v6761
    %v6763 = vpop.f32.mrb[0].mxu0
    %v6764 = vadd.f32 %v6693, %v6763
    %6765 = vdwg.mxu0
    %v6766 = vadd.f32 %v5821, %v6549
    %v6767 = vadd.f32 %v5823, %v6551
    %v6768 = vadd.f32 %v5963, %v6762
    %v6769 = vadd.f32 %v5965, %v6764
    %v6770 = vld [vmem:[#allocation2 + $0x1980] sm:$0xff]
    %v6771 = vld [vmem:[#allocation2 + $0x1988] sm:$0xff]
    %v6772 = vld [vmem:[#allocation2 + $0x1990] sm:$0xff]
    %v6773 = vld [vmem:[#allocation2 + $0x1998] sm:$0xff]
    %v6774 = vld [vmem:[#allocation2 + $0x19a0] sm:$0xff]
    %v6775 = vld [vmem:[#allocation2 + $0x19a8] sm:$0xff]
    %v6776 = vld [vmem:[#allocation2 + $0x19b0] sm:$0xff]
    %v6777 = vld [vmem:[#allocation2 + $0x19b8] sm:$0xff]
    %v6778 = vld [vmem:[#allocation2 + $0x19c0] sm:$0xff]
    %v6779 = vld [vmem:[#allocation2 + $0x19c8] sm:$0xff]
    %v6780 = vld [vmem:[#allocation2 + $0x19d0] sm:$0xff]
    %v6781 = vld [vmem:[#allocation2 + $0x19d8] sm:$0xff]
    %v6782 = vld [vmem:[#allocation2 + $0x19e0] sm:$0xff]
    %v6783 = vld [vmem:[#allocation2 + $0x19e8] sm:$0xff]
    %v6784 = vld [vmem:[#allocation2 + $0x19f0] sm:$0xff]
    %v6785 = vld [vmem:[#allocation2 + $0x19f8] sm:$0xff]
    %v6787 = vsel %vm6337, %v4863, 0
    %6789 = vmatprep.subr.mxu0 %v6771
    %6790 = vmatpush1.msra.mxu0 %v6770
    %6791 = vmatprep.subr.mxu0 %v6775
    %6792 = vmatpush1.msra.mxu0 %v6774
    %6793 = vmatprep.subr.mxu0 %v6779
    %6794 = vmatpush1.msra.mxu0 %v6778
    %6795 = vmatprep.subr.mxu0 %v6783
    %6796 = vmatpush1.msra.mxu0 %v6782
    %6797 = vmatprep.subr.mxu0 0.0
    %6798 = vmatpush1.msra.mxu0 0.0
    %6799 = vmatprep.subr.mxu0 0.0
    %6800 = vmatpush1.msra.mxu0 0.0
    %6801 = vmatprep.subr.mxu0 0.0
    %6802 = vmatpush1.msra.mxu0 0.0
    %6803 = vmatprep.subr.mxu0 0.0
    %6804 = vmatpush1.msra.mxu0 0.0
    %6805 = vmatprep.subr.mxu0 0.0
    %6806 = vmatpush1.msra.mxu0 0.0
    %6807 = vmatprep.subr.mxu0 0.0
    %6808 = vmatpush1.msra.mxu0 0.0
    %6809 = vmatprep.subr.mxu0 0.0
    %6810 = vmatpush1.msra.mxu0 0.0
    %6811 = vmatprep.subr.mxu0 0.0
    %6812 = vmatpush1.msra.mxu0 0.0
    %6813 = vmatprep.subr.mxu0 0.0
    %6814 = vmatpush1.msra.mxu0 0.0
    %6815 = vmatprep.subr.mxu0 0.0
    %6816 = vmatpush1.msra.mxu0 0.0
    %6817 = vmatprep.subr.mxu0 0.0
    %6818 = vmatpush1.msra.mxu0 0.0
    %6819 = vmatprep.subr.mxu0 0.0
    %6820 = vmatpush1.msra.mxu0 0.0
    %6821 = vmatprep.subr.mxu0 0.0
    %6822 = vmatpush1.msra.mxu0 0.0
    %6823 = vmatprep.subr.mxu0 0.0
    %6824 = vmatpush1.msra.mxu0 0.0
    %6825 = vmatprep.subr.mxu0 0.0
    %6826 = vmatpush1.msra.mxu0 0.0
    %6827 = vmatprep.subr.mxu0 0.0
    %6828 = vmatpush1.msra.mxu0 0.0
    %6829 = vmatprep.subr.mxu0 0.0
    %6830 = vmatpush1.msra.mxu0 0.0
    %6831 = vmatprep.subr.mxu0 0.0
    %6832 = vmatpush1.msra.mxu0 0.0
    %6833 = vmatprep.subr.mxu0 0.0
    %6834 = vmatpush1.msra.mxu0 0.0
    %6835 = vmatprep.subr.mxu0 0.0
    %6836 = vmatpush1.msra.mxu0 0.0
    %6837 = vmatprep.subr.mxu0 0.0
    %6838 = vmatpush1.msra.mxu0 0.0
    %6839 = vmatprep.subr.mxu0 0.0
    %6840 = vmatpush1.msra.mxu0 0.0
    %6841 = vmatprep.subr.mxu0 0.0
    %6842 = vmatpush1.msra.mxu0 0.0
    %6843 = vmatprep.subr.mxu0 0.0
    %6844 = vmatpush1.msra.mxu0 0.0
    %6845 = vmatprep.subr.mxu0 0.0
    %6846 = vmatpush1.msra.mxu0 0.0
    %6847 = vmatprep.subr.mxu0 0.0
    %6848 = vmatpush1.msra.mxu0 0.0
    %6849 = vmatprep.subr.mxu0 0.0
    %6850 = vmatpush1.msra.mxu0 0.0
    %6851 = vmatprep.subr.mxu0 0.0
    %6852 = vmatpush1.msra.mxu0 0.0
    %6853 = vmatprep.mubr.f32.mxu0 0.0
    %6854 = vmatmul.mubr.f32.gmra.mrb[0].mxu0 %v6787
    %v6855 = vpop.f32.mrb[0].mxu0
    %v6856 = vadd.f32 0.0, %v6855
    %v6857 = vpop.f32.mrb[0].mxu0
    %v6858 = vadd.f32 0.0, %v6857
    %6859 = vdwg.mxu0
    %6860 = vmatprep.subr.mxu0 %v6773
    %6861 = vmatpush1.msra.mxu0 %v6772
    %6862 = vmatprep.subr.mxu0 %v6777
    %6863 = vmatpush1.msra.mxu0 %v6776
    %6864 = vmatprep.subr.mxu0 %v6781
    %6865 = vmatpush1.msra.mxu0 %v6780
    %6866 = vmatprep.subr.mxu0 %v6785
    %6867 = vmatpush1.msra.mxu0 %v6784
    %6868 = vmatprep.subr.mxu0 0.0
    %6869 = vmatpush1.msra.mxu0 0.0
    %6870 = vmatprep.subr.mxu0 0.0
    %6871 = vmatpush1.msra.mxu0 0.0
    %6872 = vmatprep.subr.mxu0 0.0
    %6873 = vmatpush1.msra.mxu0 0.0
    %6874 = vmatprep.subr.mxu0 0.0
    %6875 = vmatpush1.msra.mxu0 0.0
    %6876 = vmatprep.subr.mxu0 0.0
    %6877 = vmatpush1.msra.mxu0 0.0
    %6878 = vmatprep.subr.mxu0 0.0
    %6879 = vmatpush1.msra.mxu0 0.0
    %6880 = vmatprep.subr.mxu0 0.0
    %6881 = vmatpush1.msra.mxu0 0.0
    %6882 = vmatprep.subr.mxu0 0.0
    %6883 = vmatpush1.msra.mxu0 0.0
    %6884 = vmatprep.subr.mxu0 0.0
    %6885 = vmatpush1.msra.mxu0 0.0
    %6886 = vmatprep.subr.mxu0 0.0
    %6887 = vmatpush1.msra.mxu0 0.0
    %6888 = vmatprep.subr.mxu0 0.0
    %6889 = vmatpush1.msra.mxu0 0.0
    %6890 = vmatprep.subr.mxu0 0.0
    %6891 = vmatpush1.msra.mxu0 0.0
    %6892 = vmatprep.subr.mxu0 0.0
    %6893 = vmatpush1.msra.mxu0 0.0
    %6894 = vmatprep.subr.mxu0 0.0
    %6895 = vmatpush1.msra.mxu0 0.0
    %6896 = vmatprep.subr.mxu0 0.0
    %6897 = vmatpush1.msra.mxu0 0.0
    %6898 = vmatprep.subr.mxu0 0.0
    %6899 = vmatpush1.msra.mxu0 0.0
    %6900 = vmatprep.subr.mxu0 0.0
    %6901 = vmatpush1.msra.mxu0 0.0
    %6902 = vmatprep.subr.mxu0 0.0
    %6903 = vmatpush1.msra.mxu0 0.0
    %6904 = vmatprep.subr.mxu0 0.0
    %6905 = vmatpush1.msra.mxu0 0.0
    %6906 = vmatprep.subr.mxu0 0.0
    %6907 = vmatpush1.msra.mxu0 0.0
    %6908 = vmatprep.subr.mxu0 0.0
    %6909 = vmatpush1.msra.mxu0 0.0
    %6910 = vmatprep.subr.mxu0 0.0
    %6911 = vmatpush1.msra.mxu0 0.0
    %6912 = vmatprep.subr.mxu0 0.0
    %6913 = vmatpush1.msra.mxu0 0.0
    %6914 = vmatprep.subr.mxu0 0.0
    %6915 = vmatpush1.msra.mxu0 0.0
    %6916 = vmatprep.subr.mxu0 0.0
    %6917 = vmatpush1.msra.mxu0 0.0
    %6918 = vmatprep.subr.mxu0 0.0
    %6919 = vmatpush1.msra.mxu0 0.0
    %6920 = vmatprep.subr.mxu0 0.0
    %6921 = vmatpush1.msra.mxu0 0.0
    %6922 = vmatprep.subr.mxu0 0.0
    %6923 = vmatpush1.msra.mxu0 0.0
    %6924 = vmatprep.mubr.f32.mxu0 0.0
    %6925 = vmatmul.mubr.f32.gmra.mrb[0].mxu0 %v6787
    %v6926 = vpop.f32.mrb[0].mxu0
    %v6927 = vadd.f32 0.0, %v6926
    %v6928 = vpop.f32.mrb[0].mxu0
    %v6929 = vadd.f32 0.0, %v6928
    %6930 = vdwg.mxu0
    %v6931 = vadd.f32 %v6766, %v6856
    %v6932 = vadd.f32 %v6767, %v6858
    %v6933 = vadd.f32 %v6768, %v6927
    %v6934 = vadd.f32 %v6769, %v6929
    %v6935 = vld [vmem:[%s12] sm:$0xf]
    %v6937 = vlaneseq
    %v6938 = vshrl.u32 %v6937, 7
    %v6939 = vsub.s32 0, %v6938
    %v6940 = vrot.slane %v6935, %v6939
    %v6941 = vlaneseq
    %v6942 = vshrl.u32 %v6941, 7
    %v6943 = vsub.s32 1, %v6942
    %v6944 = vrot.slane %v6935, %v6943
    %v6945 = vlaneseq
    %v6946 = vshrl.u32 %v6945, 7
    %v6947 = vsub.s32 2, %v6946
    %v6948 = vrot.slane %v6935, %v6947
    %v6949 = vlaneseq
    %v6950 = vshrl.u32 %v6949, 7
    %v6951 = vsub.s32 3, %v6950
    %v6952 = vrot.slane %v6935, %v6951
    %v6957 = vadd.f32 %v6931, %v6940
    %v6958 = vadd.f32 %v6932, %v6944
    %v6959 = vadd.f32 %v6933, %v6948
    %v6960 = vadd.f32 %v6934, %v6952
    %v6961 = vmax.f32 %v6957, 0.0
    %v6962 = vmax.f32 %v6958, 0.0
    %v6963 = vmax.f32 %v6959, 0.0
    %v6964 = vmax.f32 %v6960, 0.0
    %v6965 = vld [vmem:[%s13] sm:$0xff]
    %v6966 = vld [vmem:[%s13 + $0x8] sm:$0xff]
    %v6967 = vld [vmem:[%s13 + $0x10] sm:$0xff]
    %v6968 = vld [vmem:[%s13 + $0x18] sm:$0xff]
    %v6969 = vld [vmem:[%s13 + $0x20] sm:$0xff]
    %v6970 = vld [vmem:[%s13 + $0x28] sm:$0xff]
    %v6971 = vld [vmem:[%s13 + $0x30] sm:$0xff]
    %v6972 = vld [vmem:[%s13 + $0x38] sm:$0xff]
    %v6973 = vld [vmem:[%s13 + $0x40] sm:$0xff]
    %v6974 = vld [vmem:[%s13 + $0x48] sm:$0xff]
    %v6975 = vld [vmem:[%s13 + $0x50] sm:$0xff]
    %v6976 = vld [vmem:[%s13 + $0x58] sm:$0xff]
    %v6977 = vld [vmem:[%s13 + $0x60] sm:$0xff]
    %v6978 = vld [vmem:[%s13 + $0x68] sm:$0xff]
    %v6979 = vld [vmem:[%s13 + $0x70] sm:$0xff]
    %v6980 = vld [vmem:[%s13 + $0x78] sm:$0xff]
    %v6981 = vld [vmem:[%s13 + $0x80] sm:$0xff]
    %v6982 = vld [vmem:[%s13 + $0x88] sm:$0xff]
    %v6983 = vld [vmem:[%s13 + $0x90] sm:$0xff]
    %v6984 = vld [vmem:[%s13 + $0x98] sm:$0xff]
    %v6985 = vld [vmem:[%s13 + $0xa0] sm:$0xff]
    %v6986 = vld [vmem:[%s13 + $0xa8] sm:$0xff]
    %v6987 = vld [vmem:[%s13 + $0xb0] sm:$0xff]
    %v6988 = vld [vmem:[%s13 + $0xb8] sm:$0xff]
    %v6989 = vld [vmem:[%s13 + $0xc0] sm:$0xff]
    %v6990 = vld [vmem:[%s13 + $0xc8] sm:$0xff]
    %v6991 = vld [vmem:[%s13 + $0xd0] sm:$0xff]
    %v6992 = vld [vmem:[%s13 + $0xd8] sm:$0xff]
    %v6993 = vld [vmem:[%s13 + $0xe0] sm:$0xff]
    %v6994 = vld [vmem:[%s13 + $0xe8] sm:$0xff]
    %v6995 = vld [vmem:[%s13 + $0xf0] sm:$0xff]
    %v6996 = vld [vmem:[%s13 + $0xf8] sm:$0xff]
    %v6997 = vld [vmem:[%s13 + $0x100] sm:$0xff]
    %v6998 = vld [vmem:[%s13 + $0x108] sm:$0xff]
    %v6999 = vld [vmem:[%s13 + $0x110] sm:$0xff]
    %v7000 = vld [vmem:[%s13 + $0x118] sm:$0xff]
    %v7001 = vld [vmem:[%s13 + $0x120] sm:$0xff]
    %v7002 = vld [vmem:[%s13 + $0x128] sm:$0xff]
    %v7003 = vld [vmem:[%s13 + $0x130] sm:$0xff]
    %v7004 = vld [vmem:[%s13 + $0x138] sm:$0xff]
    %v7005 = vld [vmem:[%s13 + $0x140] sm:$0xff]
    %v7006 = vld [vmem:[%s13 + $0x148] sm:$0xff]
    %v7007 = vld [vmem:[%s13 + $0x150] sm:$0xff]
    %v7008 = vld [vmem:[%s13 + $0x158] sm:$0xff]
    %v7009 = vld [vmem:[%s13 + $0x160] sm:$0xff]
    %v7010 = vld [vmem:[%s13 + $0x168] sm:$0xff]
    %v7011 = vld [vmem:[%s13 + $0x170] sm:$0xff]
    %v7012 = vld [vmem:[%s13 + $0x178] sm:$0xff]
    %v7013 = vld [vmem:[%s13 + $0x180] sm:$0xff]
    %v7014 = vld [vmem:[%s13 + $0x188] sm:$0xff]
    %v7015 = vld [vmem:[%s13 + $0x190] sm:$0xff]
    %v7016 = vld [vmem:[%s13 + $0x198] sm:$0xff]
    %v7017 = vld [vmem:[%s13 + $0x1a0] sm:$0xff]
    %v7018 = vld [vmem:[%s13 + $0x1a8] sm:$0xff]
    %v7019 = vld [vmem:[%s13 + $0x1b0] sm:$0xff]
    %v7020 = vld [vmem:[%s13 + $0x1b8] sm:$0xff]
    %v7021 = vld [vmem:[%s13 + $0x1c0] sm:$0xff]
    %v7022 = vld [vmem:[%s13 + $0x1c8] sm:$0xff]
    %v7023 = vld [vmem:[%s13 + $0x1d0] sm:$0xff]
    %v7024 = vld [vmem:[%s13 + $0x1d8] sm:$0xff]
    %v7025 = vld [vmem:[%s13 + $0x1e0] sm:$0xff]
    %v7026 = vld [vmem:[%s13 + $0x1e8] sm:$0xff]
    %v7027 = vld [vmem:[%s13 + $0x1f0] sm:$0xff]
    %v7028 = vld [vmem:[%s13 + $0x1f8] sm:$0xff]
    %v7029 = vld [vmem:[%s14] sm:$0x1]
    %v7031 = vlaneseq
    %v7032 = vshrl.u32 %v7031, 7
    %v7033 = vsub.s32 0, %v7032
    %v7034 = vrot.slane %v7029, %v7033
    %7036 = vmatprep.subr.mxu0 0.0
    %7037 = vmatpush1.msra.mxu0 %v6965
    %7038 = vmatprep.subr.mxu0 0.0
    %7039 = vmatpush1.msra.mxu0 %v6966
    %7040 = vmatprep.subr.mxu0 0.0
    %7041 = vmatpush1.msra.mxu0 %v6967
    %7042 = vmatprep.subr.mxu0 0.0
    %7043 = vmatpush1.msra.mxu0 %v6968
    %7044 = vmatprep.subr.mxu0 0.0
    %7045 = vmatpush1.msra.mxu0 %v6969
    %7046 = vmatprep.subr.mxu0 0.0
    %7047 = vmatpush1.msra.mxu0 %v6970
    %7048 = vmatprep.subr.mxu0 0.0
    %7049 = vmatpush1.msra.mxu0 %v6971
    %7050 = vmatprep.subr.mxu0 0.0
    %7051 = vmatpush1.msra.mxu0 %v6972
    %7052 = vmatprep.subr.mxu0 0.0
    %7053 = vmatpush1.msra.mxu0 %v6973
    %7054 = vmatprep.subr.mxu0 0.0
    %7055 = vmatpush1.msra.mxu0 %v6974
    %7056 = vmatprep.subr.mxu0 0.0
    %7057 = vmatpush1.msra.mxu0 %v6975
    %7058 = vmatprep.subr.mxu0 0.0
    %7059 = vmatpush1.msra.mxu0 %v6976
    %7060 = vmatprep.subr.mxu0 0.0
    %7061 = vmatpush1.msra.mxu0 %v6977
    %7062 = vmatprep.subr.mxu0 0.0
    %7063 = vmatpush1.msra.mxu0 %v6978
    %7064 = vmatprep.subr.mxu0 0.0
    %7065 = vmatpush1.msra.mxu0 %v6979
    %7066 = vmatprep.subr.mxu0 0.0
    %7067 = vmatpush1.msra.mxu0 %v6980
    %7068 = vmatprep.subr.mxu0 0.0
    %7069 = vmatpush1.msra.mxu0 %v6981
    %7070 = vmatprep.subr.mxu0 0.0
    %7071 = vmatpush1.msra.mxu0 %v6982
    %7072 = vmatprep.subr.mxu0 0.0
    %7073 = vmatpush1.msra.mxu0 %v6983
    %7074 = vmatprep.subr.mxu0 0.0
    %7075 = vmatpush1.msra.mxu0 %v6984
    %7076 = vmatprep.subr.mxu0 0.0
    %7077 = vmatpush1.msra.mxu0 %v6985
    %7078 = vmatprep.subr.mxu0 0.0
    %7079 = vmatpush1.msra.mxu0 %v6986
    %7080 = vmatprep.subr.mxu0 0.0
    %7081 = vmatpush1.msra.mxu0 %v6987
    %7082 = vmatprep.subr.mxu0 0.0
    %7083 = vmatpush1.msra.mxu0 %v6988
    %7084 = vmatprep.subr.mxu0 0.0
    %7085 = vmatpush1.msra.mxu0 %v6989
    %7086 = vmatprep.subr.mxu0 0.0
    %7087 = vmatpush1.msra.mxu0 %v6990
    %7088 = vmatprep.subr.mxu0 0.0
    %7089 = vmatpush1.msra.mxu0 %v6991
    %7090 = vmatprep.subr.mxu0 0.0
    %7091 = vmatpush1.msra.mxu0 %v6992
    %7092 = vmatprep.subr.mxu0 0.0
    %7093 = vmatpush1.msra.mxu0 %v6993
    %7094 = vmatprep.subr.mxu0 0.0
    %7095 = vmatpush1.msra.mxu0 %v6994
    %7096 = vmatprep.subr.mxu0 0.0
    %7097 = vmatpush1.msra.mxu0 %v6995
    %7098 = vmatprep.subr.mxu0 0.0
    %7099 = vmatpush1.msra.mxu0 %v6996
    %7100 = vmatprep.mubr.f32.mxu0 %v6962
    %7101 = vmatmul.mubr.f32.gmra.mrb[0].mxu0 %v6961
    %v7102 = vpop.f32.mrb[0].mxu0
    %v7103 = vadd.f32 %v7034, %v7102
    %v7104 = vpop.f32.mrb[0].mxu0
    %7105 = vdwg.mxu0
    %7106 = vmatprep.subr.mxu0 0.0
    %7107 = vmatpush1.msra.mxu0 %v6997
    %7108 = vmatprep.subr.mxu0 0.0
    %7109 = vmatpush1.msra.mxu0 %v6998
    %7110 = vmatprep.subr.mxu0 0.0
    %7111 = vmatpush1.msra.mxu0 %v6999
    %7112 = vmatprep.subr.mxu0 0.0
    %7113 = vmatpush1.msra.mxu0 %v7000
    %7114 = vmatprep.subr.mxu0 0.0
    %7115 = vmatpush1.msra.mxu0 %v7001
    %7116 = vmatprep.subr.mxu0 0.0
    %7117 = vmatpush1.msra.mxu0 %v7002
    %7118 = vmatprep.subr.mxu0 0.0
    %7119 = vmatpush1.msra.mxu0 %v7003
    %7120 = vmatprep.subr.mxu0 0.0
    %7121 = vmatpush1.msra.mxu0 %v7004
    %7122 = vmatprep.subr.mxu0 0.0
    %7123 = vmatpush1.msra.mxu0 %v7005
    %7124 = vmatprep.subr.mxu0 0.0
    %7125 = vmatpush1.msra.mxu0 %v7006
    %7126 = vmatprep.subr.mxu0 0.0
    %7127 = vmatpush1.msra.mxu0 %v7007
    %7128 = vmatprep.subr.mxu0 0.0
    %7129 = vmatpush1.msra.mxu0 %v7008
    %7130 = vmatprep.subr.mxu0 0.0
    %7131 = vmatpush1.msra.mxu0 %v7009
    %7132 = vmatprep.subr.mxu0 0.0
    %7133 = vmatpush1.msra.mxu0 %v7010
    %7134 = vmatprep.subr.mxu0 0.0
    %7135 = vmatpush1.msra.mxu0 %v7011
    %7136 = vmatprep.subr.mxu0 0.0
    %7137 = vmatpush1.msra.mxu0 %v7012
    %7138 = vmatprep.subr.mxu0 0.0
    %7139 = vmatpush1.msra.mxu0 %v7013
    %7140 = vmatprep.subr.mxu0 0.0
    %7141 = vmatpush1.msra.mxu0 %v7014
    %7142 = vmatprep.subr.mxu0 0.0
    %7143 = vmatpush1.msra.mxu0 %v7015
    %7144 = vmatprep.subr.mxu0 0.0
    %7145 = vmatpush1.msra.mxu0 %v7016
    %7146 = vmatprep.subr.mxu0 0.0
    %7147 = vmatpush1.msra.mxu0 %v7017
    %7148 = vmatprep.subr.mxu0 0.0
    %7149 = vmatpush1.msra.mxu0 %v7018
    %7150 = vmatprep.subr.mxu0 0.0
    %7151 = vmatpush1.msra.mxu0 %v7019
    %7152 = vmatprep.subr.mxu0 0.0
    %7153 = vmatpush1.msra.mxu0 %v7020
    %7154 = vmatprep.subr.mxu0 0.0
    %7155 = vmatpush1.msra.mxu0 %v7021
    %7156 = vmatprep.subr.mxu0 0.0
    %7157 = vmatpush1.msra.mxu0 %v7022
    %7158 = vmatprep.subr.mxu0 0.0
    %7159 = vmatpush1.msra.mxu0 %v7023
    %7160 = vmatprep.subr.mxu0 0.0
    %7161 = vmatpush1.msra.mxu0 %v7024
    %7162 = vmatprep.subr.mxu0 0.0
    %7163 = vmatpush1.msra.mxu0 %v7025
    %7164 = vmatprep.subr.mxu0 0.0
    %7165 = vmatpush1.msra.mxu0 %v7026
    %7166 = vmatprep.subr.mxu0 0.0
    %7167 = vmatpush1.msra.mxu0 %v7027
    %7168 = vmatprep.subr.mxu0 0.0
    %7169 = vmatpush1.msra.mxu0 %v7028
    %7170 = vmatprep.mubr.f32.mxu0 %v6964
    %7171 = vmatmul.mubr.f32.gmra.mrb[0].mxu0 %v6963
    %v7172 = vpop.f32.mrb[0].mxu0
    %v7173 = vadd.f32 %v7103, %v7172
    %v7174 = vpop.f32.mrb[0].mxu0
    %7175 = vdwg.mxu0
    %v7176 = vmax.f32 %v7173, 0.0
    %vm7177 = vcmask 517120
    %7178 = vst.msk [vmem:[#allocation4] sm:$0x3] %vm7177, %v7176
    // Predicated region
    $region92: #{b_seq_forward.5} parent=1 // pred_check
      _
    $region93: #{b_seq_forward.5} parent=1 // pred_check_branch
      %7180 = sbr.rel (0) target = $region95
    $region94: #{b_seq_forward.5} parent=1 // pred_region
      %s7182 = ssub.s32 32, 32
      %7183 = vsyncadd [#allocation5], %s7182
      %s7185 = sshll.u32 [#allocation4], 4
      %s7186 = int_to_ptr.vmem [resolvable:$true] %s7185
      %7188 = dma.vmem_to_hbm [thread:$0]  %s7186, 32, %s15, [#allocation5]
    $region95: #{b_seq_forward.5} parent=1 // pred_fallthru
      _
    // Predicated region
    $region96: #{b_seq_forward.5} parent=1 // pred_check
      _
    $region97: #{b_seq_forward.5} parent=1 // pred_check_branch
      %7190 = sbr.rel (0) target = $region99
    $region98: #{b_seq_forward.5} parent=1 // pred_region
      %7191 = dma.done [#allocation5], 32
    $region99: #{b_seq_forward.5} parent=1 // pred_fallthru
      _
    %7192 = vsyncpa [#allocation5], 1
  %7193 = vsyncmov [#allocation3]
  %s7194 = vpop.sfrf %7193
  %p7195 = scmp.eq.s32.totalorder %s7194, 0
  %p7196 = pneg %p7195
  %7198 = shalt.err (%p7196)

</llo_original>
